<compile_context>
chip_gen: v5e
topology: v5e:2x2
jax: 0.10.0
libtpu: 0.0.40
codegen_flags: <defaults>
</compile_context>

<pallas_src>
import functools

import jax
import jax.numpy as jnp
from jax import lax
from jax.experimental import pallas as pl
from jax.experimental.pallas import tpu as pltpu

_BN_EPS = 1e-5
_LANE = 128


def _round_up(x, m):
    return ((x + m - 1) // m) * m


def _pick_tile(m, target):
    """Largest multiple-of-8 divisor of m that is <= target (fallback: m)."""
    t = min(m, target)
    t -= t % 8
    while t >= 8:
        if m % t == 0:
            return t
        t -= 8
    return m


# ----------------------------------------------------------------------------
# Kernel 1: down conv (k=2, s=2) as a tiled matmul + folded-BN bias + ReLU
# ----------------------------------------------------------------------------
def _down_kernel(p_ref, w_ref, b_ref, o_ref):
    acc = jnp.dot(p_ref[...], w_ref[...], preferred_element_type=jnp.float32)
    acc = acc + b_ref[...]
    o_ref[...] = jnp.maximum(acc, 0.0).astype(o_ref.dtype)


def down_conv_bn_relu(patches, wmat, bias, *, tm_target=512):
    """relu(patches @ wmat + bias).

    patches: (M, K) bf16   (K = 8*Cin, non-overlapping 2x2x2 patches)
    wmat:    (K, Cp) bf16  (BN scale folded in, Cout zero-padded to Cp)
    bias:    (1, Cp) f32
    returns: (M, Cp) bf16
    """
    M, K = patches.shape
    Cp = wmat.shape[1]
    tm = _pick_tile(M, tm_target)     # M-tiled grid; scales with input size
    return pl.pallas_call(
        _down_kernel,
        grid=(M // tm,),
        in_specs=[
            pl.BlockSpec((tm, K), lambda i: (i, 0)),
            pl.BlockSpec((K, Cp), lambda i: (0, 0)),
            pl.BlockSpec((1, Cp), lambda i: (0, 0)),
        ],
        out_specs=pl.BlockSpec((tm, Cp), lambda i: (i, 0)),
        out_shape=jax.ShapeDtypeStruct((M, Cp), jnp.bfloat16),
        compiler_params=pltpu.CompilerParams(
            dimension_semantics=("parallel",)),
    )(patches, wmat, bias)


# ----------------------------------------------------------------------------
# Kernel 2: fused 3x3x3 conv (27 tap matmuls) + folded-BN bias
#           [+ residual] + ReLU, one (n, output-depth-plane) per grid step.
# ----------------------------------------------------------------------------
def _conv3_kernel(*refs, has_residual):
    if has_residual:
        x0, x1, x2, w_ref, b_ref, r_ref, o_ref = refs
    else:
        x0, x1, x2, w_ref, b_ref, o_ref = refs
        r_ref = None

    _, _, ohp, owp, _ = x0.shape
    oh, ow = ohp - 2, owp - 2
    cp = o_ref.shape[-1]

    acc = jnp.zeros((oh * ow, cp), jnp.float32)
    xrefs = (x0, x1, x2)
    for kd in range(3):
        xr = xrefs[kd]
        for kh in range(3):
            for kw in range(3):
                t = kd * 9 + kh * 3 + kw
                # (oh, ow, Cp) window load straight from the padded plane.
                patch = xr[0, 0, kh:kh + oh, kw:kw + ow, :]
                acc = acc + jnp.dot(
                    patch.reshape(oh * ow, patch.shape[-1]),
                    w_ref[t],
                    preferred_element_type=jnp.float32,
                )
    acc = acc + b_ref[...]
    if has_residual:
        acc = acc + r_ref[0, 0].astype(jnp.float32)
    o_ref[0, 0] = jnp.maximum(acc, 0.0).astype(o_ref.dtype)


def conv3x3_bn_act(x_pad, w_taps, bias, residual=None):
    """Fused 3x3x3 conv + folded-BN bias + (residual) + ReLU.

    x_pad:    (N, OD+2, OH+2, OW+2, Cp) bf16, spatially zero-padded by 1
    w_taps:   (27, Cp, Cp) bf16, BN scale folded in, channels zero-padded
    bias:     (1, Cp) f32
    residual: (N, OD, OH*OW, Cp) bf16 or None
    returns:  (N, OD, OH*OW, Cp) bf16   (lane-dense, spatially flattened)
    """
    N, ODp, OHp, OWp, Cp = x_pad.shape
    OD, OH, OW = ODp - 2, OHp - 2, OWp - 2
    HW = OH * OW

    def x_spec(kd):
        # Depth block size is 1, so the block index equals the element index:
        # plane d+kd of the padded volume (the depth halo for tap kd).
        return pl.BlockSpec((1, 1, OHp, OWp, Cp),
                            lambda n, d, kd=kd: (n, d + kd, 0, 0, 0))

    in_specs = [x_spec(0), x_spec(1), x_spec(2),
                pl.BlockSpec((27, Cp, Cp), lambda n, d: (0, 0, 0)),
                pl.BlockSpec((1, Cp), lambda n, d: (0, 0))]
    args = [x_pad, x_pad, x_pad, w_taps, bias]
    if residual is not None:
        in_specs.append(pl.BlockSpec((1, 1, HW, Cp),
                                     lambda n, d: (n, d, 0, 0)))
        args.append(residual)

    kernel = functools.partial(_conv3_kernel,
                               has_residual=residual is not None)
    return pl.pallas_call(
        kernel,
        grid=(N, OD),
        in_specs=in_specs,
        out_specs=pl.BlockSpec((1, 1, HW, Cp), lambda n, d: (n, d, 0, 0)),
        out_shape=jax.ShapeDtypeStruct((N, OD, HW, Cp), jnp.bfloat16),
        compiler_params=pltpu.CompilerParams(
            dimension_semantics=("parallel", "parallel")),
    )(*args)


# ----------------------------------------------------------------------------
# Glue: BN folding, parameter init
# ----------------------------------------------------------------------------
def _fold_bn(p):
    """Fold conv bias + BatchNorm (eval mode) into per-channel scale/bias."""
    scale = p["gamma"] / jnp.sqrt(p["var"] + _BN_EPS)
    bias = scale * (p["b"] - p["mean"]) + p["beta"]
    return scale, bias


def init_params(key, in_channels, num_convs):
    C = in_channels * 2
    keys = jax.random.split(key, 2 + num_convs)

    def bn_params(k, c):
        k1, k2, k3, k4 = jax.random.split(k, 4)
        return dict(
            gamma=jax.random.uniform(k1, (c,), jnp.float32, 0.8, 1.2),
            beta=0.1 * jax.random.normal(k2, (c,), jnp.float32),
            mean=0.1 * jax.random.normal(k3, (c,), jnp.float32),
            var=jax.random.uniform(k4, (c,), jnp.float32, 0.5, 1.5),
        )

    kdw, kdb = jax.random.split(keys[0])
    down = dict(
        w=0.2 * jax.random.normal(kdw, (C, in_channels, 2, 2, 2), jnp.float32),
        b=0.05 * jax.random.normal(kdb, (C,), jnp.float32),
        **bn_params(keys[1], C),
    )
    convs = []
    for i in range(num_convs):
        kw, kb, kbn = jax.random.split(keys[2 + i], 3)
        convs.append(dict(
            w=0.1 * jax.random.normal(kw, (C, C, 3, 3, 3), jnp.float32),
            b=0.05 * jax.random.normal(kb, (C,), jnp.float32),
            **bn_params(kbn, C),
        ))
    return dict(down=down, convs=convs)


# ----------------------------------------------------------------------------
# DownBlock forward (use_bottle_neck=False, use_se=False)
# ----------------------------------------------------------------------------
def down_block_forward(x, params, num_convs):
    """x: (N, Cin, D, H, W)  ->  (N, 2*Cin, D/2, H/2, W/2)   (NCDHW)."""
    N, Cin, D, H, W = x.shape
    C = Cin * 2
    Cp = _round_up(C, _LANE)                       # lane-dense output channels
    OD, OH, OW = D // 2, H // 2, W // 2
    M = N * OD * OH * OW

    # --- down conv: ksize=2, stride=2 -> non-overlapping 2x2x2 patch matmul
    xn = jnp.transpose(x, (0, 2, 3, 4, 1))                         # NDHWC
    p = xn.reshape(N, OD, 2, OH, 2, OW, 2, Cin)
    p = jnp.transpose(p, (0, 1, 3, 5, 2, 4, 6, 7)).reshape(M, 8 * Cin)
    p = p.astype(jnp.bfloat16)

    s, b = _fold_bn(params["down"])
    wd = jnp.transpose(params["down"]["w"], (2, 3, 4, 1, 0)).reshape(8 * Cin, C)
    wd = jnp.pad(wd * s[None, :], ((0, 0), (0, Cp - C))).astype(jnp.bfloat16)
    bd = jnp.pad(b, (0, Cp - C)).reshape(1, Cp).astype(jnp.float32)

    down = down_conv_bn_relu(p, wd, bd)                            # (M, Cp) bf16
    res = down.reshape(N, OD, OH * OW, Cp)                         # residual operand

    # --- ResidualBlock3: num_convs x ConvBnRelu3(ksize=3, pad=1), last without
    #     its own act, then relu(input + ops(input)); residual add + final ReLU
    #     are fused into the last conv kernel.
    cur = res
    for i in range(num_convs):
        cp = params["convs"][i]
        s, b = _fold_bn(cp)
        wt = jnp.transpose(cp["w"], (2, 3, 4, 1, 0)).reshape(27, C, C)
        wt = jnp.pad(wt * s[None, None, :],
                     ((0, 0), (0, Cp - C), (0, Cp - C))).astype(jnp.bfloat16)
        bt = jnp.pad(b, (0, Cp - C)).reshape(1, Cp).astype(jnp.float32)

        x5 = cur.reshape(N, OD, OH, OW, Cp)
        x_pad = jnp.pad(x5, ((0, 0), (1, 1), (1, 1), (1, 1), (0, 0)))
        last = (i == num_convs - 1)
        cur = conv3x3_bn_act(x_pad, wt, bt, residual=res if last else None)

    out = cur.reshape(N, OD, OH, OW, Cp)[..., :C].astype(jnp.float32)
    return jnp.transpose(out, (0, 4, 1, 2, 3))                     # back to NCDHW


# ----------------------------------------------------------------------------
# Pure-JAX reference (lax.conv_general_dilated, f32 HIGHEST) for verification
# ----------------------------------------------------------------------------
def reference_forward(x, params, num_convs):
    def conv_bn(h, p, stride, pad, relu):
        out = lax.conv_general_dilated(
            h, p["w"], window_strides=(stride,) * 3, padding=[(pad, pad)] * 3,
            dimension_numbers=("NCDHW", "OIDHW", "NCDHW"),
            precision=lax.Precision.HIGHEST,
        )
        out = out + p["b"].reshape(1, -1, 1, 1, 1)
        scale = (p["gamma"] / jnp.sqrt(p["var"] + _BN_EPS)).reshape(1, -1, 1, 1, 1)
        out = scale * (out - p["mean"].reshape(1, -1, 1, 1, 1)) \
            + p["beta"].reshape(1, -1, 1, 1, 1)
        return jnp.maximum(out, 0.0) if relu else out

    down = conv_bn(x.astype(jnp.float32), params["down"], 2, 0, True)
    h = down
    for i in range(num_convs):
        h = conv_bn(h, params["convs"][i], 1, 1, i != num_convs - 1)
    return jnp.maximum(down + h, 0.0)


# ----------------------------------------------------------------------------
if __name__ == "__main__":
    N, Cin, D, H, W = 2, 4, 8, 8, 8
    num_convs = 2

    x = jax.random.normal(jax.random.PRNGKey(0), (N, Cin, D, H, W), jnp.float32)
    params = init_params(jax.random.PRNGKey(1), Cin, num_convs)

    fwd = jax.jit(down_block_forward, static_argnums=2)
    out = jax.block_until_ready(fwd(x, params, num_convs))
    assert out.shape == (N, 2 * Cin, D // 2, H // 2, W // 2), out.shape

    ref = reference_forward(x, params, num_convs)
    err = float(jnp.max(jnp.abs(out - ref)))
    ref_scale = float(jnp.max(jnp.abs(ref)))
    # bf16 matmul operands with f32 accumulation -> scale-normalized tolerance.
    assert err <= 3e-2 * max(1.0, ref_scale), (
        f"mismatch vs reference: max abs diff {err} (ref scale {ref_scale})")

    print("KERNEL_OK")
</pallas_src>

<mosaic_0001>
module attributes {stable_mosaic.version = 11 : i64} {
  func.func @_down_kernel(%arg0: i32, %arg1: memref<128x32xbf16, #tpu.memory_space<vmem>>, %arg2: memref<32x128xbf16, #tpu.memory_space<vmem>>, %arg3: memref<1x128xf32, #tpu.memory_space<vmem>>, %arg4: memref<128x128xbf16, #tpu.memory_space<vmem>>) attributes {dimension_semantics = [#tpu.dimension_semantics<parallel>], iteration_bounds = array<i64: 1>, scalar_prefetch = 0 : i64, scratch_operands = 0 : i64, tpu.core_type = #tpu.core_type<tc>, window_params = [{transform_indices = @transform_0, window_bounds = array<i64: 128, 32>}, {pipeline_mode = #tpu.pipeline_mode<synchronous>, transform_indices = @transform_1, window_bounds = array<i64: 32, 128>}, {pipeline_mode = #tpu.pipeline_mode<synchronous>, transform_indices = @transform_2, window_bounds = array<i64: 1, 128>}, {transform_indices = @transform_3, window_bounds = array<i64: 128, 128>}]} {
    %c0 = arith.constant 0 : index
    %c0_0 = arith.constant 0 : index
    %0 = vector.load %arg1[%c0, %c0_0] : memref<128x32xbf16, #tpu.memory_space<vmem>>, vector<128x32xbf16>
    %c0_1 = arith.constant 0 : index
    %c0_2 = arith.constant 0 : index
    %1 = vector.load %arg2[%c0_1, %c0_2] : memref<32x128xbf16, #tpu.memory_space<vmem>>, vector<32x128xbf16>
    %cst = arith.constant dense<0.000000e+00> : vector<128x128xf32>
    %2 = tpu.matmul %0, %1, %cst {dimension_numbers = #tpu.dot_dimension_numbers<[1], [0], [0], [1], [0, 0, 1, 1], [], []>} : vector<128x32xbf16>, vector<32x128xbf16>, vector<128x128xf32> -> vector<128x128xf32>
    %c0_3 = arith.constant 0 : index
    %c0_4 = arith.constant 0 : index
    %3 = vector.load %arg3[%c0_3, %c0_4] : memref<1x128xf32, #tpu.memory_space<vmem>>, vector<1x128xf32>
    %4 = vector.broadcast %3 : vector<1x128xf32> to vector<128x128xf32>
    %5 = arith.addf %2, %4 : vector<128x128xf32>
    %cst_5 = arith.constant 0.000000e+00 : f32
    %6 = vector.broadcast %cst_5 : f32 to vector<128x128xf32>
    %7 = arith.maximumf %5, %6 : vector<128x128xf32>
    %8 = arith.truncf %7 : vector<128x128xf32> to vector<128x128xbf16>
    %c0_6 = arith.constant 0 : index
    %c0_7 = arith.constant 0 : index
    %9 = vector.load %arg4[%c0_6, %c0_7] : memref<128x128xbf16, #tpu.memory_space<vmem>>, vector<128x128xbf16>
    tpu.vector_store %arg4[%c0_6, %c0_7], %8 {strides = array<i32>} : memref<128x128xbf16, #tpu.memory_space<vmem>>, vector<128x128xbf16>,
    return
  }
  func.func @transform_0(%arg0: i32) -> (i32, i32) {
    %c0_i32 = arith.constant 0 : i32
    %c0_i32_0 = arith.constant 0 : i32
    return %arg0, %c0_i32 : i32, i32
  }
  func.func @transform_1(%arg0: i32) -> (i32, i32) {
    %c0_i32 = arith.constant 0 : i32
    %c0_i32_0 = arith.constant 0 : i32
    %c0_i32_1 = arith.constant 0 : i32
    return %c0_i32, %c0_i32_0 : i32, i32
  }
  func.func @transform_2(%arg0: i32) -> (i32, i32) {
    %c0_i32 = arith.constant 0 : i32
    %c0_i32_0 = arith.constant 0 : i32
    %c0_i32_1 = arith.constant 0 : i32
    return %c0_i32, %c0_i32_0 : i32, i32
  }
  func.func @transform_3(%arg0: i32) -> (i32, i32) {
    %c0_i32 = arith.constant 0 : i32
    %c0_i32_0 = arith.constant 0 : i32
    return %arg0, %c0_i32 : i32, i32
  }
}

module attributes {stable_mosaic.version = 11 : i64} {
  func.func @_conv3_kernel(%arg0: i32, %arg1: i32, %arg2: memref<1x1x6x6x128xbf16, #tpu.memory_space<vmem>>, %arg3: memref<1x1x6x6x128xbf16, #tpu.memory_space<vmem>>, %arg4: memref<1x1x6x6x128xbf16, #tpu.memory_space<vmem>>, %arg5: memref<27x128x128xbf16, #tpu.memory_space<vmem>>, %arg6: memref<1x128xf32, #tpu.memory_space<vmem>>, %arg7: memref<1x1x16x128xbf16, #tpu.memory_space<vmem>>) attributes {dimension_semantics = [#tpu.dimension_semantics<parallel>, #tpu.dimension_semantics<parallel>], iteration_bounds = array<i64: 2, 4>, scalar_prefetch = 0 : i64, scratch_operands = 0 : i64, tpu.core_type = #tpu.core_type<tc>, window_params = [{transform_indices = @transform_0, window_bounds = array<i64: 1, 1, 6, 6, 128>}, {transform_indices = @transform_1, window_bounds = array<i64: 1, 1, 6, 6, 128>}, {transform_indices = @transform_2, window_bounds = array<i64: 1, 1, 6, 6, 128>}, {pipeline_mode = #tpu.pipeline_mode<synchronous>, transform_indices = @transform_3, window_bounds = array<i64: 27, 128, 128>}, {pipeline_mode = #tpu.pipeline_mode<synchronous>, transform_indices = @transform_4, window_bounds = array<i64: 1, 128>}, {transform_indices = @transform_5, window_bounds = array<i64: 1, 1, 16, 128>}]} {
    %cst = arith.constant 0.000000e+00 : f32
    %0 = vector.broadcast %cst : f32 to vector<16x128xf32>
    %c0 = arith.constant 0 : index
    %c0_0 = arith.constant 0 : index
    %c0_1 = arith.constant 0 : index
    %c0_2 = arith.constant 0 : index
    %c0_3 = arith.constant 0 : index
    %1 = vector.load %arg2[%c0, %c0_0, %c0_1, %c0_2, %c0_3] : memref<1x1x6x6x128xbf16, #tpu.memory_space<vmem>>, vector<1x1x4x4x128xbf16>
    %2 = vector.shape_cast %1 : vector<1x1x4x4x128xbf16> to vector<4x4x128xbf16>
    %3 = vector.shape_cast %2 : vector<4x4x128xbf16> to vector<16x128xbf16>
    %c0_4 = arith.constant 0 : index
    %c0_5 = arith.constant 0 : index
    %c0_6 = arith.constant 0 : index
    %4 = vector.load %arg5[%c0_4, %c0_5, %c0_6] : memref<27x128x128xbf16, #tpu.memory_space<vmem>>, vector<1x128x128xbf16>
    %5 = vector.shape_cast %4 : vector<1x128x128xbf16> to vector<128x128xbf16>
    %cst_7 = arith.constant dense<0.000000e+00> : vector<16x128xf32>
    %6 = tpu.matmul %3, %5, %cst_7 {dimension_numbers = #tpu.dot_dimension_numbers<[1], [0], [0], [1], [0, 0, 1, 1], [], []>} : vector<16x128xbf16>, vector<128x128xbf16>, vector<16x128xf32> -> vector<16x128xf32>
    %7 = arith.addf %0, %6 : vector<16x128xf32>
    %c0_8 = arith.constant 0 : index
    %c0_9 = arith.constant 0 : index
    %c0_10 = arith.constant 0 : index
    %c1 = arith.constant 1 : index
    %c0_11 = arith.constant 0 : index
    %8 = vector.load %arg2[%c0_8, %c0_9, %c0_10, %c1, %c0_11] : memref<1x1x6x6x128xbf16, #tpu.memory_space<vmem>>, vector<1x1x4x4x128xbf16>
    %9 = vector.shape_cast %8 : vector<1x1x4x4x128xbf16> to vector<4x4x128xbf16>
    %10 = vector.shape_cast %9 : vector<4x4x128xbf16> to vector<16x128xbf16>
    %c1_12 = arith.constant 1 : index
    %c0_13 = arith.constant 0 : index
    %c0_14 = arith.constant 0 : index
    %11 = vector.load %arg5[%c1_12, %c0_13, %c0_14] : memref<27x128x128xbf16, #tpu.memory_space<vmem>>, vector<1x128x128xbf16>
    %12 = vector.shape_cast %11 : vector<1x128x128xbf16> to vector<128x128xbf16>
    %cst_15 = arith.constant dense<0.000000e+00> : vector<16x128xf32>
    %13 = tpu.matmul %10, %12, %cst_15 {dimension_numbers = #tpu.dot_dimension_numbers<[1], [0], [0], [1], [0, 0, 1, 1], [], []>} : vector<16x128xbf16>, vector<128x128xbf16>, vector<16x128xf32> -> vector<16x128xf32>
    %14 = arith.addf %7, %13 : vector<16x128xf32>
    %c0_16 = arith.constant 0 : index
    %c0_17 = arith.constant 0 : index
    %c0_18 = arith.constant 0 : index
    %c2 = arith.constant 2 : index
    %c0_19 = arith.constant 0 : index
    %15 = vector.load %arg2[%c0_16, %c0_17, %c0_18, %c2, %c0_19] : memref<1x1x6x6x128xbf16, #tpu.memory_space<vmem>>, vector<1x1x4x4x128xbf16>
    %16 = vector.shape_cast %15 : vector<1x1x4x4x128xbf16> to vector<4x4x128xbf16>
    %17 = vector.shape_cast %16 : vector<4x4x128xbf16> to vector<16x128xbf16>
    %c2_20 = arith.constant 2 : index
    %c0_21 = arith.constant 0 : index
    %c0_22 = arith.constant 0 : index
    %18 = vector.load %arg5[%c2_20, %c0_21, %c0_22] : memref<27x128x128xbf16, #tpu.memory_space<vmem>>, vector<1x128x128xbf16>
    %19 = vector.shape_cast %18 : vector<1x128x128xbf16> to vector<128x128xbf16>
    %cst_23 = arith.constant dense<0.000000e+00> : vector<16x128xf32>
    %20 = tpu.matmul %17, %19, %cst_23 {dimension_numbers = #tpu.dot_dimension_numbers<[1], [0], [0], [1], [0, 0, 1, 1], [], []>} : vector<16x128xbf16>, vector<128x128xbf16>, vector<16x128xf32> -> vector<16x128xf32>
    %21 = arith.addf %14, %20 : vector<16x128xf32>
    %c0_24 = arith.constant 0 : index
    %c0_25 = arith.constant 0 : index
    %c1_26 = arith.constant 1 : index
    %c0_27 = arith.constant 0 : index
    %c0_28 = arith.constant 0 : index
    %22 = vector.load %arg2[%c0_24, %c0_25, %c1_26, %c0_27, %c0_28] : memref<1x1x6x6x128xbf16, #tpu.memory_space<vmem>>, vector<1x1x4x4x128xbf16>
    %23 = vector.shape_cast %22 : vector<1x1x4x4x128xbf16> to vector<4x4x128xbf16>
    %24 = vector.shape_cast %23 : vector<4x4x128xbf16> to vector<16x128xbf16>
    %c3 = arith.constant 3 : index
    %c0_29 = arith.constant 0 : index
    %c0_30 = arith.constant 0 : index
    %25 = vector.load %arg5[%c3, %c0_29, %c0_30] : memref<27x128x128xbf16, #tpu.memory_space<vmem>>, vector<1x128x128xbf16>
    %26 = vector.shape_cast %25 : vector<1x128x128xbf16> to vector<128x128xbf16>
    %cst_31 = arith.constant dense<0.000000e+00> : vector<16x128xf32>
    %27 = tpu.matmul %24, %26, %cst_31 {dimension_numbers = #tpu.dot_dimension_numbers<[1], [0], [0], [1], [0, 0, 1, 1], [], []>} : vector<16x128xbf16>, vector<128x128xbf16>, vector<16x128xf32> -> vector<16x128xf32>
    %28 = arith.addf %21, %27 : vector<16x128xf32>
    %c0_32 = arith.constant 0 : index
    %c0_33 = arith.constant 0 : index
    %c1_34 = arith.constant 1 : index
    %c1_35 = arith.constant 1 : index
    %c0_36 = arith.constant 0 : index
    %29 = vector.load %arg2[%c0_32, %c0_33, %c1_34, %c1_35, %c0_36] : memref<1x1x6x6x128xbf16, #tpu.memory_space<vmem>>, vector<1x1x4x4x128xbf16>
    %30 = vector.shape_cast %29 : vector<1x1x4x4x128xbf16> to vector<4x4x128xbf16>
    %31 = vector.shape_cast %30 : vector<4x4x128xbf16> to vector<16x128xbf16>
    %c4 = arith.constant 4 : index
    %c0_37 = arith.constant 0 : index
    %c0_38 = arith.constant 0 : index
    %32 = vector.load %arg5[%c4, %c0_37, %c0_38] : memref<27x128x128xbf16, #tpu.memory_space<vmem>>, vector<1x128x128xbf16>
    %33 = vector.shape_cast %32 : vector<1x128x128xbf16> to vector<128x128xbf16>
    %cst_39 = arith.constant dense<0.000000e+00> : vector<16x128xf32>
    %34 = tpu.matmul %31, %33, %cst_39 {dimension_numbers = #tpu.dot_dimension_numbers<[1], [0], [0], [1], [0, 0, 1, 1], [], []>} : vector<16x128xbf16>, vector<128x128xbf16>, vector<16x128xf32> -> vector<16x128xf32>
    %35 = arith.addf %28, %34 : vector<16x128xf32>
    %c0_40 = arith.constant 0 : index
    %c0_41 = arith.constant 0 : index
    %c1_42 = arith.constant 1 : index
    %c2_43 = arith.constant 2 : index
    %c0_44 = arith.constant 0 : index
    %36 = vector.load %arg2[%c0_40, %c0_41, %c1_42, %c2_43, %c0_44] : memref<1x1x6x6x128xbf16, #tpu.memory_space<vmem>>, vector<1x1x4x4x128xbf16>
    %37 = vector.shape_cast %36 : vector<1x1x4x4x128xbf16> to vector<4x4x128xbf16>
    %38 = vector.shape_cast %37 : vector<4x4x128xbf16> to vector<16x128xbf16>
    %c5 = arith.constant 5 : index
    %c0_45 = arith.constant 0 : index
    %c0_46 = arith.constant 0 : index
    %39 = vector.load %arg5[%c5, %c0_45, %c0_46] : memref<27x128x128xbf16, #tpu.memory_space<vmem>>, vector<1x128x128xbf16>
    %40 = vector.shape_cast %39 : vector<1x128x128xbf16> to vector<128x128xbf16>
    %cst_47 = arith.constant dense<0.000000e+00> : vector<16x128xf32>
    %41 = tpu.matmul %38, %40, %cst_47 {dimension_numbers = #tpu.dot_dimension_numbers<[1], [0], [0], [1], [0, 0, 1, 1], [], []>} : vector<16x128xbf16>, vector<128x128xbf16>, vector<16x128xf32> -> vector<16x128xf32>
    %42 = arith.addf %35, %41 : vector<16x128xf32>
    %c0_48 = arith.constant 0 : index
    %c0_49 = arith.constant 0 : index
    %c2_50 = arith.constant 2 : index
    %c0_51 = arith.constant 0 : index
    %c0_52 = arith.constant 0 : index
    %43 = vector.load %arg2[%c0_48, %c0_49, %c2_50, %c0_51, %c0_52] : memref<1x1x6x6x128xbf16, #tpu.memory_space<vmem>>, vector<1x1x4x4x128xbf16>
    %44 = vector.shape_cast %43 : vector<1x1x4x4x128xbf16> to vector<4x4x128xbf16>
    %45 = vector.shape_cast %44 : vector<4x4x128xbf16> to vector<16x128xbf16>
    %c6 = arith.constant 6 : index
    %c0_53 = arith.constant 0 : index
    %c0_54 = arith.constant 0 : index
    %46 = vector.load %arg5[%c6, %c0_53, %c0_54] : memref<27x128x128xbf16, #tpu.memory_space<vmem>>, vector<1x128x128xbf16>
    %47 = vector.shape_cast %46 : vector<1x128x128xbf16> to vector<128x128xbf16>
    %cst_55 = arith.constant dense<0.000000e+00> : vector<16x128xf32>
    %48 = tpu.matmul %45, %47, %cst_55 {dimension_numbers = #tpu.dot_dimension_numbers<[1], [0], [0], [1], [0, 0, 1, 1], [], []>} : vector<16x128xbf16>, vector<128x128xbf16>, vector<16x128xf32> -> vector<16x128xf32>
    %49 = arith.addf %42, %48 : vector<16x128xf32>
    %c0_56 = arith.constant 0 : index
    %c0_57 = arith.constant 0 : index
    %c2_58 = arith.constant 2 : index
    %c1_59 = arith.constant 1 : index
    %c0_60 = arith.constant 0 : index
    %50 = vector.load %arg2[%c0_56, %c0_57, %c2_58, %c1_59, %c0_60] : memref<1x1x6x6x128xbf16, #tpu.memory_space<vmem>>, vector<1x1x4x4x128xbf16>
    %51 = vector.shape_cast %50 : vector<1x1x4x4x128xbf16> to vector<4x4x128xbf16>
    %52 = vector.shape_cast %51 : vector<4x4x128xbf16> to vector<16x128xbf16>
    %c7 = arith.constant 7 : index
    %c0_61 = arith.constant 0 : index
    %c0_62 = arith.constant 0 : index
    %53 = vector.load %arg5[%c7, %c0_61, %c0_62] : memref<27x128x128xbf16, #tpu.memory_space<vmem>>, vector<1x128x128xbf16>
    %54 = vector.shape_cast %53 : vector<1x128x128xbf16> to vector<128x128xbf16>
    %cst_63 = arith.constant dense<0.000000e+00> : vector<16x128xf32>
    %55 = tpu.matmul %52, %54, %cst_63 {dimension_numbers = #tpu.dot_dimension_numbers<[1], [0], [0], [1], [0, 0, 1, 1], [], []>} : vector<16x128xbf16>, vector<128x128xbf16>, vector<16x128xf32> -> vector<16x128xf32>
    %56 = arith.addf %49, %55 : vector<16x128xf32>
    %c0_64 = arith.constant 0 : index
    %c0_65 = arith.constant 0 : index
    %c2_66 = arith.constant 2 : index
    %c2_67 = arith.constant 2 : index
    %c0_68 = arith.constant 0 : index
    %57 = vector.load %arg2[%c0_64, %c0_65, %c2_66, %c2_67, %c0_68] : memref<1x1x6x6x128xbf16, #tpu.memory_space<vmem>>, vector<1x1x4x4x128xbf16>
    %58 = vector.shape_cast %57 : vector<1x1x4x4x128xbf16> to vector<4x4x128xbf16>
    %59 = vector.shape_cast %58 : vector<4x4x128xbf16> to vector<16x128xbf16>
    %c8 = arith.constant 8 : index
    %c0_69 = arith.constant 0 : index
    %c0_70 = arith.constant 0 : index
    %60 = vector.load %arg5[%c8, %c0_69, %c0_70] : memref<27x128x128xbf16, #tpu.memory_space<vmem>>, vector<1x128x128xbf16>
    %61 = vector.shape_cast %60 : vector<1x128x128xbf16> to vector<128x128xbf16>
    %cst_71 = arith.constant dense<0.000000e+00> : vector<16x128xf32>
    %62 = tpu.matmul %59, %61, %cst_71 {dimension_numbers = #tpu.dot_dimension_numbers<[1], [0], [0], [1], [0, 0, 1, 1], [], []>} : vector<16x128xbf16>, vector<128x128xbf16>, vector<16x128xf32> -> vector<16x128xf32>
    %63 = arith.addf %56, %62 : vector<16x128xf32>
    %c0_72 = arith.constant 0 : index
    %c0_73 = arith.constant 0 : index
    %c0_74 = arith.constant 0 : index
    %c0_75 = arith.constant 0 : index
    %c0_76 = arith.constant 0 : index
    %64 = vector.load %arg3[%c0_72, %c0_73, %c0_74, %c0_75, %c0_76] : memref<1x1x6x6x128xbf16, #tpu.memory_space<vmem>>, vector<1x1x4x4x128xbf16>
    %65 = vector.shape_cast %64 : vector<1x1x4x4x128xbf16> to vector<4x4x128xbf16>
    %66 = vector.shape_cast %65 : vector<4x4x128xbf16> to vector<16x128xbf16>
    %c9 = arith.constant 9 : index
    %c0_77 = arith.constant 0 : index
    %c0_78 = arith.constant 0 : index
    %67 = vector.load %arg5[%c9, %c0_77, %c0_78] : memref<27x128x128xbf16, #tpu.memory_space<vmem>>, vector<1x128x128xbf16>
    %68 = vector.shape_cast %67 : vector<1x128x128xbf16> to vector<128x128xbf16>
    %cst_79 = arith.constant dense<0.000000e+00> : vector<16x128xf32>
    %69 = tpu.matmul %66, %68, %cst_79 {dimension_numbers = #tpu.dot_dimension_numbers<[1], [0], [0], [1], [0, 0, 1, 1], [], []>} : vector<16x128xbf16>, vector<128x128xbf16>, vector<16x128xf32> -> vector<16x128xf32>
    %70 = arith.addf %63, %69 : vector<16x128xf32>
    %c0_80 = arith.constant 0 : index
    %c0_81 = arith.constant 0 : index
    %c0_82 = arith.constant 0 : index
    %c1_83 = arith.constant 1 : index
    %c0_84 = arith.constant 0 : index
    %71 = vector.load %arg3[%c0_80, %c0_81, %c0_82, %c1_83, %c0_84] : memref<1x1x6x6x128xbf16, #tpu.memory_space<vmem>>, vector<1x1x4x4x128xbf16>
    %72 = vector.shape_cast %71 : vector<1x1x4x4x128xbf16> to vector<4x4x128xbf16>
    %73 = vector.shape_cast %72 : vector<4x4x128xbf16> to vector<16x128xbf16>
    %c10 = arith.constant 10 : index
    %c0_85 = arith.constant 0 : index
    %c0_86 = arith.constant 0 : index
    %74 = vector.load %arg5[%c10, %c0_85, %c0_86] : memref<27x128x128xbf16, #tpu.memory_space<vmem>>, vector<1x128x128xbf16>
    %75 = vector.shape_cast %74 : vector<1x128x128xbf16> to vector<128x128xbf16>
    %cst_87 = arith.constant dense<0.000000e+00> : vector<16x128xf32>
    %76 = tpu.matmul %73, %75, %cst_87 {dimension_numbers = #tpu.dot_dimension_numbers<[1], [0], [0], [1], [0, 0, 1, 1], [], []>} : vector<16x128xbf16>, vector<128x128xbf16>, vector<16x128xf32> -> vector<16x128xf32>
    %77 = arith.addf %70, %76 : vector<16x128xf32>
    %c0_88 = arith.constant 0 : index
    %c0_89 = arith.constant 0 : index
    %c0_90 = arith.constant 0 : index
    %c2_91 = arith.constant 2 : index
    %c0_92 = arith.constant 0 : index
    %78 = vector.load %arg3[%c0_88, %c0_89, %c0_90, %c2_91, %c0_92] : memref<1x1x6x6x128xbf16, #tpu.memory_space<vmem>>, vector<1x1x4x4x128xbf16>
    %79 = vector.shape_cast %78 : vector<1x1x4x4x128xbf16> to vector<4x4x128xbf16>
    %80 = vector.shape_cast %79 : vector<4x4x128xbf16> to vector<16x128xbf16>
    %c11 = arith.constant 11 : index
    %c0_93 = arith.constant 0 : index
    %c0_94 = arith.constant 0 : index
    %81 = vector.load %arg5[%c11, %c0_93, %c0_94] : memref<27x128x128xbf16, #tpu.memory_space<vmem>>, vector<1x128x128xbf16>
    %82 = vector.shape_cast %81 : vector<1x128x128xbf16> to vector<128x128xbf16>
    %cst_95 = arith.constant dense<0.000000e+00> : vector<16x128xf32>
    %83 = tpu.matmul %80, %82, %cst_95 {dimension_numbers = #tpu.dot_dimension_numbers<[1], [0], [0], [1], [0, 0, 1, 1], [], []>} : vector<16x128xbf16>, vector<128x128xbf16>, vector<16x128xf32> -> vector<16x128xf32>
    %84 = arith.addf %77, %83 : vector<16x128xf32>
    %c0_96 = arith.constant 0 : index
    %c0_97 = arith.constant 0 : index
    %c1_98 = arith.constant 1 : index
    %c0_99 = arith.constant 0 : index
    %c0_100 = arith.constant 0 : index
    %85 = vector.load %arg3[%c0_96, %c0_97, %c1_98, %c0_99, %c0_100] : memref<1x1x6x6x128xbf16, #tpu.memory_space<vmem>>, vector<1x1x4x4x128xbf16>
    %86 = vector.shape_cast %85 : vector<1x1x4x4x128xbf16> to vector<4x4x128xbf16>
    %87 = vector.shape_cast %86 : vector<4x4x128xbf16> to vector<16x128xbf16>
    %c12 = arith.constant 12 : index
    %c0_101 = arith.constant 0 : index
    %c0_102 = arith.constant 0 : index
    %88 = vector.load %arg5[%c12, %c0_101, %c0_102] : memref<27x128x128xbf16, #tpu.memory_space<vmem>>, vector<1x128x128xbf16>
    %89 = vector.shape_cast %88 : vector<1x128x128xbf16> to vector<128x128xbf16>
    %cst_103 = arith.constant dense<0.000000e+00> : vector<16x128xf32>
    %90 = tpu.matmul %87, %89, %cst_103 {dimension_numbers = #tpu.dot_dimension_numbers<[1], [0], [0], [1], [0, 0, 1, 1], [], []>} : vector<16x128xbf16>, vector<128x128xbf16>, vector<16x128xf32> -> vector<16x128xf32>
    %91 = arith.addf %84, %90 : vector<16x128xf32>
    %c0_104 = arith.constant 0 : index
    %c0_105 = arith.constant 0 : index
    %c1_106 = arith.constant 1 : index
    %c1_107 = arith.constant 1 : index
    %c0_108 = arith.constant 0 : index
    %92 = vector.load %arg3[%c0_104, %c0_105, %c1_106, %c1_107, %c0_108] : memref<1x1x6x6x128xbf16, #tpu.memory_space<vmem>>, vector<1x1x4x4x128xbf16>
    %93 = vector.shape_cast %92 : vector<1x1x4x4x128xbf16> to vector<4x4x128xbf16>
    %94 = vector.shape_cast %93 : vector<4x4x128xbf16> to vector<16x128xbf16>
    %c13 = arith.constant 13 : index
    %c0_109 = arith.constant 0 : index
    %c0_110 = arith.constant 0 : index
    %95 = vector.load %arg5[%c13, %c0_109, %c0_110] : memref<27x128x128xbf16, #tpu.memory_space<vmem>>, vector<1x128x128xbf16>
    %96 = vector.shape_cast %95 : vector<1x128x128xbf16> to vector<128x128xbf16>
    %cst_111 = arith.constant dense<0.000000e+00> : vector<16x128xf32>
    %97 = tpu.matmul %94, %96, %cst_111 {dimension_numbers = #tpu.dot_dimension_numbers<[1], [0], [0], [1], [0, 0, 1, 1], [], []>} : vector<16x128xbf16>, vector<128x128xbf16>, vector<16x128xf32> -> vector<16x128xf32>
    %98 = arith.addf %91, %97 : vector<16x128xf32>
    %c0_112 = arith.constant 0 : index
    %c0_113 = arith.constant 0 : index
    %c1_114 = arith.constant 1 : index
    %c2_115 = arith.constant 2 : index
    %c0_116 = arith.constant 0 : index
    %99 = vector.load %arg3[%c0_112, %c0_113, %c1_114, %c2_115, %c0_116] : memref<1x1x6x6x128xbf16, #tpu.memory_space<vmem>>, vector<1x1x4x4x128xbf16>
    %100 = vector.shape_cast %99 : vector<1x1x4x4x128xbf16> to vector<4x4x128xbf16>
    %101 = vector.shape_cast %100 : vector<4x4x128xbf16> to vector<16x128xbf16>
    %c14 = arith.constant 14 : index
    %c0_117 = arith.constant 0 : index
    %c0_118 = arith.constant 0 : index
    %102 = vector.load %arg5[%c14, %c0_117, %c0_118] : memref<27x128x128xbf16, #tpu.memory_space<vmem>>, vector<1x128x128xbf16>
    %103 = vector.shape_cast %102 : vector<1x128x128xbf16> to vector<128x128xbf16>
    %cst_119 = arith.constant dense<0.000000e+00> : vector<16x128xf32>
    %104 = tpu.matmul %101, %103, %cst_119 {dimension_numbers = #tpu.dot_dimension_numbers<[1], [0], [0], [1], [0, 0, 1, 1], [], []>} : vector<16x128xbf16>, vector<128x128xbf16>, vector<16x128xf32> -> vector<16x128xf32>
    %105 = arith.addf %98, %104 : vector<16x128xf32>
    %c0_120 = arith.constant 0 : index
    %c0_121 = arith.constant 0 : index
    %c2_122 = arith.constant 2 : index
    %c0_123 = arith.constant 0 : index
    %c0_124 = arith.constant 0 : index
    %106 = vector.load %arg3[%c0_120, %c0_121, %c2_122, %c0_123, %c0_124] : memref<1x1x6x6x128xbf16, #tpu.memory_space<vmem>>, vector<1x1x4x4x128xbf16>
    %107 = vector.shape_cast %106 : vector<1x1x4x4x128xbf16> to vector<4x4x128xbf16>
    %108 = vector.shape_cast %107 : vector<4x4x128xbf16> to vector<16x128xbf16>
    %c15 = arith.constant 15 : index
    %c0_125 = arith.constant 0 : index
    %c0_126 = arith.constant 0 : index
    %109 = vector.load %arg5[%c15, %c0_125, %c0_126] : memref<27x128x128xbf16, #tpu.memory_space<vmem>>, vector<1x128x128xbf16>
    %110 = vector.shape_cast %109 : vector<1x128x128xbf16> to vector<128x128xbf16>
    %cst_127 = arith.constant dense<0.000000e+00> : vector<16x128xf32>
    %111 = tpu.matmul %108, %110, %cst_127 {dimension_numbers = #tpu.dot_dimension_numbers<[1], [0], [0], [1], [0, 0, 1, 1], [], []>} : vector<16x128xbf16>, vector<128x128xbf16>, vector<16x128xf32> -> vector<16x128xf32>
    %112 = arith.addf %105, %111 : vector<16x128xf32>
    %c0_128 = arith.constant 0 : index
    %c0_129 = arith.constant 0 : index
    %c2_130 = arith.constant 2 : index
    %c1_131 = arith.constant 1 : index
    %c0_132 = arith.constant 0 : index
    %113 = vector.load %arg3[%c0_128, %c0_129, %c2_130, %c1_131, %c0_132] : memref<1x1x6x6x128xbf16, #tpu.memory_space<vmem>>, vector<1x1x4x4x128xbf16>
    %114 = vector.shape_cast %113 : vector<1x1x4x4x128xbf16> to vector<4x4x128xbf16>
    %115 = vector.shape_cast %114 : vector<4x4x128xbf16> to vector<16x128xbf16>
    %c16 = arith.constant 16 : index
    %c0_133 = arith.constant 0 : index
    %c0_134 = arith.constant 0 : index
    %116 = vector.load %arg5[%c16, %c0_133, %c0_134] : memref<27x128x128xbf16, #tpu.memory_space<vmem>>, vector<1x128x128xbf16>
    %117 = vector.shape_cast %116 : vector<1x128x128xbf16> to vector<128x128xbf16>
    %cst_135 = arith.constant dense<0.000000e+00> : vector<16x128xf32>
    %118 = tpu.matmul %115, %117, %cst_135 {dimension_numbers = #tpu.dot_dimension_numbers<[1], [0], [0], [1], [0, 0, 1, 1], [], []>} : vector<16x128xbf16>, vector<128x128xbf16>, vector<16x128xf32> -> vector<16x128xf32>
    %119 = arith.addf %112, %118 : vector<16x128xf32>
    %c0_136 = arith.constant 0 : index
    %c0_137 = arith.constant 0 : index
    %c2_138 = arith.constant 2 : index
    %c2_139 = arith.constant 2 : index
    %c0_140 = arith.constant 0 : index
    %120 = vector.load %arg3[%c0_136, %c0_137, %c2_138, %c2_139, %c0_140] : memref<1x1x6x6x128xbf16, #tpu.memory_space<vmem>>, vector<1x1x4x4x128xbf16>
    %121 = vector.shape_cast %120 : vector<1x1x4x4x128xbf16> to vector<4x4x128xbf16>
    %122 = vector.shape_cast %121 : vector<4x4x128xbf16> to vector<16x128xbf16>
    %c17 = arith.constant 17 : index
    %c0_141 = arith.constant 0 : index
    %c0_142 = arith.constant 0 : index
    %123 = vector.load %arg5[%c17, %c0_141, %c0_142] : memref<27x128x128xbf16, #tpu.memory_space<vmem>>, vector<1x128x128xbf16>
    %124 = vector.shape_cast %123 : vector<1x128x128xbf16> to vector<128x128xbf16>
    %cst_143 = arith.constant dense<0.000000e+00> : vector<16x128xf32>
    %125 = tpu.matmul %122, %124, %cst_143 {dimension_numbers = #tpu.dot_dimension_numbers<[1], [0], [0], [1], [0, 0, 1, 1], [], []>} : vector<16x128xbf16>, vector<128x128xbf16>, vector<16x128xf32> -> vector<16x128xf32>
    %126 = arith.addf %119, %125 : vector<16x128xf32>
    %c0_144 = arith.constant 0 : index
    %c0_145 = arith.constant 0 : index
    %c0_146 = arith.constant 0 : index
    %c0_147 = arith.constant 0 : index
    %c0_148 = arith.constant 0 : index
    %127 = vector.load %arg4[%c0_144, %c0_145, %c0_146, %c0_147, %c0_148] : memref<1x1x6x6x128xbf16, #tpu.memory_space<vmem>>, vector<1x1x4x4x128xbf16>
    %128 = vector.shape_cast %127 : vector<1x1x4x4x128xbf16> to vector<4x4x128xbf16>
    %129 = vector.shape_cast %128 : vector<4x4x128xbf16> to vector<16x128xbf16>
    %c18 = arith.constant 18 : index
    %c0_149 = arith.constant 0 : index
    %c0_150 = arith.constant 0 : index
    %130 = vector.load %arg5[%c18, %c0_149, %c0_150] : memref<27x128x128xbf16, #tpu.memory_space<vmem>>, vector<1x128x128xbf16>
    %131 = vector.shape_cast %130 : vector<1x128x128xbf16> to vector<128x128xbf16>
    %cst_151 = arith.constant dense<0.000000e+00> : vector<16x128xf32>
    %132 = tpu.matmul %129, %131, %cst_151 {dimension_numbers = #tpu.dot_dimension_numbers<[1], [0], [0], [1], [0, 0, 1, 1], [], []>} : vector<16x128xbf16>, vector<128x128xbf16>, vector<16x128xf32> -> vector<16x128xf32>
    %133 = arith.addf %126, %132 : vector<16x128xf32>
    %c0_152 = arith.constant 0 : index
    %c0_153 = arith.constant 0 : index
    %c0_154 = arith.constant 0 : index
    %c1_155 = arith.constant 1 : index
    %c0_156 = arith.constant 0 : index
    %134 = vector.load %arg4[%c0_152, %c0_153, %c0_154, %c1_155, %c0_156] : memref<1x1x6x6x128xbf16, #tpu.memory_space<vmem>>, vector<1x1x4x4x128xbf16>
    %135 = vector.shape_cast %134 : vector<1x1x4x4x128xbf16> to vector<4x4x128xbf16>
    %136 = vector.shape_cast %135 : vector<4x4x128xbf16> to vector<16x128xbf16>
    %c19 = arith.constant 19 : index
    %c0_157 = arith.constant 0 : index
    %c0_158 = arith.constant 0 : index
    %137 = vector.load %arg5[%c19, %c0_157, %c0_158] : memref<27x128x128xbf16, #tpu.memory_space<vmem>>, vector<1x128x128xbf16>
    %138 = vector.shape_cast %137 : vector<1x128x128xbf16> to vector<128x128xbf16>
    %cst_159 = arith.constant dense<0.000000e+00> : vector<16x128xf32>
    %139 = tpu.matmul %136, %138, %cst_159 {dimension_numbers = #tpu.dot_dimension_numbers<[1], [0], [0], [1], [0, 0, 1, 1], [], []>} : vector<16x128xbf16>, vector<128x128xbf16>, vector<16x128xf32> -> vector<16x128xf32>
    %140 = arith.addf %133, %139 : vector<16x128xf32>
    %c0_160 = arith.constant 0 : index
    %c0_161 = arith.constant 0 : index
    %c0_162 = arith.constant 0 : index
    %c2_163 = arith.constant 2 : index
    %c0_164 = arith.constant 0 : index
    %141 = vector.load %arg4[%c0_160, %c0_161, %c0_162, %c2_163, %c0_164] : memref<1x1x6x6x128xbf16, #tpu.memory_space<vmem>>, vector<1x1x4x4x128xbf16>
    %142 = vector.shape_cast %141 : vector<1x1x4x4x128xbf16> to vector<4x4x128xbf16>
    %143 = vector.shape_cast %142 : vector<4x4x128xbf16> to vector<16x128xbf16>
    %c20 = arith.constant 20 : index
    %c0_165 = arith.constant 0 : index
    %c0_166 = arith.constant 0 : index
    %144 = vector.load %arg5[%c20, %c0_165, %c0_166] : memref<27x128x128xbf16, #tpu.memory_space<vmem>>, vector<1x128x128xbf16>
    %145 = vector.shape_cast %144 : vector<1x128x128xbf16> to vector<128x128xbf16>
    %cst_167 = arith.constant dense<0.000000e+00> : vector<16x128xf32>
    %146 = tpu.matmul %143, %145, %cst_167 {dimension_numbers = #tpu.dot_dimension_numbers<[1], [0], [0], [1], [0, 0, 1, 1], [], []>} : vector<16x128xbf16>, vector<128x128xbf16>, vector<16x128xf32> -> vector<16x128xf32>
    %147 = arith.addf %140, %146 : vector<16x128xf32>
    %c0_168 = arith.constant 0 : index
    %c0_169 = arith.constant 0 : index
    %c1_170 = arith.constant 1 : index
    %c0_171 = arith.constant 0 : index
    %c0_172 = arith.constant 0 : index
    %148 = vector.load %arg4[%c0_168, %c0_169, %c1_170, %c0_171, %c0_172] : memref<1x1x6x6x128xbf16, #tpu.memory_space<vmem>>, vector<1x1x4x4x128xbf16>
    %149 = vector.shape_cast %148 : vector<1x1x4x4x128xbf16> to vector<4x4x128xbf16>
    %150 = vector.shape_cast %149 : vector<4x4x128xbf16> to vector<16x128xbf16>
    %c21 = arith.constant 21 : index
    %c0_173 = arith.constant 0 : index
    %c0_174 = arith.constant 0 : index
    %151 = vector.load %arg5[%c21, %c0_173, %c0_174] : memref<27x128x128xbf16, #tpu.memory_space<vmem>>, vector<1x128x128xbf16>
    %152 = vector.shape_cast %151 : vector<1x128x128xbf16> to vector<128x128xbf16>
    %cst_175 = arith.constant dense<0.000000e+00> : vector<16x128xf32>
    %153 = tpu.matmul %150, %152, %cst_175 {dimension_numbers = #tpu.dot_dimension_numbers<[1], [0], [0], [1], [0, 0, 1, 1], [], []>} : vector<16x128xbf16>, vector<128x128xbf16>, vector<16x128xf32> -> vector<16x128xf32>
    %154 = arith.addf %147, %153 : vector<16x128xf32>
    %c0_176 = arith.constant 0 : index
    %c0_177 = arith.constant 0 : index
    %c1_178 = arith.constant 1 : index
    %c1_179 = arith.constant 1 : index
    %c0_180 = arith.constant 0 : index
    %155 = vector.load %arg4[%c0_176, %c0_177, %c1_178, %c1_179, %c0_180] : memref<1x1x6x6x128xbf16, #tpu.memory_space<vmem>>, vector<1x1x4x4x128xbf16>
    %156 = vector.shape_cast %155 : vector<1x1x4x4x128xbf16> to vector<4x4x128xbf16>
    %157 = vector.shape_cast %156 : vector<4x4x128xbf16> to vector<16x128xbf16>
    %c22 = arith.constant 22 : index
    %c0_181 = arith.constant 0 : index
    %c0_182 = arith.constant 0 : index
    %158 = vector.load %arg5[%c22, %c0_181, %c0_182] : memref<27x128x128xbf16, #tpu.memory_space<vmem>>, vector<1x128x128xbf16>
    %159 = vector.shape_cast %158 : vector<1x128x128xbf16> to vector<128x128xbf16>
    %cst_183 = arith.constant dense<0.000000e+00> : vector<16x128xf32>
    %160 = tpu.matmul %157, %159, %cst_183 {dimension_numbers = #tpu.dot_dimension_numbers<[1], [0], [0], [1], [0, 0, 1, 1], [], []>} : vector<16x128xbf16>, vector<128x128xbf16>, vector<16x128xf32> -> vector<16x128xf32>
    %161 = arith.addf %154, %160 : vector<16x128xf32>
    %c0_184 = arith.constant 0 : index
    %c0_185 = arith.constant 0 : index
    %c1_186 = arith.constant 1 : index
    %c2_187 = arith.constant 2 : index
    %c0_188 = arith.constant 0 : index
    %162 = vector.load %arg4[%c0_184, %c0_185, %c1_186, %c2_187, %c0_188] : memref<1x1x6x6x128xbf16, #tpu.memory_space<vmem>>, vector<1x1x4x4x128xbf16>
    %163 = vector.shape_cast %162 : vector<1x1x4x4x128xbf16> to vector<4x4x128xbf16>
    %164 = vector.shape_cast %163 : vector<4x4x128xbf16> to vector<16x128xbf16>
    %c23 = arith.constant 23 : index
    %c0_189 = arith.constant 0 : index
    %c0_190 = arith.constant 0 : index
    %165 = vector.load %arg5[%c23, %c0_189, %c0_190] : memref<27x128x128xbf16, #tpu.memory_space<vmem>>, vector<1x128x128xbf16>
    %166 = vector.shape_cast %165 : vector<1x128x128xbf16> to vector<128x128xbf16>
    %cst_191 = arith.constant dense<0.000000e+00> : vector<16x128xf32>
    %167 = tpu.matmul %164, %166, %cst_191 {dimension_numbers = #tpu.dot_dimension_numbers<[1], [0], [0], [1], [0, 0, 1, 1], [], []>} : vector<16x128xbf16>, vector<128x128xbf16>, vector<16x128xf32> -> vector<16x128xf32>
    %168 = arith.addf %161, %167 : vector<16x128xf32>
    %c0_192 = arith.constant 0 : index
    %c0_193 = arith.constant 0 : index
    %c2_194 = arith.constant 2 : index
    %c0_195 = arith.constant 0 : index
    %c0_196 = arith.constant 0 : index
    %169 = vector.load %arg4[%c0_192, %c0_193, %c2_194, %c0_195, %c0_196] : memref<1x1x6x6x128xbf16, #tpu.memory_space<vmem>>, vector<1x1x4x4x128xbf16>
    %170 = vector.shape_cast %169 : vector<1x1x4x4x128xbf16> to vector<4x4x128xbf16>
    %171 = vector.shape_cast %170 : vector<4x4x128xbf16> to vector<16x128xbf16>
    %c24 = arith.constant 24 : index
    %c0_197 = arith.constant 0 : index
    %c0_198 = arith.constant 0 : index
    %172 = vector.load %arg5[%c24, %c0_197, %c0_198] : memref<27x128x128xbf16, #tpu.memory_space<vmem>>, vector<1x128x128xbf16>
    %173 = vector.shape_cast %172 : vector<1x128x128xbf16> to vector<128x128xbf16>
    %cst_199 = arith.constant dense<0.000000e+00> : vector<16x128xf32>
    %174 = tpu.matmul %171, %173, %cst_199 {dimension_numbers = #tpu.dot_dimension_numbers<[1], [0], [0], [1], [0, 0, 1, 1], [], []>} : vector<16x128xbf16>, vector<128x128xbf16>, vector<16x128xf32> -> vector<16x128xf32>
    %175 = arith.addf %168, %174 : vector<16x128xf32>
    %c0_200 = arith.constant 0 : index
    %c0_201 = arith.constant 0 : index
    %c2_202 = arith.constant 2 : index
    %c1_203 = arith.constant 1 : index
    %c0_204 = arith.constant 0 : index
    %176 = vector.load %arg4[%c0_200, %c0_201, %c2_202, %c1_203, %c0_204] : memref<1x1x6x6x128xbf16, #tpu.memory_space<vmem>>, vector<1x1x4x4x128xbf16>
    %177 = vector.shape_cast %176 : vector<1x1x4x4x128xbf16> to vector<4x4x128xbf16>
    %178 = vector.shape_cast %177 : vector<4x4x128xbf16> to vector<16x128xbf16>
    %c25 = arith.constant 25 : index
    %c0_205 = arith.constant 0 : index
    %c0_206 = arith.constant 0 : index
    %179 = vector.load %arg5[%c25, %c0_205, %c0_206] : memref<27x128x128xbf16, #tpu.memory_space<vmem>>, vector<1x128x128xbf16>
    %180 = vector.shape_cast %179 : vector<1x128x128xbf16> to vector<128x128xbf16>
    %cst_207 = arith.constant dense<0.000000e+00> : vector<16x128xf32>
    %181 = tpu.matmul %178, %180, %cst_207 {dimension_numbers = #tpu.dot_dimension_numbers<[1], [0], [0], [1], [0, 0, 1, 1], [], []>} : vector<16x128xbf16>, vector<128x128xbf16>, vector<16x128xf32> -> vector<16x128xf32>
    %182 = arith.addf %175, %181 : vector<16x128xf32>
    %c0_208 = arith.constant 0 : index
    %c0_209 = arith.constant 0 : index
    %c2_210 = arith.constant 2 : index
    %c2_211 = arith.constant 2 : index
    %c0_212 = arith.constant 0 : index
    %183 = vector.load %arg4[%c0_208, %c0_209, %c2_210, %c2_211, %c0_212] : memref<1x1x6x6x128xbf16, #tpu.memory_space<vmem>>, vector<1x1x4x4x128xbf16>
    %184 = vector.shape_cast %183 : vector<1x1x4x4x128xbf16> to vector<4x4x128xbf16>
    %185 = vector.shape_cast %184 : vector<4x4x128xbf16> to vector<16x128xbf16>
    %c26 = arith.constant 26 : index
    %c0_213 = arith.constant 0 : index
    %c0_214 = arith.constant 0 : index
    %186 = vector.load %arg5[%c26, %c0_213, %c0_214] : memref<27x128x128xbf16, #tpu.memory_space<vmem>>, vector<1x128x128xbf16>
    %187 = vector.shape_cast %186 : vector<1x128x128xbf16> to vector<128x128xbf16>
    %cst_215 = arith.constant dense<0.000000e+00> : vector<16x128xf32>
    %188 = tpu.matmul %185, %187, %cst_215 {dimension_numbers = #tpu.dot_dimension_numbers<[1], [0], [0], [1], [0, 0, 1, 1], [], []>} : vector<16x128xbf16>, vector<128x128xbf16>, vector<16x128xf32> -> vector<16x128xf32>
    %189 = arith.addf %182, %188 : vector<16x128xf32>
    %c0_216 = arith.constant 0 : index
    %c0_217 = arith.constant 0 : index
    %190 = vector.load %arg6[%c0_216, %c0_217] : memref<1x128xf32, #tpu.memory_space<vmem>>, vector<1x128xf32>
    %191 = vector.broadcast %190 : vector<1x128xf32> to vector<16x128xf32>
    %192 = arith.addf %189, %191 : vector<16x128xf32>
    %cst_218 = arith.constant 0.000000e+00 : f32
    %193 = vector.broadcast %cst_218 : f32 to vector<16x128xf32>
    %194 = arith.maximumf %192, %193 : vector<16x128xf32>
    %195 = arith.truncf %194 : vector<16x128xf32> to vector<16x128xbf16>
    %c0_219 = arith.constant 0 : index
    %c0_220 = arith.constant 0 : index
    %c0_221 = arith.constant 0 : index
    %c0_222 = arith.constant 0 : index
    %196 = vector.load %arg7[%c0_219, %c0_220, %c0_221, %c0_222] : memref<1x1x16x128xbf16, #tpu.memory_space<vmem>>, vector<1x1x16x128xbf16>
    %197 = vector.shape_cast %196 : vector<1x1x16x128xbf16> to vector<16x128xbf16>
    %198 = vector.shape_cast %195 : vector<16x128xbf16> to vector<1x1x16x128xbf16>
    tpu.vector_store %arg7[%c0_219, %c0_220, %c0_221, %c0_222], %198 {strides = array<i32>} : memref<1x1x16x128xbf16, #tpu.memory_space<vmem>>, vector<1x1x16x128xbf16>,
    return
  }
  func.func @transform_0(%arg0: i32, %arg1: i32) -> (i32, i32, i32, i32, i32) {
    %c0_i32 = arith.constant 0 : i32
    %0 = arith.addi %arg1, %c0_i32 : i32
    %c0_i32_0 = arith.constant 0 : i32
    %c0_i32_1 = arith.constant 0 : i32
    %c0_i32_2 = arith.constant 0 : i32
    %c0_i32_3 = arith.constant 0 : i32
    return %arg0, %0, %c0_i32_0, %c0_i32_1, %c0_i32_2 : i32, i32, i32, i32, i32
  }
  func.func @transform_1(%arg0: i32, %arg1: i32) -> (i32, i32, i32, i32, i32) {
    %c1_i32 = arith.constant 1 : i32
    %0 = arith.addi %arg1, %c1_i32 : i32
    %c0_i32 = arith.constant 0 : i32
    %c0_i32_0 = arith.constant 0 : i32
    %c0_i32_1 = arith.constant 0 : i32
    %c0_i32_2 = arith.constant 0 : i32
    return %arg0, %0, %c0_i32, %c0_i32_0, %c0_i32_1 : i32, i32, i32, i32, i32
  }
  func.func @transform_2(%arg0: i32, %arg1: i32) -> (i32, i32, i32, i32, i32) {
    %c2_i32 = arith.constant 2 : i32
    %0 = arith.addi %arg1, %c2_i32 : i32
    %c0_i32 = arith.constant 0 : i32
    %c0_i32_0 = arith.constant 0 : i32
    %c0_i32_1 = arith.constant 0 : i32
    %c0_i32_2 = arith.constant 0 : i32
    return %arg0, %0, %c0_i32, %c0_i32_0, %c0_i32_1 : i32, i32, i32, i32, i32
  }
  func.func @transform_3(%arg0: i32, %arg1: i32) -> (i32, i32, i32) {
    %c0_i32 = arith.constant 0 : i32
    %c0_i32_0 = arith.constant 0 : i32
    %c0_i32_1 = arith.constant 0 : i32
    %c0_i32_2 = arith.constant 0 : i32
    return %c0_i32, %c0_i32_0, %c0_i32_1 : i32, i32, i32
  }
  func.func @transform_4(%arg0: i32, %arg1: i32) -> (i32, i32) {
    %c0_i32 = arith.constant 0 : i32
    %c0_i32_0 = arith.constant 0 : i32
    %c0_i32_1 = arith.constant 0 : i32
    return %c0_i32, %c0_i32_0 : i32, i32
  }
  func.func @transform_5(%arg0: i32, %arg1: i32) -> (i32, i32, i32, i32) {
    %c0_i32 = arith.constant 0 : i32
    %c0_i32_0 = arith.constant 0 : i32
    %c0_i32_1 = arith.constant 0 : i32
    return %arg0, %arg1, %c0_i32, %c0_i32_0 : i32, i32, i32, i32
  }
}

module attributes {stable_mosaic.version = 11 : i64} {
  func.func @_conv3_kernel(%arg0: i32, %arg1: i32, %arg2: memref<1x1x6x6x128xbf16, #tpu.memory_space<vmem>>, %arg3: memref<1x1x6x6x128xbf16, #tpu.memory_space<vmem>>, %arg4: memref<1x1x6x6x128xbf16, #tpu.memory_space<vmem>>, %arg5: memref<27x128x128xbf16, #tpu.memory_space<vmem>>, %arg6: memref<1x128xf32, #tpu.memory_space<vmem>>, %arg7: memref<1x1x16x128xbf16, #tpu.memory_space<vmem>>, %arg8: memref<1x1x16x128xbf16, #tpu.memory_space<vmem>>) attributes {dimension_semantics = [#tpu.dimension_semantics<parallel>, #tpu.dimension_semantics<parallel>], iteration_bounds = array<i64: 2, 4>, scalar_prefetch = 0 : i64, scratch_operands = 0 : i64, tpu.core_type = #tpu.core_type<tc>, window_params = [{transform_indices = @transform_0, window_bounds = array<i64: 1, 1, 6, 6, 128>}, {transform_indices = @transform_1, window_bounds = array<i64: 1, 1, 6, 6, 128>}, {transform_indices = @transform_2, window_bounds = array<i64: 1, 1, 6, 6, 128>}, {pipeline_mode = #tpu.pipeline_mode<synchronous>, transform_indices = @transform_3, window_bounds = array<i64: 27, 128, 128>}, {pipeline_mode = #tpu.pipeline_mode<synchronous>, transform_indices = @transform_4, window_bounds = array<i64: 1, 128>}, {transform_indices = @transform_5, window_bounds = array<i64: 1, 1, 16, 128>}, {transform_indices = @transform_6, window_bounds = array<i64: 1, 1, 16, 128>}]} {
    %cst = arith.constant 0.000000e+00 : f32
    %0 = vector.broadcast %cst : f32 to vector<16x128xf32>
    %c0 = arith.constant 0 : index
    %c0_0 = arith.constant 0 : index
    %c0_1 = arith.constant 0 : index
    %c0_2 = arith.constant 0 : index
    %c0_3 = arith.constant 0 : index
    %1 = vector.load %arg2[%c0, %c0_0, %c0_1, %c0_2, %c0_3] : memref<1x1x6x6x128xbf16, #tpu.memory_space<vmem>>, vector<1x1x4x4x128xbf16>
    %2 = vector.shape_cast %1 : vector<1x1x4x4x128xbf16> to vector<4x4x128xbf16>
    %3 = vector.shape_cast %2 : vector<4x4x128xbf16> to vector<16x128xbf16>
    %c0_4 = arith.constant 0 : index
    %c0_5 = arith.constant 0 : index
    %c0_6 = arith.constant 0 : index
    %4 = vector.load %arg5[%c0_4, %c0_5, %c0_6] : memref<27x128x128xbf16, #tpu.memory_space<vmem>>, vector<1x128x128xbf16>
    %5 = vector.shape_cast %4 : vector<1x128x128xbf16> to vector<128x128xbf16>
    %cst_7 = arith.constant dense<0.000000e+00> : vector<16x128xf32>
    %6 = tpu.matmul %3, %5, %cst_7 {dimension_numbers = #tpu.dot_dimension_numbers<[1], [0], [0], [1], [0, 0, 1, 1], [], []>} : vector<16x128xbf16>, vector<128x128xbf16>, vector<16x128xf32> -> vector<16x128xf32>
    %7 = arith.addf %0, %6 : vector<16x128xf32>
    %c0_8 = arith.constant 0 : index
    %c0_9 = arith.constant 0 : index
    %c0_10 = arith.constant 0 : index
    %c1 = arith.constant 1 : index
    %c0_11 = arith.constant 0 : index
    %8 = vector.load %arg2[%c0_8, %c0_9, %c0_10, %c1, %c0_11] : memref<1x1x6x6x128xbf16, #tpu.memory_space<vmem>>, vector<1x1x4x4x128xbf16>
    %9 = vector.shape_cast %8 : vector<1x1x4x4x128xbf16> to vector<4x4x128xbf16>
    %10 = vector.shape_cast %9 : vector<4x4x128xbf16> to vector<16x128xbf16>
    %c1_12 = arith.constant 1 : index
    %c0_13 = arith.constant 0 : index
    %c0_14 = arith.constant 0 : index
    %11 = vector.load %arg5[%c1_12, %c0_13, %c0_14] : memref<27x128x128xbf16, #tpu.memory_space<vmem>>, vector<1x128x128xbf16>
    %12 = vector.shape_cast %11 : vector<1x128x128xbf16> to vector<128x128xbf16>
    %cst_15 = arith.constant dense<0.000000e+00> : vector<16x128xf32>
    %13 = tpu.matmul %10, %12, %cst_15 {dimension_numbers = #tpu.dot_dimension_numbers<[1], [0], [0], [1], [0, 0, 1, 1], [], []>} : vector<16x128xbf16>, vector<128x128xbf16>, vector<16x128xf32> -> vector<16x128xf32>
    %14 = arith.addf %7, %13 : vector<16x128xf32>
    %c0_16 = arith.constant 0 : index
    %c0_17 = arith.constant 0 : index
    %c0_18 = arith.constant 0 : index
    %c2 = arith.constant 2 : index
    %c0_19 = arith.constant 0 : index
    %15 = vector.load %arg2[%c0_16, %c0_17, %c0_18, %c2, %c0_19] : memref<1x1x6x6x128xbf16, #tpu.memory_space<vmem>>, vector<1x1x4x4x128xbf16>
    %16 = vector.shape_cast %15 : vector<1x1x4x4x128xbf16> to vector<4x4x128xbf16>
    %17 = vector.shape_cast %16 : vector<4x4x128xbf16> to vector<16x128xbf16>
    %c2_20 = arith.constant 2 : index
    %c0_21 = arith.constant 0 : index
    %c0_22 = arith.constant 0 : index
    %18 = vector.load %arg5[%c2_20, %c0_21, %c0_22] : memref<27x128x128xbf16, #tpu.memory_space<vmem>>, vector<1x128x128xbf16>
    %19 = vector.shape_cast %18 : vector<1x128x128xbf16> to vector<128x128xbf16>
    %cst_23 = arith.constant dense<0.000000e+00> : vector<16x128xf32>
    %20 = tpu.matmul %17, %19, %cst_23 {dimension_numbers = #tpu.dot_dimension_numbers<[1], [0], [0], [1], [0, 0, 1, 1], [], []>} : vector<16x128xbf16>, vector<128x128xbf16>, vector<16x128xf32> -> vector<16x128xf32>
    %21 = arith.addf %14, %20 : vector<16x128xf32>
    %c0_24 = arith.constant 0 : index
    %c0_25 = arith.constant 0 : index
    %c1_26 = arith.constant 1 : index
    %c0_27 = arith.constant 0 : index
    %c0_28 = arith.constant 0 : index
    %22 = vector.load %arg2[%c0_24, %c0_25, %c1_26, %c0_27, %c0_28] : memref<1x1x6x6x128xbf16, #tpu.memory_space<vmem>>, vector<1x1x4x4x128xbf16>
    %23 = vector.shape_cast %22 : vector<1x1x4x4x128xbf16> to vector<4x4x128xbf16>
    %24 = vector.shape_cast %23 : vector<4x4x128xbf16> to vector<16x128xbf16>
    %c3 = arith.constant 3 : index
    %c0_29 = arith.constant 0 : index
    %c0_30 = arith.constant 0 : index
    %25 = vector.load %arg5[%c3, %c0_29, %c0_30] : memref<27x128x128xbf16, #tpu.memory_space<vmem>>, vector<1x128x128xbf16>
    %26 = vector.shape_cast %25 : vector<1x128x128xbf16> to vector<128x128xbf16>
    %cst_31 = arith.constant dense<0.000000e+00> : vector<16x128xf32>
    %27 = tpu.matmul %24, %26, %cst_31 {dimension_numbers = #tpu.dot_dimension_numbers<[1], [0], [0], [1], [0, 0, 1, 1], [], []>} : vector<16x128xbf16>, vector<128x128xbf16>, vector<16x128xf32> -> vector<16x128xf32>
    %28 = arith.addf %21, %27 : vector<16x128xf32>
    %c0_32 = arith.constant 0 : index
    %c0_33 = arith.constant 0 : index
    %c1_34 = arith.constant 1 : index
    %c1_35 = arith.constant 1 : index
    %c0_36 = arith.constant 0 : index
    %29 = vector.load %arg2[%c0_32, %c0_33, %c1_34, %c1_35, %c0_36] : memref<1x1x6x6x128xbf16, #tpu.memory_space<vmem>>, vector<1x1x4x4x128xbf16>
    %30 = vector.shape_cast %29 : vector<1x1x4x4x128xbf16> to vector<4x4x128xbf16>
    %31 = vector.shape_cast %30 : vector<4x4x128xbf16> to vector<16x128xbf16>
    %c4 = arith.constant 4 : index
    %c0_37 = arith.constant 0 : index
    %c0_38 = arith.constant 0 : index
    %32 = vector.load %arg5[%c4, %c0_37, %c0_38] : memref<27x128x128xbf16, #tpu.memory_space<vmem>>, vector<1x128x128xbf16>
    %33 = vector.shape_cast %32 : vector<1x128x128xbf16> to vector<128x128xbf16>
    %cst_39 = arith.constant dense<0.000000e+00> : vector<16x128xf32>
    %34 = tpu.matmul %31, %33, %cst_39 {dimension_numbers = #tpu.dot_dimension_numbers<[1], [0], [0], [1], [0, 0, 1, 1], [], []>} : vector<16x128xbf16>, vector<128x128xbf16>, vector<16x128xf32> -> vector<16x128xf32>
    %35 = arith.addf %28, %34 : vector<16x128xf32>
    %c0_40 = arith.constant 0 : index
    %c0_41 = arith.constant 0 : index
    %c1_42 = arith.constant 1 : index
    %c2_43 = arith.constant 2 : index
    %c0_44 = arith.constant 0 : index
    %36 = vector.load %arg2[%c0_40, %c0_41, %c1_42, %c2_43, %c0_44] : memref<1x1x6x6x128xbf16, #tpu.memory_space<vmem>>, vector<1x1x4x4x128xbf16>
    %37 = vector.shape_cast %36 : vector<1x1x4x4x128xbf16> to vector<4x4x128xbf16>
    %38 = vector.shape_cast %37 : vector<4x4x128xbf16> to vector<16x128xbf16>
    %c5 = arith.constant 5 : index
    %c0_45 = arith.constant 0 : index
    %c0_46 = arith.constant 0 : index
    %39 = vector.load %arg5[%c5, %c0_45, %c0_46] : memref<27x128x128xbf16, #tpu.memory_space<vmem>>, vector<1x128x128xbf16>
    %40 = vector.shape_cast %39 : vector<1x128x128xbf16> to vector<128x128xbf16>
    %cst_47 = arith.constant dense<0.000000e+00> : vector<16x128xf32>
    %41 = tpu.matmul %38, %40, %cst_47 {dimension_numbers = #tpu.dot_dimension_numbers<[1], [0], [0], [1], [0, 0, 1, 1], [], []>} : vector<16x128xbf16>, vector<128x128xbf16>, vector<16x128xf32> -> vector<16x128xf32>
    %42 = arith.addf %35, %41 : vector<16x128xf32>
    %c0_48 = arith.constant 0 : index
    %c0_49 = arith.constant 0 : index
    %c2_50 = arith.constant 2 : index
    %c0_51 = arith.constant 0 : index
    %c0_52 = arith.constant 0 : index
    %43 = vector.load %arg2[%c0_48, %c0_49, %c2_50, %c0_51, %c0_52] : memref<1x1x6x6x128xbf16, #tpu.memory_space<vmem>>, vector<1x1x4x4x128xbf16>
    %44 = vector.shape_cast %43 : vector<1x1x4x4x128xbf16> to vector<4x4x128xbf16>
    %45 = vector.shape_cast %44 : vector<4x4x128xbf16> to vector<16x128xbf16>
    %c6 = arith.constant 6 : index
    %c0_53 = arith.constant 0 : index
    %c0_54 = arith.constant 0 : index
    %46 = vector.load %arg5[%c6, %c0_53, %c0_54] : memref<27x128x128xbf16, #tpu.memory_space<vmem>>, vector<1x128x128xbf16>
    %47 = vector.shape_cast %46 : vector<1x128x128xbf16> to vector<128x128xbf16>
    %cst_55 = arith.constant dense<0.000000e+00> : vector<16x128xf32>
    %48 = tpu.matmul %45, %47, %cst_55 {dimension_numbers = #tpu.dot_dimension_numbers<[1], [0], [0], [1], [0, 0, 1, 1], [], []>} : vector<16x128xbf16>, vector<128x128xbf16>, vector<16x128xf32> -> vector<16x128xf32>
    %49 = arith.addf %42, %48 : vector<16x128xf32>
    %c0_56 = arith.constant 0 : index
    %c0_57 = arith.constant 0 : index
    %c2_58 = arith.constant 2 : index
    %c1_59 = arith.constant 1 : index
    %c0_60 = arith.constant 0 : index
    %50 = vector.load %arg2[%c0_56, %c0_57, %c2_58, %c1_59, %c0_60] : memref<1x1x6x6x128xbf16, #tpu.memory_space<vmem>>, vector<1x1x4x4x128xbf16>
    %51 = vector.shape_cast %50 : vector<1x1x4x4x128xbf16> to vector<4x4x128xbf16>
    %52 = vector.shape_cast %51 : vector<4x4x128xbf16> to vector<16x128xbf16>
    %c7 = arith.constant 7 : index
    %c0_61 = arith.constant 0 : index
    %c0_62 = arith.constant 0 : index
    %53 = vector.load %arg5[%c7, %c0_61, %c0_62] : memref<27x128x128xbf16, #tpu.memory_space<vmem>>, vector<1x128x128xbf16>
    %54 = vector.shape_cast %53 : vector<1x128x128xbf16> to vector<128x128xbf16>
    %cst_63 = arith.constant dense<0.000000e+00> : vector<16x128xf32>
    %55 = tpu.matmul %52, %54, %cst_63 {dimension_numbers = #tpu.dot_dimension_numbers<[1], [0], [0], [1], [0, 0, 1, 1], [], []>} : vector<16x128xbf16>, vector<128x128xbf16>, vector<16x128xf32> -> vector<16x128xf32>
    %56 = arith.addf %49, %55 : vector<16x128xf32>
    %c0_64 = arith.constant 0 : index
    %c0_65 = arith.constant 0 : index
    %c2_66 = arith.constant 2 : index
    %c2_67 = arith.constant 2 : index
    %c0_68 = arith.constant 0 : index
    %57 = vector.load %arg2[%c0_64, %c0_65, %c2_66, %c2_67, %c0_68] : memref<1x1x6x6x128xbf16, #tpu.memory_space<vmem>>, vector<1x1x4x4x128xbf16>
    %58 = vector.shape_cast %57 : vector<1x1x4x4x128xbf16> to vector<4x4x128xbf16>
    %59 = vector.shape_cast %58 : vector<4x4x128xbf16> to vector<16x128xbf16>
    %c8 = arith.constant 8 : index
    %c0_69 = arith.constant 0 : index
    %c0_70 = arith.constant 0 : index
    %60 = vector.load %arg5[%c8, %c0_69, %c0_70] : memref<27x128x128xbf16, #tpu.memory_space<vmem>>, vector<1x128x128xbf16>
    %61 = vector.shape_cast %60 : vector<1x128x128xbf16> to vector<128x128xbf16>
    %cst_71 = arith.constant dense<0.000000e+00> : vector<16x128xf32>
    %62 = tpu.matmul %59, %61, %cst_71 {dimension_numbers = #tpu.dot_dimension_numbers<[1], [0], [0], [1], [0, 0, 1, 1], [], []>} : vector<16x128xbf16>, vector<128x128xbf16>, vector<16x128xf32> -> vector<16x128xf32>
    %63 = arith.addf %56, %62 : vector<16x128xf32>
    %c0_72 = arith.constant 0 : index
    %c0_73 = arith.constant 0 : index
    %c0_74 = arith.constant 0 : index
    %c0_75 = arith.constant 0 : index
    %c0_76 = arith.constant 0 : index
    %64 = vector.load %arg3[%c0_72, %c0_73, %c0_74, %c0_75, %c0_76] : memref<1x1x6x6x128xbf16, #tpu.memory_space<vmem>>, vector<1x1x4x4x128xbf16>
    %65 = vector.shape_cast %64 : vector<1x1x4x4x128xbf16> to vector<4x4x128xbf16>
    %66 = vector.shape_cast %65 : vector<4x4x128xbf16> to vector<16x128xbf16>
    %c9 = arith.constant 9 : index
    %c0_77 = arith.constant 0 : index
    %c0_78 = arith.constant 0 : index
    %67 = vector.load %arg5[%c9, %c0_77, %c0_78] : memref<27x128x128xbf16, #tpu.memory_space<vmem>>, vector<1x128x128xbf16>
    %68 = vector.shape_cast %67 : vector<1x128x128xbf16> to vector<128x128xbf16>
    %cst_79 = arith.constant dense<0.000000e+00> : vector<16x128xf32>
    %69 = tpu.matmul %66, %68, %cst_79 {dimension_numbers = #tpu.dot_dimension_numbers<[1], [0], [0], [1], [0, 0, 1, 1], [], []>} : vector<16x128xbf16>, vector<128x128xbf16>, vector<16x128xf32> -> vector<16x128xf32>
    %70 = arith.addf %63, %69 : vector<16x128xf32>
    %c0_80 = arith.constant 0 : index
    %c0_81 = arith.constant 0 : index
    %c0_82 = arith.constant 0 : index
    %c1_83 = arith.constant 1 : index
    %c0_84 = arith.constant 0 : index
    %71 = vector.load %arg3[%c0_80, %c0_81, %c0_82, %c1_83, %c0_84] : memref<1x1x6x6x128xbf16, #tpu.memory_space<vmem>>, vector<1x1x4x4x128xbf16>
    %72 = vector.shape_cast %71 : vector<1x1x4x4x128xbf16> to vector<4x4x128xbf16>
    %73 = vector.shape_cast %72 : vector<4x4x128xbf16> to vector<16x128xbf16>
    %c10 = arith.constant 10 : index
    %c0_85 = arith.constant 0 : index
    %c0_86 = arith.constant 0 : index
    %74 = vector.load %arg5[%c10, %c0_85, %c0_86] : memref<27x128x128xbf16, #tpu.memory_space<vmem>>, vector<1x128x128xbf16>
    %75 = vector.shape_cast %74 : vector<1x128x128xbf16> to vector<128x128xbf16>
    %cst_87 = arith.constant dense<0.000000e+00> : vector<16x128xf32>
    %76 = tpu.matmul %73, %75, %cst_87 {dimension_numbers = #tpu.dot_dimension_numbers<[1], [0], [0], [1], [0, 0, 1, 1], [], []>} : vector<16x128xbf16>, vector<128x128xbf16>, vector<16x128xf32> -> vector<16x128xf32>
    %77 = arith.addf %70, %76 : vector<16x128xf32>
    %c0_88 = arith.constant 0 : index
    %c0_89 = arith.constant 0 : index
    %c0_90 = arith.constant 0 : index
    %c2_91 = arith.constant 2 : index
    %c0_92 = arith.constant 0 : index
    %78 = vector.load %arg3[%c0_88, %c0_89, %c0_90, %c2_91, %c0_92] : memref<1x1x6x6x128xbf16, #tpu.memory_space<vmem>>, vector<1x1x4x4x128xbf16>
    %79 = vector.shape_cast %78 : vector<1x1x4x4x128xbf16> to vector<4x4x128xbf16>
    %80 = vector.shape_cast %79 : vector<4x4x128xbf16> to vector<16x128xbf16>
    %c11 = arith.constant 11 : index
    %c0_93 = arith.constant 0 : index
    %c0_94 = arith.constant 0 : index
    %81 = vector.load %arg5[%c11, %c0_93, %c0_94] : memref<27x128x128xbf16, #tpu.memory_space<vmem>>, vector<1x128x128xbf16>
    %82 = vector.shape_cast %81 : vector<1x128x128xbf16> to vector<128x128xbf16>
    %cst_95 = arith.constant dense<0.000000e+00> : vector<16x128xf32>
    %83 = tpu.matmul %80, %82, %cst_95 {dimension_numbers = #tpu.dot_dimension_numbers<[1], [0], [0], [1], [0, 0, 1, 1], [], []>} : vector<16x128xbf16>, vector<128x128xbf16>, vector<16x128xf32> -> vector<16x128xf32>
    %84 = arith.addf %77, %83 : vector<16x128xf32>
    %c0_96 = arith.constant 0 : index
    %c0_97 = arith.constant 0 : index
    %c1_98 = arith.constant 1 : index
    %c0_99 = arith.constant 0 : index
    %c0_100 = arith.constant 0 : index
    %85 = vector.load %arg3[%c0_96, %c0_97, %c1_98, %c0_99, %c0_100] : memref<1x1x6x6x128xbf16, #tpu.memory_space<vmem>>, vector<1x1x4x4x128xbf16>
    %86 = vector.shape_cast %85 : vector<1x1x4x4x128xbf16> to vector<4x4x128xbf16>
    %87 = vector.shape_cast %86 : vector<4x4x128xbf16> to vector<16x128xbf16>
    %c12 = arith.constant 12 : index
    %c0_101 = arith.constant 0 : index
    %c0_102 = arith.constant 0 : index
    %88 = vector.load %arg5[%c12, %c0_101, %c0_102] : memref<27x128x128xbf16, #tpu.memory_space<vmem>>, vector<1x128x128xbf16>
    %89 = vector.shape_cast %88 : vector<1x128x128xbf16> to vector<128x128xbf16>
    %cst_103 = arith.constant dense<0.000000e+00> : vector<16x128xf32>
    %90 = tpu.matmul %87, %89, %cst_103 {dimension_numbers = #tpu.dot_dimension_numbers<[1], [0], [0], [1], [0, 0, 1, 1], [], []>} : vector<16x128xbf16>, vector<128x128xbf16>, vector<16x128xf32> -> vector<16x128xf32>
    %91 = arith.addf %84, %90 : vector<16x128xf32>
    %c0_104 = arith.constant 0 : index
    %c0_105 = arith.constant 0 : index
    %c1_106 = arith.constant 1 : index
    %c1_107 = arith.constant 1 : index
    %c0_108 = arith.constant 0 : index
    %92 = vector.load %arg3[%c0_104, %c0_105, %c1_106, %c1_107, %c0_108] : memref<1x1x6x6x128xbf16, #tpu.memory_space<vmem>>, vector<1x1x4x4x128xbf16>
    %93 = vector.shape_cast %92 : vector<1x1x4x4x128xbf16> to vector<4x4x128xbf16>
    %94 = vector.shape_cast %93 : vector<4x4x128xbf16> to vector<16x128xbf16>
    %c13 = arith.constant 13 : index
    %c0_109 = arith.constant 0 : index
    %c0_110 = arith.constant 0 : index
    %95 = vector.load %arg5[%c13, %c0_109, %c0_110] : memref<27x128x128xbf16, #tpu.memory_space<vmem>>, vector<1x128x128xbf16>
    %96 = vector.shape_cast %95 : vector<1x128x128xbf16> to vector<128x128xbf16>
    %cst_111 = arith.constant dense<0.000000e+00> : vector<16x128xf32>
    %97 = tpu.matmul %94, %96, %cst_111 {dimension_numbers = #tpu.dot_dimension_numbers<[1], [0], [0], [1], [0, 0, 1, 1], [], []>} : vector<16x128xbf16>, vector<128x128xbf16>, vector<16x128xf32> -> vector<16x128xf32>
    %98 = arith.addf %91, %97 : vector<16x128xf32>
    %c0_112 = arith.constant 0 : index
    %c0_113 = arith.constant 0 : index
    %c1_114 = arith.constant 1 : index
    %c2_115 = arith.constant 2 : index
    %c0_116 = arith.constant 0 : index
    %99 = vector.load %arg3[%c0_112, %c0_113, %c1_114, %c2_115, %c0_116] : memref<1x1x6x6x128xbf16, #tpu.memory_space<vmem>>, vector<1x1x4x4x128xbf16>
    %100 = vector.shape_cast %99 : vector<1x1x4x4x128xbf16> to vector<4x4x128xbf16>
    %101 = vector.shape_cast %100 : vector<4x4x128xbf16> to vector<16x128xbf16>
    %c14 = arith.constant 14 : index
    %c0_117 = arith.constant 0 : index
    %c0_118 = arith.constant 0 : index
    %102 = vector.load %arg5[%c14, %c0_117, %c0_118] : memref<27x128x128xbf16, #tpu.memory_space<vmem>>, vector<1x128x128xbf16>
    %103 = vector.shape_cast %102 : vector<1x128x128xbf16> to vector<128x128xbf16>
    %cst_119 = arith.constant dense<0.000000e+00> : vector<16x128xf32>
    %104 = tpu.matmul %101, %103, %cst_119 {dimension_numbers = #tpu.dot_dimension_numbers<[1], [0], [0], [1], [0, 0, 1, 1], [], []>} : vector<16x128xbf16>, vector<128x128xbf16>, vector<16x128xf32> -> vector<16x128xf32>
    %105 = arith.addf %98, %104 : vector<16x128xf32>
    %c0_120 = arith.constant 0 : index
    %c0_121 = arith.constant 0 : index
    %c2_122 = arith.constant 2 : index
    %c0_123 = arith.constant 0 : index
    %c0_124 = arith.constant 0 : index
    %106 = vector.load %arg3[%c0_120, %c0_121, %c2_122, %c0_123, %c0_124] : memref<1x1x6x6x128xbf16, #tpu.memory_space<vmem>>, vector<1x1x4x4x128xbf16>
    %107 = vector.shape_cast %106 : vector<1x1x4x4x128xbf16> to vector<4x4x128xbf16>
    %108 = vector.shape_cast %107 : vector<4x4x128xbf16> to vector<16x128xbf16>
    %c15 = arith.constant 15 : index
    %c0_125 = arith.constant 0 : index
    %c0_126 = arith.constant 0 : index
    %109 = vector.load %arg5[%c15, %c0_125, %c0_126] : memref<27x128x128xbf16, #tpu.memory_space<vmem>>, vector<1x128x128xbf16>
    %110 = vector.shape_cast %109 : vector<1x128x128xbf16> to vector<128x128xbf16>
    %cst_127 = arith.constant dense<0.000000e+00> : vector<16x128xf32>
    %111 = tpu.matmul %108, %110, %cst_127 {dimension_numbers = #tpu.dot_dimension_numbers<[1], [0], [0], [1], [0, 0, 1, 1], [], []>} : vector<16x128xbf16>, vector<128x128xbf16>, vector<16x128xf32> -> vector<16x128xf32>
    %112 = arith.addf %105, %111 : vector<16x128xf32>
    %c0_128 = arith.constant 0 : index
    %c0_129 = arith.constant 0 : index
    %c2_130 = arith.constant 2 : index
    %c1_131 = arith.constant 1 : index
    %c0_132 = arith.constant 0 : index
    %113 = vector.load %arg3[%c0_128, %c0_129, %c2_130, %c1_131, %c0_132] : memref<1x1x6x6x128xbf16, #tpu.memory_space<vmem>>, vector<1x1x4x4x128xbf16>
    %114 = vector.shape_cast %113 : vector<1x1x4x4x128xbf16> to vector<4x4x128xbf16>
    %115 = vector.shape_cast %114 : vector<4x4x128xbf16> to vector<16x128xbf16>
    %c16 = arith.constant 16 : index
    %c0_133 = arith.constant 0 : index
    %c0_134 = arith.constant 0 : index
    %116 = vector.load %arg5[%c16, %c0_133, %c0_134] : memref<27x128x128xbf16, #tpu.memory_space<vmem>>, vector<1x128x128xbf16>
    %117 = vector.shape_cast %116 : vector<1x128x128xbf16> to vector<128x128xbf16>
    %cst_135 = arith.constant dense<0.000000e+00> : vector<16x128xf32>
    %118 = tpu.matmul %115, %117, %cst_135 {dimension_numbers = #tpu.dot_dimension_numbers<[1], [0], [0], [1], [0, 0, 1, 1], [], []>} : vector<16x128xbf16>, vector<128x128xbf16>, vector<16x128xf32> -> vector<16x128xf32>
    %119 = arith.addf %112, %118 : vector<16x128xf32>
    %c0_136 = arith.constant 0 : index
    %c0_137 = arith.constant 0 : index
    %c2_138 = arith.constant 2 : index
    %c2_139 = arith.constant 2 : index
    %c0_140 = arith.constant 0 : index
    %120 = vector.load %arg3[%c0_136, %c0_137, %c2_138, %c2_139, %c0_140] : memref<1x1x6x6x128xbf16, #tpu.memory_space<vmem>>, vector<1x1x4x4x128xbf16>
    %121 = vector.shape_cast %120 : vector<1x1x4x4x128xbf16> to vector<4x4x128xbf16>
    %122 = vector.shape_cast %121 : vector<4x4x128xbf16> to vector<16x128xbf16>
    %c17 = arith.constant 17 : index
    %c0_141 = arith.constant 0 : index
    %c0_142 = arith.constant 0 : index
    %123 = vector.load %arg5[%c17, %c0_141, %c0_142] : memref<27x128x128xbf16, #tpu.memory_space<vmem>>, vector<1x128x128xbf16>
    %124 = vector.shape_cast %123 : vector<1x128x128xbf16> to vector<128x128xbf16>
    %cst_143 = arith.constant dense<0.000000e+00> : vector<16x128xf32>
    %125 = tpu.matmul %122, %124, %cst_143 {dimension_numbers = #tpu.dot_dimension_numbers<[1], [0], [0], [1], [0, 0, 1, 1], [], []>} : vector<16x128xbf16>, vector<128x128xbf16>, vector<16x128xf32> -> vector<16x128xf32>
    %126 = arith.addf %119, %125 : vector<16x128xf32>
    %c0_144 = arith.constant 0 : index
    %c0_145 = arith.constant 0 : index
    %c0_146 = arith.constant 0 : index
    %c0_147 = arith.constant 0 : index
    %c0_148 = arith.constant 0 : index
    %127 = vector.load %arg4[%c0_144, %c0_145, %c0_146, %c0_147, %c0_148] : memref<1x1x6x6x128xbf16, #tpu.memory_space<vmem>>, vector<1x1x4x4x128xbf16>
    %128 = vector.shape_cast %127 : vector<1x1x4x4x128xbf16> to vector<4x4x128xbf16>
    %129 = vector.shape_cast %128 : vector<4x4x128xbf16> to vector<16x128xbf16>
    %c18 = arith.constant 18 : index
    %c0_149 = arith.constant 0 : index
    %c0_150 = arith.constant 0 : index
    %130 = vector.load %arg5[%c18, %c0_149, %c0_150] : memref<27x128x128xbf16, #tpu.memory_space<vmem>>, vector<1x128x128xbf16>
    %131 = vector.shape_cast %130 : vector<1x128x128xbf16> to vector<128x128xbf16>
    %cst_151 = arith.constant dense<0.000000e+00> : vector<16x128xf32>
    %132 = tpu.matmul %129, %131, %cst_151 {dimension_numbers = #tpu.dot_dimension_numbers<[1], [0], [0], [1], [0, 0, 1, 1], [], []>} : vector<16x128xbf16>, vector<128x128xbf16>, vector<16x128xf32> -> vector<16x128xf32>
    %133 = arith.addf %126, %132 : vector<16x128xf32>
    %c0_152 = arith.constant 0 : index
    %c0_153 = arith.constant 0 : index
    %c0_154 = arith.constant 0 : index
    %c1_155 = arith.constant 1 : index
    %c0_156 = arith.constant 0 : index
    %134 = vector.load %arg4[%c0_152, %c0_153, %c0_154, %c1_155, %c0_156] : memref<1x1x6x6x128xbf16, #tpu.memory_space<vmem>>, vector<1x1x4x4x128xbf16>
    %135 = vector.shape_cast %134 : vector<1x1x4x4x128xbf16> to vector<4x4x128xbf16>
    %136 = vector.shape_cast %135 : vector<4x4x128xbf16> to vector<16x128xbf16>
    %c19 = arith.constant 19 : index
    %c0_157 = arith.constant 0 : index
    %c0_158 = arith.constant 0 : index
    %137 = vector.load %arg5[%c19, %c0_157, %c0_158] : memref<27x128x128xbf16, #tpu.memory_space<vmem>>, vector<1x128x128xbf16>
    %138 = vector.shape_cast %137 : vector<1x128x128xbf16> to vector<128x128xbf16>
    %cst_159 = arith.constant dense<0.000000e+00> : vector<16x128xf32>
    %139 = tpu.matmul %136, %138, %cst_159 {dimension_numbers = #tpu.dot_dimension_numbers<[1], [0], [0], [1], [0, 0, 1, 1], [], []>} : vector<16x128xbf16>, vector<128x128xbf16>, vector<16x128xf32> -> vector<16x128xf32>
    %140 = arith.addf %133, %139 : vector<16x128xf32>
    %c0_160 = arith.constant 0 : index
    %c0_161 = arith.constant 0 : index
    %c0_162 = arith.constant 0 : index
    %c2_163 = arith.constant 2 : index
    %c0_164 = arith.constant 0 : index
    %141 = vector.load %arg4[%c0_160, %c0_161, %c0_162, %c2_163, %c0_164] : memref<1x1x6x6x128xbf16, #tpu.memory_space<vmem>>, vector<1x1x4x4x128xbf16>
    %142 = vector.shape_cast %141 : vector<1x1x4x4x128xbf16> to vector<4x4x128xbf16>
    %143 = vector.shape_cast %142 : vector<4x4x128xbf16> to vector<16x128xbf16>
    %c20 = arith.constant 20 : index
    %c0_165 = arith.constant 0 : index
    %c0_166 = arith.constant 0 : index
    %144 = vector.load %arg5[%c20, %c0_165, %c0_166] : memref<27x128x128xbf16, #tpu.memory_space<vmem>>, vector<1x128x128xbf16>
    %145 = vector.shape_cast %144 : vector<1x128x128xbf16> to vector<128x128xbf16>
    %cst_167 = arith.constant dense<0.000000e+00> : vector<16x128xf32>
    %146 = tpu.matmul %143, %145, %cst_167 {dimension_numbers = #tpu.dot_dimension_numbers<[1], [0], [0], [1], [0, 0, 1, 1], [], []>} : vector<16x128xbf16>, vector<128x128xbf16>, vector<16x128xf32> -> vector<16x128xf32>
    %147 = arith.addf %140, %146 : vector<16x128xf32>
    %c0_168 = arith.constant 0 : index
    %c0_169 = arith.constant 0 : index
    %c1_170 = arith.constant 1 : index
    %c0_171 = arith.constant 0 : index
    %c0_172 = arith.constant 0 : index
    %148 = vector.load %arg4[%c0_168, %c0_169, %c1_170, %c0_171, %c0_172] : memref<1x1x6x6x128xbf16, #tpu.memory_space<vmem>>, vector<1x1x4x4x128xbf16>
    %149 = vector.shape_cast %148 : vector<1x1x4x4x128xbf16> to vector<4x4x128xbf16>
    %150 = vector.shape_cast %149 : vector<4x4x128xbf16> to vector<16x128xbf16>
    %c21 = arith.constant 21 : index
    %c0_173 = arith.constant 0 : index
    %c0_174 = arith.constant 0 : index
    %151 = vector.load %arg5[%c21, %c0_173, %c0_174] : memref<27x128x128xbf16, #tpu.memory_space<vmem>>, vector<1x128x128xbf16>
    %152 = vector.shape_cast %151 : vector<1x128x128xbf16> to vector<128x128xbf16>
    %cst_175 = arith.constant dense<0.000000e+00> : vector<16x128xf32>
    %153 = tpu.matmul %150, %152, %cst_175 {dimension_numbers = #tpu.dot_dimension_numbers<[1], [0], [0], [1], [0, 0, 1, 1], [], []>} : vector<16x128xbf16>, vector<128x128xbf16>, vector<16x128xf32> -> vector<16x128xf32>
    %154 = arith.addf %147, %153 : vector<16x128xf32>
    %c0_176 = arith.constant 0 : index
    %c0_177 = arith.constant 0 : index
    %c1_178 = arith.constant 1 : index
    %c1_179 = arith.constant 1 : index
    %c0_180 = arith.constant 0 : index
    %155 = vector.load %arg4[%c0_176, %c0_177, %c1_178, %c1_179, %c0_180] : memref<1x1x6x6x128xbf16, #tpu.memory_space<vmem>>, vector<1x1x4x4x128xbf16>
    %156 = vector.shape_cast %155 : vector<1x1x4x4x128xbf16> to vector<4x4x128xbf16>
    %157 = vector.shape_cast %156 : vector<4x4x128xbf16> to vector<16x128xbf16>
    %c22 = arith.constant 22 : index
    %c0_181 = arith.constant 0 : index
    %c0_182 = arith.constant 0 : index
    %158 = vector.load %arg5[%c22, %c0_181, %c0_182] : memref<27x128x128xbf16, #tpu.memory_space<vmem>>, vector<1x128x128xbf16>
    %159 = vector.shape_cast %158 : vector<1x128x128xbf16> to vector<128x128xbf16>
    %cst_183 = arith.constant dense<0.000000e+00> : vector<16x128xf32>
    %160 = tpu.matmul %157, %159, %cst_183 {dimension_numbers = #tpu.dot_dimension_numbers<[1], [0], [0], [1], [0, 0, 1, 1], [], []>} : vector<16x128xbf16>, vector<128x128xbf16>, vector<16x128xf32> -> vector<16x128xf32>
    %161 = arith.addf %154, %160 : vector<16x128xf32>
    %c0_184 = arith.constant 0 : index
    %c0_185 = arith.constant 0 : index
    %c1_186 = arith.constant 1 : index
    %c2_187 = arith.constant 2 : index
    %c0_188 = arith.constant 0 : index
    %162 = vector.load %arg4[%c0_184, %c0_185, %c1_186, %c2_187, %c0_188] : memref<1x1x6x6x128xbf16, #tpu.memory_space<vmem>>, vector<1x1x4x4x128xbf16>
    %163 = vector.shape_cast %162 : vector<1x1x4x4x128xbf16> to vector<4x4x128xbf16>
    %164 = vector.shape_cast %163 : vector<4x4x128xbf16> to vector<16x128xbf16>
    %c23 = arith.constant 23 : index
    %c0_189 = arith.constant 0 : index
    %c0_190 = arith.constant 0 : index
    %165 = vector.load %arg5[%c23, %c0_189, %c0_190] : memref<27x128x128xbf16, #tpu.memory_space<vmem>>, vector<1x128x128xbf16>
    %166 = vector.shape_cast %165 : vector<1x128x128xbf16> to vector<128x128xbf16>
    %cst_191 = arith.constant dense<0.000000e+00> : vector<16x128xf32>
    %167 = tpu.matmul %164, %166, %cst_191 {dimension_numbers = #tpu.dot_dimension_numbers<[1], [0], [0], [1], [0, 0, 1, 1], [], []>} : vector<16x128xbf16>, vector<128x128xbf16>, vector<16x128xf32> -> vector<16x128xf32>
    %168 = arith.addf %161, %167 : vector<16x128xf32>
    %c0_192 = arith.constant 0 : index
    %c0_193 = arith.constant 0 : index
    %c2_194 = arith.constant 2 : index
    %c0_195 = arith.constant 0 : index
    %c0_196 = arith.constant 0 : index
    %169 = vector.load %arg4[%c0_192, %c0_193, %c2_194, %c0_195, %c0_196] : memref<1x1x6x6x128xbf16, #tpu.memory_space<vmem>>, vector<1x1x4x4x128xbf16>
    %170 = vector.shape_cast %169 : vector<1x1x4x4x128xbf16> to vector<4x4x128xbf16>
    %171 = vector.shape_cast %170 : vector<4x4x128xbf16> to vector<16x128xbf16>
    %c24 = arith.constant 24 : index
    %c0_197 = arith.constant 0 : index
    %c0_198 = arith.constant 0 : index
    %172 = vector.load %arg5[%c24, %c0_197, %c0_198] : memref<27x128x128xbf16, #tpu.memory_space<vmem>>, vector<1x128x128xbf16>
    %173 = vector.shape_cast %172 : vector<1x128x128xbf16> to vector<128x128xbf16>
    %cst_199 = arith.constant dense<0.000000e+00> : vector<16x128xf32>
    %174 = tpu.matmul %171, %173, %cst_199 {dimension_numbers = #tpu.dot_dimension_numbers<[1], [0], [0], [1], [0, 0, 1, 1], [], []>} : vector<16x128xbf16>, vector<128x128xbf16>, vector<16x128xf32> -> vector<16x128xf32>
    %175 = arith.addf %168, %174 : vector<16x128xf32>
    %c0_200 = arith.constant 0 : index
    %c0_201 = arith.constant 0 : index
    %c2_202 = arith.constant 2 : index
    %c1_203 = arith.constant 1 : index
    %c0_204 = arith.constant 0 : index
    %176 = vector.load %arg4[%c0_200, %c0_201, %c2_202, %c1_203, %c0_204] : memref<1x1x6x6x128xbf16, #tpu.memory_space<vmem>>, vector<1x1x4x4x128xbf16>
    %177 = vector.shape_cast %176 : vector<1x1x4x4x128xbf16> to vector<4x4x128xbf16>
    %178 = vector.shape_cast %177 : vector<4x4x128xbf16> to vector<16x128xbf16>
    %c25 = arith.constant 25 : index
    %c0_205 = arith.constant 0 : index
    %c0_206 = arith.constant 0 : index
    %179 = vector.load %arg5[%c25, %c0_205, %c0_206] : memref<27x128x128xbf16, #tpu.memory_space<vmem>>, vector<1x128x128xbf16>
    %180 = vector.shape_cast %179 : vector<1x128x128xbf16> to vector<128x128xbf16>
    %cst_207 = arith.constant dense<0.000000e+00> : vector<16x128xf32>
    %181 = tpu.matmul %178, %180, %cst_207 {dimension_numbers = #tpu.dot_dimension_numbers<[1], [0], [0], [1], [0, 0, 1, 1], [], []>} : vector<16x128xbf16>, vector<128x128xbf16>, vector<16x128xf32> -> vector<16x128xf32>
    %182 = arith.addf %175, %181 : vector<16x128xf32>
    %c0_208 = arith.constant 0 : index
    %c0_209 = arith.constant 0 : index
    %c2_210 = arith.constant 2 : index
    %c2_211 = arith.constant 2 : index
    %c0_212 = arith.constant 0 : index
    %183 = vector.load %arg4[%c0_208, %c0_209, %c2_210, %c2_211, %c0_212] : memref<1x1x6x6x128xbf16, #tpu.memory_space<vmem>>, vector<1x1x4x4x128xbf16>
    %184 = vector.shape_cast %183 : vector<1x1x4x4x128xbf16> to vector<4x4x128xbf16>
    %185 = vector.shape_cast %184 : vector<4x4x128xbf16> to vector<16x128xbf16>
    %c26 = arith.constant 26 : index
    %c0_213 = arith.constant 0 : index
    %c0_214 = arith.constant 0 : index
    %186 = vector.load %arg5[%c26, %c0_213, %c0_214] : memref<27x128x128xbf16, #tpu.memory_space<vmem>>, vector<1x128x128xbf16>
    %187 = vector.shape_cast %186 : vector<1x128x128xbf16> to vector<128x128xbf16>
    %cst_215 = arith.constant dense<0.000000e+00> : vector<16x128xf32>
    %188 = tpu.matmul %185, %187, %cst_215 {dimension_numbers = #tpu.dot_dimension_numbers<[1], [0], [0], [1], [0, 0, 1, 1], [], []>} : vector<16x128xbf16>, vector<128x128xbf16>, vector<16x128xf32> -> vector<16x128xf32>
    %189 = arith.addf %182, %188 : vector<16x128xf32>
    %c0_216 = arith.constant 0 : index
    %c0_217 = arith.constant 0 : index
    %190 = vector.load %arg6[%c0_216, %c0_217] : memref<1x128xf32, #tpu.memory_space<vmem>>, vector<1x128xf32>
    %191 = vector.broadcast %190 : vector<1x128xf32> to vector<16x128xf32>
    %192 = arith.addf %189, %191 : vector<16x128xf32>
    %c0_218 = arith.constant 0 : index
    %c0_219 = arith.constant 0 : index
    %c0_220 = arith.constant 0 : index
    %c0_221 = arith.constant 0 : index
    %193 = vector.load %arg7[%c0_218, %c0_219, %c0_220, %c0_221] : memref<1x1x16x128xbf16, #tpu.memory_space<vmem>>, vector<1x1x16x128xbf16>
    %194 = vector.shape_cast %193 : vector<1x1x16x128xbf16> to vector<16x128xbf16>
    %195 = arith.extf %194 : vector<16x128xbf16> to vector<16x128xf32>
    %196 = arith.addf %192, %195 : vector<16x128xf32>
    %cst_222 = arith.constant 0.000000e+00 : f32
    %197 = vector.broadcast %cst_222 : f32 to vector<16x128xf32>
    %198 = arith.maximumf %196, %197 : vector<16x128xf32>
    %199 = arith.truncf %198 : vector<16x128xf32> to vector<16x128xbf16>
    %c0_223 = arith.constant 0 : index
    %c0_224 = arith.constant 0 : index
    %c0_225 = arith.constant 0 : index
    %c0_226 = arith.constant 0 : index
    %200 = vector.load %arg8[%c0_223, %c0_224, %c0_225, %c0_226] : memref<1x1x16x128xbf16, #tpu.memory_space<vmem>>, vector<1x1x16x128xbf16>
    %201 = vector.shape_cast %200 : vector<1x1x16x128xbf16> to vector<16x128xbf16>
    %202 = vector.shape_cast %199 : vector<16x128xbf16> to vector<1x1x16x128xbf16>
    tpu.vector_store %arg8[%c0_223, %c0_224, %c0_225, %c0_226], %202 {strides = array<i32>} : memref<1x1x16x128xbf16, #tpu.memory_space<vmem>>, vector<1x1x16x128xbf16>,
    return
  }
  func.func @transform_0(%arg0: i32, %arg1: i32) -> (i32, i32, i32, i32, i32) {
    %c0_i32 = arith.constant 0 : i32
    %0 = arith.addi %arg1, %c0_i32 : i32
    %c0_i32_0 = arith.constant 0 : i32
    %c0_i32_1 = arith.constant 0 : i32
    %c0_i32_2 = arith.constant 0 : i32
    %c0_i32_3 = arith.constant 0 : i32
    return %arg0, %0, %c0_i32_0, %c0_i32_1, %c0_i32_2 : i32, i32, i32, i32, i32
  }
  func.func @transform_1(%arg0: i32, %arg1: i32) -> (i32, i32, i32, i32, i32) {
    %c1_i32 = arith.constant 1 : i32
    %0 = arith.addi %arg1, %c1_i32 : i32
    %c0_i32 = arith.constant 0 : i32
    %c0_i32_0 = arith.constant 0 : i32
    %c0_i32_1 = arith.constant 0 : i32
    %c0_i32_2 = arith.constant 0 : i32
    return %arg0, %0, %c0_i32, %c0_i32_0, %c0_i32_1 : i32, i32, i32, i32, i32
  }
  func.func @transform_2(%arg0: i32, %arg1: i32) -> (i32, i32, i32, i32, i32) {
    %c2_i32 = arith.constant 2 : i32
    %0 = arith.addi %arg1, %c2_i32 : i32
    %c0_i32 = arith.constant 0 : i32
    %c0_i32_0 = arith.constant 0 : i32
    %c0_i32_1 = arith.constant 0 : i32
    %c0_i32_2 = arith.constant 0 : i32
    return %arg0, %0, %c0_i32, %c0_i32_0, %c0_i32_1 : i32, i32, i32, i32, i32
  }
  func.func @transform_3(%arg0: i32, %arg1: i32) -> (i32, i32, i32) {
    %c0_i32 = arith.constant 0 : i32
    %c0_i32_0 = arith.constant 0 : i32
    %c0_i32_1 = arith.constant 0 : i32
    %c0_i32_2 = arith.constant 0 : i32
    return %c0_i32, %c0_i32_0, %c0_i32_1 : i32, i32, i32
  }
  func.func @transform_4(%arg0: i32, %arg1: i32) -> (i32, i32) {
    %c0_i32 = arith.constant 0 : i32
    %c0_i32_0 = arith.constant 0 : i32
    %c0_i32_1 = arith.constant 0 : i32
    return %c0_i32, %c0_i32_0 : i32, i32
  }
  func.func @transform_5(%arg0: i32, %arg1: i32) -> (i32, i32, i32, i32) {
    %c0_i32 = arith.constant 0 : i32
    %c0_i32_0 = arith.constant 0 : i32
    %c0_i32_1 = arith.constant 0 : i32
    return %arg0, %arg1, %c0_i32, %c0_i32_0 : i32, i32, i32, i32
  }
  func.func @transform_6(%arg0: i32, %arg1: i32) -> (i32, i32, i32, i32) {
    %c0_i32 = arith.constant 0 : i32
    %c0_i32_0 = arith.constant 0 : i32
    %c0_i32_1 = arith.constant 0 : i32
    return %arg0, %arg1, %c0_i32, %c0_i32_0 : i32, i32, i32, i32
  }
}

</mosaic_0001>

<llo_original>
// kernel: down_block_forward.3
$region0: #{down_block_forward.3}
  #allocation0 [shape = 'u32[]', space=smem, size = 0x4, offset = 0x4, fixed_abs, tag = 'smem constant byte address 0x4 - core index']
  #allocation1 [shape = 'u32[72,128]{1,0:T(1,128)}', space=vmem, size = 0x9000, scoped, tag = 'internal scratch']
  %s0 = inlined_call_operand.vmem [shape: bf16[128,32], index: 0, kind: input, shape index: {}]
  %s1 = inlined_call_operand.vmem [shape: bf16[32,128], index: 1, kind: input, shape index: {}]
  %s2 = inlined_call_operand.vmem [shape: f32[1,128], index: 2, kind: input, shape index: {}]
  %s3 = inlined_call_operand.vmem [shape: bf16[128,128], index: 3, kind: output, shape index: {}]
  %s4 = sld [smem:[#allocation0]]
  $region22: #{down_block_forward.3} parent=0
    _
  %s6 = ssub.s32 1, %s4
  %s7 = scalar_select 0, %s6, %s4
  // Predicated region
  $region2: #{down_block_forward.3} parent=0 // pred_check
    _
  $region3: #{down_block_forward.3} parent=0 // pred_check_branch
    %9 = sbr.rel (0) target = $region5
  $region4: #{down_block_forward.3} parent=0 // pred_region
    _
  $region5: #{down_block_forward.3} parent=0 // pred_fallthru
    _
  // Predicated region
  $region6: #{down_block_forward.3} parent=0 // pred_check
    _
  $region7: #{down_block_forward.3} parent=0 // pred_check_branch
    %11 = sbr.rel (0) target = $region9
  $region8: #{down_block_forward.3} parent=0 // pred_region
    _
  $region9: #{down_block_forward.3} parent=0 // pred_fallthru
    _
  // Predicated region
  $region10: #{down_block_forward.3} parent=0 // pred_check
    _
  $region11: #{down_block_forward.3} parent=0 // pred_check_branch
    %13 = sbr.rel (0) target = $region13
  $region12: #{down_block_forward.3} parent=0 // pred_region
    _
  $region13: #{down_block_forward.3} parent=0 // pred_fallthru
    _
  %v15 = vld [vmem:[%s0] sm:$0xf]
  %v16 = vld [vmem:[%s0 + $0x4] sm:$0xf]
  %v17 = vld [vmem:[%s0 + $0x8] sm:$0xf]
  %v18 = vld [vmem:[%s0 + $0xc] sm:$0xf]
  %v19 = vld [vmem:[%s0 + $0x10] sm:$0xf]
  %v20 = vld [vmem:[%s0 + $0x14] sm:$0xf]
  %v21 = vld [vmem:[%s0 + $0x18] sm:$0xf]
  %v22 = vld [vmem:[%s0 + $0x1c] sm:$0xf]
  %v23 = vld [vmem:[%s0 + $0x20] sm:$0xf]
  %v24 = vld [vmem:[%s0 + $0x24] sm:$0xf]
  %v25 = vld [vmem:[%s0 + $0x28] sm:$0xf]
  %v26 = vld [vmem:[%s0 + $0x2c] sm:$0xf]
  %v27 = vld [vmem:[%s0 + $0x30] sm:$0xf]
  %v28 = vld [vmem:[%s0 + $0x34] sm:$0xf]
  %v29 = vld [vmem:[%s0 + $0x38] sm:$0xf]
  %v30 = vld [vmem:[%s0 + $0x3c] sm:$0xf]
  %v31 = vld [vmem:[%s1] sm:$0xf]
  %v32 = vld [vmem:[%s1 + $0x4] sm:$0xf]
  %v33 = vld [vmem:[%s1 + $0x8] sm:$0xf]
  %v34 = vld [vmem:[%s1 + $0xc] sm:$0xf]
  %v35 = vld [vmem:[%s2] sm:$0x1]
  %v37 = vperm.slane %v35, 0
  %v55 = vunpack.c.l.b16 %v15
  %v56 = vunpack.c.l.b16 %v16
  %v57 = vunpack.c.l.b16 %v17
  %v58 = vunpack.c.l.b16 %v18
  %v59 = vunpack.c.l.b16 %v19
  %v60 = vunpack.c.l.b16 %v20
  %v61 = vunpack.c.l.b16 %v21
  %v62 = vunpack.c.l.b16 %v22
  %v63 = vunpack.c.l.b16 %v23
  %v64 = vunpack.c.l.b16 %v24
  %v65 = vunpack.c.l.b16 %v25
  %v66 = vunpack.c.l.b16 %v26
  %v67 = vunpack.c.l.b16 %v27
  %v68 = vunpack.c.l.b16 %v28
  %v69 = vunpack.c.l.b16 %v29
  %v70 = vunpack.c.l.b16 %v30
  %v71 = vpack.c.b16 %v56, %v55
  %v72 = vpack.c.b16 %v58, %v57
  %v73 = vpack.c.b16 %v60, %v59
  %v74 = vpack.c.b16 %v62, %v61
  %v75 = vpack.c.b16 %v64, %v63
  %v76 = vpack.c.b16 %v66, %v65
  %v77 = vpack.c.b16 %v68, %v67
  %v78 = vpack.c.b16 %v70, %v69
  %v83 = vunpack.c.l.b16 %v31
  %v84 = vunpack.c.l.b16 %v32
  %v85 = vunpack.c.l.b16 %v33
  %v86 = vunpack.c.l.b16 %v34
  %v87 = vpack.c.b16 %v84, %v83
  %v88 = vpack.c.b16 %v86, %v85
  %vm91 = vcmask 261120
  %v93 = vsel %vm91, %v71, 0
  %v96 = vsel %vm91, %v72, 0
  %v99 = vsel %vm91, %v73, 0
  %v102 = vsel %vm91, %v74, 0
  %v105 = vsel %vm91, %v75, 0
  %v108 = vsel %vm91, %v76, 0
  %v111 = vsel %vm91, %v77, 0
  %v114 = vsel %vm91, %v78, 0
  %116 = vmatpush.bf16.msra.mxu0 0
  %117 = vmatpush.bf16.msra.mxu0 0
  %118 = vmatpush.bf16.msra.mxu0 0
  %119 = vmatpush.bf16.msra.mxu0 0
  %120 = vmatpush.bf16.msra.mxu0 0
  %121 = vmatpush.bf16.msra.mxu0 0
  %122 = vmatpush.bf16.msra.mxu0 %v88
  %123 = vmatpush.bf16.msra.mxu0 %v87
  %124 = vmatmul.bf16.gmra.mxu0 %v93
  %v125 = vpop.f32.mrf.mxu0
  %v126 = vadd.f32 %v37, %v125
  %v127 = vpop.f32.mrf.mxu0
  %v128 = vadd.f32 %v37, %v127
  %129 = vmatmul.bf16.gmra.mxu0 %v96
  %v130 = vpop.f32.mrf.mxu0
  %v131 = vadd.f32 %v37, %v130
  %v132 = vpop.f32.mrf.mxu0
  %v133 = vadd.f32 %v37, %v132
  %134 = vmatmul.bf16.gmra.mxu0 %v99
  %v135 = vpop.f32.mrf.mxu0
  %v136 = vadd.f32 %v37, %v135
  %v137 = vpop.f32.mrf.mxu0
  %v138 = vadd.f32 %v37, %v137
  %139 = vmatmul.bf16.gmra.mxu0 %v102
  %v140 = vpop.f32.mrf.mxu0
  %v141 = vadd.f32 %v37, %v140
  %v142 = vpop.f32.mrf.mxu0
  %v143 = vadd.f32 %v37, %v142
  %144 = vmatmul.bf16.gmra.mxu0 %v105
  %v145 = vpop.f32.mrf.mxu0
  %v146 = vadd.f32 %v37, %v145
  %v147 = vpop.f32.mrf.mxu0
  %v148 = vadd.f32 %v37, %v147
  %149 = vmatmul.bf16.gmra.mxu0 %v108
  %v150 = vpop.f32.mrf.mxu0
  %v151 = vadd.f32 %v37, %v150
  %v152 = vpop.f32.mrf.mxu0
  %v153 = vadd.f32 %v37, %v152
  %154 = vmatmul.bf16.gmra.mxu0 %v111
  %v155 = vpop.f32.mrf.mxu0
  %v156 = vadd.f32 %v37, %v155
  %v157 = vpop.f32.mrf.mxu0
  %v158 = vadd.f32 %v37, %v157
  %159 = vmatmul.bf16.gmra.mxu0 %v114
  %v160 = vpop.f32.mrf.mxu0
  %v161 = vadd.f32 %v37, %v160
  %v162 = vpop.f32.mrf.mxu0
  %v163 = vadd.f32 %v37, %v162
  %164 = vdwg.mxu0
  %v165 = vmax.f32 %v126, 0.0
  %v166 = vmax.f32 %v128, 0.0
  %v167 = vmax.f32 %v131, 0.0
  %v168 = vmax.f32 %v133, 0.0
  %v169 = vmax.f32 %v136, 0.0
  %v170 = vmax.f32 %v138, 0.0
  %v171 = vmax.f32 %v141, 0.0
  %v172 = vmax.f32 %v143, 0.0
  %v173 = vmax.f32 %v146, 0.0
  %v174 = vmax.f32 %v148, 0.0
  %v175 = vmax.f32 %v151, 0.0
  %v176 = vmax.f32 %v153, 0.0
  %v177 = vmax.f32 %v156, 0.0
  %v178 = vmax.f32 %v158, 0.0
  %v179 = vmax.f32 %v161, 0.0
  %v180 = vmax.f32 %v163, 0.0
  %v181 = vpack.c.bf16 %v165, %v165
  %v182 = vpack.c.bf16 %v166, %v166
  %v183 = vpack.c.bf16 %v167, %v167
  %v184 = vpack.c.bf16 %v168, %v168
  %v185 = vpack.c.bf16 %v169, %v169
  %v186 = vpack.c.bf16 %v170, %v170
  %v187 = vpack.c.bf16 %v171, %v171
  %v188 = vpack.c.bf16 %v172, %v172
  %v189 = vpack.c.bf16 %v173, %v173
  %v190 = vpack.c.bf16 %v174, %v174
  %v191 = vpack.c.bf16 %v175, %v175
  %v192 = vpack.c.bf16 %v176, %v176
  %v193 = vpack.c.bf16 %v177, %v177
  %v194 = vpack.c.bf16 %v178, %v178
  %v195 = vpack.c.bf16 %v179, %v179
  %v196 = vpack.c.bf16 %v180, %v180
  %197 = vst [vmem:[%s3] sm:$0xf] %v181
  %198 = vst [vmem:[%s3 + $0x4] sm:$0xf] %v182
  %199 = vst [vmem:[%s3 + $0x8] sm:$0xf] %v183
  %200 = vst [vmem:[%s3 + $0xc] sm:$0xf] %v184
  %201 = vst [vmem:[%s3 + $0x10] sm:$0xf] %v185
  %202 = vst [vmem:[%s3 + $0x14] sm:$0xf] %v186
  %203 = vst [vmem:[%s3 + $0x18] sm:$0xf] %v187
  %204 = vst [vmem:[%s3 + $0x1c] sm:$0xf] %v188
  %205 = vst [vmem:[%s3 + $0x20] sm:$0xf] %v189
  %206 = vst [vmem:[%s3 + $0x24] sm:$0xf] %v190
  %207 = vst [vmem:[%s3 + $0x28] sm:$0xf] %v191
  %208 = vst [vmem:[%s3 + $0x2c] sm:$0xf] %v192
  %209 = vst [vmem:[%s3 + $0x30] sm:$0xf] %v193
  %210 = vst [vmem:[%s3 + $0x34] sm:$0xf] %v194
  %211 = vst [vmem:[%s3 + $0x38] sm:$0xf] %v195
  %212 = vst [vmem:[%s3 + $0x3c] sm:$0xf] %v196
  // Predicated region
  $region14: #{down_block_forward.3} parent=0 // pred_check
    _
  $region15: #{down_block_forward.3} parent=0 // pred_check_branch
    %214 = sbr.rel (0) target = $region17
  $region16: #{down_block_forward.3} parent=0 // pred_region
    _
  $region17: #{down_block_forward.3} parent=0 // pred_fallthru
    _
  // Predicated region
  $region18: #{down_block_forward.3} parent=0 // pred_check
    _
  $region19: #{down_block_forward.3} parent=0 // pred_check_branch
    %216 = sbr.rel (0) target = $region21
  $region20: #{down_block_forward.3} parent=0 // pred_region
    _
  $region21: #{down_block_forward.3} parent=0 // pred_fallthru
    _

// kernel: down_block_forward.4
$region0: #{down_block_forward.4}
  #allocation0 [shape = 'u32[]', space=smem, size = 0x4, offset = 0x4, fixed_abs, tag = 'smem constant byte address 0x4 - core index']
  #allocation1 [shape = 'u32[72,128]{1,0:T(1,128)}', space=vmem, size = 0x9000, scoped, tag = 'internal scratch']
  %s0 = inlined_call_operand.vmem [shape: bf16[2,6,6,6,128], index: 0, kind: input, shape index: {}, may-alias: {0,1,2}]
  %s1 = inlined_call_operand.vmem [shape: bf16[2,6,6,6,128], index: 1, kind: input, shape index: {}, may-alias: {0,1,2}]
  %s2 = inlined_call_operand.vmem [shape: bf16[2,6,6,6,128], index: 2, kind: input, shape index: {}, may-alias: {0,1,2}]
  %s3 = inlined_call_operand.vmem [shape: bf16[27,128,128], index: 3, kind: input, shape index: {}]
  %s4 = inlined_call_operand.vmem [shape: f32[1,128], index: 4, kind: input, shape index: {}]
  %s5 = inlined_call_operand.vmem [shape: bf16[2,4,16,128], index: 5, kind: output, shape index: {}]
  %s6 = sld [smem:[#allocation0]]
  $region53: #{down_block_forward.4} parent=0
    _
  %s8 = ssub.s32 1, %s6
  %s9 = scalar_select 0, %s8, %s6
  loop: start=0, step=1, limit=10
  $region2: #{down_block_forward.4} parent=0 // loop_pre_header
    _
  $region3: #{down_block_forward.4} parent=0 // loop_header
    %s11 = sphi 0, %s15
    %p12 = scmp.ge.s32.totalorder %s11, 10
    %s18 = sphi 0, %s30
    %s19 = sphi 0, %s26
    %s20 = sphi 0, %s18
    %s21 = sphi 0, %s19
    %s22 = sphi 0, %s20
    %s23 = sphi 0, %s21
    %s35 = sphi 0, %s37
    %s38 = sphi 0, %s35
    %s39 = sphi 0, %s38
    %s55 = sphi 0, %s39
    %s65 = sphi 0, %s67
    %s68 = sphi 0, %s65
    %s69 = sphi 0, %s68
    %s85 = sphi 0, %s69
    %s95 = sphi 0, %s97
    %s98 = sphi 0, %s95
    %s99 = sphi 0, %s98
    %s115 = sphi 0, %s99
    %s119 = sphi 0, %s119
    %s121 = sphi 0, %s119
    %s122 = sphi 0, %s121
    %s136 = sphi 0, %s122
    %s140 = sphi 0, %s140
    %s142 = sphi 0, %s140
    %s143 = sphi 0, %s142
    %s157 = sphi 0, %s143
    %s165 = sphi 0, %s167
    %s168 = sphi 0, %s165
    %s169 = sphi 0, %s168
    %s185 = sphi 0, %s169
  $region4: #{down_block_forward.4} parent=0 // loop_header_branch
    %14 = sbr.rel (%p12) target = $region8
  $region5: #{down_block_forward.4} parent=0 // loop_body
    %s16 = ssub.s32 %s11, 1
    %s17 = ssub.s32 %s11, 2
    %s24 = sadd.s32 1, %s19
    %p25 = scmp.ge.s32.totalorder %s24, 4
    %s26 = scalar_select %p25, 0, %s24
    %s27 = sadd.s32 1, %s18
    %s28 = scalar_select %p25, %s27, %s18
    %p29 = scmp.ge.s32.totalorder %s28, 2
    %s30 = scalar_select %p29, 0, %s28
    %s31 = ssub.s32 %s18, %s30
    %s32 = ssub.s32 %s19, %s26
    %s33 = sor.u32 %s31, %s32
    %p34 = scmp.eq.s32.totalorder %s33, 0
    %s36 = sadd.s32 %s35, 1
    %s37 = scalar_select %p34, %s35, %s36
    %p40 = pneg %p34
    %p41 = scmp.eq.s32.totalorder %s11, 7
    %p42 = por %p40, %p41
    %p43 = scmp.ne.s32.totalorder %s35, %s38
    %p44 = scmp.eq.s32.totalorder %s11, 0
    %p45 = por %p43, %p44
    %p46 = scmp.ne.s32.totalorder %s35, %s38
    %p47 = scmp.eq.s32.totalorder %s16, 7
    %p48 = por %p46, %p47
    %p49 = scmp.ne.s32.totalorder %s38, %s39
    %p50 = scmp.eq.s32.totalorder %s16, 0
    %p51 = por %p49, %p50
    %p52 = scmp.ne.s32.totalorder %s38, %s39
    %p53 = scmp.eq.s32.totalorder %s17, 7
    %p54 = por %p52, %p53
    %p56 = scmp.ne.s32.totalorder %s39, %s55
    %p57 = scmp.eq.s32.totalorder %s17, 0
    %p58 = por %p56, %p57
    %s59 = sadd.s32 %s19, 1
    %s60 = sadd.s32 %s26, 1
    %s61 = ssub.s32 %s18, %s30
    %s62 = ssub.s32 %s59, %s60
    %s63 = sor.u32 %s61, %s62
    %p64 = scmp.eq.s32.totalorder %s63, 0
    %s66 = sadd.s32 %s65, 1
    %s67 = scalar_select %p64, %s65, %s66
    %p70 = pneg %p64
    %p71 = scmp.eq.s32.totalorder %s11, 7
    %p72 = por %p70, %p71
    %p73 = scmp.ne.s32.totalorder %s65, %s68
    %p74 = scmp.eq.s32.totalorder %s11, 0
    %p75 = por %p73, %p74
    %p76 = scmp.ne.s32.totalorder %s65, %s68
    %p77 = scmp.eq.s32.totalorder %s16, 7
    %p78 = por %p76, %p77
    %p79 = scmp.ne.s32.totalorder %s68, %s69
    %p80 = scmp.eq.s32.totalorder %s16, 0
    %p81 = por %p79, %p80
    %p82 = scmp.ne.s32.totalorder %s68, %s69
    %p83 = scmp.eq.s32.totalorder %s17, 7
    %p84 = por %p82, %p83
    %p86 = scmp.ne.s32.totalorder %s69, %s85
    %p87 = scmp.eq.s32.totalorder %s17, 0
    %p88 = por %p86, %p87
    %s89 = sadd.s32 %s19, 2
    %s90 = sadd.s32 %s26, 2
    %s91 = ssub.s32 %s18, %s30
    %s92 = ssub.s32 %s89, %s90
    %s93 = sor.u32 %s91, %s92
    %p94 = scmp.eq.s32.totalorder %s93, 0
    %s96 = sadd.s32 %s95, 1
    %s97 = scalar_select %p94, %s95, %s96
    %p100 = pneg %p94
    %p101 = scmp.eq.s32.totalorder %s11, 7
    %p102 = por %p100, %p101
    %p103 = scmp.ne.s32.totalorder %s95, %s98
    %p104 = scmp.eq.s32.totalorder %s11, 0
    %p105 = por %p103, %p104
    %p106 = scmp.ne.s32.totalorder %s95, %s98
    %p107 = scmp.eq.s32.totalorder %s16, 7
    %p108 = por %p106, %p107
    %p109 = scmp.ne.s32.totalorder %s98, %s99
    %p110 = scmp.eq.s32.totalorder %s16, 0
    %p111 = por %p109, %p110
    %p112 = scmp.ne.s32.totalorder %s98, %s99
    %p113 = scmp.eq.s32.totalorder %s17, 7
    %p114 = por %p112, %p113
    %p116 = scmp.ne.s32.totalorder %s99, %s115
    %p117 = scmp.eq.s32.totalorder %s17, 0
    %p118 = por %p116, %p117
    %s120 = sadd.s32 %s119, 1
    %p123 = scmp.eq.s32.totalorder %s11, 7
    %p124 = scmp.ne.s32.totalorder %s119, %s121
    %p125 = scmp.eq.s32.totalorder %s11, 0
    %p126 = por %p124, %p125
    %p127 = scmp.ne.s32.totalorder %s119, %s121
    %p128 = scmp.eq.s32.totalorder %s16, 7
    %p129 = por %p127, %p128
    %p130 = scmp.ne.s32.totalorder %s121, %s122
    %p131 = scmp.eq.s32.totalorder %s16, 0
    %p132 = por %p130, %p131
    %p133 = scmp.ne.s32.totalorder %s121, %s122
    %p134 = scmp.eq.s32.totalorder %s17, 7
    %p135 = por %p133, %p134
    %p137 = scmp.ne.s32.totalorder %s122, %s136
    %p138 = scmp.eq.s32.totalorder %s17, 0
    %p139 = por %p137, %p138
    %s141 = sadd.s32 %s140, 1
    %p144 = scmp.eq.s32.totalorder %s11, 7
    %p145 = scmp.ne.s32.totalorder %s140, %s142
    %p146 = scmp.eq.s32.totalorder %s11, 0
    %p147 = por %p145, %p146
    %p148 = scmp.ne.s32.totalorder %s140, %s142
    %p149 = scmp.eq.s32.totalorder %s16, 7
    %p150 = por %p148, %p149
    %p151 = scmp.ne.s32.totalorder %s142, %s143
    %p152 = scmp.eq.s32.totalorder %s16, 0
    %p153 = por %p151, %p152
    %p154 = scmp.ne.s32.totalorder %s142, %s143
    %p155 = scmp.eq.s32.totalorder %s17, 7
    %p156 = por %p154, %p155
    %p158 = scmp.ne.s32.totalorder %s143, %s157
    %p159 = scmp.eq.s32.totalorder %s17, 0
    %p160 = por %p158, %p159
    %s161 = ssub.s32 %s18, %s30
    %s162 = ssub.s32 %s19, %s26
    %s163 = sor.u32 %s161, %s162
    %p164 = scmp.eq.s32.totalorder %s163, 0
    %s166 = sadd.s32 %s165, 1
    %s167 = scalar_select %p164, %s165, %s166
    %p170 = pneg %p164
    %p171 = scmp.eq.s32.totalorder %s11, 7
    %p172 = por %p170, %p171
    %p173 = scmp.ne.s32.totalorder %s165, %s168
    %p174 = scmp.eq.s32.totalorder %s11, 0
    %p175 = por %p173, %p174
    %p176 = scmp.ne.s32.totalorder %s165, %s168
    %p177 = scmp.eq.s32.totalorder %s16, 7
    %p178 = por %p176, %p177
    %p179 = scmp.ne.s32.totalorder %s168, %s169
    %p180 = scmp.eq.s32.totalorder %s16, 0
    %p181 = por %p179, %p180
    %p182 = scmp.ne.s32.totalorder %s168, %s169
    %p183 = scmp.eq.s32.totalorder %s17, 7
    %p184 = por %p182, %p183
    %p186 = scmp.ne.s32.totalorder %s169, %s185
    %p187 = scmp.eq.s32.totalorder %s17, 0
    %p188 = por %p186, %p187
    %p189 = scmp.le.s32.totalorder 1, %s11
    %p190 = scmp.lt.s32.totalorder %s11, 9
    %p191 = pnand %p189, %p190
    %p192 = pneg %p191
    // Predicated region
    $region9: #{down_block_forward.4} parent=5 // pred_check
      _
    $region10: #{down_block_forward.4} parent=5 // pred_check_branch
      %194 = sbr.rel (%p191) target = $region12
    $region11: #{down_block_forward.4} parent=5 // pred_region
      %s195 = ssub.s32 %s11, 1
      // Predicated region
      $region13: #{down_block_forward.4} parent=11 // pred_check
        %p196 = pneg %p132
      $region14: #{down_block_forward.4} parent=11 // pred_check_branch
        %198 = sbr.rel (%p196) target = $region16
      $region15: #{down_block_forward.4} parent=11 // pred_region
        _
      $region16: #{down_block_forward.4} parent=11 // pred_fallthru
        _
      // Predicated region
      $region17: #{down_block_forward.4} parent=11 // pred_check
        %p199 = pneg %p153
      $region18: #{down_block_forward.4} parent=11 // pred_check_branch
        %201 = sbr.rel (%p199) target = $region20
      $region19: #{down_block_forward.4} parent=11 // pred_region
        _
      $region20: #{down_block_forward.4} parent=11 // pred_fallthru
        _
    $region12: #{down_block_forward.4} parent=5 // pred_fallthru
      _
    %p202 = scmp.lt.s32.totalorder %s11, 8
    // Predicated region
    $region21: #{down_block_forward.4} parent=5 // pred_check
      %p203 = pneg %p202
    $region22: #{down_block_forward.4} parent=5 // pred_check_branch
      %205 = sbr.rel (%p203) target = $region24
    $region23: #{down_block_forward.4} parent=5 // pred_region
      // Predicated region
      $region25: #{down_block_forward.4} parent=23 // pred_check
        %p206 = pneg %p45
      $region26: #{down_block_forward.4} parent=23 // pred_check_branch
        %208 = sbr.rel (%p206) target = $region28
      $region27: #{down_block_forward.4} parent=23 // pred_region
        %p209 = scmp.lt.s32.totalorder %s18, 1
        %s210 = scalar_select %p209, %s18, 1
        %p211 = scmp.lt.s32.totalorder %s19, 5
        %s212 = scalar_select %p211, %s19, 5
        %s213 = smul.addr %s212, 6
        %s214 = smul.addr %s210, 36
        %s215 = sadd.s32 %s213, %s214
        %s216 = smul.addr %s215, 4
        %s217 = scalar_lea.vmem %s0, %s216
      $region28: #{down_block_forward.4} parent=23 // pred_fallthru
        _
      // Predicated region
      $region29: #{down_block_forward.4} parent=23 // pred_check
        %p218 = pneg %p75
      $region30: #{down_block_forward.4} parent=23 // pred_check_branch
        %220 = sbr.rel (%p218) target = $region32
      $region31: #{down_block_forward.4} parent=23 // pred_region
        %s221 = sadd.s32 %s19, 1
        %p222 = scmp.lt.s32.totalorder %s18, 1
        %s223 = scalar_select %p222, %s18, 1
        %p224 = scmp.lt.s32.totalorder %s221, 5
        %s225 = scalar_select %p224, %s221, 5
        %s226 = smul.addr %s225, 6
        %s227 = smul.addr %s223, 36
        %s228 = sadd.s32 %s226, %s227
        %s229 = smul.addr %s228, 4
        %s230 = scalar_lea.vmem %s1, %s229
        %s231 = sadd.s32 %s19, 1
      $region32: #{down_block_forward.4} parent=23 // pred_fallthru
        _
      // Predicated region
      $region33: #{down_block_forward.4} parent=23 // pred_check
        %p232 = pneg %p105
      $region34: #{down_block_forward.4} parent=23 // pred_check_branch
        %234 = sbr.rel (%p232) target = $region36
      $region35: #{down_block_forward.4} parent=23 // pred_region
        %s235 = sadd.s32 %s19, 2
        %p236 = scmp.lt.s32.totalorder %s18, 1
        %s237 = scalar_select %p236, %s18, 1
        %p238 = scmp.lt.s32.totalorder %s235, 5
        %s239 = scalar_select %p238, %s235, 5
        %s240 = smul.addr %s239, 6
        %s241 = smul.addr %s237, 36
        %s242 = sadd.s32 %s240, %s241
        %s243 = smul.addr %s242, 4
        %s244 = scalar_lea.vmem %s2, %s243
        %s245 = sadd.s32 %s19, 2
      $region36: #{down_block_forward.4} parent=23 // pred_fallthru
        _
    $region24: #{down_block_forward.4} parent=5 // pred_fallthru
      _
    %p246 = scmp.le.s32.totalorder 1, %s11
    %p247 = scmp.lt.s32.totalorder %s11, 9
    %p248 = pnand %p246, %p247
    %p249 = pneg %p248
    // Predicated region
    $region37: #{down_block_forward.4} parent=5 // pred_check
      _
    $region38: #{down_block_forward.4} parent=5 // pred_check_branch
      %251 = sbr.rel (%p248) target = $region40
    $region39: #{down_block_forward.4} parent=5 // pred_region
      %s252 = ssub.s32 %s11, 1
      %p253 = scmp.lt.s32.totalorder %s20, 1
      %s254 = scalar_select %p253, %s20, 1
      %p255 = scmp.lt.s32.totalorder %s21, 5
      %s256 = scalar_select %p255, %s21, 5
      %s257 = smul.addr %s256, 6
      %s258 = smul.addr %s254, 36
      %s259 = sadd.s32 %s257, %s258
      %s260 = smul.addr %s259, 4
      %s261 = scalar_lea.vmem %s0, %s260
      %p262 = pneg %p51
      %p263 = pneg %p48
      %s264 = sadd.s32 %s21, 1
      %p265 = scmp.lt.s32.totalorder %s20, 1
      %s266 = scalar_select %p265, %s20, 1
      %p267 = scmp.lt.s32.totalorder %s264, 5
      %s268 = scalar_select %p267, %s264, 5
      %s269 = smul.addr %s268, 6
      %s270 = smul.addr %s266, 36
      %s271 = sadd.s32 %s269, %s270
      %s272 = smul.addr %s271, 4
      %s273 = scalar_lea.vmem %s1, %s272
      %p274 = pneg %p81
      %p275 = pneg %p78
      %s276 = sadd.s32 %s21, 2
      %p277 = scmp.lt.s32.totalorder %s20, 1
      %s278 = scalar_select %p277, %s20, 1
      %p279 = scmp.lt.s32.totalorder %s276, 5
      %s280 = scalar_select %p279, %s276, 5
      %s281 = smul.addr %s280, 6
      %s282 = smul.addr %s278, 36
      %s283 = sadd.s32 %s281, %s282
      %s284 = smul.addr %s283, 4
      %s285 = scalar_lea.vmem %s2, %s284
      %p286 = pneg %p111
      %p287 = pneg %p108
      %p288 = pneg %p132
      %p289 = pneg %p129
      %p290 = pneg %p153
      %p291 = pneg %p150
      %p292 = pneg %p181
      %p293 = pneg %p178
      %p294 = scmp.lt.s32.totalorder %s20, 1
      %s295 = scalar_select %p294, %s20, 1
      %p296 = scmp.lt.s32.totalorder %s21, 3
      %s297 = scalar_select %p296, %s21, 3
      %s298 = smul.addr %s297, 2
      %s299 = smul.addr %s295, 8
      %s300 = sadd.s32 %s298, %s299
      %s301 = smul.addr %s300, 4
      %s302 = scalar_lea.vmem %s5, %s301
      %p303 = scmp.lt.s32.totalorder %s20, 1
      %s304 = scalar_select %p303, %s20, 1
      %p305 = scmp.lt.s32.totalorder %s21, 5
      %s306 = scalar_select %p305, %s21, 5
      %s307 = smul.addr %s306, 6
      %s308 = smul.addr %s304, 36
      %s309 = sadd.s32 %s307, %s308
      %s310 = smul.addr %s309, 4
      %s311 = scalar_lea.vmem %s0, %s310
      %s312 = sadd.s32 %s21, 1
      %p313 = scmp.lt.s32.totalorder %s20, 1
      %s314 = scalar_select %p313, %s20, 1
      %p315 = scmp.lt.s32.totalorder %s312, 5
      %s316 = scalar_select %p315, %s312, 5
      %s317 = smul.addr %s316, 6
      %s318 = smul.addr %s314, 36
      %s319 = sadd.s32 %s317, %s318
      %s320 = smul.addr %s319, 4
      %s321 = scalar_lea.vmem %s1, %s320
      %s322 = sadd.s32 %s21, 1
      %s323 = sadd.s32 %s21, 2
      %p324 = scmp.lt.s32.totalorder %s20, 1
      %s325 = scalar_select %p324, %s20, 1
      %p326 = scmp.lt.s32.totalorder %s323, 5
      %s327 = scalar_select %p326, %s323, 5
      %s328 = smul.addr %s327, 6
      %s329 = smul.addr %s325, 36
      %s330 = sadd.s32 %s328, %s329
      %s331 = smul.addr %s330, 4
      %s332 = scalar_lea.vmem %s2, %s331
      %s333 = sadd.s32 %s21, 2
      %p334 = scmp.lt.s32.totalorder %s20, 1
      %s335 = scalar_select %p334, %s20, 1
      %p336 = scmp.lt.s32.totalorder %s21, 3
      %s337 = scalar_select %p336, %s21, 3
      %s338 = smul.addr %s337, 2
      %s339 = smul.addr %s335, 8
      %s340 = sadd.s32 %s338, %s339
      %s341 = smul.addr %s340, 4
      %s342 = scalar_lea.vmem %s5, %s341
      %v343 = vld [vmem:[%s311] sm:$0x3]
      %v344 = vld [vmem:[%s311 + $0x4] sm:$0x3]
      %v345 = vld [vmem:[%s311 + $0x8] sm:$0x3]
      %v346 = vld [vmem:[%s311 + $0xc] sm:$0x3]
      %v347 = vld [vmem:[%s3] sm:$0xf]
      %v348 = vld [vmem:[%s3 + $0x4] sm:$0xf]
      %v349 = vld [vmem:[%s3 + $0x8] sm:$0xf]
      %v350 = vld [vmem:[%s3 + $0xc] sm:$0xf]
      %v351 = vld [vmem:[%s3 + $0x10] sm:$0xf]
      %v352 = vld [vmem:[%s3 + $0x14] sm:$0xf]
      %v353 = vld [vmem:[%s3 + $0x18] sm:$0xf]
      %v354 = vld [vmem:[%s3 + $0x1c] sm:$0xf]
      %v355 = vld [vmem:[%s3 + $0x20] sm:$0xf]
      %v356 = vld [vmem:[%s3 + $0x24] sm:$0xf]
      %v357 = vld [vmem:[%s3 + $0x28] sm:$0xf]
      %v358 = vld [vmem:[%s3 + $0x2c] sm:$0xf]
      %v359 = vld [vmem:[%s3 + $0x30] sm:$0xf]
      %v360 = vld [vmem:[%s3 + $0x34] sm:$0xf]
      %v361 = vld [vmem:[%s3 + $0x38] sm:$0xf]
      %v362 = vld [vmem:[%s3 + $0x3c] sm:$0xf]
      %v363 = vld [vmem:[%s311] sm:$0x7]
      %v364 = vld [vmem:[%s311 + $0x4] sm:$0x7]
      %v365 = vld [vmem:[%s311 + $0x8] sm:$0x7]
      %v366 = vld [vmem:[%s311 + $0xc] sm:$0x7]
      %v371 = vrot.slane %v363, 2
      %v372 = vrot.slane %v364, 2
      %v373 = vrot.slane %v365, 2
      %v374 = vrot.slane %v366, 2
      %vm375 = vcmask 1041408
      %v378 = vsel %vm375, %v363, %v371
      %vm379 = vcmask 1043458
      %v380 = vsel %vm379, %v363, %v371
      %v382 = vrot.slane %v380, 2
      %v385 = vsel %vm375, %v364, %v372
      %v386 = vsel %vm379, %v364, %v372
      %v388 = vrot.slane %v386, 2
      %v391 = vsel %vm375, %v365, %v373
      %v392 = vsel %vm379, %v365, %v373
      %v394 = vrot.slane %v392, 2
      %v397 = vsel %vm375, %v366, %v374
      %v398 = vsel %vm379, %v366, %v374
      %v400 = vrot.slane %v398, 2
      %vm401 = vsmask.f32 1280
      %vm402 = vsmask.f32 3336
      %vm403 = vmor %vm401, %vm402
      %vm404 = vsmask.f32 5392
      %vm405 = vmor %vm403, %vm404
      %vm406 = vsmask.f32 7448
      %vm407 = vmor %vm405, %vm406
      %v408 = vshrl.u32 %v378, 16
      %v410 = vrot.slane %v408, 6
      %v411 = vshll.u32 %v378, 16
      %v413 = vrot.slane %v411, 7
      %v414 = vor.u32 %v410, %v413
      %v415 = vrot.slane %v414, 2
      %v417 = vshll.u32 %v382, 16
      %v419 = vrot.slane %v417, 7
      %v420 = vsel %vm407, %v415, %v419
      %v421 = vshrl.u32 %v385, 16
      %v423 = vrot.slane %v421, 6
      %v424 = vshll.u32 %v385, 16
      %v426 = vrot.slane %v424, 7
      %v427 = vor.u32 %v423, %v426
      %v428 = vrot.slane %v427, 2
      %v430 = vshll.u32 %v388, 16
      %v432 = vrot.slane %v430, 7
      %v433 = vsel %vm407, %v428, %v432
      %v434 = vshrl.u32 %v391, 16
      %v436 = vrot.slane %v434, 6
      %v437 = vshll.u32 %v391, 16
      %v439 = vrot.slane %v437, 7
      %v440 = vor.u32 %v436, %v439
      %v441 = vrot.slane %v440, 2
      %v443 = vshll.u32 %v394, 16
      %v445 = vrot.slane %v443, 7
      %v446 = vsel %vm407, %v441, %v445
      %v447 = vshrl.u32 %v397, 16
      %v449 = vrot.slane %v447, 6
      %v450 = vshll.u32 %v397, 16
      %v452 = vrot.slane %v450, 7
      %v453 = vor.u32 %v449, %v452
      %v454 = vrot.slane %v453, 2
      %v456 = vshll.u32 %v400, 16
      %v458 = vrot.slane %v456, 7
      %v459 = vsel %vm407, %v454, %v458
      %s460 = scalar_lea.vmem %s3, 64
      %v461 = vld [vmem:[%s460] sm:$0xf]
      %v462 = vld [vmem:[%s460 + $0x4] sm:$0xf]
      %v463 = vld [vmem:[%s460 + $0x8] sm:$0xf]
      %v464 = vld [vmem:[%s460 + $0xc] sm:$0xf]
      %v465 = vld [vmem:[%s460 + $0x10] sm:$0xf]
      %v466 = vld [vmem:[%s460 + $0x14] sm:$0xf]
      %v467 = vld [vmem:[%s460 + $0x18] sm:$0xf]
      %v468 = vld [vmem:[%s460 + $0x1c] sm:$0xf]
      %v469 = vld [vmem:[%s460 + $0x20] sm:$0xf]
      %v470 = vld [vmem:[%s460 + $0x24] sm:$0xf]
      %v471 = vld [vmem:[%s460 + $0x28] sm:$0xf]
      %v472 = vld [vmem:[%s460 + $0x2c] sm:$0xf]
      %v473 = vld [vmem:[%s460 + $0x30] sm:$0xf]
      %v474 = vld [vmem:[%s460 + $0x34] sm:$0xf]
      %v475 = vld [vmem:[%s460 + $0x38] sm:$0xf]
      %v476 = vld [vmem:[%s460 + $0x3c] sm:$0xf]
      %478 = vst [vmem:[#allocation1] ss:$4 sm:$0xff] %v420
      %s480 = scalar_lea.vmem [#allocation1], 1
      %481 = vst [vmem:[%s480] ss:$4 sm:$0xff] %v433
      %s483 = scalar_lea.vmem [#allocation1], 2
      %484 = vst [vmem:[%s483] ss:$4 sm:$0xff] %v446
      %s486 = scalar_lea.vmem [#allocation1], 3
      %487 = vst [vmem:[%s486] ss:$4 sm:$0xff] %v459
      %v488 = vld.sshfl [vmem:[#allocation1] sm:$0xff pattern:$0x73625140]
      %v506 = vunpack.c.l.b16 %v461
      %v507 = vunpack.c.l.b16 %v462
      %v508 = vunpack.c.l.b16 %v463
      %v509 = vunpack.c.l.b16 %v464
      %v510 = vunpack.c.l.b16 %v465
      %v511 = vunpack.c.l.b16 %v466
      %v512 = vunpack.c.l.b16 %v467
      %v513 = vunpack.c.l.b16 %v468
      %v514 = vunpack.c.l.b16 %v469
      %v515 = vunpack.c.l.b16 %v470
      %v516 = vunpack.c.l.b16 %v471
      %v517 = vunpack.c.l.b16 %v472
      %v518 = vunpack.c.l.b16 %v473
      %v519 = vunpack.c.l.b16 %v474
      %v520 = vunpack.c.l.b16 %v475
      %v521 = vunpack.c.l.b16 %v476
      %v522 = vpack.c.b16 %v507, %v506
      %v523 = vpack.c.b16 %v509, %v508
      %v524 = vpack.c.b16 %v511, %v510
      %v525 = vpack.c.b16 %v513, %v512
      %v526 = vpack.c.b16 %v515, %v514
      %v527 = vpack.c.b16 %v517, %v516
      %v528 = vpack.c.b16 %v519, %v518
      %v529 = vpack.c.b16 %v521, %v520
      %538 = vmatpush.bf16.msra.mxu0 %v529
      %539 = vmatpush.bf16.msra.mxu0 %v528
      %540 = vmatpush.bf16.msra.mxu0 %v527
      %541 = vmatpush.bf16.msra.mxu0 %v526
      %542 = vmatpush.bf16.msra.mxu0 %v525
      %543 = vmatpush.bf16.msra.mxu0 %v524
      %544 = vmatpush.bf16.msra.mxu0 %v523
      %545 = vmatpush.bf16.msra.mxu0 %v522
      %546 = vmatmul.bf16.gmra.mxu0 %v488
      %v547 = vpop.f32.mrf.mxu0
      %v548 = vadd.f32 0.0, %v547
      %v549 = vpop.f32.mrf.mxu0
      %v550 = vadd.f32 0.0, %v549
      %551 = vdwg.mxu0
      %553 = vst [vmem:[#allocation1] ss:$4 sm:$0xff] %v343
      %s555 = scalar_lea.vmem [#allocation1], 1
      %556 = vst [vmem:[%s555] ss:$4 sm:$0xff] %v344
      %s558 = scalar_lea.vmem [#allocation1], 2
      %559 = vst [vmem:[%s558] ss:$4 sm:$0xff] %v345
      %s561 = scalar_lea.vmem [#allocation1], 3
      %562 = vst [vmem:[%s561] ss:$4 sm:$0xff] %v346
      %v563 = vld.sshfl [vmem:[#allocation1] sm:$0xff pattern:$0x73625140]
      %v581 = vunpack.c.l.b16 %v347
      %v582 = vunpack.c.l.b16 %v348
      %v583 = vunpack.c.l.b16 %v349
      %v584 = vunpack.c.l.b16 %v350
      %v585 = vunpack.c.l.b16 %v351
      %v586 = vunpack.c.l.b16 %v352
      %v587 = vunpack.c.l.b16 %v353
      %v588 = vunpack.c.l.b16 %v354
      %v589 = vunpack.c.l.b16 %v355
      %v590 = vunpack.c.l.b16 %v356
      %v591 = vunpack.c.l.b16 %v357
      %v592 = vunpack.c.l.b16 %v358
      %v593 = vunpack.c.l.b16 %v359
      %v594 = vunpack.c.l.b16 %v360
      %v595 = vunpack.c.l.b16 %v361
      %v596 = vunpack.c.l.b16 %v362
      %v597 = vpack.c.b16 %v582, %v581
      %v598 = vpack.c.b16 %v584, %v583
      %v599 = vpack.c.b16 %v586, %v585
      %v600 = vpack.c.b16 %v588, %v587
      %v601 = vpack.c.b16 %v590, %v589
      %v602 = vpack.c.b16 %v592, %v591
      %v603 = vpack.c.b16 %v594, %v593
      %v604 = vpack.c.b16 %v596, %v595
      %613 = vmatpush.bf16.msra.mxu0 %v604
      %614 = vmatpush.bf16.msra.mxu0 %v603
      %615 = vmatpush.bf16.msra.mxu0 %v602
      %616 = vmatpush.bf16.msra.mxu0 %v601
      %617 = vmatpush.bf16.msra.mxu0 %v600
      %618 = vmatpush.bf16.msra.mxu0 %v599
      %619 = vmatpush.bf16.msra.mxu0 %v598
      %620 = vmatpush.bf16.msra.mxu0 %v597
      %621 = vmatmul.bf16.gmra.mxu0 %v563
      %v622 = vpop.f32.mrf.mxu0
      %v623 = vadd.f32 %v548, %v622
      %v624 = vpop.f32.mrf.mxu0
      %v625 = vadd.f32 %v550, %v624
      %626 = vdwg.mxu0
      %v627 = vld [vmem:[%s311] sm:$0x6]
      %v628 = vld [vmem:[%s311 + $0x4] sm:$0x6]
      %v629 = vld [vmem:[%s311 + $0x8] sm:$0x6]
      %v630 = vld [vmem:[%s311 + $0xc] sm:$0x6]
      %v635 = vrot.slane %v627, 2
      %v636 = vrot.slane %v628, 2
      %v637 = vrot.slane %v629, 2
      %v638 = vrot.slane %v630, 2
      %v641 = vsel %vm375, %v627, %v635
      %v643 = vsel %vm379, %v627, %v635
      %v645 = vrot.slane %v643, 2
      %v648 = vsel %vm375, %v628, %v636
      %v650 = vsel %vm379, %v628, %v636
      %v652 = vrot.slane %v650, 2
      %v655 = vsel %vm375, %v629, %v637
      %v657 = vsel %vm379, %v629, %v637
      %v659 = vrot.slane %v657, 2
      %v662 = vsel %vm375, %v630, %v638
      %v664 = vsel %vm379, %v630, %v638
      %v666 = vrot.slane %v664, 2
      %vm667 = vcmask 1040384
      %vm668 = vcmask 1042434
      %vm669 = vmor %vm667, %vm668
      %vm670 = vcmask 1044484
      %vm671 = vmor %vm669, %vm670
      %vm672 = vcmask 1046534
      %vm673 = vmor %vm671, %vm672
      %v674 = vrot.slane %v641, 7
      %v675 = vrot.slane %v674, 2
      %v676 = vrot.slane %v645, 7
      %v677 = vsel %vm673, %v675, %v676
      %v678 = vrot.slane %v648, 7
      %v679 = vrot.slane %v678, 2
      %v680 = vrot.slane %v652, 7
      %v681 = vsel %vm673, %v679, %v680
      %v682 = vrot.slane %v655, 7
      %v683 = vrot.slane %v682, 2
      %v684 = vrot.slane %v659, 7
      %v685 = vsel %vm673, %v683, %v684
      %v686 = vrot.slane %v662, 7
      %v687 = vrot.slane %v686, 2
      %v688 = vrot.slane %v666, 7
      %v689 = vsel %vm673, %v687, %v688
      %s690 = scalar_lea.vmem %s3, 128
      %v691 = vld [vmem:[%s690] sm:$0xf]
      %v692 = vld [vmem:[%s690 + $0x4] sm:$0xf]
      %v693 = vld [vmem:[%s690 + $0x8] sm:$0xf]
      %v694 = vld [vmem:[%s690 + $0xc] sm:$0xf]
      %v695 = vld [vmem:[%s690 + $0x10] sm:$0xf]
      %v696 = vld [vmem:[%s690 + $0x14] sm:$0xf]
      %v697 = vld [vmem:[%s690 + $0x18] sm:$0xf]
      %v698 = vld [vmem:[%s690 + $0x1c] sm:$0xf]
      %v699 = vld [vmem:[%s690 + $0x20] sm:$0xf]
      %v700 = vld [vmem:[%s690 + $0x24] sm:$0xf]
      %v701 = vld [vmem:[%s690 + $0x28] sm:$0xf]
      %v702 = vld [vmem:[%s690 + $0x2c] sm:$0xf]
      %v703 = vld [vmem:[%s690 + $0x30] sm:$0xf]
      %v704 = vld [vmem:[%s690 + $0x34] sm:$0xf]
      %v705 = vld [vmem:[%s690 + $0x38] sm:$0xf]
      %v706 = vld [vmem:[%s690 + $0x3c] sm:$0xf]
      %708 = vst [vmem:[#allocation1] ss:$4 sm:$0xff] %v677
      %s710 = scalar_lea.vmem [#allocation1], 1
      %711 = vst [vmem:[%s710] ss:$4 sm:$0xff] %v681
      %s713 = scalar_lea.vmem [#allocation1], 2
      %714 = vst [vmem:[%s713] ss:$4 sm:$0xff] %v685
      %s716 = scalar_lea.vmem [#allocation1], 3
      %717 = vst [vmem:[%s716] ss:$4 sm:$0xff] %v689
      %v718 = vld.sshfl [vmem:[#allocation1] sm:$0xff pattern:$0x73625140]
      %v736 = vunpack.c.l.b16 %v691
      %v737 = vunpack.c.l.b16 %v692
      %v738 = vunpack.c.l.b16 %v693
      %v739 = vunpack.c.l.b16 %v694
      %v740 = vunpack.c.l.b16 %v695
      %v741 = vunpack.c.l.b16 %v696
      %v742 = vunpack.c.l.b16 %v697
      %v743 = vunpack.c.l.b16 %v698
      %v744 = vunpack.c.l.b16 %v699
      %v745 = vunpack.c.l.b16 %v700
      %v746 = vunpack.c.l.b16 %v701
      %v747 = vunpack.c.l.b16 %v702
      %v748 = vunpack.c.l.b16 %v703
      %v749 = vunpack.c.l.b16 %v704
      %v750 = vunpack.c.l.b16 %v705
      %v751 = vunpack.c.l.b16 %v706
      %v752 = vpack.c.b16 %v737, %v736
      %v753 = vpack.c.b16 %v739, %v738
      %v754 = vpack.c.b16 %v741, %v740
      %v755 = vpack.c.b16 %v743, %v742
      %v756 = vpack.c.b16 %v745, %v744
      %v757 = vpack.c.b16 %v747, %v746
      %v758 = vpack.c.b16 %v749, %v748
      %v759 = vpack.c.b16 %v751, %v750
      %768 = vmatpush.bf16.msra.mxu0 %v759
      %769 = vmatpush.bf16.msra.mxu0 %v758
      %770 = vmatpush.bf16.msra.mxu0 %v757
      %771 = vmatpush.bf16.msra.mxu0 %v756
      %772 = vmatpush.bf16.msra.mxu0 %v755
      %773 = vmatpush.bf16.msra.mxu0 %v754
      %774 = vmatpush.bf16.msra.mxu0 %v753
      %775 = vmatpush.bf16.msra.mxu0 %v752
      %776 = vmatmul.bf16.gmra.mxu0 %v718
      %v777 = vpop.f32.mrf.mxu0
      %v778 = vadd.f32 0.0, %v777
      %v779 = vpop.f32.mrf.mxu0
      %v780 = vadd.f32 0.0, %v779
      %781 = vdwg.mxu0
      %v782 = vadd.f32 %v623, %v778
      %v783 = vadd.f32 %v625, %v780
      %s784 = scalar_lea.vmem %s311, 4
      %v785 = vld [vmem:[%s784] sm:$0x3]
      %v786 = vld [vmem:[%s784 + $0x4] sm:$0x3]
      %v787 = vld [vmem:[%s784 + $0x8] sm:$0x3]
      %v788 = vld [vmem:[%s784 + $0xc] sm:$0x3]
      %s789 = scalar_lea.vmem %s3, 192
      %v790 = vld [vmem:[%s789] sm:$0xf]
      %v791 = vld [vmem:[%s789 + $0x4] sm:$0xf]
      %v792 = vld [vmem:[%s789 + $0x8] sm:$0xf]
      %v793 = vld [vmem:[%s789 + $0xc] sm:$0xf]
      %v794 = vld [vmem:[%s789 + $0x10] sm:$0xf]
      %v795 = vld [vmem:[%s789 + $0x14] sm:$0xf]
      %v796 = vld [vmem:[%s789 + $0x18] sm:$0xf]
      %v797 = vld [vmem:[%s789 + $0x1c] sm:$0xf]
      %v798 = vld [vmem:[%s789 + $0x20] sm:$0xf]
      %v799 = vld [vmem:[%s789 + $0x24] sm:$0xf]
      %v800 = vld [vmem:[%s789 + $0x28] sm:$0xf]
      %v801 = vld [vmem:[%s789 + $0x2c] sm:$0xf]
      %v802 = vld [vmem:[%s789 + $0x30] sm:$0xf]
      %v803 = vld [vmem:[%s789 + $0x34] sm:$0xf]
      %v804 = vld [vmem:[%s789 + $0x38] sm:$0xf]
      %v805 = vld [vmem:[%s789 + $0x3c] sm:$0xf]
      %807 = vst [vmem:[#allocation1] ss:$4 sm:$0xff] %v785
      %s809 = scalar_lea.vmem [#allocation1], 1
      %810 = vst [vmem:[%s809] ss:$4 sm:$0xff] %v786
      %s812 = scalar_lea.vmem [#allocation1], 2
      %813 = vst [vmem:[%s812] ss:$4 sm:$0xff] %v787
      %s815 = scalar_lea.vmem [#allocation1], 3
      %816 = vst [vmem:[%s815] ss:$4 sm:$0xff] %v788
      %v817 = vld.sshfl [vmem:[#allocation1] sm:$0xff pattern:$0x73625140]
      %v835 = vunpack.c.l.b16 %v790
      %v836 = vunpack.c.l.b16 %v791
      %v837 = vunpack.c.l.b16 %v792
      %v838 = vunpack.c.l.b16 %v793
      %v839 = vunpack.c.l.b16 %v794
      %v840 = vunpack.c.l.b16 %v795
      %v841 = vunpack.c.l.b16 %v796
      %v842 = vunpack.c.l.b16 %v797
      %v843 = vunpack.c.l.b16 %v798
      %v844 = vunpack.c.l.b16 %v799
      %v845 = vunpack.c.l.b16 %v800
      %v846 = vunpack.c.l.b16 %v801
      %v847 = vunpack.c.l.b16 %v802
      %v848 = vunpack.c.l.b16 %v803
      %v849 = vunpack.c.l.b16 %v804
      %v850 = vunpack.c.l.b16 %v805
      %v851 = vpack.c.b16 %v836, %v835
      %v852 = vpack.c.b16 %v838, %v837
      %v853 = vpack.c.b16 %v840, %v839
      %v854 = vpack.c.b16 %v842, %v841
      %v855 = vpack.c.b16 %v844, %v843
      %v856 = vpack.c.b16 %v846, %v845
      %v857 = vpack.c.b16 %v848, %v847
      %v858 = vpack.c.b16 %v850, %v849
      %867 = vmatpush.bf16.msra.mxu0 %v858
      %868 = vmatpush.bf16.msra.mxu0 %v857
      %869 = vmatpush.bf16.msra.mxu0 %v856
      %870 = vmatpush.bf16.msra.mxu0 %v855
      %871 = vmatpush.bf16.msra.mxu0 %v854
      %872 = vmatpush.bf16.msra.mxu0 %v853
      %873 = vmatpush.bf16.msra.mxu0 %v852
      %874 = vmatpush.bf16.msra.mxu0 %v851
      %875 = vmatmul.bf16.gmra.mxu0 %v817
      %v876 = vpop.f32.mrf.mxu0
      %v877 = vadd.f32 0.0, %v876
      %v878 = vpop.f32.mrf.mxu0
      %v879 = vadd.f32 0.0, %v878
      %880 = vdwg.mxu0
      %v881 = vadd.f32 %v782, %v877
      %v882 = vadd.f32 %v783, %v879
      %v883 = vld [vmem:[%s784] sm:$0x7]
      %v884 = vld [vmem:[%s784 + $0x4] sm:$0x7]
      %v885 = vld [vmem:[%s784 + $0x8] sm:$0x7]
      %v886 = vld [vmem:[%s784 + $0xc] sm:$0x7]
      %v891 = vrot.slane %v883, 2
      %v892 = vrot.slane %v884, 2
      %v893 = vrot.slane %v885, 2
      %v894 = vrot.slane %v886, 2
      %v897 = vsel %vm375, %v883, %v891
      %v898 = vsel %vm379, %v883, %v891
      %v900 = vrot.slane %v898, 2
      %v903 = vsel %vm375, %v884, %v892
      %v904 = vsel %vm379, %v884, %v892
      %v906 = vrot.slane %v904, 2
      %v909 = vsel %vm375, %v885, %v893
      %v910 = vsel %vm379, %v885, %v893
      %v912 = vrot.slane %v910, 2
      %v915 = vsel %vm375, %v886, %v894
      %v916 = vsel %vm379, %v886, %v894
      %v918 = vrot.slane %v916, 2
      %v919 = vshrl.u32 %v897, 16
      %v921 = vrot.slane %v919, 6
      %v922 = vshll.u32 %v897, 16
      %v924 = vrot.slane %v922, 7
      %v925 = vor.u32 %v921, %v924
      %v926 = vrot.slane %v925, 2
      %v928 = vshll.u32 %v900, 16
      %v930 = vrot.slane %v928, 7
      %v931 = vsel %vm407, %v926, %v930
      %v932 = vshrl.u32 %v903, 16
      %v934 = vrot.slane %v932, 6
      %v935 = vshll.u32 %v903, 16
      %v937 = vrot.slane %v935, 7
      %v938 = vor.u32 %v934, %v937
      %v939 = vrot.slane %v938, 2
      %v941 = vshll.u32 %v906, 16
      %v943 = vrot.slane %v941, 7
      %v944 = vsel %vm407, %v939, %v943
      %v945 = vshrl.u32 %v909, 16
      %v947 = vrot.slane %v945, 6
      %v948 = vshll.u32 %v909, 16
      %v950 = vrot.slane %v948, 7
      %v951 = vor.u32 %v947, %v950
      %v952 = vrot.slane %v951, 2
      %v954 = vshll.u32 %v912, 16
      %v956 = vrot.slane %v954, 7
      %v957 = vsel %vm407, %v952, %v956
      %v958 = vshrl.u32 %v915, 16
      %v960 = vrot.slane %v958, 6
      %v961 = vshll.u32 %v915, 16
      %v963 = vrot.slane %v961, 7
      %v964 = vor.u32 %v960, %v963
      %v965 = vrot.slane %v964, 2
      %v967 = vshll.u32 %v918, 16
      %v969 = vrot.slane %v967, 7
      %v970 = vsel %vm407, %v965, %v969
      %s971 = scalar_lea.vmem %s3, 256
      %v972 = vld [vmem:[%s971] sm:$0xf]
      %v973 = vld [vmem:[%s971 + $0x4] sm:$0xf]
      %v974 = vld [vmem:[%s971 + $0x8] sm:$0xf]
      %v975 = vld [vmem:[%s971 + $0xc] sm:$0xf]
      %v976 = vld [vmem:[%s971 + $0x10] sm:$0xf]
      %v977 = vld [vmem:[%s971 + $0x14] sm:$0xf]
      %v978 = vld [vmem:[%s971 + $0x18] sm:$0xf]
      %v979 = vld [vmem:[%s971 + $0x1c] sm:$0xf]
      %v980 = vld [vmem:[%s971 + $0x20] sm:$0xf]
      %v981 = vld [vmem:[%s971 + $0x24] sm:$0xf]
      %v982 = vld [vmem:[%s971 + $0x28] sm:$0xf]
      %v983 = vld [vmem:[%s971 + $0x2c] sm:$0xf]
      %v984 = vld [vmem:[%s971 + $0x30] sm:$0xf]
      %v985 = vld [vmem:[%s971 + $0x34] sm:$0xf]
      %v986 = vld [vmem:[%s971 + $0x38] sm:$0xf]
      %v987 = vld [vmem:[%s971 + $0x3c] sm:$0xf]
      %989 = vst [vmem:[#allocation1] ss:$4 sm:$0xff] %v931
      %s991 = scalar_lea.vmem [#allocation1], 1
      %992 = vst [vmem:[%s991] ss:$4 sm:$0xff] %v944
      %s994 = scalar_lea.vmem [#allocation1], 2
      %995 = vst [vmem:[%s994] ss:$4 sm:$0xff] %v957
      %s997 = scalar_lea.vmem [#allocation1], 3
      %998 = vst [vmem:[%s997] ss:$4 sm:$0xff] %v970
      %v999 = vld.sshfl [vmem:[#allocation1] sm:$0xff pattern:$0x73625140]
      %v1017 = vunpack.c.l.b16 %v972
      %v1018 = vunpack.c.l.b16 %v973
      %v1019 = vunpack.c.l.b16 %v974
      %v1020 = vunpack.c.l.b16 %v975
      %v1021 = vunpack.c.l.b16 %v976
      %v1022 = vunpack.c.l.b16 %v977
      %v1023 = vunpack.c.l.b16 %v978
      %v1024 = vunpack.c.l.b16 %v979
      %v1025 = vunpack.c.l.b16 %v980
      %v1026 = vunpack.c.l.b16 %v981
      %v1027 = vunpack.c.l.b16 %v982
      %v1028 = vunpack.c.l.b16 %v983
      %v1029 = vunpack.c.l.b16 %v984
      %v1030 = vunpack.c.l.b16 %v985
      %v1031 = vunpack.c.l.b16 %v986
      %v1032 = vunpack.c.l.b16 %v987
      %v1033 = vpack.c.b16 %v1018, %v1017
      %v1034 = vpack.c.b16 %v1020, %v1019
      %v1035 = vpack.c.b16 %v1022, %v1021
      %v1036 = vpack.c.b16 %v1024, %v1023
      %v1037 = vpack.c.b16 %v1026, %v1025
      %v1038 = vpack.c.b16 %v1028, %v1027
      %v1039 = vpack.c.b16 %v1030, %v1029
      %v1040 = vpack.c.b16 %v1032, %v1031
      %1049 = vmatpush.bf16.msra.mxu0 %v1040
      %1050 = vmatpush.bf16.msra.mxu0 %v1039
      %1051 = vmatpush.bf16.msra.mxu0 %v1038
      %1052 = vmatpush.bf16.msra.mxu0 %v1037
      %1053 = vmatpush.bf16.msra.mxu0 %v1036
      %1054 = vmatpush.bf16.msra.mxu0 %v1035
      %1055 = vmatpush.bf16.msra.mxu0 %v1034
      %1056 = vmatpush.bf16.msra.mxu0 %v1033
      %1057 = vmatmul.bf16.gmra.mxu0 %v999
      %v1058 = vpop.f32.mrf.mxu0
      %v1059 = vadd.f32 0.0, %v1058
      %v1060 = vpop.f32.mrf.mxu0
      %v1061 = vadd.f32 0.0, %v1060
      %1062 = vdwg.mxu0
      %v1063 = vadd.f32 %v881, %v1059
      %v1064 = vadd.f32 %v882, %v1061
      %v1065 = vld [vmem:[%s784] sm:$0x6]
      %v1066 = vld [vmem:[%s784 + $0x4] sm:$0x6]
      %v1067 = vld [vmem:[%s784 + $0x8] sm:$0x6]
      %v1068 = vld [vmem:[%s784 + $0xc] sm:$0x6]
      %v1073 = vrot.slane %v1065, 2
      %v1074 = vrot.slane %v1066, 2
      %v1075 = vrot.slane %v1067, 2
      %v1076 = vrot.slane %v1068, 2
      %v1079 = vsel %vm375, %v1065, %v1073
      %v1081 = vsel %vm379, %v1065, %v1073
      %v1083 = vrot.slane %v1081, 2
      %v1086 = vsel %vm375, %v1066, %v1074
      %v1088 = vsel %vm379, %v1066, %v1074
      %v1090 = vrot.slane %v1088, 2
      %v1093 = vsel %vm375, %v1067, %v1075
      %v1095 = vsel %vm379, %v1067, %v1075
      %v1097 = vrot.slane %v1095, 2
      %v1100 = vsel %vm375, %v1068, %v1076
      %v1102 = vsel %vm379, %v1068, %v1076
      %v1104 = vrot.slane %v1102, 2
      %v1105 = vrot.slane %v1079, 7
      %v1106 = vrot.slane %v1105, 2
      %v1107 = vrot.slane %v1083, 7
      %v1108 = vsel %vm673, %v1106, %v1107
      %v1109 = vrot.slane %v1086, 7
      %v1110 = vrot.slane %v1109, 2
      %v1111 = vrot.slane %v1090, 7
      %v1112 = vsel %vm673, %v1110, %v1111
      %v1113 = vrot.slane %v1093, 7
      %v1114 = vrot.slane %v1113, 2
      %v1115 = vrot.slane %v1097, 7
      %v1116 = vsel %vm673, %v1114, %v1115
      %v1117 = vrot.slane %v1100, 7
      %v1118 = vrot.slane %v1117, 2
      %v1119 = vrot.slane %v1104, 7
      %v1120 = vsel %vm673, %v1118, %v1119
      %s1121 = scalar_lea.vmem %s3, 320
      %v1122 = vld [vmem:[%s1121] sm:$0xf]
      %v1123 = vld [vmem:[%s1121 + $0x4] sm:$0xf]
      %v1124 = vld [vmem:[%s1121 + $0x8] sm:$0xf]
      %v1125 = vld [vmem:[%s1121 + $0xc] sm:$0xf]
      %v1126 = vld [vmem:[%s1121 + $0x10] sm:$0xf]
      %v1127 = vld [vmem:[%s1121 + $0x14] sm:$0xf]
      %v1128 = vld [vmem:[%s1121 + $0x18] sm:$0xf]
      %v1129 = vld [vmem:[%s1121 + $0x1c] sm:$0xf]
      %v1130 = vld [vmem:[%s1121 + $0x20] sm:$0xf]
      %v1131 = vld [vmem:[%s1121 + $0x24] sm:$0xf]
      %v1132 = vld [vmem:[%s1121 + $0x28] sm:$0xf]
      %v1133 = vld [vmem:[%s1121 + $0x2c] sm:$0xf]
      %v1134 = vld [vmem:[%s1121 + $0x30] sm:$0xf]
      %v1135 = vld [vmem:[%s1121 + $0x34] sm:$0xf]
      %v1136 = vld [vmem:[%s1121 + $0x38] sm:$0xf]
      %v1137 = vld [vmem:[%s1121 + $0x3c] sm:$0xf]
      %1139 = vst [vmem:[#allocation1] ss:$4 sm:$0xff] %v1108
      %s1141 = scalar_lea.vmem [#allocation1], 1
      %1142 = vst [vmem:[%s1141] ss:$4 sm:$0xff] %v1112
      %s1144 = scalar_lea.vmem [#allocation1], 2
      %1145 = vst [vmem:[%s1144] ss:$4 sm:$0xff] %v1116
      %s1147 = scalar_lea.vmem [#allocation1], 3
      %1148 = vst [vmem:[%s1147] ss:$4 sm:$0xff] %v1120
      %v1149 = vld.sshfl [vmem:[#allocation1] sm:$0xff pattern:$0x73625140]
      %v1167 = vunpack.c.l.b16 %v1122
      %v1168 = vunpack.c.l.b16 %v1123
      %v1169 = vunpack.c.l.b16 %v1124
      %v1170 = vunpack.c.l.b16 %v1125
      %v1171 = vunpack.c.l.b16 %v1126
      %v1172 = vunpack.c.l.b16 %v1127
      %v1173 = vunpack.c.l.b16 %v1128
      %v1174 = vunpack.c.l.b16 %v1129
      %v1175 = vunpack.c.l.b16 %v1130
      %v1176 = vunpack.c.l.b16 %v1131
      %v1177 = vunpack.c.l.b16 %v1132
      %v1178 = vunpack.c.l.b16 %v1133
      %v1179 = vunpack.c.l.b16 %v1134
      %v1180 = vunpack.c.l.b16 %v1135
      %v1181 = vunpack.c.l.b16 %v1136
      %v1182 = vunpack.c.l.b16 %v1137
      %v1183 = vpack.c.b16 %v1168, %v1167
      %v1184 = vpack.c.b16 %v1170, %v1169
      %v1185 = vpack.c.b16 %v1172, %v1171
      %v1186 = vpack.c.b16 %v1174, %v1173
      %v1187 = vpack.c.b16 %v1176, %v1175
      %v1188 = vpack.c.b16 %v1178, %v1177
      %v1189 = vpack.c.b16 %v1180, %v1179
      %v1190 = vpack.c.b16 %v1182, %v1181
      %1199 = vmatpush.bf16.msra.mxu0 %v1190
      %1200 = vmatpush.bf16.msra.mxu0 %v1189
      %1201 = vmatpush.bf16.msra.mxu0 %v1188
      %1202 = vmatpush.bf16.msra.mxu0 %v1187
      %1203 = vmatpush.bf16.msra.mxu0 %v1186
      %1204 = vmatpush.bf16.msra.mxu0 %v1185
      %1205 = vmatpush.bf16.msra.mxu0 %v1184
      %1206 = vmatpush.bf16.msra.mxu0 %v1183
      %1207 = vmatmul.bf16.gmra.mxu0 %v1149
      %v1208 = vpop.f32.mrf.mxu0
      %v1209 = vadd.f32 0.0, %v1208
      %v1210 = vpop.f32.mrf.mxu0
      %v1211 = vadd.f32 0.0, %v1210
      %1212 = vdwg.mxu0
      %v1213 = vadd.f32 %v1063, %v1209
      %v1214 = vadd.f32 %v1064, %v1211
      %s1215 = scalar_lea.vmem %s311, 8
      %v1216 = vld [vmem:[%s1215] sm:$0x3]
      %v1217 = vld [vmem:[%s1215 + $0x4] sm:$0x3]
      %v1218 = vld [vmem:[%s1215 + $0x8] sm:$0x3]
      %v1219 = vld [vmem:[%s1215 + $0xc] sm:$0x3]
      %s1220 = scalar_lea.vmem %s3, 384
      %v1221 = vld [vmem:[%s1220] sm:$0xf]
      %v1222 = vld [vmem:[%s1220 + $0x4] sm:$0xf]
      %v1223 = vld [vmem:[%s1220 + $0x8] sm:$0xf]
      %v1224 = vld [vmem:[%s1220 + $0xc] sm:$0xf]
      %v1225 = vld [vmem:[%s1220 + $0x10] sm:$0xf]
      %v1226 = vld [vmem:[%s1220 + $0x14] sm:$0xf]
      %v1227 = vld [vmem:[%s1220 + $0x18] sm:$0xf]
      %v1228 = vld [vmem:[%s1220 + $0x1c] sm:$0xf]
      %v1229 = vld [vmem:[%s1220 + $0x20] sm:$0xf]
      %v1230 = vld [vmem:[%s1220 + $0x24] sm:$0xf]
      %v1231 = vld [vmem:[%s1220 + $0x28] sm:$0xf]
      %v1232 = vld [vmem:[%s1220 + $0x2c] sm:$0xf]
      %v1233 = vld [vmem:[%s1220 + $0x30] sm:$0xf]
      %v1234 = vld [vmem:[%s1220 + $0x34] sm:$0xf]
      %v1235 = vld [vmem:[%s1220 + $0x38] sm:$0xf]
      %v1236 = vld [vmem:[%s1220 + $0x3c] sm:$0xf]
      %1238 = vst [vmem:[#allocation1] ss:$4 sm:$0xff] %v1216
      %s1240 = scalar_lea.vmem [#allocation1], 1
      %1241 = vst [vmem:[%s1240] ss:$4 sm:$0xff] %v1217
      %s1243 = scalar_lea.vmem [#allocation1], 2
      %1244 = vst [vmem:[%s1243] ss:$4 sm:$0xff] %v1218
      %s1246 = scalar_lea.vmem [#allocation1], 3
      %1247 = vst [vmem:[%s1246] ss:$4 sm:$0xff] %v1219
      %v1248 = vld.sshfl [vmem:[#allocation1] sm:$0xff pattern:$0x73625140]
      %v1266 = vunpack.c.l.b16 %v1221
      %v1267 = vunpack.c.l.b16 %v1222
      %v1268 = vunpack.c.l.b16 %v1223
      %v1269 = vunpack.c.l.b16 %v1224
      %v1270 = vunpack.c.l.b16 %v1225
      %v1271 = vunpack.c.l.b16 %v1226
      %v1272 = vunpack.c.l.b16 %v1227
      %v1273 = vunpack.c.l.b16 %v1228
      %v1274 = vunpack.c.l.b16 %v1229
      %v1275 = vunpack.c.l.b16 %v1230
      %v1276 = vunpack.c.l.b16 %v1231
      %v1277 = vunpack.c.l.b16 %v1232
      %v1278 = vunpack.c.l.b16 %v1233
      %v1279 = vunpack.c.l.b16 %v1234
      %v1280 = vunpack.c.l.b16 %v1235
      %v1281 = vunpack.c.l.b16 %v1236
      %v1282 = vpack.c.b16 %v1267, %v1266
      %v1283 = vpack.c.b16 %v1269, %v1268
      %v1284 = vpack.c.b16 %v1271, %v1270
      %v1285 = vpack.c.b16 %v1273, %v1272
      %v1286 = vpack.c.b16 %v1275, %v1274
      %v1287 = vpack.c.b16 %v1277, %v1276
      %v1288 = vpack.c.b16 %v1279, %v1278
      %v1289 = vpack.c.b16 %v1281, %v1280
      %1298 = vmatpush.bf16.msra.mxu0 %v1289
      %1299 = vmatpush.bf16.msra.mxu0 %v1288
      %1300 = vmatpush.bf16.msra.mxu0 %v1287
      %1301 = vmatpush.bf16.msra.mxu0 %v1286
      %1302 = vmatpush.bf16.msra.mxu0 %v1285
      %1303 = vmatpush.bf16.msra.mxu0 %v1284
      %1304 = vmatpush.bf16.msra.mxu0 %v1283
      %1305 = vmatpush.bf16.msra.mxu0 %v1282
      %1306 = vmatmul.bf16.gmra.mxu0 %v1248
      %v1307 = vpop.f32.mrf.mxu0
      %v1308 = vadd.f32 0.0, %v1307
      %v1309 = vpop.f32.mrf.mxu0
      %v1310 = vadd.f32 0.0, %v1309
      %1311 = vdwg.mxu0
      %v1312 = vadd.f32 %v1213, %v1308
      %v1313 = vadd.f32 %v1214, %v1310
      %v1314 = vld [vmem:[%s1215] sm:$0x7]
      %v1315 = vld [vmem:[%s1215 + $0x4] sm:$0x7]
      %v1316 = vld [vmem:[%s1215 + $0x8] sm:$0x7]
      %v1317 = vld [vmem:[%s1215 + $0xc] sm:$0x7]
      %v1322 = vrot.slane %v1314, 2
      %v1323 = vrot.slane %v1315, 2
      %v1324 = vrot.slane %v1316, 2
      %v1325 = vrot.slane %v1317, 2
      %v1328 = vsel %vm375, %v1314, %v1322
      %v1329 = vsel %vm379, %v1314, %v1322
      %v1331 = vrot.slane %v1329, 2
      %v1334 = vsel %vm375, %v1315, %v1323
      %v1335 = vsel %vm379, %v1315, %v1323
      %v1337 = vrot.slane %v1335, 2
      %v1340 = vsel %vm375, %v1316, %v1324
      %v1341 = vsel %vm379, %v1316, %v1324
      %v1343 = vrot.slane %v1341, 2
      %v1346 = vsel %vm375, %v1317, %v1325
      %v1347 = vsel %vm379, %v1317, %v1325
      %v1349 = vrot.slane %v1347, 2
      %v1350 = vshrl.u32 %v1328, 16
      %v1352 = vrot.slane %v1350, 6
      %v1353 = vshll.u32 %v1328, 16
      %v1355 = vrot.slane %v1353, 7
      %v1356 = vor.u32 %v1352, %v1355
      %v1357 = vrot.slane %v1356, 2
      %v1359 = vshll.u32 %v1331, 16
      %v1361 = vrot.slane %v1359, 7
      %v1362 = vsel %vm407, %v1357, %v1361
      %v1363 = vshrl.u32 %v1334, 16
      %v1365 = vrot.slane %v1363, 6
      %v1366 = vshll.u32 %v1334, 16
      %v1368 = vrot.slane %v1366, 7
      %v1369 = vor.u32 %v1365, %v1368
      %v1370 = vrot.slane %v1369, 2
      %v1372 = vshll.u32 %v1337, 16
      %v1374 = vrot.slane %v1372, 7
      %v1375 = vsel %vm407, %v1370, %v1374
      %v1376 = vshrl.u32 %v1340, 16
      %v1378 = vrot.slane %v1376, 6
      %v1379 = vshll.u32 %v1340, 16
      %v1381 = vrot.slane %v1379, 7
      %v1382 = vor.u32 %v1378, %v1381
      %v1383 = vrot.slane %v1382, 2
      %v1385 = vshll.u32 %v1343, 16
      %v1387 = vrot.slane %v1385, 7
      %v1388 = vsel %vm407, %v1383, %v1387
      %v1389 = vshrl.u32 %v1346, 16
      %v1391 = vrot.slane %v1389, 6
      %v1392 = vshll.u32 %v1346, 16
      %v1394 = vrot.slane %v1392, 7
      %v1395 = vor.u32 %v1391, %v1394
      %v1396 = vrot.slane %v1395, 2
      %v1398 = vshll.u32 %v1349, 16
      %v1400 = vrot.slane %v1398, 7
      %v1401 = vsel %vm407, %v1396, %v1400
      %s1402 = scalar_lea.vmem %s3, 448
      %v1403 = vld [vmem:[%s1402] sm:$0xf]
      %v1404 = vld [vmem:[%s1402 + $0x4] sm:$0xf]
      %v1405 = vld [vmem:[%s1402 + $0x8] sm:$0xf]
      %v1406 = vld [vmem:[%s1402 + $0xc] sm:$0xf]
      %v1407 = vld [vmem:[%s1402 + $0x10] sm:$0xf]
      %v1408 = vld [vmem:[%s1402 + $0x14] sm:$0xf]
      %v1409 = vld [vmem:[%s1402 + $0x18] sm:$0xf]
      %v1410 = vld [vmem:[%s1402 + $0x1c] sm:$0xf]
      %v1411 = vld [vmem:[%s1402 + $0x20] sm:$0xf]
      %v1412 = vld [vmem:[%s1402 + $0x24] sm:$0xf]
      %v1413 = vld [vmem:[%s1402 + $0x28] sm:$0xf]
      %v1414 = vld [vmem:[%s1402 + $0x2c] sm:$0xf]
      %v1415 = vld [vmem:[%s1402 + $0x30] sm:$0xf]
      %v1416 = vld [vmem:[%s1402 + $0x34] sm:$0xf]
      %v1417 = vld [vmem:[%s1402 + $0x38] sm:$0xf]
      %v1418 = vld [vmem:[%s1402 + $0x3c] sm:$0xf]
      %1420 = vst [vmem:[#allocation1] ss:$4 sm:$0xff] %v1362
      %s1422 = scalar_lea.vmem [#allocation1], 1
      %1423 = vst [vmem:[%s1422] ss:$4 sm:$0xff] %v1375
      %s1425 = scalar_lea.vmem [#allocation1], 2
      %1426 = vst [vmem:[%s1425] ss:$4 sm:$0xff] %v1388
      %s1428 = scalar_lea.vmem [#allocation1], 3
      %1429 = vst [vmem:[%s1428] ss:$4 sm:$0xff] %v1401
      %v1430 = vld.sshfl [vmem:[#allocation1] sm:$0xff pattern:$0x73625140]
      %v1448 = vunpack.c.l.b16 %v1403
      %v1449 = vunpack.c.l.b16 %v1404
      %v1450 = vunpack.c.l.b16 %v1405
      %v1451 = vunpack.c.l.b16 %v1406
      %v1452 = vunpack.c.l.b16 %v1407
      %v1453 = vunpack.c.l.b16 %v1408
      %v1454 = vunpack.c.l.b16 %v1409
      %v1455 = vunpack.c.l.b16 %v1410
      %v1456 = vunpack.c.l.b16 %v1411
      %v1457 = vunpack.c.l.b16 %v1412
      %v1458 = vunpack.c.l.b16 %v1413
      %v1459 = vunpack.c.l.b16 %v1414
      %v1460 = vunpack.c.l.b16 %v1415
      %v1461 = vunpack.c.l.b16 %v1416
      %v1462 = vunpack.c.l.b16 %v1417
      %v1463 = vunpack.c.l.b16 %v1418
      %v1464 = vpack.c.b16 %v1449, %v1448
      %v1465 = vpack.c.b16 %v1451, %v1450
      %v1466 = vpack.c.b16 %v1453, %v1452
      %v1467 = vpack.c.b16 %v1455, %v1454
      %v1468 = vpack.c.b16 %v1457, %v1456
      %v1469 = vpack.c.b16 %v1459, %v1458
      %v1470 = vpack.c.b16 %v1461, %v1460
      %v1471 = vpack.c.b16 %v1463, %v1462
      %1480 = vmatpush.bf16.msra.mxu0 %v1471
      %1481 = vmatpush.bf16.msra.mxu0 %v1470
      %1482 = vmatpush.bf16.msra.mxu0 %v1469
      %1483 = vmatpush.bf16.msra.mxu0 %v1468
      %1484 = vmatpush.bf16.msra.mxu0 %v1467
      %1485 = vmatpush.bf16.msra.mxu0 %v1466
      %1486 = vmatpush.bf16.msra.mxu0 %v1465
      %1487 = vmatpush.bf16.msra.mxu0 %v1464
      %1488 = vmatmul.bf16.gmra.mxu0 %v1430
      %v1489 = vpop.f32.mrf.mxu0
      %v1490 = vadd.f32 0.0, %v1489
      %v1491 = vpop.f32.mrf.mxu0
      %v1492 = vadd.f32 0.0, %v1491
      %1493 = vdwg.mxu0
      %v1494 = vadd.f32 %v1312, %v1490
      %v1495 = vadd.f32 %v1313, %v1492
      %v1496 = vld [vmem:[%s1215] sm:$0x6]
      %v1497 = vld [vmem:[%s1215 + $0x4] sm:$0x6]
      %v1498 = vld [vmem:[%s1215 + $0x8] sm:$0x6]
      %v1499 = vld [vmem:[%s1215 + $0xc] sm:$0x6]
      %v1504 = vrot.slane %v1496, 2
      %v1505 = vrot.slane %v1497, 2
      %v1506 = vrot.slane %v1498, 2
      %v1507 = vrot.slane %v1499, 2
      %v1510 = vsel %vm375, %v1496, %v1504
      %v1512 = vsel %vm379, %v1496, %v1504
      %v1514 = vrot.slane %v1512, 2
      %v1517 = vsel %vm375, %v1497, %v1505
      %v1519 = vsel %vm379, %v1497, %v1505
      %v1521 = vrot.slane %v1519, 2
      %v1524 = vsel %vm375, %v1498, %v1506
      %v1526 = vsel %vm379, %v1498, %v1506
      %v1528 = vrot.slane %v1526, 2
      %v1531 = vsel %vm375, %v1499, %v1507
      %v1533 = vsel %vm379, %v1499, %v1507
      %v1535 = vrot.slane %v1533, 2
      %v1536 = vrot.slane %v1510, 7
      %v1537 = vrot.slane %v1536, 2
      %v1538 = vrot.slane %v1514, 7
      %v1539 = vsel %vm673, %v1537, %v1538
      %v1540 = vrot.slane %v1517, 7
      %v1541 = vrot.slane %v1540, 2
      %v1542 = vrot.slane %v1521, 7
      %v1543 = vsel %vm673, %v1541, %v1542
      %v1544 = vrot.slane %v1524, 7
      %v1545 = vrot.slane %v1544, 2
      %v1546 = vrot.slane %v1528, 7
      %v1547 = vsel %vm673, %v1545, %v1546
      %v1548 = vrot.slane %v1531, 7
      %v1549 = vrot.slane %v1548, 2
      %v1550 = vrot.slane %v1535, 7
      %v1551 = vsel %vm673, %v1549, %v1550
      %s1552 = scalar_lea.vmem %s3, 512
      %v1553 = vld [vmem:[%s1552] sm:$0xf]
      %v1554 = vld [vmem:[%s1552 + $0x4] sm:$0xf]
      %v1555 = vld [vmem:[%s1552 + $0x8] sm:$0xf]
      %v1556 = vld [vmem:[%s1552 + $0xc] sm:$0xf]
      %v1557 = vld [vmem:[%s1552 + $0x10] sm:$0xf]
      %v1558 = vld [vmem:[%s1552 + $0x14] sm:$0xf]
      %v1559 = vld [vmem:[%s1552 + $0x18] sm:$0xf]
      %v1560 = vld [vmem:[%s1552 + $0x1c] sm:$0xf]
      %v1561 = vld [vmem:[%s1552 + $0x20] sm:$0xf]
      %v1562 = vld [vmem:[%s1552 + $0x24] sm:$0xf]
      %v1563 = vld [vmem:[%s1552 + $0x28] sm:$0xf]
      %v1564 = vld [vmem:[%s1552 + $0x2c] sm:$0xf]
      %v1565 = vld [vmem:[%s1552 + $0x30] sm:$0xf]
      %v1566 = vld [vmem:[%s1552 + $0x34] sm:$0xf]
      %v1567 = vld [vmem:[%s1552 + $0x38] sm:$0xf]
      %v1568 = vld [vmem:[%s1552 + $0x3c] sm:$0xf]
      %1570 = vst [vmem:[#allocation1] ss:$4 sm:$0xff] %v1539
      %s1572 = scalar_lea.vmem [#allocation1], 1
      %1573 = vst [vmem:[%s1572] ss:$4 sm:$0xff] %v1543
      %s1575 = scalar_lea.vmem [#allocation1], 2
      %1576 = vst [vmem:[%s1575] ss:$4 sm:$0xff] %v1547
      %s1578 = scalar_lea.vmem [#allocation1], 3
      %1579 = vst [vmem:[%s1578] ss:$4 sm:$0xff] %v1551
      %v1580 = vld.sshfl [vmem:[#allocation1] sm:$0xff pattern:$0x73625140]
      %v1598 = vunpack.c.l.b16 %v1553
      %v1599 = vunpack.c.l.b16 %v1554
      %v1600 = vunpack.c.l.b16 %v1555
      %v1601 = vunpack.c.l.b16 %v1556
      %v1602 = vunpack.c.l.b16 %v1557
      %v1603 = vunpack.c.l.b16 %v1558
      %v1604 = vunpack.c.l.b16 %v1559
      %v1605 = vunpack.c.l.b16 %v1560
      %v1606 = vunpack.c.l.b16 %v1561
      %v1607 = vunpack.c.l.b16 %v1562
      %v1608 = vunpack.c.l.b16 %v1563
      %v1609 = vunpack.c.l.b16 %v1564
      %v1610 = vunpack.c.l.b16 %v1565
      %v1611 = vunpack.c.l.b16 %v1566
      %v1612 = vunpack.c.l.b16 %v1567
      %v1613 = vunpack.c.l.b16 %v1568
      %v1614 = vpack.c.b16 %v1599, %v1598
      %v1615 = vpack.c.b16 %v1601, %v1600
      %v1616 = vpack.c.b16 %v1603, %v1602
      %v1617 = vpack.c.b16 %v1605, %v1604
      %v1618 = vpack.c.b16 %v1607, %v1606
      %v1619 = vpack.c.b16 %v1609, %v1608
      %v1620 = vpack.c.b16 %v1611, %v1610
      %v1621 = vpack.c.b16 %v1613, %v1612
      %1630 = vmatpush.bf16.msra.mxu0 %v1621
      %1631 = vmatpush.bf16.msra.mxu0 %v1620
      %1632 = vmatpush.bf16.msra.mxu0 %v1619
      %1633 = vmatpush.bf16.msra.mxu0 %v1618
      %1634 = vmatpush.bf16.msra.mxu0 %v1617
      %1635 = vmatpush.bf16.msra.mxu0 %v1616
      %1636 = vmatpush.bf16.msra.mxu0 %v1615
      %1637 = vmatpush.bf16.msra.mxu0 %v1614
      %1638 = vmatmul.bf16.gmra.mxu0 %v1580
      %v1639 = vpop.f32.mrf.mxu0
      %v1640 = vadd.f32 0.0, %v1639
      %v1641 = vpop.f32.mrf.mxu0
      %v1642 = vadd.f32 0.0, %v1641
      %1643 = vdwg.mxu0
      %v1644 = vadd.f32 %v1494, %v1640
      %v1645 = vadd.f32 %v1495, %v1642
      %v1646 = vld [vmem:[%s321] sm:$0x3]
      %v1647 = vld [vmem:[%s321 + $0x4] sm:$0x3]
      %v1648 = vld [vmem:[%s321 + $0x8] sm:$0x3]
      %v1649 = vld [vmem:[%s321 + $0xc] sm:$0x3]
      %s1650 = scalar_lea.vmem %s3, 576
      %v1651 = vld [vmem:[%s1650] sm:$0xf]
      %v1652 = vld [vmem:[%s1650 + $0x4] sm:$0xf]
      %v1653 = vld [vmem:[%s1650 + $0x8] sm:$0xf]
      %v1654 = vld [vmem:[%s1650 + $0xc] sm:$0xf]
      %v1655 = vld [vmem:[%s1650 + $0x10] sm:$0xf]
      %v1656 = vld [vmem:[%s1650 + $0x14] sm:$0xf]
      %v1657 = vld [vmem:[%s1650 + $0x18] sm:$0xf]
      %v1658 = vld [vmem:[%s1650 + $0x1c] sm:$0xf]
      %v1659 = vld [vmem:[%s1650 + $0x20] sm:$0xf]
      %v1660 = vld [vmem:[%s1650 + $0x24] sm:$0xf]
      %v1661 = vld [vmem:[%s1650 + $0x28] sm:$0xf]
      %v1662 = vld [vmem:[%s1650 + $0x2c] sm:$0xf]
      %v1663 = vld [vmem:[%s1650 + $0x30] sm:$0xf]
      %v1664 = vld [vmem:[%s1650 + $0x34] sm:$0xf]
      %v1665 = vld [vmem:[%s1650 + $0x38] sm:$0xf]
      %v1666 = vld [vmem:[%s1650 + $0x3c] sm:$0xf]
      %1668 = vst [vmem:[#allocation1] ss:$4 sm:$0xff] %v1646
      %s1670 = scalar_lea.vmem [#allocation1], 1
      %1671 = vst [vmem:[%s1670] ss:$4 sm:$0xff] %v1647
      %s1673 = scalar_lea.vmem [#allocation1], 2
      %1674 = vst [vmem:[%s1673] ss:$4 sm:$0xff] %v1648
      %s1676 = scalar_lea.vmem [#allocation1], 3
      %1677 = vst [vmem:[%s1676] ss:$4 sm:$0xff] %v1649
      %v1678 = vld.sshfl [vmem:[#allocation1] sm:$0xff pattern:$0x73625140]
      %v1696 = vunpack.c.l.b16 %v1651
      %v1697 = vunpack.c.l.b16 %v1652
      %v1698 = vunpack.c.l.b16 %v1653
      %v1699 = vunpack.c.l.b16 %v1654
      %v1700 = vunpack.c.l.b16 %v1655
      %v1701 = vunpack.c.l.b16 %v1656
      %v1702 = vunpack.c.l.b16 %v1657
      %v1703 = vunpack.c.l.b16 %v1658
      %v1704 = vunpack.c.l.b16 %v1659
      %v1705 = vunpack.c.l.b16 %v1660
      %v1706 = vunpack.c.l.b16 %v1661
      %v1707 = vunpack.c.l.b16 %v1662
      %v1708 = vunpack.c.l.b16 %v1663
      %v1709 = vunpack.c.l.b16 %v1664
      %v1710 = vunpack.c.l.b16 %v1665
      %v1711 = vunpack.c.l.b16 %v1666
      %v1712 = vpack.c.b16 %v1697, %v1696
      %v1713 = vpack.c.b16 %v1699, %v1698
      %v1714 = vpack.c.b16 %v1701, %v1700
      %v1715 = vpack.c.b16 %v1703, %v1702
      %v1716 = vpack.c.b16 %v1705, %v1704
      %v1717 = vpack.c.b16 %v1707, %v1706
      %v1718 = vpack.c.b16 %v1709, %v1708
      %v1719 = vpack.c.b16 %v1711, %v1710
      %1728 = vmatpush.bf16.msra.mxu0 %v1719
      %1729 = vmatpush.bf16.msra.mxu0 %v1718
      %1730 = vmatpush.bf16.msra.mxu0 %v1717
      %1731 = vmatpush.bf16.msra.mxu0 %v1716
      %1732 = vmatpush.bf16.msra.mxu0 %v1715
      %1733 = vmatpush.bf16.msra.mxu0 %v1714
      %1734 = vmatpush.bf16.msra.mxu0 %v1713
      %1735 = vmatpush.bf16.msra.mxu0 %v1712
      %1736 = vmatmul.bf16.gmra.mxu0 %v1678
      %v1737 = vpop.f32.mrf.mxu0
      %v1738 = vadd.f32 0.0, %v1737
      %v1739 = vpop.f32.mrf.mxu0
      %v1740 = vadd.f32 0.0, %v1739
      %1741 = vdwg.mxu0
      %v1742 = vadd.f32 %v1644, %v1738
      %v1743 = vadd.f32 %v1645, %v1740
      %v1744 = vld [vmem:[%s321] sm:$0x7]
      %v1745 = vld [vmem:[%s321 + $0x4] sm:$0x7]
      %v1746 = vld [vmem:[%s321 + $0x8] sm:$0x7]
      %v1747 = vld [vmem:[%s321 + $0xc] sm:$0x7]
      %v1752 = vrot.slane %v1744, 2
      %v1753 = vrot.slane %v1745, 2
      %v1754 = vrot.slane %v1746, 2
      %v1755 = vrot.slane %v1747, 2
      %v1758 = vsel %vm375, %v1744, %v1752
      %v1759 = vsel %vm379, %v1744, %v1752
      %v1761 = vrot.slane %v1759, 2
      %v1764 = vsel %vm375, %v1745, %v1753
      %v1765 = vsel %vm379, %v1745, %v1753
      %v1767 = vrot.slane %v1765, 2
      %v1770 = vsel %vm375, %v1746, %v1754
      %v1771 = vsel %vm379, %v1746, %v1754
      %v1773 = vrot.slane %v1771, 2
      %v1776 = vsel %vm375, %v1747, %v1755
      %v1777 = vsel %vm379, %v1747, %v1755
      %v1779 = vrot.slane %v1777, 2
      %v1780 = vshrl.u32 %v1758, 16
      %v1782 = vrot.slane %v1780, 6
      %v1783 = vshll.u32 %v1758, 16
      %v1785 = vrot.slane %v1783, 7
      %v1786 = vor.u32 %v1782, %v1785
      %v1787 = vrot.slane %v1786, 2
      %v1789 = vshll.u32 %v1761, 16
      %v1791 = vrot.slane %v1789, 7
      %v1792 = vsel %vm407, %v1787, %v1791
      %v1793 = vshrl.u32 %v1764, 16
      %v1795 = vrot.slane %v1793, 6
      %v1796 = vshll.u32 %v1764, 16
      %v1798 = vrot.slane %v1796, 7
      %v1799 = vor.u32 %v1795, %v1798
      %v1800 = vrot.slane %v1799, 2
      %v1802 = vshll.u32 %v1767, 16
      %v1804 = vrot.slane %v1802, 7
      %v1805 = vsel %vm407, %v1800, %v1804
      %v1806 = vshrl.u32 %v1770, 16
      %v1808 = vrot.slane %v1806, 6
      %v1809 = vshll.u32 %v1770, 16
      %v1811 = vrot.slane %v1809, 7
      %v1812 = vor.u32 %v1808, %v1811
      %v1813 = vrot.slane %v1812, 2
      %v1815 = vshll.u32 %v1773, 16
      %v1817 = vrot.slane %v1815, 7
      %v1818 = vsel %vm407, %v1813, %v1817
      %v1819 = vshrl.u32 %v1776, 16
      %v1821 = vrot.slane %v1819, 6
      %v1822 = vshll.u32 %v1776, 16
      %v1824 = vrot.slane %v1822, 7
      %v1825 = vor.u32 %v1821, %v1824
      %v1826 = vrot.slane %v1825, 2
      %v1828 = vshll.u32 %v1779, 16
      %v1830 = vrot.slane %v1828, 7
      %v1831 = vsel %vm407, %v1826, %v1830
      %s1832 = scalar_lea.vmem %s3, 640
      %v1833 = vld [vmem:[%s1832] sm:$0xf]
      %v1834 = vld [vmem:[%s1832 + $0x4] sm:$0xf]
      %v1835 = vld [vmem:[%s1832 + $0x8] sm:$0xf]
      %v1836 = vld [vmem:[%s1832 + $0xc] sm:$0xf]
      %v1837 = vld [vmem:[%s1832 + $0x10] sm:$0xf]
      %v1838 = vld [vmem:[%s1832 + $0x14] sm:$0xf]
      %v1839 = vld [vmem:[%s1832 + $0x18] sm:$0xf]
      %v1840 = vld [vmem:[%s1832 + $0x1c] sm:$0xf]
      %v1841 = vld [vmem:[%s1832 + $0x20] sm:$0xf]
      %v1842 = vld [vmem:[%s1832 + $0x24] sm:$0xf]
      %v1843 = vld [vmem:[%s1832 + $0x28] sm:$0xf]
      %v1844 = vld [vmem:[%s1832 + $0x2c] sm:$0xf]
      %v1845 = vld [vmem:[%s1832 + $0x30] sm:$0xf]
      %v1846 = vld [vmem:[%s1832 + $0x34] sm:$0xf]
      %v1847 = vld [vmem:[%s1832 + $0x38] sm:$0xf]
      %v1848 = vld [vmem:[%s1832 + $0x3c] sm:$0xf]
      %1850 = vst [vmem:[#allocation1] ss:$4 sm:$0xff] %v1792
      %s1852 = scalar_lea.vmem [#allocation1], 1
      %1853 = vst [vmem:[%s1852] ss:$4 sm:$0xff] %v1805
      %s1855 = scalar_lea.vmem [#allocation1], 2
      %1856 = vst [vmem:[%s1855] ss:$4 sm:$0xff] %v1818
      %s1858 = scalar_lea.vmem [#allocation1], 3
      %1859 = vst [vmem:[%s1858] ss:$4 sm:$0xff] %v1831
      %v1860 = vld.sshfl [vmem:[#allocation1] sm:$0xff pattern:$0x73625140]
      %v1878 = vunpack.c.l.b16 %v1833
      %v1879 = vunpack.c.l.b16 %v1834
      %v1880 = vunpack.c.l.b16 %v1835
      %v1881 = vunpack.c.l.b16 %v1836
      %v1882 = vunpack.c.l.b16 %v1837
      %v1883 = vunpack.c.l.b16 %v1838
      %v1884 = vunpack.c.l.b16 %v1839
      %v1885 = vunpack.c.l.b16 %v1840
      %v1886 = vunpack.c.l.b16 %v1841
      %v1887 = vunpack.c.l.b16 %v1842
      %v1888 = vunpack.c.l.b16 %v1843
      %v1889 = vunpack.c.l.b16 %v1844
      %v1890 = vunpack.c.l.b16 %v1845
      %v1891 = vunpack.c.l.b16 %v1846
      %v1892 = vunpack.c.l.b16 %v1847
      %v1893 = vunpack.c.l.b16 %v1848
      %v1894 = vpack.c.b16 %v1879, %v1878
      %v1895 = vpack.c.b16 %v1881, %v1880
      %v1896 = vpack.c.b16 %v1883, %v1882
      %v1897 = vpack.c.b16 %v1885, %v1884
      %v1898 = vpack.c.b16 %v1887, %v1886
      %v1899 = vpack.c.b16 %v1889, %v1888
      %v1900 = vpack.c.b16 %v1891, %v1890
      %v1901 = vpack.c.b16 %v1893, %v1892
      %1910 = vmatpush.bf16.msra.mxu0 %v1901
      %1911 = vmatpush.bf16.msra.mxu0 %v1900
      %1912 = vmatpush.bf16.msra.mxu0 %v1899
      %1913 = vmatpush.bf16.msra.mxu0 %v1898
      %1914 = vmatpush.bf16.msra.mxu0 %v1897
      %1915 = vmatpush.bf16.msra.mxu0 %v1896
      %1916 = vmatpush.bf16.msra.mxu0 %v1895
      %1917 = vmatpush.bf16.msra.mxu0 %v1894
      %1918 = vmatmul.bf16.gmra.mxu0 %v1860
      %v1919 = vpop.f32.mrf.mxu0
      %v1920 = vadd.f32 0.0, %v1919
      %v1921 = vpop.f32.mrf.mxu0
      %v1922 = vadd.f32 0.0, %v1921
      %1923 = vdwg.mxu0
      %v1924 = vadd.f32 %v1742, %v1920
      %v1925 = vadd.f32 %v1743, %v1922
      %v1926 = vld [vmem:[%s321] sm:$0x6]
      %v1927 = vld [vmem:[%s321 + $0x4] sm:$0x6]
      %v1928 = vld [vmem:[%s321 + $0x8] sm:$0x6]
      %v1929 = vld [vmem:[%s321 + $0xc] sm:$0x6]
      %v1934 = vrot.slane %v1926, 2
      %v1935 = vrot.slane %v1927, 2
      %v1936 = vrot.slane %v1928, 2
      %v1937 = vrot.slane %v1929, 2
      %v1940 = vsel %vm375, %v1926, %v1934
      %v1942 = vsel %vm379, %v1926, %v1934
      %v1944 = vrot.slane %v1942, 2
      %v1947 = vsel %vm375, %v1927, %v1935
      %v1949 = vsel %vm379, %v1927, %v1935
      %v1951 = vrot.slane %v1949, 2
      %v1954 = vsel %vm375, %v1928, %v1936
      %v1956 = vsel %vm379, %v1928, %v1936
      %v1958 = vrot.slane %v1956, 2
      %v1961 = vsel %vm375, %v1929, %v1937
      %v1963 = vsel %vm379, %v1929, %v1937
      %v1965 = vrot.slane %v1963, 2
      %v1966 = vrot.slane %v1940, 7
      %v1967 = vrot.slane %v1966, 2
      %v1968 = vrot.slane %v1944, 7
      %v1969 = vsel %vm673, %v1967, %v1968
      %v1970 = vrot.slane %v1947, 7
      %v1971 = vrot.slane %v1970, 2
      %v1972 = vrot.slane %v1951, 7
      %v1973 = vsel %vm673, %v1971, %v1972
      %v1974 = vrot.slane %v1954, 7
      %v1975 = vrot.slane %v1974, 2
      %v1976 = vrot.slane %v1958, 7
      %v1977 = vsel %vm673, %v1975, %v1976
      %v1978 = vrot.slane %v1961, 7
      %v1979 = vrot.slane %v1978, 2
      %v1980 = vrot.slane %v1965, 7
      %v1981 = vsel %vm673, %v1979, %v1980
      %s1982 = scalar_lea.vmem %s3, 704
      %v1983 = vld [vmem:[%s1982] sm:$0xf]
      %v1984 = vld [vmem:[%s1982 + $0x4] sm:$0xf]
      %v1985 = vld [vmem:[%s1982 + $0x8] sm:$0xf]
      %v1986 = vld [vmem:[%s1982 + $0xc] sm:$0xf]
      %v1987 = vld [vmem:[%s1982 + $0x10] sm:$0xf]
      %v1988 = vld [vmem:[%s1982 + $0x14] sm:$0xf]
      %v1989 = vld [vmem:[%s1982 + $0x18] sm:$0xf]
      %v1990 = vld [vmem:[%s1982 + $0x1c] sm:$0xf]
      %v1991 = vld [vmem:[%s1982 + $0x20] sm:$0xf]
      %v1992 = vld [vmem:[%s1982 + $0x24] sm:$0xf]
      %v1993 = vld [vmem:[%s1982 + $0x28] sm:$0xf]
      %v1994 = vld [vmem:[%s1982 + $0x2c] sm:$0xf]
      %v1995 = vld [vmem:[%s1982 + $0x30] sm:$0xf]
      %v1996 = vld [vmem:[%s1982 + $0x34] sm:$0xf]
      %v1997 = vld [vmem:[%s1982 + $0x38] sm:$0xf]
      %v1998 = vld [vmem:[%s1982 + $0x3c] sm:$0xf]
      %2000 = vst [vmem:[#allocation1] ss:$4 sm:$0xff] %v1969
      %s2002 = scalar_lea.vmem [#allocation1], 1
      %2003 = vst [vmem:[%s2002] ss:$4 sm:$0xff] %v1973
      %s2005 = scalar_lea.vmem [#allocation1], 2
      %2006 = vst [vmem:[%s2005] ss:$4 sm:$0xff] %v1977
      %s2008 = scalar_lea.vmem [#allocation1], 3
      %2009 = vst [vmem:[%s2008] ss:$4 sm:$0xff] %v1981
      %v2010 = vld.sshfl [vmem:[#allocation1] sm:$0xff pattern:$0x73625140]
      %v2028 = vunpack.c.l.b16 %v1983
      %v2029 = vunpack.c.l.b16 %v1984
      %v2030 = vunpack.c.l.b16 %v1985
      %v2031 = vunpack.c.l.b16 %v1986
      %v2032 = vunpack.c.l.b16 %v1987
      %v2033 = vunpack.c.l.b16 %v1988
      %v2034 = vunpack.c.l.b16 %v1989
      %v2035 = vunpack.c.l.b16 %v1990
      %v2036 = vunpack.c.l.b16 %v1991
      %v2037 = vunpack.c.l.b16 %v1992
      %v2038 = vunpack.c.l.b16 %v1993
      %v2039 = vunpack.c.l.b16 %v1994
      %v2040 = vunpack.c.l.b16 %v1995
      %v2041 = vunpack.c.l.b16 %v1996
      %v2042 = vunpack.c.l.b16 %v1997
      %v2043 = vunpack.c.l.b16 %v1998
      %v2044 = vpack.c.b16 %v2029, %v2028
      %v2045 = vpack.c.b16 %v2031, %v2030
      %v2046 = vpack.c.b16 %v2033, %v2032
      %v2047 = vpack.c.b16 %v2035, %v2034
      %v2048 = vpack.c.b16 %v2037, %v2036
      %v2049 = vpack.c.b16 %v2039, %v2038
      %v2050 = vpack.c.b16 %v2041, %v2040
      %v2051 = vpack.c.b16 %v2043, %v2042
      %2060 = vmatpush.bf16.msra.mxu0 %v2051
      %2061 = vmatpush.bf16.msra.mxu0 %v2050
      %2062 = vmatpush.bf16.msra.mxu0 %v2049
      %2063 = vmatpush.bf16.msra.mxu0 %v2048
      %2064 = vmatpush.bf16.msra.mxu0 %v2047
      %2065 = vmatpush.bf16.msra.mxu0 %v2046
      %2066 = vmatpush.bf16.msra.mxu0 %v2045
      %2067 = vmatpush.bf16.msra.mxu0 %v2044
      %2068 = vmatmul.bf16.gmra.mxu0 %v2010
      %v2069 = vpop.f32.mrf.mxu0
      %v2070 = vadd.f32 0.0, %v2069
      %v2071 = vpop.f32.mrf.mxu0
      %v2072 = vadd.f32 0.0, %v2071
      %2073 = vdwg.mxu0
      %v2074 = vadd.f32 %v1924, %v2070
      %v2075 = vadd.f32 %v1925, %v2072
      %s2076 = scalar_lea.vmem %s321, 4
      %v2077 = vld [vmem:[%s2076] sm:$0x3]
      %v2078 = vld [vmem:[%s2076 + $0x4] sm:$0x3]
      %v2079 = vld [vmem:[%s2076 + $0x8] sm:$0x3]
      %v2080 = vld [vmem:[%s2076 + $0xc] sm:$0x3]
      %s2081 = scalar_lea.vmem %s3, 768
      %v2082 = vld [vmem:[%s2081] sm:$0xf]
      %v2083 = vld [vmem:[%s2081 + $0x4] sm:$0xf]
      %v2084 = vld [vmem:[%s2081 + $0x8] sm:$0xf]
      %v2085 = vld [vmem:[%s2081 + $0xc] sm:$0xf]
      %v2086 = vld [vmem:[%s2081 + $0x10] sm:$0xf]
      %v2087 = vld [vmem:[%s2081 + $0x14] sm:$0xf]
      %v2088 = vld [vmem:[%s2081 + $0x18] sm:$0xf]
      %v2089 = vld [vmem:[%s2081 + $0x1c] sm:$0xf]
      %v2090 = vld [vmem:[%s2081 + $0x20] sm:$0xf]
      %v2091 = vld [vmem:[%s2081 + $0x24] sm:$0xf]
      %v2092 = vld [vmem:[%s2081 + $0x28] sm:$0xf]
      %v2093 = vld [vmem:[%s2081 + $0x2c] sm:$0xf]
      %v2094 = vld [vmem:[%s2081 + $0x30] sm:$0xf]
      %v2095 = vld [vmem:[%s2081 + $0x34] sm:$0xf]
      %v2096 = vld [vmem:[%s2081 + $0x38] sm:$0xf]
      %v2097 = vld [vmem:[%s2081 + $0x3c] sm:$0xf]
      %2099 = vst [vmem:[#allocation1] ss:$4 sm:$0xff] %v2077
      %s2101 = scalar_lea.vmem [#allocation1], 1
      %2102 = vst [vmem:[%s2101] ss:$4 sm:$0xff] %v2078
      %s2104 = scalar_lea.vmem [#allocation1], 2
      %2105 = vst [vmem:[%s2104] ss:$4 sm:$0xff] %v2079
      %s2107 = scalar_lea.vmem [#allocation1], 3
      %2108 = vst [vmem:[%s2107] ss:$4 sm:$0xff] %v2080
      %v2109 = vld.sshfl [vmem:[#allocation1] sm:$0xff pattern:$0x73625140]
      %v2127 = vunpack.c.l.b16 %v2082
      %v2128 = vunpack.c.l.b16 %v2083
      %v2129 = vunpack.c.l.b16 %v2084
      %v2130 = vunpack.c.l.b16 %v2085
      %v2131 = vunpack.c.l.b16 %v2086
      %v2132 = vunpack.c.l.b16 %v2087
      %v2133 = vunpack.c.l.b16 %v2088
      %v2134 = vunpack.c.l.b16 %v2089
      %v2135 = vunpack.c.l.b16 %v2090
      %v2136 = vunpack.c.l.b16 %v2091
      %v2137 = vunpack.c.l.b16 %v2092
      %v2138 = vunpack.c.l.b16 %v2093
      %v2139 = vunpack.c.l.b16 %v2094
      %v2140 = vunpack.c.l.b16 %v2095
      %v2141 = vunpack.c.l.b16 %v2096
      %v2142 = vunpack.c.l.b16 %v2097
      %v2143 = vpack.c.b16 %v2128, %v2127
      %v2144 = vpack.c.b16 %v2130, %v2129
      %v2145 = vpack.c.b16 %v2132, %v2131
      %v2146 = vpack.c.b16 %v2134, %v2133
      %v2147 = vpack.c.b16 %v2136, %v2135
      %v2148 = vpack.c.b16 %v2138, %v2137
      %v2149 = vpack.c.b16 %v2140, %v2139
      %v2150 = vpack.c.b16 %v2142, %v2141
      %2159 = vmatpush.bf16.msra.mxu0 %v2150
      %2160 = vmatpush.bf16.msra.mxu0 %v2149
      %2161 = vmatpush.bf16.msra.mxu0 %v2148
      %2162 = vmatpush.bf16.msra.mxu0 %v2147
      %2163 = vmatpush.bf16.msra.mxu0 %v2146
      %2164 = vmatpush.bf16.msra.mxu0 %v2145
      %2165 = vmatpush.bf16.msra.mxu0 %v2144
      %2166 = vmatpush.bf16.msra.mxu0 %v2143
      %2167 = vmatmul.bf16.gmra.mxu0 %v2109
      %v2168 = vpop.f32.mrf.mxu0
      %v2169 = vadd.f32 0.0, %v2168
      %v2170 = vpop.f32.mrf.mxu0
      %v2171 = vadd.f32 0.0, %v2170
      %2172 = vdwg.mxu0
      %v2173 = vadd.f32 %v2074, %v2169
      %v2174 = vadd.f32 %v2075, %v2171
      %v2175 = vld [vmem:[%s2076] sm:$0x7]
      %v2176 = vld [vmem:[%s2076 + $0x4] sm:$0x7]
      %v2177 = vld [vmem:[%s2076 + $0x8] sm:$0x7]
      %v2178 = vld [vmem:[%s2076 + $0xc] sm:$0x7]
      %v2183 = vrot.slane %v2175, 2
      %v2184 = vrot.slane %v2176, 2
      %v2185 = vrot.slane %v2177, 2
      %v2186 = vrot.slane %v2178, 2
      %v2189 = vsel %vm375, %v2175, %v2183
      %v2190 = vsel %vm379, %v2175, %v2183
      %v2192 = vrot.slane %v2190, 2
      %v2195 = vsel %vm375, %v2176, %v2184
      %v2196 = vsel %vm379, %v2176, %v2184
      %v2198 = vrot.slane %v2196, 2
      %v2201 = vsel %vm375, %v2177, %v2185
      %v2202 = vsel %vm379, %v2177, %v2185
      %v2204 = vrot.slane %v2202, 2
      %v2207 = vsel %vm375, %v2178, %v2186
      %v2208 = vsel %vm379, %v2178, %v2186
      %v2210 = vrot.slane %v2208, 2
      %v2211 = vshrl.u32 %v2189, 16
      %v2213 = vrot.slane %v2211, 6
      %v2214 = vshll.u32 %v2189, 16
      %v2216 = vrot.slane %v2214, 7
      %v2217 = vor.u32 %v2213, %v2216
      %v2218 = vrot.slane %v2217, 2
      %v2220 = vshll.u32 %v2192, 16
      %v2222 = vrot.slane %v2220, 7
      %v2223 = vsel %vm407, %v2218, %v2222
      %v2224 = vshrl.u32 %v2195, 16
      %v2226 = vrot.slane %v2224, 6
      %v2227 = vshll.u32 %v2195, 16
      %v2229 = vrot.slane %v2227, 7
      %v2230 = vor.u32 %v2226, %v2229
      %v2231 = vrot.slane %v2230, 2
      %v2233 = vshll.u32 %v2198, 16
      %v2235 = vrot.slane %v2233, 7
      %v2236 = vsel %vm407, %v2231, %v2235
      %v2237 = vshrl.u32 %v2201, 16
      %v2239 = vrot.slane %v2237, 6
      %v2240 = vshll.u32 %v2201, 16
      %v2242 = vrot.slane %v2240, 7
      %v2243 = vor.u32 %v2239, %v2242
      %v2244 = vrot.slane %v2243, 2
      %v2246 = vshll.u32 %v2204, 16
      %v2248 = vrot.slane %v2246, 7
      %v2249 = vsel %vm407, %v2244, %v2248
      %v2250 = vshrl.u32 %v2207, 16
      %v2252 = vrot.slane %v2250, 6
      %v2253 = vshll.u32 %v2207, 16
      %v2255 = vrot.slane %v2253, 7
      %v2256 = vor.u32 %v2252, %v2255
      %v2257 = vrot.slane %v2256, 2
      %v2259 = vshll.u32 %v2210, 16
      %v2261 = vrot.slane %v2259, 7
      %v2262 = vsel %vm407, %v2257, %v2261
      %s2263 = scalar_lea.vmem %s3, 832
      %v2264 = vld [vmem:[%s2263] sm:$0xf]
      %v2265 = vld [vmem:[%s2263 + $0x4] sm:$0xf]
      %v2266 = vld [vmem:[%s2263 + $0x8] sm:$0xf]
      %v2267 = vld [vmem:[%s2263 + $0xc] sm:$0xf]
      %v2268 = vld [vmem:[%s2263 + $0x10] sm:$0xf]
      %v2269 = vld [vmem:[%s2263 + $0x14] sm:$0xf]
      %v2270 = vld [vmem:[%s2263 + $0x18] sm:$0xf]
      %v2271 = vld [vmem:[%s2263 + $0x1c] sm:$0xf]
      %v2272 = vld [vmem:[%s2263 + $0x20] sm:$0xf]
      %v2273 = vld [vmem:[%s2263 + $0x24] sm:$0xf]
      %v2274 = vld [vmem:[%s2263 + $0x28] sm:$0xf]
      %v2275 = vld [vmem:[%s2263 + $0x2c] sm:$0xf]
      %v2276 = vld [vmem:[%s2263 + $0x30] sm:$0xf]
      %v2277 = vld [vmem:[%s2263 + $0x34] sm:$0xf]
      %v2278 = vld [vmem:[%s2263 + $0x38] sm:$0xf]
      %v2279 = vld [vmem:[%s2263 + $0x3c] sm:$0xf]
      %2281 = vst [vmem:[#allocation1] ss:$4 sm:$0xff] %v2223
      %s2283 = scalar_lea.vmem [#allocation1], 1
      %2284 = vst [vmem:[%s2283] ss:$4 sm:$0xff] %v2236
      %s2286 = scalar_lea.vmem [#allocation1], 2
      %2287 = vst [vmem:[%s2286] ss:$4 sm:$0xff] %v2249
      %s2289 = scalar_lea.vmem [#allocation1], 3
      %2290 = vst [vmem:[%s2289] ss:$4 sm:$0xff] %v2262
      %v2291 = vld.sshfl [vmem:[#allocation1] sm:$0xff pattern:$0x73625140]
      %v2309 = vunpack.c.l.b16 %v2264
      %v2310 = vunpack.c.l.b16 %v2265
      %v2311 = vunpack.c.l.b16 %v2266
      %v2312 = vunpack.c.l.b16 %v2267
      %v2313 = vunpack.c.l.b16 %v2268
      %v2314 = vunpack.c.l.b16 %v2269
      %v2315 = vunpack.c.l.b16 %v2270
      %v2316 = vunpack.c.l.b16 %v2271
      %v2317 = vunpack.c.l.b16 %v2272
      %v2318 = vunpack.c.l.b16 %v2273
      %v2319 = vunpack.c.l.b16 %v2274
      %v2320 = vunpack.c.l.b16 %v2275
      %v2321 = vunpack.c.l.b16 %v2276
      %v2322 = vunpack.c.l.b16 %v2277
      %v2323 = vunpack.c.l.b16 %v2278
      %v2324 = vunpack.c.l.b16 %v2279
      %v2325 = vpack.c.b16 %v2310, %v2309
      %v2326 = vpack.c.b16 %v2312, %v2311
      %v2327 = vpack.c.b16 %v2314, %v2313
      %v2328 = vpack.c.b16 %v2316, %v2315
      %v2329 = vpack.c.b16 %v2318, %v2317
      %v2330 = vpack.c.b16 %v2320, %v2319
      %v2331 = vpack.c.b16 %v2322, %v2321
      %v2332 = vpack.c.b16 %v2324, %v2323
      %2341 = vmatpush.bf16.msra.mxu0 %v2332
      %2342 = vmatpush.bf16.msra.mxu0 %v2331
      %2343 = vmatpush.bf16.msra.mxu0 %v2330
      %2344 = vmatpush.bf16.msra.mxu0 %v2329
      %2345 = vmatpush.bf16.msra.mxu0 %v2328
      %2346 = vmatpush.bf16.msra.mxu0 %v2327
      %2347 = vmatpush.bf16.msra.mxu0 %v2326
      %2348 = vmatpush.bf16.msra.mxu0 %v2325
      %2349 = vmatmul.bf16.gmra.mxu0 %v2291
      %v2350 = vpop.f32.mrf.mxu0
      %v2351 = vadd.f32 0.0, %v2350
      %v2352 = vpop.f32.mrf.mxu0
      %v2353 = vadd.f32 0.0, %v2352
      %2354 = vdwg.mxu0
      %v2355 = vadd.f32 %v2173, %v2351
      %v2356 = vadd.f32 %v2174, %v2353
      %v2357 = vld [vmem:[%s2076] sm:$0x6]
      %v2358 = vld [vmem:[%s2076 + $0x4] sm:$0x6]
      %v2359 = vld [vmem:[%s2076 + $0x8] sm:$0x6]
      %v2360 = vld [vmem:[%s2076 + $0xc] sm:$0x6]
      %v2365 = vrot.slane %v2357, 2
      %v2366 = vrot.slane %v2358, 2
      %v2367 = vrot.slane %v2359, 2
      %v2368 = vrot.slane %v2360, 2
      %v2371 = vsel %vm375, %v2357, %v2365
      %v2373 = vsel %vm379, %v2357, %v2365
      %v2375 = vrot.slane %v2373, 2
      %v2378 = vsel %vm375, %v2358, %v2366
      %v2380 = vsel %vm379, %v2358, %v2366
      %v2382 = vrot.slane %v2380, 2
      %v2385 = vsel %vm375, %v2359, %v2367
      %v2387 = vsel %vm379, %v2359, %v2367
      %v2389 = vrot.slane %v2387, 2
      %v2392 = vsel %vm375, %v2360, %v2368
      %v2394 = vsel %vm379, %v2360, %v2368
      %v2396 = vrot.slane %v2394, 2
      %v2397 = vrot.slane %v2371, 7
      %v2398 = vrot.slane %v2397, 2
      %v2399 = vrot.slane %v2375, 7
      %v2400 = vsel %vm673, %v2398, %v2399
      %v2401 = vrot.slane %v2378, 7
      %v2402 = vrot.slane %v2401, 2
      %v2403 = vrot.slane %v2382, 7
      %v2404 = vsel %vm673, %v2402, %v2403
      %v2405 = vrot.slane %v2385, 7
      %v2406 = vrot.slane %v2405, 2
      %v2407 = vrot.slane %v2389, 7
      %v2408 = vsel %vm673, %v2406, %v2407
      %v2409 = vrot.slane %v2392, 7
      %v2410 = vrot.slane %v2409, 2
      %v2411 = vrot.slane %v2396, 7
      %v2412 = vsel %vm673, %v2410, %v2411
      %s2413 = scalar_lea.vmem %s3, 896
      %v2414 = vld [vmem:[%s2413] sm:$0xf]
      %v2415 = vld [vmem:[%s2413 + $0x4] sm:$0xf]
      %v2416 = vld [vmem:[%s2413 + $0x8] sm:$0xf]
      %v2417 = vld [vmem:[%s2413 + $0xc] sm:$0xf]
      %v2418 = vld [vmem:[%s2413 + $0x10] sm:$0xf]
      %v2419 = vld [vmem:[%s2413 + $0x14] sm:$0xf]
      %v2420 = vld [vmem:[%s2413 + $0x18] sm:$0xf]
      %v2421 = vld [vmem:[%s2413 + $0x1c] sm:$0xf]
      %v2422 = vld [vmem:[%s2413 + $0x20] sm:$0xf]
      %v2423 = vld [vmem:[%s2413 + $0x24] sm:$0xf]
      %v2424 = vld [vmem:[%s2413 + $0x28] sm:$0xf]
      %v2425 = vld [vmem:[%s2413 + $0x2c] sm:$0xf]
      %v2426 = vld [vmem:[%s2413 + $0x30] sm:$0xf]
      %v2427 = vld [vmem:[%s2413 + $0x34] sm:$0xf]
      %v2428 = vld [vmem:[%s2413 + $0x38] sm:$0xf]
      %v2429 = vld [vmem:[%s2413 + $0x3c] sm:$0xf]
      %2431 = vst [vmem:[#allocation1] ss:$4 sm:$0xff] %v2400
      %s2433 = scalar_lea.vmem [#allocation1], 1
      %2434 = vst [vmem:[%s2433] ss:$4 sm:$0xff] %v2404
      %s2436 = scalar_lea.vmem [#allocation1], 2
      %2437 = vst [vmem:[%s2436] ss:$4 sm:$0xff] %v2408
      %s2439 = scalar_lea.vmem [#allocation1], 3
      %2440 = vst [vmem:[%s2439] ss:$4 sm:$0xff] %v2412
      %v2441 = vld.sshfl [vmem:[#allocation1] sm:$0xff pattern:$0x73625140]
      %v2459 = vunpack.c.l.b16 %v2414
      %v2460 = vunpack.c.l.b16 %v2415
      %v2461 = vunpack.c.l.b16 %v2416
      %v2462 = vunpack.c.l.b16 %v2417
      %v2463 = vunpack.c.l.b16 %v2418
      %v2464 = vunpack.c.l.b16 %v2419
      %v2465 = vunpack.c.l.b16 %v2420
      %v2466 = vunpack.c.l.b16 %v2421
      %v2467 = vunpack.c.l.b16 %v2422
      %v2468 = vunpack.c.l.b16 %v2423
      %v2469 = vunpack.c.l.b16 %v2424
      %v2470 = vunpack.c.l.b16 %v2425
      %v2471 = vunpack.c.l.b16 %v2426
      %v2472 = vunpack.c.l.b16 %v2427
      %v2473 = vunpack.c.l.b16 %v2428
      %v2474 = vunpack.c.l.b16 %v2429
      %v2475 = vpack.c.b16 %v2460, %v2459
      %v2476 = vpack.c.b16 %v2462, %v2461
      %v2477 = vpack.c.b16 %v2464, %v2463
      %v2478 = vpack.c.b16 %v2466, %v2465
      %v2479 = vpack.c.b16 %v2468, %v2467
      %v2480 = vpack.c.b16 %v2470, %v2469
      %v2481 = vpack.c.b16 %v2472, %v2471
      %v2482 = vpack.c.b16 %v2474, %v2473
      %2491 = vmatpush.bf16.msra.mxu0 %v2482
      %2492 = vmatpush.bf16.msra.mxu0 %v2481
      %2493 = vmatpush.bf16.msra.mxu0 %v2480
      %2494 = vmatpush.bf16.msra.mxu0 %v2479
      %2495 = vmatpush.bf16.msra.mxu0 %v2478
      %2496 = vmatpush.bf16.msra.mxu0 %v2477
      %2497 = vmatpush.bf16.msra.mxu0 %v2476
      %2498 = vmatpush.bf16.msra.mxu0 %v2475
      %2499 = vmatmul.bf16.gmra.mxu0 %v2441
      %v2500 = vpop.f32.mrf.mxu0
      %v2501 = vadd.f32 0.0, %v2500
      %v2502 = vpop.f32.mrf.mxu0
      %v2503 = vadd.f32 0.0, %v2502
      %2504 = vdwg.mxu0
      %v2505 = vadd.f32 %v2355, %v2501
      %v2506 = vadd.f32 %v2356, %v2503
      %s2507 = scalar_lea.vmem %s321, 8
      %v2508 = vld [vmem:[%s2507] sm:$0x3]
      %v2509 = vld [vmem:[%s2507 + $0x4] sm:$0x3]
      %v2510 = vld [vmem:[%s2507 + $0x8] sm:$0x3]
      %v2511 = vld [vmem:[%s2507 + $0xc] sm:$0x3]
      %s2512 = scalar_lea.vmem %s3, 960
      %v2513 = vld [vmem:[%s2512] sm:$0xf]
      %v2514 = vld [vmem:[%s2512 + $0x4] sm:$0xf]
      %v2515 = vld [vmem:[%s2512 + $0x8] sm:$0xf]
      %v2516 = vld [vmem:[%s2512 + $0xc] sm:$0xf]
      %v2517 = vld [vmem:[%s2512 + $0x10] sm:$0xf]
      %v2518 = vld [vmem:[%s2512 + $0x14] sm:$0xf]
      %v2519 = vld [vmem:[%s2512 + $0x18] sm:$0xf]
      %v2520 = vld [vmem:[%s2512 + $0x1c] sm:$0xf]
      %v2521 = vld [vmem:[%s2512 + $0x20] sm:$0xf]
      %v2522 = vld [vmem:[%s2512 + $0x24] sm:$0xf]
      %v2523 = vld [vmem:[%s2512 + $0x28] sm:$0xf]
      %v2524 = vld [vmem:[%s2512 + $0x2c] sm:$0xf]
      %v2525 = vld [vmem:[%s2512 + $0x30] sm:$0xf]
      %v2526 = vld [vmem:[%s2512 + $0x34] sm:$0xf]
      %v2527 = vld [vmem:[%s2512 + $0x38] sm:$0xf]
      %v2528 = vld [vmem:[%s2512 + $0x3c] sm:$0xf]
      %2530 = vst [vmem:[#allocation1] ss:$4 sm:$0xff] %v2508
      %s2532 = scalar_lea.vmem [#allocation1], 1
      %2533 = vst [vmem:[%s2532] ss:$4 sm:$0xff] %v2509
      %s2535 = scalar_lea.vmem [#allocation1], 2
      %2536 = vst [vmem:[%s2535] ss:$4 sm:$0xff] %v2510
      %s2538 = scalar_lea.vmem [#allocation1], 3
      %2539 = vst [vmem:[%s2538] ss:$4 sm:$0xff] %v2511
      %v2540 = vld.sshfl [vmem:[#allocation1] sm:$0xff pattern:$0x73625140]
      %v2558 = vunpack.c.l.b16 %v2513
      %v2559 = vunpack.c.l.b16 %v2514
      %v2560 = vunpack.c.l.b16 %v2515
      %v2561 = vunpack.c.l.b16 %v2516
      %v2562 = vunpack.c.l.b16 %v2517
      %v2563 = vunpack.c.l.b16 %v2518
      %v2564 = vunpack.c.l.b16 %v2519
      %v2565 = vunpack.c.l.b16 %v2520
      %v2566 = vunpack.c.l.b16 %v2521
      %v2567 = vunpack.c.l.b16 %v2522
      %v2568 = vunpack.c.l.b16 %v2523
      %v2569 = vunpack.c.l.b16 %v2524
      %v2570 = vunpack.c.l.b16 %v2525
      %v2571 = vunpack.c.l.b16 %v2526
      %v2572 = vunpack.c.l.b16 %v2527
      %v2573 = vunpack.c.l.b16 %v2528
      %v2574 = vpack.c.b16 %v2559, %v2558
      %v2575 = vpack.c.b16 %v2561, %v2560
      %v2576 = vpack.c.b16 %v2563, %v2562
      %v2577 = vpack.c.b16 %v2565, %v2564
      %v2578 = vpack.c.b16 %v2567, %v2566
      %v2579 = vpack.c.b16 %v2569, %v2568
      %v2580 = vpack.c.b16 %v2571, %v2570
      %v2581 = vpack.c.b16 %v2573, %v2572
      %2590 = vmatpush.bf16.msra.mxu0 %v2581
      %2591 = vmatpush.bf16.msra.mxu0 %v2580
      %2592 = vmatpush.bf16.msra.mxu0 %v2579
      %2593 = vmatpush.bf16.msra.mxu0 %v2578
      %2594 = vmatpush.bf16.msra.mxu0 %v2577
      %2595 = vmatpush.bf16.msra.mxu0 %v2576
      %2596 = vmatpush.bf16.msra.mxu0 %v2575
      %2597 = vmatpush.bf16.msra.mxu0 %v2574
      %2598 = vmatmul.bf16.gmra.mxu0 %v2540
      %v2599 = vpop.f32.mrf.mxu0
      %v2600 = vadd.f32 0.0, %v2599
      %v2601 = vpop.f32.mrf.mxu0
      %v2602 = vadd.f32 0.0, %v2601
      %2603 = vdwg.mxu0
      %v2604 = vadd.f32 %v2505, %v2600
      %v2605 = vadd.f32 %v2506, %v2602
      %v2606 = vld [vmem:[%s2507] sm:$0x7]
      %v2607 = vld [vmem:[%s2507 + $0x4] sm:$0x7]
      %v2608 = vld [vmem:[%s2507 + $0x8] sm:$0x7]
      %v2609 = vld [vmem:[%s2507 + $0xc] sm:$0x7]
      %v2614 = vrot.slane %v2606, 2
      %v2615 = vrot.slane %v2607, 2
      %v2616 = vrot.slane %v2608, 2
      %v2617 = vrot.slane %v2609, 2
      %v2620 = vsel %vm375, %v2606, %v2614
      %v2621 = vsel %vm379, %v2606, %v2614
      %v2623 = vrot.slane %v2621, 2
      %v2626 = vsel %vm375, %v2607, %v2615
      %v2627 = vsel %vm379, %v2607, %v2615
      %v2629 = vrot.slane %v2627, 2
      %v2632 = vsel %vm375, %v2608, %v2616
      %v2633 = vsel %vm379, %v2608, %v2616
      %v2635 = vrot.slane %v2633, 2
      %v2638 = vsel %vm375, %v2609, %v2617
      %v2639 = vsel %vm379, %v2609, %v2617
      %v2641 = vrot.slane %v2639, 2
      %v2642 = vshrl.u32 %v2620, 16
      %v2644 = vrot.slane %v2642, 6
      %v2645 = vshll.u32 %v2620, 16
      %v2647 = vrot.slane %v2645, 7
      %v2648 = vor.u32 %v2644, %v2647
      %v2649 = vrot.slane %v2648, 2
      %v2651 = vshll.u32 %v2623, 16
      %v2653 = vrot.slane %v2651, 7
      %v2654 = vsel %vm407, %v2649, %v2653
      %v2655 = vshrl.u32 %v2626, 16
      %v2657 = vrot.slane %v2655, 6
      %v2658 = vshll.u32 %v2626, 16
      %v2660 = vrot.slane %v2658, 7
      %v2661 = vor.u32 %v2657, %v2660
      %v2662 = vrot.slane %v2661, 2
      %v2664 = vshll.u32 %v2629, 16
      %v2666 = vrot.slane %v2664, 7
      %v2667 = vsel %vm407, %v2662, %v2666
      %v2668 = vshrl.u32 %v2632, 16
      %v2670 = vrot.slane %v2668, 6
      %v2671 = vshll.u32 %v2632, 16
      %v2673 = vrot.slane %v2671, 7
      %v2674 = vor.u32 %v2670, %v2673
      %v2675 = vrot.slane %v2674, 2
      %v2677 = vshll.u32 %v2635, 16
      %v2679 = vrot.slane %v2677, 7
      %v2680 = vsel %vm407, %v2675, %v2679
      %v2681 = vshrl.u32 %v2638, 16
      %v2683 = vrot.slane %v2681, 6
      %v2684 = vshll.u32 %v2638, 16
      %v2686 = vrot.slane %v2684, 7
      %v2687 = vor.u32 %v2683, %v2686
      %v2688 = vrot.slane %v2687, 2
      %v2690 = vshll.u32 %v2641, 16
      %v2692 = vrot.slane %v2690, 7
      %v2693 = vsel %vm407, %v2688, %v2692
      %s2694 = scalar_lea.vmem %s3, 1024
      %v2695 = vld [vmem:[%s2694] sm:$0xf]
      %v2696 = vld [vmem:[%s2694 + $0x4] sm:$0xf]
      %v2697 = vld [vmem:[%s2694 + $0x8] sm:$0xf]
      %v2698 = vld [vmem:[%s2694 + $0xc] sm:$0xf]
      %v2699 = vld [vmem:[%s2694 + $0x10] sm:$0xf]
      %v2700 = vld [vmem:[%s2694 + $0x14] sm:$0xf]
      %v2701 = vld [vmem:[%s2694 + $0x18] sm:$0xf]
      %v2702 = vld [vmem:[%s2694 + $0x1c] sm:$0xf]
      %v2703 = vld [vmem:[%s2694 + $0x20] sm:$0xf]
      %v2704 = vld [vmem:[%s2694 + $0x24] sm:$0xf]
      %v2705 = vld [vmem:[%s2694 + $0x28] sm:$0xf]
      %v2706 = vld [vmem:[%s2694 + $0x2c] sm:$0xf]
      %v2707 = vld [vmem:[%s2694 + $0x30] sm:$0xf]
      %v2708 = vld [vmem:[%s2694 + $0x34] sm:$0xf]
      %v2709 = vld [vmem:[%s2694 + $0x38] sm:$0xf]
      %v2710 = vld [vmem:[%s2694 + $0x3c] sm:$0xf]
      %2712 = vst [vmem:[#allocation1] ss:$4 sm:$0xff] %v2654
      %s2714 = scalar_lea.vmem [#allocation1], 1
      %2715 = vst [vmem:[%s2714] ss:$4 sm:$0xff] %v2667
      %s2717 = scalar_lea.vmem [#allocation1], 2
      %2718 = vst [vmem:[%s2717] ss:$4 sm:$0xff] %v2680
      %s2720 = scalar_lea.vmem [#allocation1], 3
      %2721 = vst [vmem:[%s2720] ss:$4 sm:$0xff] %v2693
      %v2722 = vld.sshfl [vmem:[#allocation1] sm:$0xff pattern:$0x73625140]
      %v2740 = vunpack.c.l.b16 %v2695
      %v2741 = vunpack.c.l.b16 %v2696
      %v2742 = vunpack.c.l.b16 %v2697
      %v2743 = vunpack.c.l.b16 %v2698
      %v2744 = vunpack.c.l.b16 %v2699
      %v2745 = vunpack.c.l.b16 %v2700
      %v2746 = vunpack.c.l.b16 %v2701
      %v2747 = vunpack.c.l.b16 %v2702
      %v2748 = vunpack.c.l.b16 %v2703
      %v2749 = vunpack.c.l.b16 %v2704
      %v2750 = vunpack.c.l.b16 %v2705
      %v2751 = vunpack.c.l.b16 %v2706
      %v2752 = vunpack.c.l.b16 %v2707
      %v2753 = vunpack.c.l.b16 %v2708
      %v2754 = vunpack.c.l.b16 %v2709
      %v2755 = vunpack.c.l.b16 %v2710
      %v2756 = vpack.c.b16 %v2741, %v2740
      %v2757 = vpack.c.b16 %v2743, %v2742
      %v2758 = vpack.c.b16 %v2745, %v2744
      %v2759 = vpack.c.b16 %v2747, %v2746
      %v2760 = vpack.c.b16 %v2749, %v2748
      %v2761 = vpack.c.b16 %v2751, %v2750
      %v2762 = vpack.c.b16 %v2753, %v2752
      %v2763 = vpack.c.b16 %v2755, %v2754
      %2772 = vmatpush.bf16.msra.mxu0 %v2763
      %2773 = vmatpush.bf16.msra.mxu0 %v2762
      %2774 = vmatpush.bf16.msra.mxu0 %v2761
      %2775 = vmatpush.bf16.msra.mxu0 %v2760
      %2776 = vmatpush.bf16.msra.mxu0 %v2759
      %2777 = vmatpush.bf16.msra.mxu0 %v2758
      %2778 = vmatpush.bf16.msra.mxu0 %v2757
      %2779 = vmatpush.bf16.msra.mxu0 %v2756
      %2780 = vmatmul.bf16.gmra.mxu0 %v2722
      %v2781 = vpop.f32.mrf.mxu0
      %v2782 = vadd.f32 0.0, %v2781
      %v2783 = vpop.f32.mrf.mxu0
      %v2784 = vadd.f32 0.0, %v2783
      %2785 = vdwg.mxu0
      %v2786 = vadd.f32 %v2604, %v2782
      %v2787 = vadd.f32 %v2605, %v2784
      %v2788 = vld [vmem:[%s2507] sm:$0x6]
      %v2789 = vld [vmem:[%s2507 + $0x4] sm:$0x6]
      %v2790 = vld [vmem:[%s2507 + $0x8] sm:$0x6]
      %v2791 = vld [vmem:[%s2507 + $0xc] sm:$0x6]
      %v2796 = vrot.slane %v2788, 2
      %v2797 = vrot.slane %v2789, 2
      %v2798 = vrot.slane %v2790, 2
      %v2799 = vrot.slane %v2791, 2
      %v2802 = vsel %vm375, %v2788, %v2796
      %v2804 = vsel %vm379, %v2788, %v2796
      %v2806 = vrot.slane %v2804, 2
      %v2809 = vsel %vm375, %v2789, %v2797
      %v2811 = vsel %vm379, %v2789, %v2797
      %v2813 = vrot.slane %v2811, 2
      %v2816 = vsel %vm375, %v2790, %v2798
      %v2818 = vsel %vm379, %v2790, %v2798
      %v2820 = vrot.slane %v2818, 2
      %v2823 = vsel %vm375, %v2791, %v2799
      %v2825 = vsel %vm379, %v2791, %v2799
      %v2827 = vrot.slane %v2825, 2
      %v2828 = vrot.slane %v2802, 7
      %v2829 = vrot.slane %v2828, 2
      %v2830 = vrot.slane %v2806, 7
      %v2831 = vsel %vm673, %v2829, %v2830
      %v2832 = vrot.slane %v2809, 7
      %v2833 = vrot.slane %v2832, 2
      %v2834 = vrot.slane %v2813, 7
      %v2835 = vsel %vm673, %v2833, %v2834
      %v2836 = vrot.slane %v2816, 7
      %v2837 = vrot.slane %v2836, 2
      %v2838 = vrot.slane %v2820, 7
      %v2839 = vsel %vm673, %v2837, %v2838
      %v2840 = vrot.slane %v2823, 7
      %v2841 = vrot.slane %v2840, 2
      %v2842 = vrot.slane %v2827, 7
      %v2843 = vsel %vm673, %v2841, %v2842
      %s2844 = scalar_lea.vmem %s3, 1088
      %v2845 = vld [vmem:[%s2844] sm:$0xf]
      %v2846 = vld [vmem:[%s2844 + $0x4] sm:$0xf]
      %v2847 = vld [vmem:[%s2844 + $0x8] sm:$0xf]
      %v2848 = vld [vmem:[%s2844 + $0xc] sm:$0xf]
      %v2849 = vld [vmem:[%s2844 + $0x10] sm:$0xf]
      %v2850 = vld [vmem:[%s2844 + $0x14] sm:$0xf]
      %v2851 = vld [vmem:[%s2844 + $0x18] sm:$0xf]
      %v2852 = vld [vmem:[%s2844 + $0x1c] sm:$0xf]
      %v2853 = vld [vmem:[%s2844 + $0x20] sm:$0xf]
      %v2854 = vld [vmem:[%s2844 + $0x24] sm:$0xf]
      %v2855 = vld [vmem:[%s2844 + $0x28] sm:$0xf]
      %v2856 = vld [vmem:[%s2844 + $0x2c] sm:$0xf]
      %v2857 = vld [vmem:[%s2844 + $0x30] sm:$0xf]
      %v2858 = vld [vmem:[%s2844 + $0x34] sm:$0xf]
      %v2859 = vld [vmem:[%s2844 + $0x38] sm:$0xf]
      %v2860 = vld [vmem:[%s2844 + $0x3c] sm:$0xf]
      %2862 = vst [vmem:[#allocation1] ss:$4 sm:$0xff] %v2831
      %s2864 = scalar_lea.vmem [#allocation1], 1
      %2865 = vst [vmem:[%s2864] ss:$4 sm:$0xff] %v2835
      %s2867 = scalar_lea.vmem [#allocation1], 2
      %2868 = vst [vmem:[%s2867] ss:$4 sm:$0xff] %v2839
      %s2870 = scalar_lea.vmem [#allocation1], 3
      %2871 = vst [vmem:[%s2870] ss:$4 sm:$0xff] %v2843
      %v2872 = vld.sshfl [vmem:[#allocation1] sm:$0xff pattern:$0x73625140]
      %v2890 = vunpack.c.l.b16 %v2845
      %v2891 = vunpack.c.l.b16 %v2846
      %v2892 = vunpack.c.l.b16 %v2847
      %v2893 = vunpack.c.l.b16 %v2848
      %v2894 = vunpack.c.l.b16 %v2849
      %v2895 = vunpack.c.l.b16 %v2850
      %v2896 = vunpack.c.l.b16 %v2851
      %v2897 = vunpack.c.l.b16 %v2852
      %v2898 = vunpack.c.l.b16 %v2853
      %v2899 = vunpack.c.l.b16 %v2854
      %v2900 = vunpack.c.l.b16 %v2855
      %v2901 = vunpack.c.l.b16 %v2856
      %v2902 = vunpack.c.l.b16 %v2857
      %v2903 = vunpack.c.l.b16 %v2858
      %v2904 = vunpack.c.l.b16 %v2859
      %v2905 = vunpack.c.l.b16 %v2860
      %v2906 = vpack.c.b16 %v2891, %v2890
      %v2907 = vpack.c.b16 %v2893, %v2892
      %v2908 = vpack.c.b16 %v2895, %v2894
      %v2909 = vpack.c.b16 %v2897, %v2896
      %v2910 = vpack.c.b16 %v2899, %v2898
      %v2911 = vpack.c.b16 %v2901, %v2900
      %v2912 = vpack.c.b16 %v2903, %v2902
      %v2913 = vpack.c.b16 %v2905, %v2904
      %2922 = vmatpush.bf16.msra.mxu0 %v2913
      %2923 = vmatpush.bf16.msra.mxu0 %v2912
      %2924 = vmatpush.bf16.msra.mxu0 %v2911
      %2925 = vmatpush.bf16.msra.mxu0 %v2910
      %2926 = vmatpush.bf16.msra.mxu0 %v2909
      %2927 = vmatpush.bf16.msra.mxu0 %v2908
      %2928 = vmatpush.bf16.msra.mxu0 %v2907
      %2929 = vmatpush.bf16.msra.mxu0 %v2906
      %2930 = vmatmul.bf16.gmra.mxu0 %v2872
      %v2931 = vpop.f32.mrf.mxu0
      %v2932 = vadd.f32 0.0, %v2931
      %v2933 = vpop.f32.mrf.mxu0
      %v2934 = vadd.f32 0.0, %v2933
      %2935 = vdwg.mxu0
      %v2936 = vadd.f32 %v2786, %v2932
      %v2937 = vadd.f32 %v2787, %v2934
      %v2938 = vld [vmem:[%s332] sm:$0x3]
      %v2939 = vld [vmem:[%s332 + $0x4] sm:$0x3]
      %v2940 = vld [vmem:[%s332 + $0x8] sm:$0x3]
      %v2941 = vld [vmem:[%s332 + $0xc] sm:$0x3]
      %s2942 = scalar_lea.vmem %s3, 1152
      %v2943 = vld [vmem:[%s2942] sm:$0xf]
      %v2944 = vld [vmem:[%s2942 + $0x4] sm:$0xf]
      %v2945 = vld [vmem:[%s2942 + $0x8] sm:$0xf]
      %v2946 = vld [vmem:[%s2942 + $0xc] sm:$0xf]
      %v2947 = vld [vmem:[%s2942 + $0x10] sm:$0xf]
      %v2948 = vld [vmem:[%s2942 + $0x14] sm:$0xf]
      %v2949 = vld [vmem:[%s2942 + $0x18] sm:$0xf]
      %v2950 = vld [vmem:[%s2942 + $0x1c] sm:$0xf]
      %v2951 = vld [vmem:[%s2942 + $0x20] sm:$0xf]
      %v2952 = vld [vmem:[%s2942 + $0x24] sm:$0xf]
      %v2953 = vld [vmem:[%s2942 + $0x28] sm:$0xf]
      %v2954 = vld [vmem:[%s2942 + $0x2c] sm:$0xf]
      %v2955 = vld [vmem:[%s2942 + $0x30] sm:$0xf]
      %v2956 = vld [vmem:[%s2942 + $0x34] sm:$0xf]
      %v2957 = vld [vmem:[%s2942 + $0x38] sm:$0xf]
      %v2958 = vld [vmem:[%s2942 + $0x3c] sm:$0xf]
      %2960 = vst [vmem:[#allocation1] ss:$4 sm:$0xff] %v2938
      %s2962 = scalar_lea.vmem [#allocation1], 1
      %2963 = vst [vmem:[%s2962] ss:$4 sm:$0xff] %v2939
      %s2965 = scalar_lea.vmem [#allocation1], 2
      %2966 = vst [vmem:[%s2965] ss:$4 sm:$0xff] %v2940
      %s2968 = scalar_lea.vmem [#allocation1], 3
      %2969 = vst [vmem:[%s2968] ss:$4 sm:$0xff] %v2941
      %v2970 = vld.sshfl [vmem:[#allocation1] sm:$0xff pattern:$0x73625140]
      %v2988 = vunpack.c.l.b16 %v2943
      %v2989 = vunpack.c.l.b16 %v2944
      %v2990 = vunpack.c.l.b16 %v2945
      %v2991 = vunpack.c.l.b16 %v2946
      %v2992 = vunpack.c.l.b16 %v2947
      %v2993 = vunpack.c.l.b16 %v2948
      %v2994 = vunpack.c.l.b16 %v2949
      %v2995 = vunpack.c.l.b16 %v2950
      %v2996 = vunpack.c.l.b16 %v2951
      %v2997 = vunpack.c.l.b16 %v2952
      %v2998 = vunpack.c.l.b16 %v2953
      %v2999 = vunpack.c.l.b16 %v2954
      %v3000 = vunpack.c.l.b16 %v2955
      %v3001 = vunpack.c.l.b16 %v2956
      %v3002 = vunpack.c.l.b16 %v2957
      %v3003 = vunpack.c.l.b16 %v2958
      %v3004 = vpack.c.b16 %v2989, %v2988
      %v3005 = vpack.c.b16 %v2991, %v2990
      %v3006 = vpack.c.b16 %v2993, %v2992
      %v3007 = vpack.c.b16 %v2995, %v2994
      %v3008 = vpack.c.b16 %v2997, %v2996
      %v3009 = vpack.c.b16 %v2999, %v2998
      %v3010 = vpack.c.b16 %v3001, %v3000
      %v3011 = vpack.c.b16 %v3003, %v3002
      %3020 = vmatpush.bf16.msra.mxu0 %v3011
      %3021 = vmatpush.bf16.msra.mxu0 %v3010
      %3022 = vmatpush.bf16.msra.mxu0 %v3009
      %3023 = vmatpush.bf16.msra.mxu0 %v3008
      %3024 = vmatpush.bf16.msra.mxu0 %v3007
      %3025 = vmatpush.bf16.msra.mxu0 %v3006
      %3026 = vmatpush.bf16.msra.mxu0 %v3005
      %3027 = vmatpush.bf16.msra.mxu0 %v3004
      %3028 = vmatmul.bf16.gmra.mxu0 %v2970
      %v3029 = vpop.f32.mrf.mxu0
      %v3030 = vadd.f32 0.0, %v3029
      %v3031 = vpop.f32.mrf.mxu0
      %v3032 = vadd.f32 0.0, %v3031
      %3033 = vdwg.mxu0
      %v3034 = vadd.f32 %v2936, %v3030
      %v3035 = vadd.f32 %v2937, %v3032
      %v3036 = vld [vmem:[%s332] sm:$0x7]
      %v3037 = vld [vmem:[%s332 + $0x4] sm:$0x7]
      %v3038 = vld [vmem:[%s332 + $0x8] sm:$0x7]
      %v3039 = vld [vmem:[%s332 + $0xc] sm:$0x7]
      %v3044 = vrot.slane %v3036, 2
      %v3045 = vrot.slane %v3037, 2
      %v3046 = vrot.slane %v3038, 2
      %v3047 = vrot.slane %v3039, 2
      %v3050 = vsel %vm375, %v3036, %v3044
      %v3051 = vsel %vm379, %v3036, %v3044
      %v3053 = vrot.slane %v3051, 2
      %v3056 = vsel %vm375, %v3037, %v3045
      %v3057 = vsel %vm379, %v3037, %v3045
      %v3059 = vrot.slane %v3057, 2
      %v3062 = vsel %vm375, %v3038, %v3046
      %v3063 = vsel %vm379, %v3038, %v3046
      %v3065 = vrot.slane %v3063, 2
      %v3068 = vsel %vm375, %v3039, %v3047
      %v3069 = vsel %vm379, %v3039, %v3047
      %v3071 = vrot.slane %v3069, 2
      %v3072 = vshrl.u32 %v3050, 16
      %v3074 = vrot.slane %v3072, 6
      %v3075 = vshll.u32 %v3050, 16
      %v3077 = vrot.slane %v3075, 7
      %v3078 = vor.u32 %v3074, %v3077
      %v3079 = vrot.slane %v3078, 2
      %v3081 = vshll.u32 %v3053, 16
      %v3083 = vrot.slane %v3081, 7
      %v3084 = vsel %vm407, %v3079, %v3083
      %v3085 = vshrl.u32 %v3056, 16
      %v3087 = vrot.slane %v3085, 6
      %v3088 = vshll.u32 %v3056, 16
      %v3090 = vrot.slane %v3088, 7
      %v3091 = vor.u32 %v3087, %v3090
      %v3092 = vrot.slane %v3091, 2
      %v3094 = vshll.u32 %v3059, 16
      %v3096 = vrot.slane %v3094, 7
      %v3097 = vsel %vm407, %v3092, %v3096
      %v3098 = vshrl.u32 %v3062, 16
      %v3100 = vrot.slane %v3098, 6
      %v3101 = vshll.u32 %v3062, 16
      %v3103 = vrot.slane %v3101, 7
      %v3104 = vor.u32 %v3100, %v3103
      %v3105 = vrot.slane %v3104, 2
      %v3107 = vshll.u32 %v3065, 16
      %v3109 = vrot.slane %v3107, 7
      %v3110 = vsel %vm407, %v3105, %v3109
      %v3111 = vshrl.u32 %v3068, 16
      %v3113 = vrot.slane %v3111, 6
      %v3114 = vshll.u32 %v3068, 16
      %v3116 = vrot.slane %v3114, 7
      %v3117 = vor.u32 %v3113, %v3116
      %v3118 = vrot.slane %v3117, 2
      %v3120 = vshll.u32 %v3071, 16
      %v3122 = vrot.slane %v3120, 7
      %v3123 = vsel %vm407, %v3118, %v3122
      %s3124 = scalar_lea.vmem %s3, 1216
      %v3125 = vld [vmem:[%s3124] sm:$0xf]
      %v3126 = vld [vmem:[%s3124 + $0x4] sm:$0xf]
      %v3127 = vld [vmem:[%s3124 + $0x8] sm:$0xf]
      %v3128 = vld [vmem:[%s3124 + $0xc] sm:$0xf]
      %v3129 = vld [vmem:[%s3124 + $0x10] sm:$0xf]
      %v3130 = vld [vmem:[%s3124 + $0x14] sm:$0xf]
      %v3131 = vld [vmem:[%s3124 + $0x18] sm:$0xf]
      %v3132 = vld [vmem:[%s3124 + $0x1c] sm:$0xf]
      %v3133 = vld [vmem:[%s3124 + $0x20] sm:$0xf]
      %v3134 = vld [vmem:[%s3124 + $0x24] sm:$0xf]
      %v3135 = vld [vmem:[%s3124 + $0x28] sm:$0xf]
      %v3136 = vld [vmem:[%s3124 + $0x2c] sm:$0xf]
      %v3137 = vld [vmem:[%s3124 + $0x30] sm:$0xf]
      %v3138 = vld [vmem:[%s3124 + $0x34] sm:$0xf]
      %v3139 = vld [vmem:[%s3124 + $0x38] sm:$0xf]
      %v3140 = vld [vmem:[%s3124 + $0x3c] sm:$0xf]
      %3142 = vst [vmem:[#allocation1] ss:$4 sm:$0xff] %v3084
      %s3144 = scalar_lea.vmem [#allocation1], 1
      %3145 = vst [vmem:[%s3144] ss:$4 sm:$0xff] %v3097
      %s3147 = scalar_lea.vmem [#allocation1], 2
      %3148 = vst [vmem:[%s3147] ss:$4 sm:$0xff] %v3110
      %s3150 = scalar_lea.vmem [#allocation1], 3
      %3151 = vst [vmem:[%s3150] ss:$4 sm:$0xff] %v3123
      %v3152 = vld.sshfl [vmem:[#allocation1] sm:$0xff pattern:$0x73625140]
      %v3170 = vunpack.c.l.b16 %v3125
      %v3171 = vunpack.c.l.b16 %v3126
      %v3172 = vunpack.c.l.b16 %v3127
      %v3173 = vunpack.c.l.b16 %v3128
      %v3174 = vunpack.c.l.b16 %v3129
      %v3175 = vunpack.c.l.b16 %v3130
      %v3176 = vunpack.c.l.b16 %v3131
      %v3177 = vunpack.c.l.b16 %v3132
      %v3178 = vunpack.c.l.b16 %v3133
      %v3179 = vunpack.c.l.b16 %v3134
      %v3180 = vunpack.c.l.b16 %v3135
      %v3181 = vunpack.c.l.b16 %v3136
      %v3182 = vunpack.c.l.b16 %v3137
      %v3183 = vunpack.c.l.b16 %v3138
      %v3184 = vunpack.c.l.b16 %v3139
      %v3185 = vunpack.c.l.b16 %v3140
      %v3186 = vpack.c.b16 %v3171, %v3170
      %v3187 = vpack.c.b16 %v3173, %v3172
      %v3188 = vpack.c.b16 %v3175, %v3174
      %v3189 = vpack.c.b16 %v3177, %v3176
      %v3190 = vpack.c.b16 %v3179, %v3178
      %v3191 = vpack.c.b16 %v3181, %v3180
      %v3192 = vpack.c.b16 %v3183, %v3182
      %v3193 = vpack.c.b16 %v3185, %v3184
      %3202 = vmatpush.bf16.msra.mxu0 %v3193
      %3203 = vmatpush.bf16.msra.mxu0 %v3192
      %3204 = vmatpush.bf16.msra.mxu0 %v3191
      %3205 = vmatpush.bf16.msra.mxu0 %v3190
      %3206 = vmatpush.bf16.msra.mxu0 %v3189
      %3207 = vmatpush.bf16.msra.mxu0 %v3188
      %3208 = vmatpush.bf16.msra.mxu0 %v3187
      %3209 = vmatpush.bf16.msra.mxu0 %v3186
      %3210 = vmatmul.bf16.gmra.mxu0 %v3152
      %v3211 = vpop.f32.mrf.mxu0
      %v3212 = vadd.f32 0.0, %v3211
      %v3213 = vpop.f32.mrf.mxu0
      %v3214 = vadd.f32 0.0, %v3213
      %3215 = vdwg.mxu0
      %v3216 = vadd.f32 %v3034, %v3212
      %v3217 = vadd.f32 %v3035, %v3214
      %v3218 = vld [vmem:[%s332] sm:$0x6]
      %v3219 = vld [vmem:[%s332 + $0x4] sm:$0x6]
      %v3220 = vld [vmem:[%s332 + $0x8] sm:$0x6]
      %v3221 = vld [vmem:[%s332 + $0xc] sm:$0x6]
      %v3226 = vrot.slane %v3218, 2
      %v3227 = vrot.slane %v3219, 2
      %v3228 = vrot.slane %v3220, 2
      %v3229 = vrot.slane %v3221, 2
      %v3232 = vsel %vm375, %v3218, %v3226
      %v3234 = vsel %vm379, %v3218, %v3226
      %v3236 = vrot.slane %v3234, 2
      %v3239 = vsel %vm375, %v3219, %v3227
      %v3241 = vsel %vm379, %v3219, %v3227
      %v3243 = vrot.slane %v3241, 2
      %v3246 = vsel %vm375, %v3220, %v3228
      %v3248 = vsel %vm379, %v3220, %v3228
      %v3250 = vrot.slane %v3248, 2
      %v3253 = vsel %vm375, %v3221, %v3229
      %v3255 = vsel %vm379, %v3221, %v3229
      %v3257 = vrot.slane %v3255, 2
      %v3258 = vrot.slane %v3232, 7
      %v3259 = vrot.slane %v3258, 2
      %v3260 = vrot.slane %v3236, 7
      %v3261 = vsel %vm673, %v3259, %v3260
      %v3262 = vrot.slane %v3239, 7
      %v3263 = vrot.slane %v3262, 2
      %v3264 = vrot.slane %v3243, 7
      %v3265 = vsel %vm673, %v3263, %v3264
      %v3266 = vrot.slane %v3246, 7
      %v3267 = vrot.slane %v3266, 2
      %v3268 = vrot.slane %v3250, 7
      %v3269 = vsel %vm673, %v3267, %v3268
      %v3270 = vrot.slane %v3253, 7
      %v3271 = vrot.slane %v3270, 2
      %v3272 = vrot.slane %v3257, 7
      %v3273 = vsel %vm673, %v3271, %v3272
      %s3274 = scalar_lea.vmem %s3, 1280
      %v3275 = vld [vmem:[%s3274] sm:$0xf]
      %v3276 = vld [vmem:[%s3274 + $0x4] sm:$0xf]
      %v3277 = vld [vmem:[%s3274 + $0x8] sm:$0xf]
      %v3278 = vld [vmem:[%s3274 + $0xc] sm:$0xf]
      %v3279 = vld [vmem:[%s3274 + $0x10] sm:$0xf]
      %v3280 = vld [vmem:[%s3274 + $0x14] sm:$0xf]
      %v3281 = vld [vmem:[%s3274 + $0x18] sm:$0xf]
      %v3282 = vld [vmem:[%s3274 + $0x1c] sm:$0xf]
      %v3283 = vld [vmem:[%s3274 + $0x20] sm:$0xf]
      %v3284 = vld [vmem:[%s3274 + $0x24] sm:$0xf]
      %v3285 = vld [vmem:[%s3274 + $0x28] sm:$0xf]
      %v3286 = vld [vmem:[%s3274 + $0x2c] sm:$0xf]
      %v3287 = vld [vmem:[%s3274 + $0x30] sm:$0xf]
      %v3288 = vld [vmem:[%s3274 + $0x34] sm:$0xf]
      %v3289 = vld [vmem:[%s3274 + $0x38] sm:$0xf]
      %v3290 = vld [vmem:[%s3274 + $0x3c] sm:$0xf]
      %3292 = vst [vmem:[#allocation1] ss:$4 sm:$0xff] %v3261
      %s3294 = scalar_lea.vmem [#allocation1], 1
      %3295 = vst [vmem:[%s3294] ss:$4 sm:$0xff] %v3265
      %s3297 = scalar_lea.vmem [#allocation1], 2
      %3298 = vst [vmem:[%s3297] ss:$4 sm:$0xff] %v3269
      %s3300 = scalar_lea.vmem [#allocation1], 3
      %3301 = vst [vmem:[%s3300] ss:$4 sm:$0xff] %v3273
      %v3302 = vld.sshfl [vmem:[#allocation1] sm:$0xff pattern:$0x73625140]
      %v3320 = vunpack.c.l.b16 %v3275
      %v3321 = vunpack.c.l.b16 %v3276
      %v3322 = vunpack.c.l.b16 %v3277
      %v3323 = vunpack.c.l.b16 %v3278
      %v3324 = vunpack.c.l.b16 %v3279
      %v3325 = vunpack.c.l.b16 %v3280
      %v3326 = vunpack.c.l.b16 %v3281
      %v3327 = vunpack.c.l.b16 %v3282
      %v3328 = vunpack.c.l.b16 %v3283
      %v3329 = vunpack.c.l.b16 %v3284
      %v3330 = vunpack.c.l.b16 %v3285
      %v3331 = vunpack.c.l.b16 %v3286
      %v3332 = vunpack.c.l.b16 %v3287
      %v3333 = vunpack.c.l.b16 %v3288
      %v3334 = vunpack.c.l.b16 %v3289
      %v3335 = vunpack.c.l.b16 %v3290
      %v3336 = vpack.c.b16 %v3321, %v3320
      %v3337 = vpack.c.b16 %v3323, %v3322
      %v3338 = vpack.c.b16 %v3325, %v3324
      %v3339 = vpack.c.b16 %v3327, %v3326
      %v3340 = vpack.c.b16 %v3329, %v3328
      %v3341 = vpack.c.b16 %v3331, %v3330
      %v3342 = vpack.c.b16 %v3333, %v3332
      %v3343 = vpack.c.b16 %v3335, %v3334
      %3352 = vmatpush.bf16.msra.mxu0 %v3343
      %3353 = vmatpush.bf16.msra.mxu0 %v3342
      %3354 = vmatpush.bf16.msra.mxu0 %v3341
      %3355 = vmatpush.bf16.msra.mxu0 %v3340
      %3356 = vmatpush.bf16.msra.mxu0 %v3339
      %3357 = vmatpush.bf16.msra.mxu0 %v3338
      %3358 = vmatpush.bf16.msra.mxu0 %v3337
      %3359 = vmatpush.bf16.msra.mxu0 %v3336
      %3360 = vmatmul.bf16.gmra.mxu0 %v3302
      %v3361 = vpop.f32.mrf.mxu0
      %v3362 = vadd.f32 0.0, %v3361
      %v3363 = vpop.f32.mrf.mxu0
      %v3364 = vadd.f32 0.0, %v3363
      %3365 = vdwg.mxu0
      %v3366 = vadd.f32 %v3216, %v3362
      %v3367 = vadd.f32 %v3217, %v3364
      %s3368 = scalar_lea.vmem %s332, 4
      %v3369 = vld [vmem:[%s3368] sm:$0x3]
      %v3370 = vld [vmem:[%s3368 + $0x4] sm:$0x3]
      %v3371 = vld [vmem:[%s3368 + $0x8] sm:$0x3]
      %v3372 = vld [vmem:[%s3368 + $0xc] sm:$0x3]
      %s3373 = scalar_lea.vmem %s3, 1344
      %v3374 = vld [vmem:[%s3373] sm:$0xf]
      %v3375 = vld [vmem:[%s3373 + $0x4] sm:$0xf]
      %v3376 = vld [vmem:[%s3373 + $0x8] sm:$0xf]
      %v3377 = vld [vmem:[%s3373 + $0xc] sm:$0xf]
      %v3378 = vld [vmem:[%s3373 + $0x10] sm:$0xf]
      %v3379 = vld [vmem:[%s3373 + $0x14] sm:$0xf]
      %v3380 = vld [vmem:[%s3373 + $0x18] sm:$0xf]
      %v3381 = vld [vmem:[%s3373 + $0x1c] sm:$0xf]
      %v3382 = vld [vmem:[%s3373 + $0x20] sm:$0xf]
      %v3383 = vld [vmem:[%s3373 + $0x24] sm:$0xf]
      %v3384 = vld [vmem:[%s3373 + $0x28] sm:$0xf]
      %v3385 = vld [vmem:[%s3373 + $0x2c] sm:$0xf]
      %v3386 = vld [vmem:[%s3373 + $0x30] sm:$0xf]
      %v3387 = vld [vmem:[%s3373 + $0x34] sm:$0xf]
      %v3388 = vld [vmem:[%s3373 + $0x38] sm:$0xf]
      %v3389 = vld [vmem:[%s3373 + $0x3c] sm:$0xf]
      %3391 = vst [vmem:[#allocation1] ss:$4 sm:$0xff] %v3369
      %s3393 = scalar_lea.vmem [#allocation1], 1
      %3394 = vst [vmem:[%s3393] ss:$4 sm:$0xff] %v3370
      %s3396 = scalar_lea.vmem [#allocation1], 2
      %3397 = vst [vmem:[%s3396] ss:$4 sm:$0xff] %v3371
      %s3399 = scalar_lea.vmem [#allocation1], 3
      %3400 = vst [vmem:[%s3399] ss:$4 sm:$0xff] %v3372
      %v3401 = vld.sshfl [vmem:[#allocation1] sm:$0xff pattern:$0x73625140]
      %v3419 = vunpack.c.l.b16 %v3374
      %v3420 = vunpack.c.l.b16 %v3375
      %v3421 = vunpack.c.l.b16 %v3376
      %v3422 = vunpack.c.l.b16 %v3377
      %v3423 = vunpack.c.l.b16 %v3378
      %v3424 = vunpack.c.l.b16 %v3379
      %v3425 = vunpack.c.l.b16 %v3380
      %v3426 = vunpack.c.l.b16 %v3381
      %v3427 = vunpack.c.l.b16 %v3382
      %v3428 = vunpack.c.l.b16 %v3383
      %v3429 = vunpack.c.l.b16 %v3384
      %v3430 = vunpack.c.l.b16 %v3385
      %v3431 = vunpack.c.l.b16 %v3386
      %v3432 = vunpack.c.l.b16 %v3387
      %v3433 = vunpack.c.l.b16 %v3388
      %v3434 = vunpack.c.l.b16 %v3389
      %v3435 = vpack.c.b16 %v3420, %v3419
      %v3436 = vpack.c.b16 %v3422, %v3421
      %v3437 = vpack.c.b16 %v3424, %v3423
      %v3438 = vpack.c.b16 %v3426, %v3425
      %v3439 = vpack.c.b16 %v3428, %v3427
      %v3440 = vpack.c.b16 %v3430, %v3429
      %v3441 = vpack.c.b16 %v3432, %v3431
      %v3442 = vpack.c.b16 %v3434, %v3433
      %3451 = vmatpush.bf16.msra.mxu0 %v3442
      %3452 = vmatpush.bf16.msra.mxu0 %v3441
      %3453 = vmatpush.bf16.msra.mxu0 %v3440
      %3454 = vmatpush.bf16.msra.mxu0 %v3439
      %3455 = vmatpush.bf16.msra.mxu0 %v3438
      %3456 = vmatpush.bf16.msra.mxu0 %v3437
      %3457 = vmatpush.bf16.msra.mxu0 %v3436
      %3458 = vmatpush.bf16.msra.mxu0 %v3435
      %3459 = vmatmul.bf16.gmra.mxu0 %v3401
      %v3460 = vpop.f32.mrf.mxu0
      %v3461 = vadd.f32 0.0, %v3460
      %v3462 = vpop.f32.mrf.mxu0
      %v3463 = vadd.f32 0.0, %v3462
      %3464 = vdwg.mxu0
      %v3465 = vadd.f32 %v3366, %v3461
      %v3466 = vadd.f32 %v3367, %v3463
      %v3467 = vld [vmem:[%s3368] sm:$0x7]
      %v3468 = vld [vmem:[%s3368 + $0x4] sm:$0x7]
      %v3469 = vld [vmem:[%s3368 + $0x8] sm:$0x7]
      %v3470 = vld [vmem:[%s3368 + $0xc] sm:$0x7]
      %v3475 = vrot.slane %v3467, 2
      %v3476 = vrot.slane %v3468, 2
      %v3477 = vrot.slane %v3469, 2
      %v3478 = vrot.slane %v3470, 2
      %v3481 = vsel %vm375, %v3467, %v3475
      %v3482 = vsel %vm379, %v3467, %v3475
      %v3484 = vrot.slane %v3482, 2
      %v3487 = vsel %vm375, %v3468, %v3476
      %v3488 = vsel %vm379, %v3468, %v3476
      %v3490 = vrot.slane %v3488, 2
      %v3493 = vsel %vm375, %v3469, %v3477
      %v3494 = vsel %vm379, %v3469, %v3477
      %v3496 = vrot.slane %v3494, 2
      %v3499 = vsel %vm375, %v3470, %v3478
      %v3500 = vsel %vm379, %v3470, %v3478
      %v3502 = vrot.slane %v3500, 2
      %v3503 = vshrl.u32 %v3481, 16
      %v3505 = vrot.slane %v3503, 6
      %v3506 = vshll.u32 %v3481, 16
      %v3508 = vrot.slane %v3506, 7
      %v3509 = vor.u32 %v3505, %v3508
      %v3510 = vrot.slane %v3509, 2
      %v3512 = vshll.u32 %v3484, 16
      %v3514 = vrot.slane %v3512, 7
      %v3515 = vsel %vm407, %v3510, %v3514
      %v3516 = vshrl.u32 %v3487, 16
      %v3518 = vrot.slane %v3516, 6
      %v3519 = vshll.u32 %v3487, 16
      %v3521 = vrot.slane %v3519, 7
      %v3522 = vor.u32 %v3518, %v3521
      %v3523 = vrot.slane %v3522, 2
      %v3525 = vshll.u32 %v3490, 16
      %v3527 = vrot.slane %v3525, 7
      %v3528 = vsel %vm407, %v3523, %v3527
      %v3529 = vshrl.u32 %v3493, 16
      %v3531 = vrot.slane %v3529, 6
      %v3532 = vshll.u32 %v3493, 16
      %v3534 = vrot.slane %v3532, 7
      %v3535 = vor.u32 %v3531, %v3534
      %v3536 = vrot.slane %v3535, 2
      %v3538 = vshll.u32 %v3496, 16
      %v3540 = vrot.slane %v3538, 7
      %v3541 = vsel %vm407, %v3536, %v3540
      %v3542 = vshrl.u32 %v3499, 16
      %v3544 = vrot.slane %v3542, 6
      %v3545 = vshll.u32 %v3499, 16
      %v3547 = vrot.slane %v3545, 7
      %v3548 = vor.u32 %v3544, %v3547
      %v3549 = vrot.slane %v3548, 2
      %v3551 = vshll.u32 %v3502, 16
      %v3553 = vrot.slane %v3551, 7
      %v3554 = vsel %vm407, %v3549, %v3553
      %s3555 = scalar_lea.vmem %s3, 1408
      %v3556 = vld [vmem:[%s3555] sm:$0xf]
      %v3557 = vld [vmem:[%s3555 + $0x4] sm:$0xf]
      %v3558 = vld [vmem:[%s3555 + $0x8] sm:$0xf]
      %v3559 = vld [vmem:[%s3555 + $0xc] sm:$0xf]
      %v3560 = vld [vmem:[%s3555 + $0x10] sm:$0xf]
      %v3561 = vld [vmem:[%s3555 + $0x14] sm:$0xf]
      %v3562 = vld [vmem:[%s3555 + $0x18] sm:$0xf]
      %v3563 = vld [vmem:[%s3555 + $0x1c] sm:$0xf]
      %v3564 = vld [vmem:[%s3555 + $0x20] sm:$0xf]
      %v3565 = vld [vmem:[%s3555 + $0x24] sm:$0xf]
      %v3566 = vld [vmem:[%s3555 + $0x28] sm:$0xf]
      %v3567 = vld [vmem:[%s3555 + $0x2c] sm:$0xf]
      %v3568 = vld [vmem:[%s3555 + $0x30] sm:$0xf]
      %v3569 = vld [vmem:[%s3555 + $0x34] sm:$0xf]
      %v3570 = vld [vmem:[%s3555 + $0x38] sm:$0xf]
      %v3571 = vld [vmem:[%s3555 + $0x3c] sm:$0xf]
      %3573 = vst [vmem:[#allocation1] ss:$4 sm:$0xff] %v3515
      %s3575 = scalar_lea.vmem [#allocation1], 1
      %3576 = vst [vmem:[%s3575] ss:$4 sm:$0xff] %v3528
      %s3578 = scalar_lea.vmem [#allocation1], 2
      %3579 = vst [vmem:[%s3578] ss:$4 sm:$0xff] %v3541
      %s3581 = scalar_lea.vmem [#allocation1], 3
      %3582 = vst [vmem:[%s3581] ss:$4 sm:$0xff] %v3554
      %v3583 = vld.sshfl [vmem:[#allocation1] sm:$0xff pattern:$0x73625140]
      %v3601 = vunpack.c.l.b16 %v3556
      %v3602 = vunpack.c.l.b16 %v3557
      %v3603 = vunpack.c.l.b16 %v3558
      %v3604 = vunpack.c.l.b16 %v3559
      %v3605 = vunpack.c.l.b16 %v3560
      %v3606 = vunpack.c.l.b16 %v3561
      %v3607 = vunpack.c.l.b16 %v3562
      %v3608 = vunpack.c.l.b16 %v3563
      %v3609 = vunpack.c.l.b16 %v3564
      %v3610 = vunpack.c.l.b16 %v3565
      %v3611 = vunpack.c.l.b16 %v3566
      %v3612 = vunpack.c.l.b16 %v3567
      %v3613 = vunpack.c.l.b16 %v3568
      %v3614 = vunpack.c.l.b16 %v3569
      %v3615 = vunpack.c.l.b16 %v3570
      %v3616 = vunpack.c.l.b16 %v3571
      %v3617 = vpack.c.b16 %v3602, %v3601
      %v3618 = vpack.c.b16 %v3604, %v3603
      %v3619 = vpack.c.b16 %v3606, %v3605
      %v3620 = vpack.c.b16 %v3608, %v3607
      %v3621 = vpack.c.b16 %v3610, %v3609
      %v3622 = vpack.c.b16 %v3612, %v3611
      %v3623 = vpack.c.b16 %v3614, %v3613
      %v3624 = vpack.c.b16 %v3616, %v3615
      %3633 = vmatpush.bf16.msra.mxu0 %v3624
      %3634 = vmatpush.bf16.msra.mxu0 %v3623
      %3635 = vmatpush.bf16.msra.mxu0 %v3622
      %3636 = vmatpush.bf16.msra.mxu0 %v3621
      %3637 = vmatpush.bf16.msra.mxu0 %v3620
      %3638 = vmatpush.bf16.msra.mxu0 %v3619
      %3639 = vmatpush.bf16.msra.mxu0 %v3618
      %3640 = vmatpush.bf16.msra.mxu0 %v3617
      %3641 = vmatmul.bf16.gmra.mxu0 %v3583
      %v3642 = vpop.f32.mrf.mxu0
      %v3643 = vadd.f32 0.0, %v3642
      %v3644 = vpop.f32.mrf.mxu0
      %v3645 = vadd.f32 0.0, %v3644
      %3646 = vdwg.mxu0
      %v3647 = vadd.f32 %v3465, %v3643
      %v3648 = vadd.f32 %v3466, %v3645
      %v3649 = vld [vmem:[%s3368] sm:$0x6]
      %v3650 = vld [vmem:[%s3368 + $0x4] sm:$0x6]
      %v3651 = vld [vmem:[%s3368 + $0x8] sm:$0x6]
      %v3652 = vld [vmem:[%s3368 + $0xc] sm:$0x6]
      %v3657 = vrot.slane %v3649, 2
      %v3658 = vrot.slane %v3650, 2
      %v3659 = vrot.slane %v3651, 2
      %v3660 = vrot.slane %v3652, 2
      %v3663 = vsel %vm375, %v3649, %v3657
      %v3665 = vsel %vm379, %v3649, %v3657
      %v3667 = vrot.slane %v3665, 2
      %v3670 = vsel %vm375, %v3650, %v3658
      %v3672 = vsel %vm379, %v3650, %v3658
      %v3674 = vrot.slane %v3672, 2
      %v3677 = vsel %vm375, %v3651, %v3659
      %v3679 = vsel %vm379, %v3651, %v3659
      %v3681 = vrot.slane %v3679, 2
      %v3684 = vsel %vm375, %v3652, %v3660
      %v3686 = vsel %vm379, %v3652, %v3660
      %v3688 = vrot.slane %v3686, 2
      %v3689 = vrot.slane %v3663, 7
      %v3690 = vrot.slane %v3689, 2
      %v3691 = vrot.slane %v3667, 7
      %v3692 = vsel %vm673, %v3690, %v3691
      %v3693 = vrot.slane %v3670, 7
      %v3694 = vrot.slane %v3693, 2
      %v3695 = vrot.slane %v3674, 7
      %v3696 = vsel %vm673, %v3694, %v3695
      %v3697 = vrot.slane %v3677, 7
      %v3698 = vrot.slane %v3697, 2
      %v3699 = vrot.slane %v3681, 7
      %v3700 = vsel %vm673, %v3698, %v3699
      %v3701 = vrot.slane %v3684, 7
      %v3702 = vrot.slane %v3701, 2
      %v3703 = vrot.slane %v3688, 7
      %v3704 = vsel %vm673, %v3702, %v3703
      %s3705 = scalar_lea.vmem %s3, 1472
      %v3706 = vld [vmem:[%s3705] sm:$0xf]
      %v3707 = vld [vmem:[%s3705 + $0x4] sm:$0xf]
      %v3708 = vld [vmem:[%s3705 + $0x8] sm:$0xf]
      %v3709 = vld [vmem:[%s3705 + $0xc] sm:$0xf]
      %v3710 = vld [vmem:[%s3705 + $0x10] sm:$0xf]
      %v3711 = vld [vmem:[%s3705 + $0x14] sm:$0xf]
      %v3712 = vld [vmem:[%s3705 + $0x18] sm:$0xf]
      %v3713 = vld [vmem:[%s3705 + $0x1c] sm:$0xf]
      %v3714 = vld [vmem:[%s3705 + $0x20] sm:$0xf]
      %v3715 = vld [vmem:[%s3705 + $0x24] sm:$0xf]
      %v3716 = vld [vmem:[%s3705 + $0x28] sm:$0xf]
      %v3717 = vld [vmem:[%s3705 + $0x2c] sm:$0xf]
      %v3718 = vld [vmem:[%s3705 + $0x30] sm:$0xf]
      %v3719 = vld [vmem:[%s3705 + $0x34] sm:$0xf]
      %v3720 = vld [vmem:[%s3705 + $0x38] sm:$0xf]
      %v3721 = vld [vmem:[%s3705 + $0x3c] sm:$0xf]
      %3723 = vst [vmem:[#allocation1] ss:$4 sm:$0xff] %v3692
      %s3725 = scalar_lea.vmem [#allocation1], 1
      %3726 = vst [vmem:[%s3725] ss:$4 sm:$0xff] %v3696
      %s3728 = scalar_lea.vmem [#allocation1], 2
      %3729 = vst [vmem:[%s3728] ss:$4 sm:$0xff] %v3700
      %s3731 = scalar_lea.vmem [#allocation1], 3
      %3732 = vst [vmem:[%s3731] ss:$4 sm:$0xff] %v3704
      %v3733 = vld.sshfl [vmem:[#allocation1] sm:$0xff pattern:$0x73625140]
      %v3751 = vunpack.c.l.b16 %v3706
      %v3752 = vunpack.c.l.b16 %v3707
      %v3753 = vunpack.c.l.b16 %v3708
      %v3754 = vunpack.c.l.b16 %v3709
      %v3755 = vunpack.c.l.b16 %v3710
      %v3756 = vunpack.c.l.b16 %v3711
      %v3757 = vunpack.c.l.b16 %v3712
      %v3758 = vunpack.c.l.b16 %v3713
      %v3759 = vunpack.c.l.b16 %v3714
      %v3760 = vunpack.c.l.b16 %v3715
      %v3761 = vunpack.c.l.b16 %v3716
      %v3762 = vunpack.c.l.b16 %v3717
      %v3763 = vunpack.c.l.b16 %v3718
      %v3764 = vunpack.c.l.b16 %v3719
      %v3765 = vunpack.c.l.b16 %v3720
      %v3766 = vunpack.c.l.b16 %v3721
      %v3767 = vpack.c.b16 %v3752, %v3751
      %v3768 = vpack.c.b16 %v3754, %v3753
      %v3769 = vpack.c.b16 %v3756, %v3755
      %v3770 = vpack.c.b16 %v3758, %v3757
      %v3771 = vpack.c.b16 %v3760, %v3759
      %v3772 = vpack.c.b16 %v3762, %v3761
      %v3773 = vpack.c.b16 %v3764, %v3763
      %v3774 = vpack.c.b16 %v3766, %v3765
      %3783 = vmatpush.bf16.msra.mxu0 %v3774
      %3784 = vmatpush.bf16.msra.mxu0 %v3773
      %3785 = vmatpush.bf16.msra.mxu0 %v3772
      %3786 = vmatpush.bf16.msra.mxu0 %v3771
      %3787 = vmatpush.bf16.msra.mxu0 %v3770
      %3788 = vmatpush.bf16.msra.mxu0 %v3769
      %3789 = vmatpush.bf16.msra.mxu0 %v3768
      %3790 = vmatpush.bf16.msra.mxu0 %v3767
      %3791 = vmatmul.bf16.gmra.mxu0 %v3733
      %v3792 = vpop.f32.mrf.mxu0
      %v3793 = vadd.f32 0.0, %v3792
      %v3794 = vpop.f32.mrf.mxu0
      %v3795 = vadd.f32 0.0, %v3794
      %3796 = vdwg.mxu0
      %v3797 = vadd.f32 %v3647, %v3793
      %v3798 = vadd.f32 %v3648, %v3795
      %s3799 = scalar_lea.vmem %s332, 8
      %v3800 = vld [vmem:[%s3799] sm:$0x3]
      %v3801 = vld [vmem:[%s3799 + $0x4] sm:$0x3]
      %v3802 = vld [vmem:[%s3799 + $0x8] sm:$0x3]
      %v3803 = vld [vmem:[%s3799 + $0xc] sm:$0x3]
      %s3804 = scalar_lea.vmem %s3, 1536
      %v3805 = vld [vmem:[%s3804] sm:$0xf]
      %v3806 = vld [vmem:[%s3804 + $0x4] sm:$0xf]
      %v3807 = vld [vmem:[%s3804 + $0x8] sm:$0xf]
      %v3808 = vld [vmem:[%s3804 + $0xc] sm:$0xf]
      %v3809 = vld [vmem:[%s3804 + $0x10] sm:$0xf]
      %v3810 = vld [vmem:[%s3804 + $0x14] sm:$0xf]
      %v3811 = vld [vmem:[%s3804 + $0x18] sm:$0xf]
      %v3812 = vld [vmem:[%s3804 + $0x1c] sm:$0xf]
      %v3813 = vld [vmem:[%s3804 + $0x20] sm:$0xf]
      %v3814 = vld [vmem:[%s3804 + $0x24] sm:$0xf]
      %v3815 = vld [vmem:[%s3804 + $0x28] sm:$0xf]
      %v3816 = vld [vmem:[%s3804 + $0x2c] sm:$0xf]
      %v3817 = vld [vmem:[%s3804 + $0x30] sm:$0xf]
      %v3818 = vld [vmem:[%s3804 + $0x34] sm:$0xf]
      %v3819 = vld [vmem:[%s3804 + $0x38] sm:$0xf]
      %v3820 = vld [vmem:[%s3804 + $0x3c] sm:$0xf]
      %3822 = vst [vmem:[#allocation1] ss:$4 sm:$0xff] %v3800
      %s3824 = scalar_lea.vmem [#allocation1], 1
      %3825 = vst [vmem:[%s3824] ss:$4 sm:$0xff] %v3801
      %s3827 = scalar_lea.vmem [#allocation1], 2
      %3828 = vst [vmem:[%s3827] ss:$4 sm:$0xff] %v3802
      %s3830 = scalar_lea.vmem [#allocation1], 3
      %3831 = vst [vmem:[%s3830] ss:$4 sm:$0xff] %v3803
      %v3832 = vld.sshfl [vmem:[#allocation1] sm:$0xff pattern:$0x73625140]
      %v3850 = vunpack.c.l.b16 %v3805
      %v3851 = vunpack.c.l.b16 %v3806
      %v3852 = vunpack.c.l.b16 %v3807
      %v3853 = vunpack.c.l.b16 %v3808
      %v3854 = vunpack.c.l.b16 %v3809
      %v3855 = vunpack.c.l.b16 %v3810
      %v3856 = vunpack.c.l.b16 %v3811
      %v3857 = vunpack.c.l.b16 %v3812
      %v3858 = vunpack.c.l.b16 %v3813
      %v3859 = vunpack.c.l.b16 %v3814
      %v3860 = vunpack.c.l.b16 %v3815
      %v3861 = vunpack.c.l.b16 %v3816
      %v3862 = vunpack.c.l.b16 %v3817
      %v3863 = vunpack.c.l.b16 %v3818
      %v3864 = vunpack.c.l.b16 %v3819
      %v3865 = vunpack.c.l.b16 %v3820
      %v3866 = vpack.c.b16 %v3851, %v3850
      %v3867 = vpack.c.b16 %v3853, %v3852
      %v3868 = vpack.c.b16 %v3855, %v3854
      %v3869 = vpack.c.b16 %v3857, %v3856
      %v3870 = vpack.c.b16 %v3859, %v3858
      %v3871 = vpack.c.b16 %v3861, %v3860
      %v3872 = vpack.c.b16 %v3863, %v3862
      %v3873 = vpack.c.b16 %v3865, %v3864
      %3882 = vmatpush.bf16.msra.mxu0 %v3873
      %3883 = vmatpush.bf16.msra.mxu0 %v3872
      %3884 = vmatpush.bf16.msra.mxu0 %v3871
      %3885 = vmatpush.bf16.msra.mxu0 %v3870
      %3886 = vmatpush.bf16.msra.mxu0 %v3869
      %3887 = vmatpush.bf16.msra.mxu0 %v3868
      %3888 = vmatpush.bf16.msra.mxu0 %v3867
      %3889 = vmatpush.bf16.msra.mxu0 %v3866
      %3890 = vmatmul.bf16.gmra.mxu0 %v3832
      %v3891 = vpop.f32.mrf.mxu0
      %v3892 = vadd.f32 0.0, %v3891
      %v3893 = vpop.f32.mrf.mxu0
      %v3894 = vadd.f32 0.0, %v3893
      %3895 = vdwg.mxu0
      %v3896 = vadd.f32 %v3797, %v3892
      %v3897 = vadd.f32 %v3798, %v3894
      %v3898 = vld [vmem:[%s3799] sm:$0x7]
      %v3899 = vld [vmem:[%s3799 + $0x4] sm:$0x7]
      %v3900 = vld [vmem:[%s3799 + $0x8] sm:$0x7]
      %v3901 = vld [vmem:[%s3799 + $0xc] sm:$0x7]
      %v3906 = vrot.slane %v3898, 2
      %v3907 = vrot.slane %v3899, 2
      %v3908 = vrot.slane %v3900, 2
      %v3909 = vrot.slane %v3901, 2
      %v3912 = vsel %vm375, %v3898, %v3906
      %v3913 = vsel %vm379, %v3898, %v3906
      %v3915 = vrot.slane %v3913, 2
      %v3918 = vsel %vm375, %v3899, %v3907
      %v3919 = vsel %vm379, %v3899, %v3907
      %v3921 = vrot.slane %v3919, 2
      %v3924 = vsel %vm375, %v3900, %v3908
      %v3925 = vsel %vm379, %v3900, %v3908
      %v3927 = vrot.slane %v3925, 2
      %v3930 = vsel %vm375, %v3901, %v3909
      %v3931 = vsel %vm379, %v3901, %v3909
      %v3933 = vrot.slane %v3931, 2
      %v3934 = vshrl.u32 %v3912, 16
      %v3936 = vrot.slane %v3934, 6
      %v3937 = vshll.u32 %v3912, 16
      %v3939 = vrot.slane %v3937, 7
      %v3940 = vor.u32 %v3936, %v3939
      %v3941 = vrot.slane %v3940, 2
      %v3943 = vshll.u32 %v3915, 16
      %v3945 = vrot.slane %v3943, 7
      %v3946 = vsel %vm407, %v3941, %v3945
      %v3947 = vshrl.u32 %v3918, 16
      %v3949 = vrot.slane %v3947, 6
      %v3950 = vshll.u32 %v3918, 16
      %v3952 = vrot.slane %v3950, 7
      %v3953 = vor.u32 %v3949, %v3952
      %v3954 = vrot.slane %v3953, 2
      %v3956 = vshll.u32 %v3921, 16
      %v3958 = vrot.slane %v3956, 7
      %v3959 = vsel %vm407, %v3954, %v3958
      %v3960 = vshrl.u32 %v3924, 16
      %v3962 = vrot.slane %v3960, 6
      %v3963 = vshll.u32 %v3924, 16
      %v3965 = vrot.slane %v3963, 7
      %v3966 = vor.u32 %v3962, %v3965
      %v3967 = vrot.slane %v3966, 2
      %v3969 = vshll.u32 %v3927, 16
      %v3971 = vrot.slane %v3969, 7
      %v3972 = vsel %vm407, %v3967, %v3971
      %v3973 = vshrl.u32 %v3930, 16
      %v3975 = vrot.slane %v3973, 6
      %v3976 = vshll.u32 %v3930, 16
      %v3978 = vrot.slane %v3976, 7
      %v3979 = vor.u32 %v3975, %v3978
      %v3980 = vrot.slane %v3979, 2
      %v3982 = vshll.u32 %v3933, 16
      %v3984 = vrot.slane %v3982, 7
      %v3985 = vsel %vm407, %v3980, %v3984
      %s3986 = scalar_lea.vmem %s3, 1600
      %v3987 = vld [vmem:[%s3986] sm:$0xf]
      %v3988 = vld [vmem:[%s3986 + $0x4] sm:$0xf]
      %v3989 = vld [vmem:[%s3986 + $0x8] sm:$0xf]
      %v3990 = vld [vmem:[%s3986 + $0xc] sm:$0xf]
      %v3991 = vld [vmem:[%s3986 + $0x10] sm:$0xf]
      %v3992 = vld [vmem:[%s3986 + $0x14] sm:$0xf]
      %v3993 = vld [vmem:[%s3986 + $0x18] sm:$0xf]
      %v3994 = vld [vmem:[%s3986 + $0x1c] sm:$0xf]
      %v3995 = vld [vmem:[%s3986 + $0x20] sm:$0xf]
      %v3996 = vld [vmem:[%s3986 + $0x24] sm:$0xf]
      %v3997 = vld [vmem:[%s3986 + $0x28] sm:$0xf]
      %v3998 = vld [vmem:[%s3986 + $0x2c] sm:$0xf]
      %v3999 = vld [vmem:[%s3986 + $0x30] sm:$0xf]
      %v4000 = vld [vmem:[%s3986 + $0x34] sm:$0xf]
      %v4001 = vld [vmem:[%s3986 + $0x38] sm:$0xf]
      %v4002 = vld [vmem:[%s3986 + $0x3c] sm:$0xf]
      %4004 = vst [vmem:[#allocation1] ss:$4 sm:$0xff] %v3946
      %s4006 = scalar_lea.vmem [#allocation1], 1
      %4007 = vst [vmem:[%s4006] ss:$4 sm:$0xff] %v3959
      %s4009 = scalar_lea.vmem [#allocation1], 2
      %4010 = vst [vmem:[%s4009] ss:$4 sm:$0xff] %v3972
      %s4012 = scalar_lea.vmem [#allocation1], 3
      %4013 = vst [vmem:[%s4012] ss:$4 sm:$0xff] %v3985
      %v4014 = vld.sshfl [vmem:[#allocation1] sm:$0xff pattern:$0x73625140]
      %v4032 = vunpack.c.l.b16 %v3987
      %v4033 = vunpack.c.l.b16 %v3988
      %v4034 = vunpack.c.l.b16 %v3989
      %v4035 = vunpack.c.l.b16 %v3990
      %v4036 = vunpack.c.l.b16 %v3991
      %v4037 = vunpack.c.l.b16 %v3992
      %v4038 = vunpack.c.l.b16 %v3993
      %v4039 = vunpack.c.l.b16 %v3994
      %v4040 = vunpack.c.l.b16 %v3995
      %v4041 = vunpack.c.l.b16 %v3996
      %v4042 = vunpack.c.l.b16 %v3997
      %v4043 = vunpack.c.l.b16 %v3998
      %v4044 = vunpack.c.l.b16 %v3999
      %v4045 = vunpack.c.l.b16 %v4000
      %v4046 = vunpack.c.l.b16 %v4001
      %v4047 = vunpack.c.l.b16 %v4002
      %v4048 = vpack.c.b16 %v4033, %v4032
      %v4049 = vpack.c.b16 %v4035, %v4034
      %v4050 = vpack.c.b16 %v4037, %v4036
      %v4051 = vpack.c.b16 %v4039, %v4038
      %v4052 = vpack.c.b16 %v4041, %v4040
      %v4053 = vpack.c.b16 %v4043, %v4042
      %v4054 = vpack.c.b16 %v4045, %v4044
      %v4055 = vpack.c.b16 %v4047, %v4046
      %4064 = vmatpush.bf16.msra.mxu0 %v4055
      %4065 = vmatpush.bf16.msra.mxu0 %v4054
      %4066 = vmatpush.bf16.msra.mxu0 %v4053
      %4067 = vmatpush.bf16.msra.mxu0 %v4052
      %4068 = vmatpush.bf16.msra.mxu0 %v4051
      %4069 = vmatpush.bf16.msra.mxu0 %v4050
      %4070 = vmatpush.bf16.msra.mxu0 %v4049
      %4071 = vmatpush.bf16.msra.mxu0 %v4048
      %4072 = vmatmul.bf16.gmra.mxu0 %v4014
      %v4073 = vpop.f32.mrf.mxu0
      %v4074 = vadd.f32 0.0, %v4073
      %v4075 = vpop.f32.mrf.mxu0
      %v4076 = vadd.f32 0.0, %v4075
      %4077 = vdwg.mxu0
      %v4078 = vadd.f32 %v3896, %v4074
      %v4079 = vadd.f32 %v3897, %v4076
      %v4080 = vld [vmem:[%s3799] sm:$0x6]
      %v4081 = vld [vmem:[%s3799 + $0x4] sm:$0x6]
      %v4082 = vld [vmem:[%s3799 + $0x8] sm:$0x6]
      %v4083 = vld [vmem:[%s3799 + $0xc] sm:$0x6]
      %v4088 = vrot.slane %v4080, 2
      %v4089 = vrot.slane %v4081, 2
      %v4090 = vrot.slane %v4082, 2
      %v4091 = vrot.slane %v4083, 2
      %v4094 = vsel %vm375, %v4080, %v4088
      %v4096 = vsel %vm379, %v4080, %v4088
      %v4098 = vrot.slane %v4096, 2
      %v4101 = vsel %vm375, %v4081, %v4089
      %v4103 = vsel %vm379, %v4081, %v4089
      %v4105 = vrot.slane %v4103, 2
      %v4108 = vsel %vm375, %v4082, %v4090
      %v4110 = vsel %vm379, %v4082, %v4090
      %v4112 = vrot.slane %v4110, 2
      %v4115 = vsel %vm375, %v4083, %v4091
      %v4117 = vsel %vm379, %v4083, %v4091
      %v4119 = vrot.slane %v4117, 2
      %v4120 = vrot.slane %v4094, 7
      %v4121 = vrot.slane %v4120, 2
      %v4122 = vrot.slane %v4098, 7
      %v4123 = vsel %vm673, %v4121, %v4122
      %v4124 = vrot.slane %v4101, 7
      %v4125 = vrot.slane %v4124, 2
      %v4126 = vrot.slane %v4105, 7
      %v4127 = vsel %vm673, %v4125, %v4126
      %v4128 = vrot.slane %v4108, 7
      %v4129 = vrot.slane %v4128, 2
      %v4130 = vrot.slane %v4112, 7
      %v4131 = vsel %vm673, %v4129, %v4130
      %v4132 = vrot.slane %v4115, 7
      %v4133 = vrot.slane %v4132, 2
      %v4134 = vrot.slane %v4119, 7
      %v4135 = vsel %vm673, %v4133, %v4134
      %s4136 = scalar_lea.vmem %s3, 1664
      %v4137 = vld [vmem:[%s4136] sm:$0xf]
      %v4138 = vld [vmem:[%s4136 + $0x4] sm:$0xf]
      %v4139 = vld [vmem:[%s4136 + $0x8] sm:$0xf]
      %v4140 = vld [vmem:[%s4136 + $0xc] sm:$0xf]
      %v4141 = vld [vmem:[%s4136 + $0x10] sm:$0xf]
      %v4142 = vld [vmem:[%s4136 + $0x14] sm:$0xf]
      %v4143 = vld [vmem:[%s4136 + $0x18] sm:$0xf]
      %v4144 = vld [vmem:[%s4136 + $0x1c] sm:$0xf]
      %v4145 = vld [vmem:[%s4136 + $0x20] sm:$0xf]
      %v4146 = vld [vmem:[%s4136 + $0x24] sm:$0xf]
      %v4147 = vld [vmem:[%s4136 + $0x28] sm:$0xf]
      %v4148 = vld [vmem:[%s4136 + $0x2c] sm:$0xf]
      %v4149 = vld [vmem:[%s4136 + $0x30] sm:$0xf]
      %v4150 = vld [vmem:[%s4136 + $0x34] sm:$0xf]
      %v4151 = vld [vmem:[%s4136 + $0x38] sm:$0xf]
      %v4152 = vld [vmem:[%s4136 + $0x3c] sm:$0xf]
      %4154 = vst [vmem:[#allocation1] ss:$4 sm:$0xff] %v4123
      %s4156 = scalar_lea.vmem [#allocation1], 1
      %4157 = vst [vmem:[%s4156] ss:$4 sm:$0xff] %v4127
      %s4159 = scalar_lea.vmem [#allocation1], 2
      %4160 = vst [vmem:[%s4159] ss:$4 sm:$0xff] %v4131
      %s4162 = scalar_lea.vmem [#allocation1], 3
      %4163 = vst [vmem:[%s4162] ss:$4 sm:$0xff] %v4135
      %v4164 = vld.sshfl [vmem:[#allocation1] sm:$0xff pattern:$0x73625140]
      %v4182 = vunpack.c.l.b16 %v4137
      %v4183 = vunpack.c.l.b16 %v4138
      %v4184 = vunpack.c.l.b16 %v4139
      %v4185 = vunpack.c.l.b16 %v4140
      %v4186 = vunpack.c.l.b16 %v4141
      %v4187 = vunpack.c.l.b16 %v4142
      %v4188 = vunpack.c.l.b16 %v4143
      %v4189 = vunpack.c.l.b16 %v4144
      %v4190 = vunpack.c.l.b16 %v4145
      %v4191 = vunpack.c.l.b16 %v4146
      %v4192 = vunpack.c.l.b16 %v4147
      %v4193 = vunpack.c.l.b16 %v4148
      %v4194 = vunpack.c.l.b16 %v4149
      %v4195 = vunpack.c.l.b16 %v4150
      %v4196 = vunpack.c.l.b16 %v4151
      %v4197 = vunpack.c.l.b16 %v4152
      %v4198 = vpack.c.b16 %v4183, %v4182
      %v4199 = vpack.c.b16 %v4185, %v4184
      %v4200 = vpack.c.b16 %v4187, %v4186
      %v4201 = vpack.c.b16 %v4189, %v4188
      %v4202 = vpack.c.b16 %v4191, %v4190
      %v4203 = vpack.c.b16 %v4193, %v4192
      %v4204 = vpack.c.b16 %v4195, %v4194
      %v4205 = vpack.c.b16 %v4197, %v4196
      %4214 = vmatpush.bf16.msra.mxu0 %v4205
      %4215 = vmatpush.bf16.msra.mxu0 %v4204
      %4216 = vmatpush.bf16.msra.mxu0 %v4203
      %4217 = vmatpush.bf16.msra.mxu0 %v4202
      %4218 = vmatpush.bf16.msra.mxu0 %v4201
      %4219 = vmatpush.bf16.msra.mxu0 %v4200
      %4220 = vmatpush.bf16.msra.mxu0 %v4199
      %4221 = vmatpush.bf16.msra.mxu0 %v4198
      %4222 = vmatmul.bf16.gmra.mxu0 %v4164
      %v4223 = vpop.f32.mrf.mxu0
      %v4224 = vadd.f32 0.0, %v4223
      %v4225 = vpop.f32.mrf.mxu0
      %v4226 = vadd.f32 0.0, %v4225
      %4227 = vdwg.mxu0
      %v4228 = vadd.f32 %v4078, %v4224
      %v4229 = vadd.f32 %v4079, %v4226
      %v4230 = vld [vmem:[%s4] sm:$0x1]
      %v4232 = vperm.slane %v4230, 0
      %v4234 = vadd.f32 %v4228, %v4232
      %v4235 = vadd.f32 %v4229, %v4232
      %v4236 = vmax.f32 %v4234, 0.0
      %v4237 = vmax.f32 %v4235, 0.0
      %v4238 = vpack.c.bf16 %v4236, %v4236
      %v4239 = vpack.c.bf16 %v4237, %v4237
      %4240 = vst [vmem:[%s342] sm:$0xf] %v4238
      %4241 = vst [vmem:[%s342 + $0x4] sm:$0xf] %v4239
      %p4242 = scmp.lt.s32.totalorder %s20, 1
      %s4243 = scalar_select %p4242, %s20, 1
      %p4244 = scmp.lt.s32.totalorder %s21, 3
      %s4245 = scalar_select %p4244, %s21, 3
      %s4246 = smul.addr %s4245, 2
      %s4247 = smul.addr %s4243, 8
      %s4248 = sadd.s32 %s4246, %s4247
      %s4249 = smul.addr %s4248, 4
      %s4250 = scalar_lea.vmem %s5, %s4249
      // Predicated region
      $region41: #{down_block_forward.4} parent=39 // pred_check
        %p4251 = pneg %p178
      $region42: #{down_block_forward.4} parent=39 // pred_check_branch
        %4253 = sbr.rel (%p4251) target = $region44
      $region43: #{down_block_forward.4} parent=39 // pred_region
        _
      $region44: #{down_block_forward.4} parent=39 // pred_fallthru
        _
    $region40: #{down_block_forward.4} parent=5 // pred_fallthru
      _
    %p4254 = scmp.le.s32.totalorder 2, %s11
    // Predicated region
    $region45: #{down_block_forward.4} parent=5 // pred_check
      %p4255 = pneg %p4254
    $region46: #{down_block_forward.4} parent=5 // pred_check_branch
      %4257 = sbr.rel (%p4255) target = $region48
    $region47: #{down_block_forward.4} parent=5 // pred_region
      %s4258 = ssub.s32 %s11, 2
      // Predicated region
      $region49: #{down_block_forward.4} parent=47 // pred_check
        %p4259 = pneg %p184
      $region50: #{down_block_forward.4} parent=47 // pred_check_branch
        %4261 = sbr.rel (%p4259) target = $region52
      $region51: #{down_block_forward.4} parent=47 // pred_region
        %p4262 = scmp.lt.s32.totalorder %s22, 1
        %s4263 = scalar_select %p4262, %s22, 1
        %p4264 = scmp.lt.s32.totalorder %s23, 3
        %s4265 = scalar_select %p4264, %s23, 3
        %s4266 = smul.addr %s4265, 2
        %s4267 = smul.addr %s4263, 8
        %s4268 = sadd.s32 %s4266, %s4267
        %s4269 = smul.addr %s4268, 4
        %s4270 = scalar_lea.vmem %s5, %s4269
      $region52: #{down_block_forward.4} parent=47 // pred_fallthru
        _
    $region48: #{down_block_forward.4} parent=5 // pred_fallthru
      _
  $region6: #{down_block_forward.4} parent=0 // loop_footer
    %s15 = sadd.s32 1, %s11
  $region7: #{down_block_forward.4} parent=0 // loop_footer_branch
    %10 = sbr.rel target = $region3
  $region8: #{down_block_forward.4} parent=0 // loop_exit
    _

// kernel: down_block_forward.5
$region0: #{down_block_forward.5}
  #allocation0 [shape = 'u32[]', space=smem, size = 0x4, offset = 0x4, fixed_abs, tag = 'smem constant byte address 0x4 - core index']
  #allocation1 [shape = 'u32[72,128]{1,0:T(1,128)}', space=vmem, size = 0x9000, scoped, tag = 'internal scratch']
  %s0 = inlined_call_operand.vmem [shape: bf16[2,6,6,6,128], index: 0, kind: input, shape index: {}, may-alias: {0,1,2}]
  %s1 = inlined_call_operand.vmem [shape: bf16[2,6,6,6,128], index: 1, kind: input, shape index: {}, may-alias: {0,1,2}]
  %s2 = inlined_call_operand.vmem [shape: bf16[2,6,6,6,128], index: 2, kind: input, shape index: {}, may-alias: {0,1,2}]
  %s3 = inlined_call_operand.vmem [shape: bf16[27,128,128], index: 3, kind: input, shape index: {}]
  %s4 = inlined_call_operand.vmem [shape: f32[1,128], index: 4, kind: input, shape index: {}]
  %s5 = inlined_call_operand.vmem [shape: bf16[2,4,16,128], index: 5, kind: input, shape index: {}]
  %s6 = inlined_call_operand.vmem [shape: bf16[2,4,16,128], index: 6, kind: output, shape index: {}]
  %s7 = sld [smem:[#allocation0]]
  $region57: #{down_block_forward.5} parent=0
    _
  %s9 = ssub.s32 1, %s7
  %s10 = scalar_select 0, %s9, %s7
  loop: start=0, step=1, limit=10
  $region2: #{down_block_forward.5} parent=0 // loop_pre_header
    _
  $region3: #{down_block_forward.5} parent=0 // loop_header
    %s12 = sphi 0, %s16
    %p13 = scmp.ge.s32.totalorder %s12, 10
    %s19 = sphi 0, %s31
    %s20 = sphi 0, %s27
    %s21 = sphi 0, %s19
    %s22 = sphi 0, %s20
    %s23 = sphi 0, %s21
    %s24 = sphi 0, %s22
    %s36 = sphi 0, %s38
    %s39 = sphi 0, %s36
    %s40 = sphi 0, %s39
    %s56 = sphi 0, %s40
    %s66 = sphi 0, %s68
    %s69 = sphi 0, %s66
    %s70 = sphi 0, %s69
    %s86 = sphi 0, %s70
    %s96 = sphi 0, %s98
    %s99 = sphi 0, %s96
    %s100 = sphi 0, %s99
    %s116 = sphi 0, %s100
    %s120 = sphi 0, %s120
    %s122 = sphi 0, %s120
    %s123 = sphi 0, %s122
    %s137 = sphi 0, %s123
    %s141 = sphi 0, %s141
    %s143 = sphi 0, %s141
    %s144 = sphi 0, %s143
    %s158 = sphi 0, %s144
    %s166 = sphi 0, %s168
    %s169 = sphi 0, %s166
    %s170 = sphi 0, %s169
    %s186 = sphi 0, %s170
    %s194 = sphi 0, %s196
    %s197 = sphi 0, %s194
    %s198 = sphi 0, %s197
    %s214 = sphi 0, %s198
  $region4: #{down_block_forward.5} parent=0 // loop_header_branch
    %15 = sbr.rel (%p13) target = $region8
  $region5: #{down_block_forward.5} parent=0 // loop_body
    %s17 = ssub.s32 %s12, 1
    %s18 = ssub.s32 %s12, 2
    %s25 = sadd.s32 1, %s20
    %p26 = scmp.ge.s32.totalorder %s25, 4
    %s27 = scalar_select %p26, 0, %s25
    %s28 = sadd.s32 1, %s19
    %s29 = scalar_select %p26, %s28, %s19
    %p30 = scmp.ge.s32.totalorder %s29, 2
    %s31 = scalar_select %p30, 0, %s29
    %s32 = ssub.s32 %s19, %s31
    %s33 = ssub.s32 %s20, %s27
    %s34 = sor.u32 %s32, %s33
    %p35 = scmp.eq.s32.totalorder %s34, 0
    %s37 = sadd.s32 %s36, 1
    %s38 = scalar_select %p35, %s36, %s37
    %p41 = pneg %p35
    %p42 = scmp.eq.s32.totalorder %s12, 7
    %p43 = por %p41, %p42
    %p44 = scmp.ne.s32.totalorder %s36, %s39
    %p45 = scmp.eq.s32.totalorder %s12, 0
    %p46 = por %p44, %p45
    %p47 = scmp.ne.s32.totalorder %s36, %s39
    %p48 = scmp.eq.s32.totalorder %s17, 7
    %p49 = por %p47, %p48
    %p50 = scmp.ne.s32.totalorder %s39, %s40
    %p51 = scmp.eq.s32.totalorder %s17, 0
    %p52 = por %p50, %p51
    %p53 = scmp.ne.s32.totalorder %s39, %s40
    %p54 = scmp.eq.s32.totalorder %s18, 7
    %p55 = por %p53, %p54
    %p57 = scmp.ne.s32.totalorder %s40, %s56
    %p58 = scmp.eq.s32.totalorder %s18, 0
    %p59 = por %p57, %p58
    %s60 = sadd.s32 %s20, 1
    %s61 = sadd.s32 %s27, 1
    %s62 = ssub.s32 %s19, %s31
    %s63 = ssub.s32 %s60, %s61
    %s64 = sor.u32 %s62, %s63
    %p65 = scmp.eq.s32.totalorder %s64, 0
    %s67 = sadd.s32 %s66, 1
    %s68 = scalar_select %p65, %s66, %s67
    %p71 = pneg %p65
    %p72 = scmp.eq.s32.totalorder %s12, 7
    %p73 = por %p71, %p72
    %p74 = scmp.ne.s32.totalorder %s66, %s69
    %p75 = scmp.eq.s32.totalorder %s12, 0
    %p76 = por %p74, %p75
    %p77 = scmp.ne.s32.totalorder %s66, %s69
    %p78 = scmp.eq.s32.totalorder %s17, 7
    %p79 = por %p77, %p78
    %p80 = scmp.ne.s32.totalorder %s69, %s70
    %p81 = scmp.eq.s32.totalorder %s17, 0
    %p82 = por %p80, %p81
    %p83 = scmp.ne.s32.totalorder %s69, %s70
    %p84 = scmp.eq.s32.totalorder %s18, 7
    %p85 = por %p83, %p84
    %p87 = scmp.ne.s32.totalorder %s70, %s86
    %p88 = scmp.eq.s32.totalorder %s18, 0
    %p89 = por %p87, %p88
    %s90 = sadd.s32 %s20, 2
    %s91 = sadd.s32 %s27, 2
    %s92 = ssub.s32 %s19, %s31
    %s93 = ssub.s32 %s90, %s91
    %s94 = sor.u32 %s92, %s93
    %p95 = scmp.eq.s32.totalorder %s94, 0
    %s97 = sadd.s32 %s96, 1
    %s98 = scalar_select %p95, %s96, %s97
    %p101 = pneg %p95
    %p102 = scmp.eq.s32.totalorder %s12, 7
    %p103 = por %p101, %p102
    %p104 = scmp.ne.s32.totalorder %s96, %s99
    %p105 = scmp.eq.s32.totalorder %s12, 0
    %p106 = por %p104, %p105
    %p107 = scmp.ne.s32.totalorder %s96, %s99
    %p108 = scmp.eq.s32.totalorder %s17, 7
    %p109 = por %p107, %p108
    %p110 = scmp.ne.s32.totalorder %s99, %s100
    %p111 = scmp.eq.s32.totalorder %s17, 0
    %p112 = por %p110, %p111
    %p113 = scmp.ne.s32.totalorder %s99, %s100
    %p114 = scmp.eq.s32.totalorder %s18, 7
    %p115 = por %p113, %p114
    %p117 = scmp.ne.s32.totalorder %s100, %s116
    %p118 = scmp.eq.s32.totalorder %s18, 0
    %p119 = por %p117, %p118
    %s121 = sadd.s32 %s120, 1
    %p124 = scmp.eq.s32.totalorder %s12, 7
    %p125 = scmp.ne.s32.totalorder %s120, %s122
    %p126 = scmp.eq.s32.totalorder %s12, 0
    %p127 = por %p125, %p126
    %p128 = scmp.ne.s32.totalorder %s120, %s122
    %p129 = scmp.eq.s32.totalorder %s17, 7
    %p130 = por %p128, %p129
    %p131 = scmp.ne.s32.totalorder %s122, %s123
    %p132 = scmp.eq.s32.totalorder %s17, 0
    %p133 = por %p131, %p132
    %p134 = scmp.ne.s32.totalorder %s122, %s123
    %p135 = scmp.eq.s32.totalorder %s18, 7
    %p136 = por %p134, %p135
    %p138 = scmp.ne.s32.totalorder %s123, %s137
    %p139 = scmp.eq.s32.totalorder %s18, 0
    %p140 = por %p138, %p139
    %s142 = sadd.s32 %s141, 1
    %p145 = scmp.eq.s32.totalorder %s12, 7
    %p146 = scmp.ne.s32.totalorder %s141, %s143
    %p147 = scmp.eq.s32.totalorder %s12, 0
    %p148 = por %p146, %p147
    %p149 = scmp.ne.s32.totalorder %s141, %s143
    %p150 = scmp.eq.s32.totalorder %s17, 7
    %p151 = por %p149, %p150
    %p152 = scmp.ne.s32.totalorder %s143, %s144
    %p153 = scmp.eq.s32.totalorder %s17, 0
    %p154 = por %p152, %p153
    %p155 = scmp.ne.s32.totalorder %s143, %s144
    %p156 = scmp.eq.s32.totalorder %s18, 7
    %p157 = por %p155, %p156
    %p159 = scmp.ne.s32.totalorder %s144, %s158
    %p160 = scmp.eq.s32.totalorder %s18, 0
    %p161 = por %p159, %p160
    %s162 = ssub.s32 %s19, %s31
    %s163 = ssub.s32 %s20, %s27
    %s164 = sor.u32 %s162, %s163
    %p165 = scmp.eq.s32.totalorder %s164, 0
    %s167 = sadd.s32 %s166, 1
    %s168 = scalar_select %p165, %s166, %s167
    %p171 = pneg %p165
    %p172 = scmp.eq.s32.totalorder %s12, 7
    %p173 = por %p171, %p172
    %p174 = scmp.ne.s32.totalorder %s166, %s169
    %p175 = scmp.eq.s32.totalorder %s12, 0
    %p176 = por %p174, %p175
    %p177 = scmp.ne.s32.totalorder %s166, %s169
    %p178 = scmp.eq.s32.totalorder %s17, 7
    %p179 = por %p177, %p178
    %p180 = scmp.ne.s32.totalorder %s169, %s170
    %p181 = scmp.eq.s32.totalorder %s17, 0
    %p182 = por %p180, %p181
    %p183 = scmp.ne.s32.totalorder %s169, %s170
    %p184 = scmp.eq.s32.totalorder %s18, 7
    %p185 = por %p183, %p184
    %p187 = scmp.ne.s32.totalorder %s170, %s186
    %p188 = scmp.eq.s32.totalorder %s18, 0
    %p189 = por %p187, %p188
    %s190 = ssub.s32 %s19, %s31
    %s191 = ssub.s32 %s20, %s27
    %s192 = sor.u32 %s190, %s191
    %p193 = scmp.eq.s32.totalorder %s192, 0
    %s195 = sadd.s32 %s194, 1
    %s196 = scalar_select %p193, %s194, %s195
    %p199 = pneg %p193
    %p200 = scmp.eq.s32.totalorder %s12, 7
    %p201 = por %p199, %p200
    %p202 = scmp.ne.s32.totalorder %s194, %s197
    %p203 = scmp.eq.s32.totalorder %s12, 0
    %p204 = por %p202, %p203
    %p205 = scmp.ne.s32.totalorder %s194, %s197
    %p206 = scmp.eq.s32.totalorder %s17, 7
    %p207 = por %p205, %p206
    %p208 = scmp.ne.s32.totalorder %s197, %s198
    %p209 = scmp.eq.s32.totalorder %s17, 0
    %p210 = por %p208, %p209
    %p211 = scmp.ne.s32.totalorder %s197, %s198
    %p212 = scmp.eq.s32.totalorder %s18, 7
    %p213 = por %p211, %p212
    %p215 = scmp.ne.s32.totalorder %s198, %s214
    %p216 = scmp.eq.s32.totalorder %s18, 0
    %p217 = por %p215, %p216
    %p218 = scmp.le.s32.totalorder 1, %s12
    %p219 = scmp.lt.s32.totalorder %s12, 9
    %p220 = pnand %p218, %p219
    %p221 = pneg %p220
    // Predicated region
    $region9: #{down_block_forward.5} parent=5 // pred_check
      _
    $region10: #{down_block_forward.5} parent=5 // pred_check_branch
      %223 = sbr.rel (%p220) target = $region12
    $region11: #{down_block_forward.5} parent=5 // pred_region
      %s224 = ssub.s32 %s12, 1
      // Predicated region
      $region13: #{down_block_forward.5} parent=11 // pred_check
        %p225 = pneg %p133
      $region14: #{down_block_forward.5} parent=11 // pred_check_branch
        %227 = sbr.rel (%p225) target = $region16
      $region15: #{down_block_forward.5} parent=11 // pred_region
        _
      $region16: #{down_block_forward.5} parent=11 // pred_fallthru
        _
      // Predicated region
      $region17: #{down_block_forward.5} parent=11 // pred_check
        %p228 = pneg %p154
      $region18: #{down_block_forward.5} parent=11 // pred_check_branch
        %230 = sbr.rel (%p228) target = $region20
      $region19: #{down_block_forward.5} parent=11 // pred_region
        _
      $region20: #{down_block_forward.5} parent=11 // pred_fallthru
        _
    $region12: #{down_block_forward.5} parent=5 // pred_fallthru
      _
    %p231 = scmp.lt.s32.totalorder %s12, 8
    // Predicated region
    $region21: #{down_block_forward.5} parent=5 // pred_check
      %p232 = pneg %p231
    $region22: #{down_block_forward.5} parent=5 // pred_check_branch
      %234 = sbr.rel (%p232) target = $region24
    $region23: #{down_block_forward.5} parent=5 // pred_region
      // Predicated region
      $region25: #{down_block_forward.5} parent=23 // pred_check
        %p235 = pneg %p46
      $region26: #{down_block_forward.5} parent=23 // pred_check_branch
        %237 = sbr.rel (%p235) target = $region28
      $region27: #{down_block_forward.5} parent=23 // pred_region
        %p238 = scmp.lt.s32.totalorder %s19, 1
        %s239 = scalar_select %p238, %s19, 1
        %p240 = scmp.lt.s32.totalorder %s20, 5
        %s241 = scalar_select %p240, %s20, 5
        %s242 = smul.addr %s241, 6
        %s243 = smul.addr %s239, 36
        %s244 = sadd.s32 %s242, %s243
        %s245 = smul.addr %s244, 4
        %s246 = scalar_lea.vmem %s0, %s245
      $region28: #{down_block_forward.5} parent=23 // pred_fallthru
        _
      // Predicated region
      $region29: #{down_block_forward.5} parent=23 // pred_check
        %p247 = pneg %p76
      $region30: #{down_block_forward.5} parent=23 // pred_check_branch
        %249 = sbr.rel (%p247) target = $region32
      $region31: #{down_block_forward.5} parent=23 // pred_region
        %s250 = sadd.s32 %s20, 1
        %p251 = scmp.lt.s32.totalorder %s19, 1
        %s252 = scalar_select %p251, %s19, 1
        %p253 = scmp.lt.s32.totalorder %s250, 5
        %s254 = scalar_select %p253, %s250, 5
        %s255 = smul.addr %s254, 6
        %s256 = smul.addr %s252, 36
        %s257 = sadd.s32 %s255, %s256
        %s258 = smul.addr %s257, 4
        %s259 = scalar_lea.vmem %s1, %s258
        %s260 = sadd.s32 %s20, 1
      $region32: #{down_block_forward.5} parent=23 // pred_fallthru
        _
      // Predicated region
      $region33: #{down_block_forward.5} parent=23 // pred_check
        %p261 = pneg %p106
      $region34: #{down_block_forward.5} parent=23 // pred_check_branch
        %263 = sbr.rel (%p261) target = $region36
      $region35: #{down_block_forward.5} parent=23 // pred_region
        %s264 = sadd.s32 %s20, 2
        %p265 = scmp.lt.s32.totalorder %s19, 1
        %s266 = scalar_select %p265, %s19, 1
        %p267 = scmp.lt.s32.totalorder %s264, 5
        %s268 = scalar_select %p267, %s264, 5
        %s269 = smul.addr %s268, 6
        %s270 = smul.addr %s266, 36
        %s271 = sadd.s32 %s269, %s270
        %s272 = smul.addr %s271, 4
        %s273 = scalar_lea.vmem %s2, %s272
        %s274 = sadd.s32 %s20, 2
      $region36: #{down_block_forward.5} parent=23 // pred_fallthru
        _
      // Predicated region
      $region37: #{down_block_forward.5} parent=23 // pred_check
        %p275 = pneg %p176
      $region38: #{down_block_forward.5} parent=23 // pred_check_branch
        %277 = sbr.rel (%p275) target = $region40
      $region39: #{down_block_forward.5} parent=23 // pred_region
        %p278 = scmp.lt.s32.totalorder %s19, 1
        %s279 = scalar_select %p278, %s19, 1
        %p280 = scmp.lt.s32.totalorder %s20, 3
        %s281 = scalar_select %p280, %s20, 3
        %s282 = smul.addr %s281, 2
        %s283 = smul.addr %s279, 8
        %s284 = sadd.s32 %s282, %s283
        %s285 = smul.addr %s284, 4
        %s286 = scalar_lea.vmem %s5, %s285
      $region40: #{down_block_forward.5} parent=23 // pred_fallthru
        _
    $region24: #{down_block_forward.5} parent=5 // pred_fallthru
      _
    %p287 = scmp.le.s32.totalorder 1, %s12
    %p288 = scmp.lt.s32.totalorder %s12, 9
    %p289 = pnand %p287, %p288
    %p290 = pneg %p289
    // Predicated region
    $region41: #{down_block_forward.5} parent=5 // pred_check
      _
    $region42: #{down_block_forward.5} parent=5 // pred_check_branch
      %292 = sbr.rel (%p289) target = $region44
    $region43: #{down_block_forward.5} parent=5 // pred_region
      %s293 = ssub.s32 %s12, 1
      %p294 = scmp.lt.s32.totalorder %s21, 1
      %s295 = scalar_select %p294, %s21, 1
      %p296 = scmp.lt.s32.totalorder %s22, 5
      %s297 = scalar_select %p296, %s22, 5
      %s298 = smul.addr %s297, 6
      %s299 = smul.addr %s295, 36
      %s300 = sadd.s32 %s298, %s299
      %s301 = smul.addr %s300, 4
      %s302 = scalar_lea.vmem %s0, %s301
      %p303 = pneg %p52
      %p304 = pneg %p49
      %s305 = sadd.s32 %s22, 1
      %p306 = scmp.lt.s32.totalorder %s21, 1
      %s307 = scalar_select %p306, %s21, 1
      %p308 = scmp.lt.s32.totalorder %s305, 5
      %s309 = scalar_select %p308, %s305, 5
      %s310 = smul.addr %s309, 6
      %s311 = smul.addr %s307, 36
      %s312 = sadd.s32 %s310, %s311
      %s313 = smul.addr %s312, 4
      %s314 = scalar_lea.vmem %s1, %s313
      %p315 = pneg %p82
      %p316 = pneg %p79
      %s317 = sadd.s32 %s22, 2
      %p318 = scmp.lt.s32.totalorder %s21, 1
      %s319 = scalar_select %p318, %s21, 1
      %p320 = scmp.lt.s32.totalorder %s317, 5
      %s321 = scalar_select %p320, %s317, 5
      %s322 = smul.addr %s321, 6
      %s323 = smul.addr %s319, 36
      %s324 = sadd.s32 %s322, %s323
      %s325 = smul.addr %s324, 4
      %s326 = scalar_lea.vmem %s2, %s325
      %p327 = pneg %p112
      %p328 = pneg %p109
      %p329 = pneg %p133
      %p330 = pneg %p130
      %p331 = pneg %p154
      %p332 = pneg %p151
      %p333 = scmp.lt.s32.totalorder %s21, 1
      %s334 = scalar_select %p333, %s21, 1
      %p335 = scmp.lt.s32.totalorder %s22, 3
      %s336 = scalar_select %p335, %s22, 3
      %s337 = smul.addr %s336, 2
      %s338 = smul.addr %s334, 8
      %s339 = sadd.s32 %s337, %s338
      %s340 = smul.addr %s339, 4
      %s341 = scalar_lea.vmem %s5, %s340
      %p342 = pneg %p182
      %p343 = pneg %p179
      %p344 = pneg %p210
      %p345 = pneg %p207
      %p346 = scmp.lt.s32.totalorder %s21, 1
      %s347 = scalar_select %p346, %s21, 1
      %p348 = scmp.lt.s32.totalorder %s22, 3
      %s349 = scalar_select %p348, %s22, 3
      %s350 = smul.addr %s349, 2
      %s351 = smul.addr %s347, 8
      %s352 = sadd.s32 %s350, %s351
      %s353 = smul.addr %s352, 4
      %s354 = scalar_lea.vmem %s6, %s353
      %p355 = scmp.lt.s32.totalorder %s21, 1
      %s356 = scalar_select %p355, %s21, 1
      %p357 = scmp.lt.s32.totalorder %s22, 5
      %s358 = scalar_select %p357, %s22, 5
      %s359 = smul.addr %s358, 6
      %s360 = smul.addr %s356, 36
      %s361 = sadd.s32 %s359, %s360
      %s362 = smul.addr %s361, 4
      %s363 = scalar_lea.vmem %s0, %s362
      %s364 = sadd.s32 %s22, 1
      %p365 = scmp.lt.s32.totalorder %s21, 1
      %s366 = scalar_select %p365, %s21, 1
      %p367 = scmp.lt.s32.totalorder %s364, 5
      %s368 = scalar_select %p367, %s364, 5
      %s369 = smul.addr %s368, 6
      %s370 = smul.addr %s366, 36
      %s371 = sadd.s32 %s369, %s370
      %s372 = smul.addr %s371, 4
      %s373 = scalar_lea.vmem %s1, %s372
      %s374 = sadd.s32 %s22, 1
      %s375 = sadd.s32 %s22, 2
      %p376 = scmp.lt.s32.totalorder %s21, 1
      %s377 = scalar_select %p376, %s21, 1
      %p378 = scmp.lt.s32.totalorder %s375, 5
      %s379 = scalar_select %p378, %s375, 5
      %s380 = smul.addr %s379, 6
      %s381 = smul.addr %s377, 36
      %s382 = sadd.s32 %s380, %s381
      %s383 = smul.addr %s382, 4
      %s384 = scalar_lea.vmem %s2, %s383
      %s385 = sadd.s32 %s22, 2
      %p386 = scmp.lt.s32.totalorder %s21, 1
      %s387 = scalar_select %p386, %s21, 1
      %p388 = scmp.lt.s32.totalorder %s22, 3
      %s389 = scalar_select %p388, %s22, 3
      %s390 = smul.addr %s389, 2
      %s391 = smul.addr %s387, 8
      %s392 = sadd.s32 %s390, %s391
      %s393 = smul.addr %s392, 4
      %s394 = scalar_lea.vmem %s5, %s393
      %p395 = scmp.lt.s32.totalorder %s21, 1
      %s396 = scalar_select %p395, %s21, 1
      %p397 = scmp.lt.s32.totalorder %s22, 3
      %s398 = scalar_select %p397, %s22, 3
      %s399 = smul.addr %s398, 2
      %s400 = smul.addr %s396, 8
      %s401 = sadd.s32 %s399, %s400
      %s402 = smul.addr %s401, 4
      %s403 = scalar_lea.vmem %s6, %s402
      %v404 = vld [vmem:[%s363] sm:$0x3]
      %v405 = vld [vmem:[%s363 + $0x4] sm:$0x3]
      %v406 = vld [vmem:[%s363 + $0x8] sm:$0x3]
      %v407 = vld [vmem:[%s363 + $0xc] sm:$0x3]
      %v408 = vld [vmem:[%s3] sm:$0xf]
      %v409 = vld [vmem:[%s3 + $0x4] sm:$0xf]
      %v410 = vld [vmem:[%s3 + $0x8] sm:$0xf]
      %v411 = vld [vmem:[%s3 + $0xc] sm:$0xf]
      %v412 = vld [vmem:[%s3 + $0x10] sm:$0xf]
      %v413 = vld [vmem:[%s3 + $0x14] sm:$0xf]
      %v414 = vld [vmem:[%s3 + $0x18] sm:$0xf]
      %v415 = vld [vmem:[%s3 + $0x1c] sm:$0xf]
      %v416 = vld [vmem:[%s3 + $0x20] sm:$0xf]
      %v417 = vld [vmem:[%s3 + $0x24] sm:$0xf]
      %v418 = vld [vmem:[%s3 + $0x28] sm:$0xf]
      %v419 = vld [vmem:[%s3 + $0x2c] sm:$0xf]
      %v420 = vld [vmem:[%s3 + $0x30] sm:$0xf]
      %v421 = vld [vmem:[%s3 + $0x34] sm:$0xf]
      %v422 = vld [vmem:[%s3 + $0x38] sm:$0xf]
      %v423 = vld [vmem:[%s3 + $0x3c] sm:$0xf]
      %v424 = vld [vmem:[%s363] sm:$0x7]
      %v425 = vld [vmem:[%s363 + $0x4] sm:$0x7]
      %v426 = vld [vmem:[%s363 + $0x8] sm:$0x7]
      %v427 = vld [vmem:[%s363 + $0xc] sm:$0x7]
      %v432 = vrot.slane %v424, 2
      %v433 = vrot.slane %v425, 2
      %v434 = vrot.slane %v426, 2
      %v435 = vrot.slane %v427, 2
      %vm436 = vcmask 1041408
      %v439 = vsel %vm436, %v424, %v432
      %vm440 = vcmask 1043458
      %v441 = vsel %vm440, %v424, %v432
      %v443 = vrot.slane %v441, 2
      %v446 = vsel %vm436, %v425, %v433
      %v447 = vsel %vm440, %v425, %v433
      %v449 = vrot.slane %v447, 2
      %v452 = vsel %vm436, %v426, %v434
      %v453 = vsel %vm440, %v426, %v434
      %v455 = vrot.slane %v453, 2
      %v458 = vsel %vm436, %v427, %v435
      %v459 = vsel %vm440, %v427, %v435
      %v461 = vrot.slane %v459, 2
      %vm462 = vsmask.f32 1280
      %vm463 = vsmask.f32 3336
      %vm464 = vmor %vm462, %vm463
      %vm465 = vsmask.f32 5392
      %vm466 = vmor %vm464, %vm465
      %vm467 = vsmask.f32 7448
      %vm468 = vmor %vm466, %vm467
      %v469 = vshrl.u32 %v439, 16
      %v471 = vrot.slane %v469, 6
      %v472 = vshll.u32 %v439, 16
      %v474 = vrot.slane %v472, 7
      %v475 = vor.u32 %v471, %v474
      %v476 = vrot.slane %v475, 2
      %v478 = vshll.u32 %v443, 16
      %v480 = vrot.slane %v478, 7
      %v481 = vsel %vm468, %v476, %v480
      %v482 = vshrl.u32 %v446, 16
      %v484 = vrot.slane %v482, 6
      %v485 = vshll.u32 %v446, 16
      %v487 = vrot.slane %v485, 7
      %v488 = vor.u32 %v484, %v487
      %v489 = vrot.slane %v488, 2
      %v491 = vshll.u32 %v449, 16
      %v493 = vrot.slane %v491, 7
      %v494 = vsel %vm468, %v489, %v493
      %v495 = vshrl.u32 %v452, 16
      %v497 = vrot.slane %v495, 6
      %v498 = vshll.u32 %v452, 16
      %v500 = vrot.slane %v498, 7
      %v501 = vor.u32 %v497, %v500
      %v502 = vrot.slane %v501, 2
      %v504 = vshll.u32 %v455, 16
      %v506 = vrot.slane %v504, 7
      %v507 = vsel %vm468, %v502, %v506
      %v508 = vshrl.u32 %v458, 16
      %v510 = vrot.slane %v508, 6
      %v511 = vshll.u32 %v458, 16
      %v513 = vrot.slane %v511, 7
      %v514 = vor.u32 %v510, %v513
      %v515 = vrot.slane %v514, 2
      %v517 = vshll.u32 %v461, 16
      %v519 = vrot.slane %v517, 7
      %v520 = vsel %vm468, %v515, %v519
      %s521 = scalar_lea.vmem %s3, 64
      %v522 = vld [vmem:[%s521] sm:$0xf]
      %v523 = vld [vmem:[%s521 + $0x4] sm:$0xf]
      %v524 = vld [vmem:[%s521 + $0x8] sm:$0xf]
      %v525 = vld [vmem:[%s521 + $0xc] sm:$0xf]
      %v526 = vld [vmem:[%s521 + $0x10] sm:$0xf]
      %v527 = vld [vmem:[%s521 + $0x14] sm:$0xf]
      %v528 = vld [vmem:[%s521 + $0x18] sm:$0xf]
      %v529 = vld [vmem:[%s521 + $0x1c] sm:$0xf]
      %v530 = vld [vmem:[%s521 + $0x20] sm:$0xf]
      %v531 = vld [vmem:[%s521 + $0x24] sm:$0xf]
      %v532 = vld [vmem:[%s521 + $0x28] sm:$0xf]
      %v533 = vld [vmem:[%s521 + $0x2c] sm:$0xf]
      %v534 = vld [vmem:[%s521 + $0x30] sm:$0xf]
      %v535 = vld [vmem:[%s521 + $0x34] sm:$0xf]
      %v536 = vld [vmem:[%s521 + $0x38] sm:$0xf]
      %v537 = vld [vmem:[%s521 + $0x3c] sm:$0xf]
      %539 = vst [vmem:[#allocation1] ss:$4 sm:$0xff] %v481
      %s541 = scalar_lea.vmem [#allocation1], 1
      %542 = vst [vmem:[%s541] ss:$4 sm:$0xff] %v494
      %s544 = scalar_lea.vmem [#allocation1], 2
      %545 = vst [vmem:[%s544] ss:$4 sm:$0xff] %v507
      %s547 = scalar_lea.vmem [#allocation1], 3
      %548 = vst [vmem:[%s547] ss:$4 sm:$0xff] %v520
      %v549 = vld.sshfl [vmem:[#allocation1] sm:$0xff pattern:$0x73625140]
      %v567 = vunpack.c.l.b16 %v522
      %v568 = vunpack.c.l.b16 %v523
      %v569 = vunpack.c.l.b16 %v524
      %v570 = vunpack.c.l.b16 %v525
      %v571 = vunpack.c.l.b16 %v526
      %v572 = vunpack.c.l.b16 %v527
      %v573 = vunpack.c.l.b16 %v528
      %v574 = vunpack.c.l.b16 %v529
      %v575 = vunpack.c.l.b16 %v530
      %v576 = vunpack.c.l.b16 %v531
      %v577 = vunpack.c.l.b16 %v532
      %v578 = vunpack.c.l.b16 %v533
      %v579 = vunpack.c.l.b16 %v534
      %v580 = vunpack.c.l.b16 %v535
      %v581 = vunpack.c.l.b16 %v536
      %v582 = vunpack.c.l.b16 %v537
      %v583 = vpack.c.b16 %v568, %v567
      %v584 = vpack.c.b16 %v570, %v569
      %v585 = vpack.c.b16 %v572, %v571
      %v586 = vpack.c.b16 %v574, %v573
      %v587 = vpack.c.b16 %v576, %v575
      %v588 = vpack.c.b16 %v578, %v577
      %v589 = vpack.c.b16 %v580, %v579
      %v590 = vpack.c.b16 %v582, %v581
      %599 = vmatpush.bf16.msra.mxu0 %v590
      %600 = vmatpush.bf16.msra.mxu0 %v589
      %601 = vmatpush.bf16.msra.mxu0 %v588
      %602 = vmatpush.bf16.msra.mxu0 %v587
      %603 = vmatpush.bf16.msra.mxu0 %v586
      %604 = vmatpush.bf16.msra.mxu0 %v585
      %605 = vmatpush.bf16.msra.mxu0 %v584
      %606 = vmatpush.bf16.msra.mxu0 %v583
      %607 = vmatmul.bf16.gmra.mxu0 %v549
      %v608 = vpop.f32.mrf.mxu0
      %v609 = vadd.f32 0.0, %v608
      %v610 = vpop.f32.mrf.mxu0
      %v611 = vadd.f32 0.0, %v610
      %612 = vdwg.mxu0
      %614 = vst [vmem:[#allocation1] ss:$4 sm:$0xff] %v404
      %s616 = scalar_lea.vmem [#allocation1], 1
      %617 = vst [vmem:[%s616] ss:$4 sm:$0xff] %v405
      %s619 = scalar_lea.vmem [#allocation1], 2
      %620 = vst [vmem:[%s619] ss:$4 sm:$0xff] %v406
      %s622 = scalar_lea.vmem [#allocation1], 3
      %623 = vst [vmem:[%s622] ss:$4 sm:$0xff] %v407
      %v624 = vld.sshfl [vmem:[#allocation1] sm:$0xff pattern:$0x73625140]
      %v642 = vunpack.c.l.b16 %v408
      %v643 = vunpack.c.l.b16 %v409
      %v644 = vunpack.c.l.b16 %v410
      %v645 = vunpack.c.l.b16 %v411
      %v646 = vunpack.c.l.b16 %v412
      %v647 = vunpack.c.l.b16 %v413
      %v648 = vunpack.c.l.b16 %v414
      %v649 = vunpack.c.l.b16 %v415
      %v650 = vunpack.c.l.b16 %v416
      %v651 = vunpack.c.l.b16 %v417
      %v652 = vunpack.c.l.b16 %v418
      %v653 = vunpack.c.l.b16 %v419
      %v654 = vunpack.c.l.b16 %v420
      %v655 = vunpack.c.l.b16 %v421
      %v656 = vunpack.c.l.b16 %v422
      %v657 = vunpack.c.l.b16 %v423
      %v658 = vpack.c.b16 %v643, %v642
      %v659 = vpack.c.b16 %v645, %v644
      %v660 = vpack.c.b16 %v647, %v646
      %v661 = vpack.c.b16 %v649, %v648
      %v662 = vpack.c.b16 %v651, %v650
      %v663 = vpack.c.b16 %v653, %v652
      %v664 = vpack.c.b16 %v655, %v654
      %v665 = vpack.c.b16 %v657, %v656
      %674 = vmatpush.bf16.msra.mxu0 %v665
      %675 = vmatpush.bf16.msra.mxu0 %v664
      %676 = vmatpush.bf16.msra.mxu0 %v663
      %677 = vmatpush.bf16.msra.mxu0 %v662
      %678 = vmatpush.bf16.msra.mxu0 %v661
      %679 = vmatpush.bf16.msra.mxu0 %v660
      %680 = vmatpush.bf16.msra.mxu0 %v659
      %681 = vmatpush.bf16.msra.mxu0 %v658
      %682 = vmatmul.bf16.gmra.mxu0 %v624
      %v683 = vpop.f32.mrf.mxu0
      %v684 = vadd.f32 %v609, %v683
      %v685 = vpop.f32.mrf.mxu0
      %v686 = vadd.f32 %v611, %v685
      %687 = vdwg.mxu0
      %v688 = vld [vmem:[%s363] sm:$0x6]
      %v689 = vld [vmem:[%s363 + $0x4] sm:$0x6]
      %v690 = vld [vmem:[%s363 + $0x8] sm:$0x6]
      %v691 = vld [vmem:[%s363 + $0xc] sm:$0x6]
      %v696 = vrot.slane %v688, 2
      %v697 = vrot.slane %v689, 2
      %v698 = vrot.slane %v690, 2
      %v699 = vrot.slane %v691, 2
      %v702 = vsel %vm436, %v688, %v696
      %v704 = vsel %vm440, %v688, %v696
      %v706 = vrot.slane %v704, 2
      %v709 = vsel %vm436, %v689, %v697
      %v711 = vsel %vm440, %v689, %v697
      %v713 = vrot.slane %v711, 2
      %v716 = vsel %vm436, %v690, %v698
      %v718 = vsel %vm440, %v690, %v698
      %v720 = vrot.slane %v718, 2
      %v723 = vsel %vm436, %v691, %v699
      %v725 = vsel %vm440, %v691, %v699
      %v727 = vrot.slane %v725, 2
      %vm728 = vcmask 1040384
      %vm729 = vcmask 1042434
      %vm730 = vmor %vm728, %vm729
      %vm731 = vcmask 1044484
      %vm732 = vmor %vm730, %vm731
      %vm733 = vcmask 1046534
      %vm734 = vmor %vm732, %vm733
      %v735 = vrot.slane %v702, 7
      %v736 = vrot.slane %v735, 2
      %v737 = vrot.slane %v706, 7
      %v738 = vsel %vm734, %v736, %v737
      %v739 = vrot.slane %v709, 7
      %v740 = vrot.slane %v739, 2
      %v741 = vrot.slane %v713, 7
      %v742 = vsel %vm734, %v740, %v741
      %v743 = vrot.slane %v716, 7
      %v744 = vrot.slane %v743, 2
      %v745 = vrot.slane %v720, 7
      %v746 = vsel %vm734, %v744, %v745
      %v747 = vrot.slane %v723, 7
      %v748 = vrot.slane %v747, 2
      %v749 = vrot.slane %v727, 7
      %v750 = vsel %vm734, %v748, %v749
      %s751 = scalar_lea.vmem %s3, 128
      %v752 = vld [vmem:[%s751] sm:$0xf]
      %v753 = vld [vmem:[%s751 + $0x4] sm:$0xf]
      %v754 = vld [vmem:[%s751 + $0x8] sm:$0xf]
      %v755 = vld [vmem:[%s751 + $0xc] sm:$0xf]
      %v756 = vld [vmem:[%s751 + $0x10] sm:$0xf]
      %v757 = vld [vmem:[%s751 + $0x14] sm:$0xf]
      %v758 = vld [vmem:[%s751 + $0x18] sm:$0xf]
      %v759 = vld [vmem:[%s751 + $0x1c] sm:$0xf]
      %v760 = vld [vmem:[%s751 + $0x20] sm:$0xf]
      %v761 = vld [vmem:[%s751 + $0x24] sm:$0xf]
      %v762 = vld [vmem:[%s751 + $0x28] sm:$0xf]
      %v763 = vld [vmem:[%s751 + $0x2c] sm:$0xf]
      %v764 = vld [vmem:[%s751 + $0x30] sm:$0xf]
      %v765 = vld [vmem:[%s751 + $0x34] sm:$0xf]
      %v766 = vld [vmem:[%s751 + $0x38] sm:$0xf]
      %v767 = vld [vmem:[%s751 + $0x3c] sm:$0xf]
      %769 = vst [vmem:[#allocation1] ss:$4 sm:$0xff] %v738
      %s771 = scalar_lea.vmem [#allocation1], 1
      %772 = vst [vmem:[%s771] ss:$4 sm:$0xff] %v742
      %s774 = scalar_lea.vmem [#allocation1], 2
      %775 = vst [vmem:[%s774] ss:$4 sm:$0xff] %v746
      %s777 = scalar_lea.vmem [#allocation1], 3
      %778 = vst [vmem:[%s777] ss:$4 sm:$0xff] %v750
      %v779 = vld.sshfl [vmem:[#allocation1] sm:$0xff pattern:$0x73625140]
      %v797 = vunpack.c.l.b16 %v752
      %v798 = vunpack.c.l.b16 %v753
      %v799 = vunpack.c.l.b16 %v754
      %v800 = vunpack.c.l.b16 %v755
      %v801 = vunpack.c.l.b16 %v756
      %v802 = vunpack.c.l.b16 %v757
      %v803 = vunpack.c.l.b16 %v758
      %v804 = vunpack.c.l.b16 %v759
      %v805 = vunpack.c.l.b16 %v760
      %v806 = vunpack.c.l.b16 %v761
      %v807 = vunpack.c.l.b16 %v762
      %v808 = vunpack.c.l.b16 %v763
      %v809 = vunpack.c.l.b16 %v764
      %v810 = vunpack.c.l.b16 %v765
      %v811 = vunpack.c.l.b16 %v766
      %v812 = vunpack.c.l.b16 %v767
      %v813 = vpack.c.b16 %v798, %v797
      %v814 = vpack.c.b16 %v800, %v799
      %v815 = vpack.c.b16 %v802, %v801
      %v816 = vpack.c.b16 %v804, %v803
      %v817 = vpack.c.b16 %v806, %v805
      %v818 = vpack.c.b16 %v808, %v807
      %v819 = vpack.c.b16 %v810, %v809
      %v820 = vpack.c.b16 %v812, %v811
      %829 = vmatpush.bf16.msra.mxu0 %v820
      %830 = vmatpush.bf16.msra.mxu0 %v819
      %831 = vmatpush.bf16.msra.mxu0 %v818
      %832 = vmatpush.bf16.msra.mxu0 %v817
      %833 = vmatpush.bf16.msra.mxu0 %v816
      %834 = vmatpush.bf16.msra.mxu0 %v815
      %835 = vmatpush.bf16.msra.mxu0 %v814
      %836 = vmatpush.bf16.msra.mxu0 %v813
      %837 = vmatmul.bf16.gmra.mxu0 %v779
      %v838 = vpop.f32.mrf.mxu0
      %v839 = vadd.f32 0.0, %v838
      %v840 = vpop.f32.mrf.mxu0
      %v841 = vadd.f32 0.0, %v840
      %842 = vdwg.mxu0
      %v843 = vadd.f32 %v684, %v839
      %v844 = vadd.f32 %v686, %v841
      %s845 = scalar_lea.vmem %s363, 4
      %v846 = vld [vmem:[%s845] sm:$0x3]
      %v847 = vld [vmem:[%s845 + $0x4] sm:$0x3]
      %v848 = vld [vmem:[%s845 + $0x8] sm:$0x3]
      %v849 = vld [vmem:[%s845 + $0xc] sm:$0x3]
      %s850 = scalar_lea.vmem %s3, 192
      %v851 = vld [vmem:[%s850] sm:$0xf]
      %v852 = vld [vmem:[%s850 + $0x4] sm:$0xf]
      %v853 = vld [vmem:[%s850 + $0x8] sm:$0xf]
      %v854 = vld [vmem:[%s850 + $0xc] sm:$0xf]
      %v855 = vld [vmem:[%s850 + $0x10] sm:$0xf]
      %v856 = vld [vmem:[%s850 + $0x14] sm:$0xf]
      %v857 = vld [vmem:[%s850 + $0x18] sm:$0xf]
      %v858 = vld [vmem:[%s850 + $0x1c] sm:$0xf]
      %v859 = vld [vmem:[%s850 + $0x20] sm:$0xf]
      %v860 = vld [vmem:[%s850 + $0x24] sm:$0xf]
      %v861 = vld [vmem:[%s850 + $0x28] sm:$0xf]
      %v862 = vld [vmem:[%s850 + $0x2c] sm:$0xf]
      %v863 = vld [vmem:[%s850 + $0x30] sm:$0xf]
      %v864 = vld [vmem:[%s850 + $0x34] sm:$0xf]
      %v865 = vld [vmem:[%s850 + $0x38] sm:$0xf]
      %v866 = vld [vmem:[%s850 + $0x3c] sm:$0xf]
      %868 = vst [vmem:[#allocation1] ss:$4 sm:$0xff] %v846
      %s870 = scalar_lea.vmem [#allocation1], 1
      %871 = vst [vmem:[%s870] ss:$4 sm:$0xff] %v847
      %s873 = scalar_lea.vmem [#allocation1], 2
      %874 = vst [vmem:[%s873] ss:$4 sm:$0xff] %v848
      %s876 = scalar_lea.vmem [#allocation1], 3
      %877 = vst [vmem:[%s876] ss:$4 sm:$0xff] %v849
      %v878 = vld.sshfl [vmem:[#allocation1] sm:$0xff pattern:$0x73625140]
      %v896 = vunpack.c.l.b16 %v851
      %v897 = vunpack.c.l.b16 %v852
      %v898 = vunpack.c.l.b16 %v853
      %v899 = vunpack.c.l.b16 %v854
      %v900 = vunpack.c.l.b16 %v855
      %v901 = vunpack.c.l.b16 %v856
      %v902 = vunpack.c.l.b16 %v857
      %v903 = vunpack.c.l.b16 %v858
      %v904 = vunpack.c.l.b16 %v859
      %v905 = vunpack.c.l.b16 %v860
      %v906 = vunpack.c.l.b16 %v861
      %v907 = vunpack.c.l.b16 %v862
      %v908 = vunpack.c.l.b16 %v863
      %v909 = vunpack.c.l.b16 %v864
      %v910 = vunpack.c.l.b16 %v865
      %v911 = vunpack.c.l.b16 %v866
      %v912 = vpack.c.b16 %v897, %v896
      %v913 = vpack.c.b16 %v899, %v898
      %v914 = vpack.c.b16 %v901, %v900
      %v915 = vpack.c.b16 %v903, %v902
      %v916 = vpack.c.b16 %v905, %v904
      %v917 = vpack.c.b16 %v907, %v906
      %v918 = vpack.c.b16 %v909, %v908
      %v919 = vpack.c.b16 %v911, %v910
      %928 = vmatpush.bf16.msra.mxu0 %v919
      %929 = vmatpush.bf16.msra.mxu0 %v918
      %930 = vmatpush.bf16.msra.mxu0 %v917
      %931 = vmatpush.bf16.msra.mxu0 %v916
      %932 = vmatpush.bf16.msra.mxu0 %v915
      %933 = vmatpush.bf16.msra.mxu0 %v914
      %934 = vmatpush.bf16.msra.mxu0 %v913
      %935 = vmatpush.bf16.msra.mxu0 %v912
      %936 = vmatmul.bf16.gmra.mxu0 %v878
      %v937 = vpop.f32.mrf.mxu0
      %v938 = vadd.f32 0.0, %v937
      %v939 = vpop.f32.mrf.mxu0
      %v940 = vadd.f32 0.0, %v939
      %941 = vdwg.mxu0
      %v942 = vadd.f32 %v843, %v938
      %v943 = vadd.f32 %v844, %v940
      %v944 = vld [vmem:[%s845] sm:$0x7]
      %v945 = vld [vmem:[%s845 + $0x4] sm:$0x7]
      %v946 = vld [vmem:[%s845 + $0x8] sm:$0x7]
      %v947 = vld [vmem:[%s845 + $0xc] sm:$0x7]
      %v952 = vrot.slane %v944, 2
      %v953 = vrot.slane %v945, 2
      %v954 = vrot.slane %v946, 2
      %v955 = vrot.slane %v947, 2
      %v958 = vsel %vm436, %v944, %v952
      %v959 = vsel %vm440, %v944, %v952
      %v961 = vrot.slane %v959, 2
      %v964 = vsel %vm436, %v945, %v953
      %v965 = vsel %vm440, %v945, %v953
      %v967 = vrot.slane %v965, 2
      %v970 = vsel %vm436, %v946, %v954
      %v971 = vsel %vm440, %v946, %v954
      %v973 = vrot.slane %v971, 2
      %v976 = vsel %vm436, %v947, %v955
      %v977 = vsel %vm440, %v947, %v955
      %v979 = vrot.slane %v977, 2
      %v980 = vshrl.u32 %v958, 16
      %v982 = vrot.slane %v980, 6
      %v983 = vshll.u32 %v958, 16
      %v985 = vrot.slane %v983, 7
      %v986 = vor.u32 %v982, %v985
      %v987 = vrot.slane %v986, 2
      %v989 = vshll.u32 %v961, 16
      %v991 = vrot.slane %v989, 7
      %v992 = vsel %vm468, %v987, %v991
      %v993 = vshrl.u32 %v964, 16
      %v995 = vrot.slane %v993, 6
      %v996 = vshll.u32 %v964, 16
      %v998 = vrot.slane %v996, 7
      %v999 = vor.u32 %v995, %v998
      %v1000 = vrot.slane %v999, 2
      %v1002 = vshll.u32 %v967, 16
      %v1004 = vrot.slane %v1002, 7
      %v1005 = vsel %vm468, %v1000, %v1004
      %v1006 = vshrl.u32 %v970, 16
      %v1008 = vrot.slane %v1006, 6
      %v1009 = vshll.u32 %v970, 16
      %v1011 = vrot.slane %v1009, 7
      %v1012 = vor.u32 %v1008, %v1011
      %v1013 = vrot.slane %v1012, 2
      %v1015 = vshll.u32 %v973, 16
      %v1017 = vrot.slane %v1015, 7
      %v1018 = vsel %vm468, %v1013, %v1017
      %v1019 = vshrl.u32 %v976, 16
      %v1021 = vrot.slane %v1019, 6
      %v1022 = vshll.u32 %v976, 16
      %v1024 = vrot.slane %v1022, 7
      %v1025 = vor.u32 %v1021, %v1024
      %v1026 = vrot.slane %v1025, 2
      %v1028 = vshll.u32 %v979, 16
      %v1030 = vrot.slane %v1028, 7
      %v1031 = vsel %vm468, %v1026, %v1030
      %s1032 = scalar_lea.vmem %s3, 256
      %v1033 = vld [vmem:[%s1032] sm:$0xf]
      %v1034 = vld [vmem:[%s1032 + $0x4] sm:$0xf]
      %v1035 = vld [vmem:[%s1032 + $0x8] sm:$0xf]
      %v1036 = vld [vmem:[%s1032 + $0xc] sm:$0xf]
      %v1037 = vld [vmem:[%s1032 + $0x10] sm:$0xf]
      %v1038 = vld [vmem:[%s1032 + $0x14] sm:$0xf]
      %v1039 = vld [vmem:[%s1032 + $0x18] sm:$0xf]
      %v1040 = vld [vmem:[%s1032 + $0x1c] sm:$0xf]
      %v1041 = vld [vmem:[%s1032 + $0x20] sm:$0xf]
      %v1042 = vld [vmem:[%s1032 + $0x24] sm:$0xf]
      %v1043 = vld [vmem:[%s1032 + $0x28] sm:$0xf]
      %v1044 = vld [vmem:[%s1032 + $0x2c] sm:$0xf]
      %v1045 = vld [vmem:[%s1032 + $0x30] sm:$0xf]
      %v1046 = vld [vmem:[%s1032 + $0x34] sm:$0xf]
      %v1047 = vld [vmem:[%s1032 + $0x38] sm:$0xf]
      %v1048 = vld [vmem:[%s1032 + $0x3c] sm:$0xf]
      %1050 = vst [vmem:[#allocation1] ss:$4 sm:$0xff] %v992
      %s1052 = scalar_lea.vmem [#allocation1], 1
      %1053 = vst [vmem:[%s1052] ss:$4 sm:$0xff] %v1005
      %s1055 = scalar_lea.vmem [#allocation1], 2
      %1056 = vst [vmem:[%s1055] ss:$4 sm:$0xff] %v1018
      %s1058 = scalar_lea.vmem [#allocation1], 3
      %1059 = vst [vmem:[%s1058] ss:$4 sm:$0xff] %v1031
      %v1060 = vld.sshfl [vmem:[#allocation1] sm:$0xff pattern:$0x73625140]
      %v1078 = vunpack.c.l.b16 %v1033
      %v1079 = vunpack.c.l.b16 %v1034
      %v1080 = vunpack.c.l.b16 %v1035
      %v1081 = vunpack.c.l.b16 %v1036
      %v1082 = vunpack.c.l.b16 %v1037
      %v1083 = vunpack.c.l.b16 %v1038
      %v1084 = vunpack.c.l.b16 %v1039
      %v1085 = vunpack.c.l.b16 %v1040
      %v1086 = vunpack.c.l.b16 %v1041
      %v1087 = vunpack.c.l.b16 %v1042
      %v1088 = vunpack.c.l.b16 %v1043
      %v1089 = vunpack.c.l.b16 %v1044
      %v1090 = vunpack.c.l.b16 %v1045
      %v1091 = vunpack.c.l.b16 %v1046
      %v1092 = vunpack.c.l.b16 %v1047
      %v1093 = vunpack.c.l.b16 %v1048
      %v1094 = vpack.c.b16 %v1079, %v1078
      %v1095 = vpack.c.b16 %v1081, %v1080
      %v1096 = vpack.c.b16 %v1083, %v1082
      %v1097 = vpack.c.b16 %v1085, %v1084
      %v1098 = vpack.c.b16 %v1087, %v1086
      %v1099 = vpack.c.b16 %v1089, %v1088
      %v1100 = vpack.c.b16 %v1091, %v1090
      %v1101 = vpack.c.b16 %v1093, %v1092
      %1110 = vmatpush.bf16.msra.mxu0 %v1101
      %1111 = vmatpush.bf16.msra.mxu0 %v1100
      %1112 = vmatpush.bf16.msra.mxu0 %v1099
      %1113 = vmatpush.bf16.msra.mxu0 %v1098
      %1114 = vmatpush.bf16.msra.mxu0 %v1097
      %1115 = vmatpush.bf16.msra.mxu0 %v1096
      %1116 = vmatpush.bf16.msra.mxu0 %v1095
      %1117 = vmatpush.bf16.msra.mxu0 %v1094
      %1118 = vmatmul.bf16.gmra.mxu0 %v1060
      %v1119 = vpop.f32.mrf.mxu0
      %v1120 = vadd.f32 0.0, %v1119
      %v1121 = vpop.f32.mrf.mxu0
      %v1122 = vadd.f32 0.0, %v1121
      %1123 = vdwg.mxu0
      %v1124 = vadd.f32 %v942, %v1120
      %v1125 = vadd.f32 %v943, %v1122
      %v1126 = vld [vmem:[%s845] sm:$0x6]
      %v1127 = vld [vmem:[%s845 + $0x4] sm:$0x6]
      %v1128 = vld [vmem:[%s845 + $0x8] sm:$0x6]
      %v1129 = vld [vmem:[%s845 + $0xc] sm:$0x6]
      %v1134 = vrot.slane %v1126, 2
      %v1135 = vrot.slane %v1127, 2
      %v1136 = vrot.slane %v1128, 2
      %v1137 = vrot.slane %v1129, 2
      %v1140 = vsel %vm436, %v1126, %v1134
      %v1142 = vsel %vm440, %v1126, %v1134
      %v1144 = vrot.slane %v1142, 2
      %v1147 = vsel %vm436, %v1127, %v1135
      %v1149 = vsel %vm440, %v1127, %v1135
      %v1151 = vrot.slane %v1149, 2
      %v1154 = vsel %vm436, %v1128, %v1136
      %v1156 = vsel %vm440, %v1128, %v1136
      %v1158 = vrot.slane %v1156, 2
      %v1161 = vsel %vm436, %v1129, %v1137
      %v1163 = vsel %vm440, %v1129, %v1137
      %v1165 = vrot.slane %v1163, 2
      %v1166 = vrot.slane %v1140, 7
      %v1167 = vrot.slane %v1166, 2
      %v1168 = vrot.slane %v1144, 7
      %v1169 = vsel %vm734, %v1167, %v1168
      %v1170 = vrot.slane %v1147, 7
      %v1171 = vrot.slane %v1170, 2
      %v1172 = vrot.slane %v1151, 7
      %v1173 = vsel %vm734, %v1171, %v1172
      %v1174 = vrot.slane %v1154, 7
      %v1175 = vrot.slane %v1174, 2
      %v1176 = vrot.slane %v1158, 7
      %v1177 = vsel %vm734, %v1175, %v1176
      %v1178 = vrot.slane %v1161, 7
      %v1179 = vrot.slane %v1178, 2
      %v1180 = vrot.slane %v1165, 7
      %v1181 = vsel %vm734, %v1179, %v1180
      %s1182 = scalar_lea.vmem %s3, 320
      %v1183 = vld [vmem:[%s1182] sm:$0xf]
      %v1184 = vld [vmem:[%s1182 + $0x4] sm:$0xf]
      %v1185 = vld [vmem:[%s1182 + $0x8] sm:$0xf]
      %v1186 = vld [vmem:[%s1182 + $0xc] sm:$0xf]
      %v1187 = vld [vmem:[%s1182 + $0x10] sm:$0xf]
      %v1188 = vld [vmem:[%s1182 + $0x14] sm:$0xf]
      %v1189 = vld [vmem:[%s1182 + $0x18] sm:$0xf]
      %v1190 = vld [vmem:[%s1182 + $0x1c] sm:$0xf]
      %v1191 = vld [vmem:[%s1182 + $0x20] sm:$0xf]
      %v1192 = vld [vmem:[%s1182 + $0x24] sm:$0xf]
      %v1193 = vld [vmem:[%s1182 + $0x28] sm:$0xf]
      %v1194 = vld [vmem:[%s1182 + $0x2c] sm:$0xf]
      %v1195 = vld [vmem:[%s1182 + $0x30] sm:$0xf]
      %v1196 = vld [vmem:[%s1182 + $0x34] sm:$0xf]
      %v1197 = vld [vmem:[%s1182 + $0x38] sm:$0xf]
      %v1198 = vld [vmem:[%s1182 + $0x3c] sm:$0xf]
      %1200 = vst [vmem:[#allocation1] ss:$4 sm:$0xff] %v1169
      %s1202 = scalar_lea.vmem [#allocation1], 1
      %1203 = vst [vmem:[%s1202] ss:$4 sm:$0xff] %v1173
      %s1205 = scalar_lea.vmem [#allocation1], 2
      %1206 = vst [vmem:[%s1205] ss:$4 sm:$0xff] %v1177
      %s1208 = scalar_lea.vmem [#allocation1], 3
      %1209 = vst [vmem:[%s1208] ss:$4 sm:$0xff] %v1181
      %v1210 = vld.sshfl [vmem:[#allocation1] sm:$0xff pattern:$0x73625140]
      %v1228 = vunpack.c.l.b16 %v1183
      %v1229 = vunpack.c.l.b16 %v1184
      %v1230 = vunpack.c.l.b16 %v1185
      %v1231 = vunpack.c.l.b16 %v1186
      %v1232 = vunpack.c.l.b16 %v1187
      %v1233 = vunpack.c.l.b16 %v1188
      %v1234 = vunpack.c.l.b16 %v1189
      %v1235 = vunpack.c.l.b16 %v1190
      %v1236 = vunpack.c.l.b16 %v1191
      %v1237 = vunpack.c.l.b16 %v1192
      %v1238 = vunpack.c.l.b16 %v1193
      %v1239 = vunpack.c.l.b16 %v1194
      %v1240 = vunpack.c.l.b16 %v1195
      %v1241 = vunpack.c.l.b16 %v1196
      %v1242 = vunpack.c.l.b16 %v1197
      %v1243 = vunpack.c.l.b16 %v1198
      %v1244 = vpack.c.b16 %v1229, %v1228
      %v1245 = vpack.c.b16 %v1231, %v1230
      %v1246 = vpack.c.b16 %v1233, %v1232
      %v1247 = vpack.c.b16 %v1235, %v1234
      %v1248 = vpack.c.b16 %v1237, %v1236
      %v1249 = vpack.c.b16 %v1239, %v1238
      %v1250 = vpack.c.b16 %v1241, %v1240
      %v1251 = vpack.c.b16 %v1243, %v1242
      %1260 = vmatpush.bf16.msra.mxu0 %v1251
      %1261 = vmatpush.bf16.msra.mxu0 %v1250
      %1262 = vmatpush.bf16.msra.mxu0 %v1249
      %1263 = vmatpush.bf16.msra.mxu0 %v1248
      %1264 = vmatpush.bf16.msra.mxu0 %v1247
      %1265 = vmatpush.bf16.msra.mxu0 %v1246
      %1266 = vmatpush.bf16.msra.mxu0 %v1245
      %1267 = vmatpush.bf16.msra.mxu0 %v1244
      %1268 = vmatmul.bf16.gmra.mxu0 %v1210
      %v1269 = vpop.f32.mrf.mxu0
      %v1270 = vadd.f32 0.0, %v1269
      %v1271 = vpop.f32.mrf.mxu0
      %v1272 = vadd.f32 0.0, %v1271
      %1273 = vdwg.mxu0
      %v1274 = vadd.f32 %v1124, %v1270
      %v1275 = vadd.f32 %v1125, %v1272
      %s1276 = scalar_lea.vmem %s363, 8
      %v1277 = vld [vmem:[%s1276] sm:$0x3]
      %v1278 = vld [vmem:[%s1276 + $0x4] sm:$0x3]
      %v1279 = vld [vmem:[%s1276 + $0x8] sm:$0x3]
      %v1280 = vld [vmem:[%s1276 + $0xc] sm:$0x3]
      %s1281 = scalar_lea.vmem %s3, 384
      %v1282 = vld [vmem:[%s1281] sm:$0xf]
      %v1283 = vld [vmem:[%s1281 + $0x4] sm:$0xf]
      %v1284 = vld [vmem:[%s1281 + $0x8] sm:$0xf]
      %v1285 = vld [vmem:[%s1281 + $0xc] sm:$0xf]
      %v1286 = vld [vmem:[%s1281 + $0x10] sm:$0xf]
      %v1287 = vld [vmem:[%s1281 + $0x14] sm:$0xf]
      %v1288 = vld [vmem:[%s1281 + $0x18] sm:$0xf]
      %v1289 = vld [vmem:[%s1281 + $0x1c] sm:$0xf]
      %v1290 = vld [vmem:[%s1281 + $0x20] sm:$0xf]
      %v1291 = vld [vmem:[%s1281 + $0x24] sm:$0xf]
      %v1292 = vld [vmem:[%s1281 + $0x28] sm:$0xf]
      %v1293 = vld [vmem:[%s1281 + $0x2c] sm:$0xf]
      %v1294 = vld [vmem:[%s1281 + $0x30] sm:$0xf]
      %v1295 = vld [vmem:[%s1281 + $0x34] sm:$0xf]
      %v1296 = vld [vmem:[%s1281 + $0x38] sm:$0xf]
      %v1297 = vld [vmem:[%s1281 + $0x3c] sm:$0xf]
      %1299 = vst [vmem:[#allocation1] ss:$4 sm:$0xff] %v1277
      %s1301 = scalar_lea.vmem [#allocation1], 1
      %1302 = vst [vmem:[%s1301] ss:$4 sm:$0xff] %v1278
      %s1304 = scalar_lea.vmem [#allocation1], 2
      %1305 = vst [vmem:[%s1304] ss:$4 sm:$0xff] %v1279
      %s1307 = scalar_lea.vmem [#allocation1], 3
      %1308 = vst [vmem:[%s1307] ss:$4 sm:$0xff] %v1280
      %v1309 = vld.sshfl [vmem:[#allocation1] sm:$0xff pattern:$0x73625140]
      %v1327 = vunpack.c.l.b16 %v1282
      %v1328 = vunpack.c.l.b16 %v1283
      %v1329 = vunpack.c.l.b16 %v1284
      %v1330 = vunpack.c.l.b16 %v1285
      %v1331 = vunpack.c.l.b16 %v1286
      %v1332 = vunpack.c.l.b16 %v1287
      %v1333 = vunpack.c.l.b16 %v1288
      %v1334 = vunpack.c.l.b16 %v1289
      %v1335 = vunpack.c.l.b16 %v1290
      %v1336 = vunpack.c.l.b16 %v1291
      %v1337 = vunpack.c.l.b16 %v1292
      %v1338 = vunpack.c.l.b16 %v1293
      %v1339 = vunpack.c.l.b16 %v1294
      %v1340 = vunpack.c.l.b16 %v1295
      %v1341 = vunpack.c.l.b16 %v1296
      %v1342 = vunpack.c.l.b16 %v1297
      %v1343 = vpack.c.b16 %v1328, %v1327
      %v1344 = vpack.c.b16 %v1330, %v1329
      %v1345 = vpack.c.b16 %v1332, %v1331
      %v1346 = vpack.c.b16 %v1334, %v1333
      %v1347 = vpack.c.b16 %v1336, %v1335
      %v1348 = vpack.c.b16 %v1338, %v1337
      %v1349 = vpack.c.b16 %v1340, %v1339
      %v1350 = vpack.c.b16 %v1342, %v1341
      %1359 = vmatpush.bf16.msra.mxu0 %v1350
      %1360 = vmatpush.bf16.msra.mxu0 %v1349
      %1361 = vmatpush.bf16.msra.mxu0 %v1348
      %1362 = vmatpush.bf16.msra.mxu0 %v1347
      %1363 = vmatpush.bf16.msra.mxu0 %v1346
      %1364 = vmatpush.bf16.msra.mxu0 %v1345
      %1365 = vmatpush.bf16.msra.mxu0 %v1344
      %1366 = vmatpush.bf16.msra.mxu0 %v1343
      %1367 = vmatmul.bf16.gmra.mxu0 %v1309
      %v1368 = vpop.f32.mrf.mxu0
      %v1369 = vadd.f32 0.0, %v1368
      %v1370 = vpop.f32.mrf.mxu0
      %v1371 = vadd.f32 0.0, %v1370
      %1372 = vdwg.mxu0
      %v1373 = vadd.f32 %v1274, %v1369
      %v1374 = vadd.f32 %v1275, %v1371
      %v1375 = vld [vmem:[%s1276] sm:$0x7]
      %v1376 = vld [vmem:[%s1276 + $0x4] sm:$0x7]
      %v1377 = vld [vmem:[%s1276 + $0x8] sm:$0x7]
      %v1378 = vld [vmem:[%s1276 + $0xc] sm:$0x7]
      %v1383 = vrot.slane %v1375, 2
      %v1384 = vrot.slane %v1376, 2
      %v1385 = vrot.slane %v1377, 2
      %v1386 = vrot.slane %v1378, 2
      %v1389 = vsel %vm436, %v1375, %v1383
      %v1390 = vsel %vm440, %v1375, %v1383
      %v1392 = vrot.slane %v1390, 2
      %v1395 = vsel %vm436, %v1376, %v1384
      %v1396 = vsel %vm440, %v1376, %v1384
      %v1398 = vrot.slane %v1396, 2
      %v1401 = vsel %vm436, %v1377, %v1385
      %v1402 = vsel %vm440, %v1377, %v1385
      %v1404 = vrot.slane %v1402, 2
      %v1407 = vsel %vm436, %v1378, %v1386
      %v1408 = vsel %vm440, %v1378, %v1386
      %v1410 = vrot.slane %v1408, 2
      %v1411 = vshrl.u32 %v1389, 16
      %v1413 = vrot.slane %v1411, 6
      %v1414 = vshll.u32 %v1389, 16
      %v1416 = vrot.slane %v1414, 7
      %v1417 = vor.u32 %v1413, %v1416
      %v1418 = vrot.slane %v1417, 2
      %v1420 = vshll.u32 %v1392, 16
      %v1422 = vrot.slane %v1420, 7
      %v1423 = vsel %vm468, %v1418, %v1422
      %v1424 = vshrl.u32 %v1395, 16
      %v1426 = vrot.slane %v1424, 6
      %v1427 = vshll.u32 %v1395, 16
      %v1429 = vrot.slane %v1427, 7
      %v1430 = vor.u32 %v1426, %v1429
      %v1431 = vrot.slane %v1430, 2
      %v1433 = vshll.u32 %v1398, 16
      %v1435 = vrot.slane %v1433, 7
      %v1436 = vsel %vm468, %v1431, %v1435
      %v1437 = vshrl.u32 %v1401, 16
      %v1439 = vrot.slane %v1437, 6
      %v1440 = vshll.u32 %v1401, 16
      %v1442 = vrot.slane %v1440, 7
      %v1443 = vor.u32 %v1439, %v1442
      %v1444 = vrot.slane %v1443, 2
      %v1446 = vshll.u32 %v1404, 16
      %v1448 = vrot.slane %v1446, 7
      %v1449 = vsel %vm468, %v1444, %v1448
      %v1450 = vshrl.u32 %v1407, 16
      %v1452 = vrot.slane %v1450, 6
      %v1453 = vshll.u32 %v1407, 16
      %v1455 = vrot.slane %v1453, 7
      %v1456 = vor.u32 %v1452, %v1455
      %v1457 = vrot.slane %v1456, 2
      %v1459 = vshll.u32 %v1410, 16
      %v1461 = vrot.slane %v1459, 7
      %v1462 = vsel %vm468, %v1457, %v1461
      %s1463 = scalar_lea.vmem %s3, 448
      %v1464 = vld [vmem:[%s1463] sm:$0xf]
      %v1465 = vld [vmem:[%s1463 + $0x4] sm:$0xf]
      %v1466 = vld [vmem:[%s1463 + $0x8] sm:$0xf]
      %v1467 = vld [vmem:[%s1463 + $0xc] sm:$0xf]
      %v1468 = vld [vmem:[%s1463 + $0x10] sm:$0xf]
      %v1469 = vld [vmem:[%s1463 + $0x14] sm:$0xf]
      %v1470 = vld [vmem:[%s1463 + $0x18] sm:$0xf]
      %v1471 = vld [vmem:[%s1463 + $0x1c] sm:$0xf]
      %v1472 = vld [vmem:[%s1463 + $0x20] sm:$0xf]
      %v1473 = vld [vmem:[%s1463 + $0x24] sm:$0xf]
      %v1474 = vld [vmem:[%s1463 + $0x28] sm:$0xf]
      %v1475 = vld [vmem:[%s1463 + $0x2c] sm:$0xf]
      %v1476 = vld [vmem:[%s1463 + $0x30] sm:$0xf]
      %v1477 = vld [vmem:[%s1463 + $0x34] sm:$0xf]
      %v1478 = vld [vmem:[%s1463 + $0x38] sm:$0xf]
      %v1479 = vld [vmem:[%s1463 + $0x3c] sm:$0xf]
      %1481 = vst [vmem:[#allocation1] ss:$4 sm:$0xff] %v1423
      %s1483 = scalar_lea.vmem [#allocation1], 1
      %1484 = vst [vmem:[%s1483] ss:$4 sm:$0xff] %v1436
      %s1486 = scalar_lea.vmem [#allocation1], 2
      %1487 = vst [vmem:[%s1486] ss:$4 sm:$0xff] %v1449
      %s1489 = scalar_lea.vmem [#allocation1], 3
      %1490 = vst [vmem:[%s1489] ss:$4 sm:$0xff] %v1462
      %v1491 = vld.sshfl [vmem:[#allocation1] sm:$0xff pattern:$0x73625140]
      %v1509 = vunpack.c.l.b16 %v1464
      %v1510 = vunpack.c.l.b16 %v1465
      %v1511 = vunpack.c.l.b16 %v1466
      %v1512 = vunpack.c.l.b16 %v1467
      %v1513 = vunpack.c.l.b16 %v1468
      %v1514 = vunpack.c.l.b16 %v1469
      %v1515 = vunpack.c.l.b16 %v1470
      %v1516 = vunpack.c.l.b16 %v1471
      %v1517 = vunpack.c.l.b16 %v1472
      %v1518 = vunpack.c.l.b16 %v1473
      %v1519 = vunpack.c.l.b16 %v1474
      %v1520 = vunpack.c.l.b16 %v1475
      %v1521 = vunpack.c.l.b16 %v1476
      %v1522 = vunpack.c.l.b16 %v1477
      %v1523 = vunpack.c.l.b16 %v1478
      %v1524 = vunpack.c.l.b16 %v1479
      %v1525 = vpack.c.b16 %v1510, %v1509
      %v1526 = vpack.c.b16 %v1512, %v1511
      %v1527 = vpack.c.b16 %v1514, %v1513
      %v1528 = vpack.c.b16 %v1516, %v1515
      %v1529 = vpack.c.b16 %v1518, %v1517
      %v1530 = vpack.c.b16 %v1520, %v1519
      %v1531 = vpack.c.b16 %v1522, %v1521
      %v1532 = vpack.c.b16 %v1524, %v1523
      %1541 = vmatpush.bf16.msra.mxu0 %v1532
      %1542 = vmatpush.bf16.msra.mxu0 %v1531
      %1543 = vmatpush.bf16.msra.mxu0 %v1530
      %1544 = vmatpush.bf16.msra.mxu0 %v1529
      %1545 = vmatpush.bf16.msra.mxu0 %v1528
      %1546 = vmatpush.bf16.msra.mxu0 %v1527
      %1547 = vmatpush.bf16.msra.mxu0 %v1526
      %1548 = vmatpush.bf16.msra.mxu0 %v1525
      %1549 = vmatmul.bf16.gmra.mxu0 %v1491
      %v1550 = vpop.f32.mrf.mxu0
      %v1551 = vadd.f32 0.0, %v1550
      %v1552 = vpop.f32.mrf.mxu0
      %v1553 = vadd.f32 0.0, %v1552
      %1554 = vdwg.mxu0
      %v1555 = vadd.f32 %v1373, %v1551
      %v1556 = vadd.f32 %v1374, %v1553
      %v1557 = vld [vmem:[%s1276] sm:$0x6]
      %v1558 = vld [vmem:[%s1276 + $0x4] sm:$0x6]
      %v1559 = vld [vmem:[%s1276 + $0x8] sm:$0x6]
      %v1560 = vld [vmem:[%s1276 + $0xc] sm:$0x6]
      %v1565 = vrot.slane %v1557, 2
      %v1566 = vrot.slane %v1558, 2
      %v1567 = vrot.slane %v1559, 2
      %v1568 = vrot.slane %v1560, 2
      %v1571 = vsel %vm436, %v1557, %v1565
      %v1573 = vsel %vm440, %v1557, %v1565
      %v1575 = vrot.slane %v1573, 2
      %v1578 = vsel %vm436, %v1558, %v1566
      %v1580 = vsel %vm440, %v1558, %v1566
      %v1582 = vrot.slane %v1580, 2
      %v1585 = vsel %vm436, %v1559, %v1567
      %v1587 = vsel %vm440, %v1559, %v1567
      %v1589 = vrot.slane %v1587, 2
      %v1592 = vsel %vm436, %v1560, %v1568
      %v1594 = vsel %vm440, %v1560, %v1568
      %v1596 = vrot.slane %v1594, 2
      %v1597 = vrot.slane %v1571, 7
      %v1598 = vrot.slane %v1597, 2
      %v1599 = vrot.slane %v1575, 7
      %v1600 = vsel %vm734, %v1598, %v1599
      %v1601 = vrot.slane %v1578, 7
      %v1602 = vrot.slane %v1601, 2
      %v1603 = vrot.slane %v1582, 7
      %v1604 = vsel %vm734, %v1602, %v1603
      %v1605 = vrot.slane %v1585, 7
      %v1606 = vrot.slane %v1605, 2
      %v1607 = vrot.slane %v1589, 7
      %v1608 = vsel %vm734, %v1606, %v1607
      %v1609 = vrot.slane %v1592, 7
      %v1610 = vrot.slane %v1609, 2
      %v1611 = vrot.slane %v1596, 7
      %v1612 = vsel %vm734, %v1610, %v1611
      %s1613 = scalar_lea.vmem %s3, 512
      %v1614 = vld [vmem:[%s1613] sm:$0xf]
      %v1615 = vld [vmem:[%s1613 + $0x4] sm:$0xf]
      %v1616 = vld [vmem:[%s1613 + $0x8] sm:$0xf]
      %v1617 = vld [vmem:[%s1613 + $0xc] sm:$0xf]
      %v1618 = vld [vmem:[%s1613 + $0x10] sm:$0xf]
      %v1619 = vld [vmem:[%s1613 + $0x14] sm:$0xf]
      %v1620 = vld [vmem:[%s1613 + $0x18] sm:$0xf]
      %v1621 = vld [vmem:[%s1613 + $0x1c] sm:$0xf]
      %v1622 = vld [vmem:[%s1613 + $0x20] sm:$0xf]
      %v1623 = vld [vmem:[%s1613 + $0x24] sm:$0xf]
      %v1624 = vld [vmem:[%s1613 + $0x28] sm:$0xf]
      %v1625 = vld [vmem:[%s1613 + $0x2c] sm:$0xf]
      %v1626 = vld [vmem:[%s1613 + $0x30] sm:$0xf]
      %v1627 = vld [vmem:[%s1613 + $0x34] sm:$0xf]
      %v1628 = vld [vmem:[%s1613 + $0x38] sm:$0xf]
      %v1629 = vld [vmem:[%s1613 + $0x3c] sm:$0xf]
      %1631 = vst [vmem:[#allocation1] ss:$4 sm:$0xff] %v1600
      %s1633 = scalar_lea.vmem [#allocation1], 1
      %1634 = vst [vmem:[%s1633] ss:$4 sm:$0xff] %v1604
      %s1636 = scalar_lea.vmem [#allocation1], 2
      %1637 = vst [vmem:[%s1636] ss:$4 sm:$0xff] %v1608
      %s1639 = scalar_lea.vmem [#allocation1], 3
      %1640 = vst [vmem:[%s1639] ss:$4 sm:$0xff] %v1612
      %v1641 = vld.sshfl [vmem:[#allocation1] sm:$0xff pattern:$0x73625140]
      %v1659 = vunpack.c.l.b16 %v1614
      %v1660 = vunpack.c.l.b16 %v1615
      %v1661 = vunpack.c.l.b16 %v1616
      %v1662 = vunpack.c.l.b16 %v1617
      %v1663 = vunpack.c.l.b16 %v1618
      %v1664 = vunpack.c.l.b16 %v1619
      %v1665 = vunpack.c.l.b16 %v1620
      %v1666 = vunpack.c.l.b16 %v1621
      %v1667 = vunpack.c.l.b16 %v1622
      %v1668 = vunpack.c.l.b16 %v1623
      %v1669 = vunpack.c.l.b16 %v1624
      %v1670 = vunpack.c.l.b16 %v1625
      %v1671 = vunpack.c.l.b16 %v1626
      %v1672 = vunpack.c.l.b16 %v1627
      %v1673 = vunpack.c.l.b16 %v1628
      %v1674 = vunpack.c.l.b16 %v1629
      %v1675 = vpack.c.b16 %v1660, %v1659
      %v1676 = vpack.c.b16 %v1662, %v1661
      %v1677 = vpack.c.b16 %v1664, %v1663
      %v1678 = vpack.c.b16 %v1666, %v1665
      %v1679 = vpack.c.b16 %v1668, %v1667
      %v1680 = vpack.c.b16 %v1670, %v1669
      %v1681 = vpack.c.b16 %v1672, %v1671
      %v1682 = vpack.c.b16 %v1674, %v1673
      %1691 = vmatpush.bf16.msra.mxu0 %v1682
      %1692 = vmatpush.bf16.msra.mxu0 %v1681
      %1693 = vmatpush.bf16.msra.mxu0 %v1680
      %1694 = vmatpush.bf16.msra.mxu0 %v1679
      %1695 = vmatpush.bf16.msra.mxu0 %v1678
      %1696 = vmatpush.bf16.msra.mxu0 %v1677
      %1697 = vmatpush.bf16.msra.mxu0 %v1676
      %1698 = vmatpush.bf16.msra.mxu0 %v1675
      %1699 = vmatmul.bf16.gmra.mxu0 %v1641
      %v1700 = vpop.f32.mrf.mxu0
      %v1701 = vadd.f32 0.0, %v1700
      %v1702 = vpop.f32.mrf.mxu0
      %v1703 = vadd.f32 0.0, %v1702
      %1704 = vdwg.mxu0
      %v1705 = vadd.f32 %v1555, %v1701
      %v1706 = vadd.f32 %v1556, %v1703
      %v1707 = vld [vmem:[%s373] sm:$0x3]
      %v1708 = vld [vmem:[%s373 + $0x4] sm:$0x3]
      %v1709 = vld [vmem:[%s373 + $0x8] sm:$0x3]
      %v1710 = vld [vmem:[%s373 + $0xc] sm:$0x3]
      %s1711 = scalar_lea.vmem %s3, 576
      %v1712 = vld [vmem:[%s1711] sm:$0xf]
      %v1713 = vld [vmem:[%s1711 + $0x4] sm:$0xf]
      %v1714 = vld [vmem:[%s1711 + $0x8] sm:$0xf]
      %v1715 = vld [vmem:[%s1711 + $0xc] sm:$0xf]
      %v1716 = vld [vmem:[%s1711 + $0x10] sm:$0xf]
      %v1717 = vld [vmem:[%s1711 + $0x14] sm:$0xf]
      %v1718 = vld [vmem:[%s1711 + $0x18] sm:$0xf]
      %v1719 = vld [vmem:[%s1711 + $0x1c] sm:$0xf]
      %v1720 = vld [vmem:[%s1711 + $0x20] sm:$0xf]
      %v1721 = vld [vmem:[%s1711 + $0x24] sm:$0xf]
      %v1722 = vld [vmem:[%s1711 + $0x28] sm:$0xf]
      %v1723 = vld [vmem:[%s1711 + $0x2c] sm:$0xf]
      %v1724 = vld [vmem:[%s1711 + $0x30] sm:$0xf]
      %v1725 = vld [vmem:[%s1711 + $0x34] sm:$0xf]
      %v1726 = vld [vmem:[%s1711 + $0x38] sm:$0xf]
      %v1727 = vld [vmem:[%s1711 + $0x3c] sm:$0xf]
      %1729 = vst [vmem:[#allocation1] ss:$4 sm:$0xff] %v1707
      %s1731 = scalar_lea.vmem [#allocation1], 1
      %1732 = vst [vmem:[%s1731] ss:$4 sm:$0xff] %v1708
      %s1734 = scalar_lea.vmem [#allocation1], 2
      %1735 = vst [vmem:[%s1734] ss:$4 sm:$0xff] %v1709
      %s1737 = scalar_lea.vmem [#allocation1], 3
      %1738 = vst [vmem:[%s1737] ss:$4 sm:$0xff] %v1710
      %v1739 = vld.sshfl [vmem:[#allocation1] sm:$0xff pattern:$0x73625140]
      %v1757 = vunpack.c.l.b16 %v1712
      %v1758 = vunpack.c.l.b16 %v1713
      %v1759 = vunpack.c.l.b16 %v1714
      %v1760 = vunpack.c.l.b16 %v1715
      %v1761 = vunpack.c.l.b16 %v1716
      %v1762 = vunpack.c.l.b16 %v1717
      %v1763 = vunpack.c.l.b16 %v1718
      %v1764 = vunpack.c.l.b16 %v1719
      %v1765 = vunpack.c.l.b16 %v1720
      %v1766 = vunpack.c.l.b16 %v1721
      %v1767 = vunpack.c.l.b16 %v1722
      %v1768 = vunpack.c.l.b16 %v1723
      %v1769 = vunpack.c.l.b16 %v1724
      %v1770 = vunpack.c.l.b16 %v1725
      %v1771 = vunpack.c.l.b16 %v1726
      %v1772 = vunpack.c.l.b16 %v1727
      %v1773 = vpack.c.b16 %v1758, %v1757
      %v1774 = vpack.c.b16 %v1760, %v1759
      %v1775 = vpack.c.b16 %v1762, %v1761
      %v1776 = vpack.c.b16 %v1764, %v1763
      %v1777 = vpack.c.b16 %v1766, %v1765
      %v1778 = vpack.c.b16 %v1768, %v1767
      %v1779 = vpack.c.b16 %v1770, %v1769
      %v1780 = vpack.c.b16 %v1772, %v1771
      %1789 = vmatpush.bf16.msra.mxu0 %v1780
      %1790 = vmatpush.bf16.msra.mxu0 %v1779
      %1791 = vmatpush.bf16.msra.mxu0 %v1778
      %1792 = vmatpush.bf16.msra.mxu0 %v1777
      %1793 = vmatpush.bf16.msra.mxu0 %v1776
      %1794 = vmatpush.bf16.msra.mxu0 %v1775
      %1795 = vmatpush.bf16.msra.mxu0 %v1774
      %1796 = vmatpush.bf16.msra.mxu0 %v1773
      %1797 = vmatmul.bf16.gmra.mxu0 %v1739
      %v1798 = vpop.f32.mrf.mxu0
      %v1799 = vadd.f32 0.0, %v1798
      %v1800 = vpop.f32.mrf.mxu0
      %v1801 = vadd.f32 0.0, %v1800
      %1802 = vdwg.mxu0
      %v1803 = vadd.f32 %v1705, %v1799
      %v1804 = vadd.f32 %v1706, %v1801
      %v1805 = vld [vmem:[%s373] sm:$0x7]
      %v1806 = vld [vmem:[%s373 + $0x4] sm:$0x7]
      %v1807 = vld [vmem:[%s373 + $0x8] sm:$0x7]
      %v1808 = vld [vmem:[%s373 + $0xc] sm:$0x7]
      %v1813 = vrot.slane %v1805, 2
      %v1814 = vrot.slane %v1806, 2
      %v1815 = vrot.slane %v1807, 2
      %v1816 = vrot.slane %v1808, 2
      %v1819 = vsel %vm436, %v1805, %v1813
      %v1820 = vsel %vm440, %v1805, %v1813
      %v1822 = vrot.slane %v1820, 2
      %v1825 = vsel %vm436, %v1806, %v1814
      %v1826 = vsel %vm440, %v1806, %v1814
      %v1828 = vrot.slane %v1826, 2
      %v1831 = vsel %vm436, %v1807, %v1815
      %v1832 = vsel %vm440, %v1807, %v1815
      %v1834 = vrot.slane %v1832, 2
      %v1837 = vsel %vm436, %v1808, %v1816
      %v1838 = vsel %vm440, %v1808, %v1816
      %v1840 = vrot.slane %v1838, 2
      %v1841 = vshrl.u32 %v1819, 16
      %v1843 = vrot.slane %v1841, 6
      %v1844 = vshll.u32 %v1819, 16
      %v1846 = vrot.slane %v1844, 7
      %v1847 = vor.u32 %v1843, %v1846
      %v1848 = vrot.slane %v1847, 2
      %v1850 = vshll.u32 %v1822, 16
      %v1852 = vrot.slane %v1850, 7
      %v1853 = vsel %vm468, %v1848, %v1852
      %v1854 = vshrl.u32 %v1825, 16
      %v1856 = vrot.slane %v1854, 6
      %v1857 = vshll.u32 %v1825, 16
      %v1859 = vrot.slane %v1857, 7
      %v1860 = vor.u32 %v1856, %v1859
      %v1861 = vrot.slane %v1860, 2
      %v1863 = vshll.u32 %v1828, 16
      %v1865 = vrot.slane %v1863, 7
      %v1866 = vsel %vm468, %v1861, %v1865
      %v1867 = vshrl.u32 %v1831, 16
      %v1869 = vrot.slane %v1867, 6
      %v1870 = vshll.u32 %v1831, 16
      %v1872 = vrot.slane %v1870, 7
      %v1873 = vor.u32 %v1869, %v1872
      %v1874 = vrot.slane %v1873, 2
      %v1876 = vshll.u32 %v1834, 16
      %v1878 = vrot.slane %v1876, 7
      %v1879 = vsel %vm468, %v1874, %v1878
      %v1880 = vshrl.u32 %v1837, 16
      %v1882 = vrot.slane %v1880, 6
      %v1883 = vshll.u32 %v1837, 16
      %v1885 = vrot.slane %v1883, 7
      %v1886 = vor.u32 %v1882, %v1885
      %v1887 = vrot.slane %v1886, 2
      %v1889 = vshll.u32 %v1840, 16
      %v1891 = vrot.slane %v1889, 7
      %v1892 = vsel %vm468, %v1887, %v1891
      %s1893 = scalar_lea.vmem %s3, 640
      %v1894 = vld [vmem:[%s1893] sm:$0xf]
      %v1895 = vld [vmem:[%s1893 + $0x4] sm:$0xf]
      %v1896 = vld [vmem:[%s1893 + $0x8] sm:$0xf]
      %v1897 = vld [vmem:[%s1893 + $0xc] sm:$0xf]
      %v1898 = vld [vmem:[%s1893 + $0x10] sm:$0xf]
      %v1899 = vld [vmem:[%s1893 + $0x14] sm:$0xf]
      %v1900 = vld [vmem:[%s1893 + $0x18] sm:$0xf]
      %v1901 = vld [vmem:[%s1893 + $0x1c] sm:$0xf]
      %v1902 = vld [vmem:[%s1893 + $0x20] sm:$0xf]
      %v1903 = vld [vmem:[%s1893 + $0x24] sm:$0xf]
      %v1904 = vld [vmem:[%s1893 + $0x28] sm:$0xf]
      %v1905 = vld [vmem:[%s1893 + $0x2c] sm:$0xf]
      %v1906 = vld [vmem:[%s1893 + $0x30] sm:$0xf]
      %v1907 = vld [vmem:[%s1893 + $0x34] sm:$0xf]
      %v1908 = vld [vmem:[%s1893 + $0x38] sm:$0xf]
      %v1909 = vld [vmem:[%s1893 + $0x3c] sm:$0xf]
      %1911 = vst [vmem:[#allocation1] ss:$4 sm:$0xff] %v1853
      %s1913 = scalar_lea.vmem [#allocation1], 1
      %1914 = vst [vmem:[%s1913] ss:$4 sm:$0xff] %v1866
      %s1916 = scalar_lea.vmem [#allocation1], 2
      %1917 = vst [vmem:[%s1916] ss:$4 sm:$0xff] %v1879
      %s1919 = scalar_lea.vmem [#allocation1], 3
      %1920 = vst [vmem:[%s1919] ss:$4 sm:$0xff] %v1892
      %v1921 = vld.sshfl [vmem:[#allocation1] sm:$0xff pattern:$0x73625140]
      %v1939 = vunpack.c.l.b16 %v1894
      %v1940 = vunpack.c.l.b16 %v1895
      %v1941 = vunpack.c.l.b16 %v1896
      %v1942 = vunpack.c.l.b16 %v1897
      %v1943 = vunpack.c.l.b16 %v1898
      %v1944 = vunpack.c.l.b16 %v1899
      %v1945 = vunpack.c.l.b16 %v1900
      %v1946 = vunpack.c.l.b16 %v1901
      %v1947 = vunpack.c.l.b16 %v1902
      %v1948 = vunpack.c.l.b16 %v1903
      %v1949 = vunpack.c.l.b16 %v1904
      %v1950 = vunpack.c.l.b16 %v1905
      %v1951 = vunpack.c.l.b16 %v1906
      %v1952 = vunpack.c.l.b16 %v1907
      %v1953 = vunpack.c.l.b16 %v1908
      %v1954 = vunpack.c.l.b16 %v1909
      %v1955 = vpack.c.b16 %v1940, %v1939
      %v1956 = vpack.c.b16 %v1942, %v1941
      %v1957 = vpack.c.b16 %v1944, %v1943
      %v1958 = vpack.c.b16 %v1946, %v1945
      %v1959 = vpack.c.b16 %v1948, %v1947
      %v1960 = vpack.c.b16 %v1950, %v1949
      %v1961 = vpack.c.b16 %v1952, %v1951
      %v1962 = vpack.c.b16 %v1954, %v1953
      %1971 = vmatpush.bf16.msra.mxu0 %v1962
      %1972 = vmatpush.bf16.msra.mxu0 %v1961
      %1973 = vmatpush.bf16.msra.mxu0 %v1960
      %1974 = vmatpush.bf16.msra.mxu0 %v1959
      %1975 = vmatpush.bf16.msra.mxu0 %v1958
      %1976 = vmatpush.bf16.msra.mxu0 %v1957
      %1977 = vmatpush.bf16.msra.mxu0 %v1956
      %1978 = vmatpush.bf16.msra.mxu0 %v1955
      %1979 = vmatmul.bf16.gmra.mxu0 %v1921
      %v1980 = vpop.f32.mrf.mxu0
      %v1981 = vadd.f32 0.0, %v1980
      %v1982 = vpop.f32.mrf.mxu0
      %v1983 = vadd.f32 0.0, %v1982
      %1984 = vdwg.mxu0
      %v1985 = vadd.f32 %v1803, %v1981
      %v1986 = vadd.f32 %v1804, %v1983
      %v1987 = vld [vmem:[%s373] sm:$0x6]
      %v1988 = vld [vmem:[%s373 + $0x4] sm:$0x6]
      %v1989 = vld [vmem:[%s373 + $0x8] sm:$0x6]
      %v1990 = vld [vmem:[%s373 + $0xc] sm:$0x6]
      %v1995 = vrot.slane %v1987, 2
      %v1996 = vrot.slane %v1988, 2
      %v1997 = vrot.slane %v1989, 2
      %v1998 = vrot.slane %v1990, 2
      %v2001 = vsel %vm436, %v1987, %v1995
      %v2003 = vsel %vm440, %v1987, %v1995
      %v2005 = vrot.slane %v2003, 2
      %v2008 = vsel %vm436, %v1988, %v1996
      %v2010 = vsel %vm440, %v1988, %v1996
      %v2012 = vrot.slane %v2010, 2
      %v2015 = vsel %vm436, %v1989, %v1997
      %v2017 = vsel %vm440, %v1989, %v1997
      %v2019 = vrot.slane %v2017, 2
      %v2022 = vsel %vm436, %v1990, %v1998
      %v2024 = vsel %vm440, %v1990, %v1998
      %v2026 = vrot.slane %v2024, 2
      %v2027 = vrot.slane %v2001, 7
      %v2028 = vrot.slane %v2027, 2
      %v2029 = vrot.slane %v2005, 7
      %v2030 = vsel %vm734, %v2028, %v2029
      %v2031 = vrot.slane %v2008, 7
      %v2032 = vrot.slane %v2031, 2
      %v2033 = vrot.slane %v2012, 7
      %v2034 = vsel %vm734, %v2032, %v2033
      %v2035 = vrot.slane %v2015, 7
      %v2036 = vrot.slane %v2035, 2
      %v2037 = vrot.slane %v2019, 7
      %v2038 = vsel %vm734, %v2036, %v2037
      %v2039 = vrot.slane %v2022, 7
      %v2040 = vrot.slane %v2039, 2
      %v2041 = vrot.slane %v2026, 7
      %v2042 = vsel %vm734, %v2040, %v2041
      %s2043 = scalar_lea.vmem %s3, 704
      %v2044 = vld [vmem:[%s2043] sm:$0xf]
      %v2045 = vld [vmem:[%s2043 + $0x4] sm:$0xf]
      %v2046 = vld [vmem:[%s2043 + $0x8] sm:$0xf]
      %v2047 = vld [vmem:[%s2043 + $0xc] sm:$0xf]
      %v2048 = vld [vmem:[%s2043 + $0x10] sm:$0xf]
      %v2049 = vld [vmem:[%s2043 + $0x14] sm:$0xf]
      %v2050 = vld [vmem:[%s2043 + $0x18] sm:$0xf]
      %v2051 = vld [vmem:[%s2043 + $0x1c] sm:$0xf]
      %v2052 = vld [vmem:[%s2043 + $0x20] sm:$0xf]
      %v2053 = vld [vmem:[%s2043 + $0x24] sm:$0xf]
      %v2054 = vld [vmem:[%s2043 + $0x28] sm:$0xf]
      %v2055 = vld [vmem:[%s2043 + $0x2c] sm:$0xf]
      %v2056 = vld [vmem:[%s2043 + $0x30] sm:$0xf]
      %v2057 = vld [vmem:[%s2043 + $0x34] sm:$0xf]
      %v2058 = vld [vmem:[%s2043 + $0x38] sm:$0xf]
      %v2059 = vld [vmem:[%s2043 + $0x3c] sm:$0xf]
      %2061 = vst [vmem:[#allocation1] ss:$4 sm:$0xff] %v2030
      %s2063 = scalar_lea.vmem [#allocation1], 1
      %2064 = vst [vmem:[%s2063] ss:$4 sm:$0xff] %v2034
      %s2066 = scalar_lea.vmem [#allocation1], 2
      %2067 = vst [vmem:[%s2066] ss:$4 sm:$0xff] %v2038
      %s2069 = scalar_lea.vmem [#allocation1], 3
      %2070 = vst [vmem:[%s2069] ss:$4 sm:$0xff] %v2042
      %v2071 = vld.sshfl [vmem:[#allocation1] sm:$0xff pattern:$0x73625140]
      %v2089 = vunpack.c.l.b16 %v2044
      %v2090 = vunpack.c.l.b16 %v2045
      %v2091 = vunpack.c.l.b16 %v2046
      %v2092 = vunpack.c.l.b16 %v2047
      %v2093 = vunpack.c.l.b16 %v2048
      %v2094 = vunpack.c.l.b16 %v2049
      %v2095 = vunpack.c.l.b16 %v2050
      %v2096 = vunpack.c.l.b16 %v2051
      %v2097 = vunpack.c.l.b16 %v2052
      %v2098 = vunpack.c.l.b16 %v2053
      %v2099 = vunpack.c.l.b16 %v2054
      %v2100 = vunpack.c.l.b16 %v2055
      %v2101 = vunpack.c.l.b16 %v2056
      %v2102 = vunpack.c.l.b16 %v2057
      %v2103 = vunpack.c.l.b16 %v2058
      %v2104 = vunpack.c.l.b16 %v2059
      %v2105 = vpack.c.b16 %v2090, %v2089
      %v2106 = vpack.c.b16 %v2092, %v2091
      %v2107 = vpack.c.b16 %v2094, %v2093
      %v2108 = vpack.c.b16 %v2096, %v2095
      %v2109 = vpack.c.b16 %v2098, %v2097
      %v2110 = vpack.c.b16 %v2100, %v2099
      %v2111 = vpack.c.b16 %v2102, %v2101
      %v2112 = vpack.c.b16 %v2104, %v2103
      %2121 = vmatpush.bf16.msra.mxu0 %v2112
      %2122 = vmatpush.bf16.msra.mxu0 %v2111
      %2123 = vmatpush.bf16.msra.mxu0 %v2110
      %2124 = vmatpush.bf16.msra.mxu0 %v2109
      %2125 = vmatpush.bf16.msra.mxu0 %v2108
      %2126 = vmatpush.bf16.msra.mxu0 %v2107
      %2127 = vmatpush.bf16.msra.mxu0 %v2106
      %2128 = vmatpush.bf16.msra.mxu0 %v2105
      %2129 = vmatmul.bf16.gmra.mxu0 %v2071
      %v2130 = vpop.f32.mrf.mxu0
      %v2131 = vadd.f32 0.0, %v2130
      %v2132 = vpop.f32.mrf.mxu0
      %v2133 = vadd.f32 0.0, %v2132
      %2134 = vdwg.mxu0
      %v2135 = vadd.f32 %v1985, %v2131
      %v2136 = vadd.f32 %v1986, %v2133
      %s2137 = scalar_lea.vmem %s373, 4
      %v2138 = vld [vmem:[%s2137] sm:$0x3]
      %v2139 = vld [vmem:[%s2137 + $0x4] sm:$0x3]
      %v2140 = vld [vmem:[%s2137 + $0x8] sm:$0x3]
      %v2141 = vld [vmem:[%s2137 + $0xc] sm:$0x3]
      %s2142 = scalar_lea.vmem %s3, 768
      %v2143 = vld [vmem:[%s2142] sm:$0xf]
      %v2144 = vld [vmem:[%s2142 + $0x4] sm:$0xf]
      %v2145 = vld [vmem:[%s2142 + $0x8] sm:$0xf]
      %v2146 = vld [vmem:[%s2142 + $0xc] sm:$0xf]
      %v2147 = vld [vmem:[%s2142 + $0x10] sm:$0xf]
      %v2148 = vld [vmem:[%s2142 + $0x14] sm:$0xf]
      %v2149 = vld [vmem:[%s2142 + $0x18] sm:$0xf]
      %v2150 = vld [vmem:[%s2142 + $0x1c] sm:$0xf]
      %v2151 = vld [vmem:[%s2142 + $0x20] sm:$0xf]
      %v2152 = vld [vmem:[%s2142 + $0x24] sm:$0xf]
      %v2153 = vld [vmem:[%s2142 + $0x28] sm:$0xf]
      %v2154 = vld [vmem:[%s2142 + $0x2c] sm:$0xf]
      %v2155 = vld [vmem:[%s2142 + $0x30] sm:$0xf]
      %v2156 = vld [vmem:[%s2142 + $0x34] sm:$0xf]
      %v2157 = vld [vmem:[%s2142 + $0x38] sm:$0xf]
      %v2158 = vld [vmem:[%s2142 + $0x3c] sm:$0xf]
      %2160 = vst [vmem:[#allocation1] ss:$4 sm:$0xff] %v2138
      %s2162 = scalar_lea.vmem [#allocation1], 1
      %2163 = vst [vmem:[%s2162] ss:$4 sm:$0xff] %v2139
      %s2165 = scalar_lea.vmem [#allocation1], 2
      %2166 = vst [vmem:[%s2165] ss:$4 sm:$0xff] %v2140
      %s2168 = scalar_lea.vmem [#allocation1], 3
      %2169 = vst [vmem:[%s2168] ss:$4 sm:$0xff] %v2141
      %v2170 = vld.sshfl [vmem:[#allocation1] sm:$0xff pattern:$0x73625140]
      %v2188 = vunpack.c.l.b16 %v2143
      %v2189 = vunpack.c.l.b16 %v2144
      %v2190 = vunpack.c.l.b16 %v2145
      %v2191 = vunpack.c.l.b16 %v2146
      %v2192 = vunpack.c.l.b16 %v2147
      %v2193 = vunpack.c.l.b16 %v2148
      %v2194 = vunpack.c.l.b16 %v2149
      %v2195 = vunpack.c.l.b16 %v2150
      %v2196 = vunpack.c.l.b16 %v2151
      %v2197 = vunpack.c.l.b16 %v2152
      %v2198 = vunpack.c.l.b16 %v2153
      %v2199 = vunpack.c.l.b16 %v2154
      %v2200 = vunpack.c.l.b16 %v2155
      %v2201 = vunpack.c.l.b16 %v2156
      %v2202 = vunpack.c.l.b16 %v2157
      %v2203 = vunpack.c.l.b16 %v2158
      %v2204 = vpack.c.b16 %v2189, %v2188
      %v2205 = vpack.c.b16 %v2191, %v2190
      %v2206 = vpack.c.b16 %v2193, %v2192
      %v2207 = vpack.c.b16 %v2195, %v2194
      %v2208 = vpack.c.b16 %v2197, %v2196
      %v2209 = vpack.c.b16 %v2199, %v2198
      %v2210 = vpack.c.b16 %v2201, %v2200
      %v2211 = vpack.c.b16 %v2203, %v2202
      %2220 = vmatpush.bf16.msra.mxu0 %v2211
      %2221 = vmatpush.bf16.msra.mxu0 %v2210
      %2222 = vmatpush.bf16.msra.mxu0 %v2209
      %2223 = vmatpush.bf16.msra.mxu0 %v2208
      %2224 = vmatpush.bf16.msra.mxu0 %v2207
      %2225 = vmatpush.bf16.msra.mxu0 %v2206
      %2226 = vmatpush.bf16.msra.mxu0 %v2205
      %2227 = vmatpush.bf16.msra.mxu0 %v2204
      %2228 = vmatmul.bf16.gmra.mxu0 %v2170
      %v2229 = vpop.f32.mrf.mxu0
      %v2230 = vadd.f32 0.0, %v2229
      %v2231 = vpop.f32.mrf.mxu0
      %v2232 = vadd.f32 0.0, %v2231
      %2233 = vdwg.mxu0
      %v2234 = vadd.f32 %v2135, %v2230
      %v2235 = vadd.f32 %v2136, %v2232
      %v2236 = vld [vmem:[%s2137] sm:$0x7]
      %v2237 = vld [vmem:[%s2137 + $0x4] sm:$0x7]
      %v2238 = vld [vmem:[%s2137 + $0x8] sm:$0x7]
      %v2239 = vld [vmem:[%s2137 + $0xc] sm:$0x7]
      %v2244 = vrot.slane %v2236, 2
      %v2245 = vrot.slane %v2237, 2
      %v2246 = vrot.slane %v2238, 2
      %v2247 = vrot.slane %v2239, 2
      %v2250 = vsel %vm436, %v2236, %v2244
      %v2251 = vsel %vm440, %v2236, %v2244
      %v2253 = vrot.slane %v2251, 2
      %v2256 = vsel %vm436, %v2237, %v2245
      %v2257 = vsel %vm440, %v2237, %v2245
      %v2259 = vrot.slane %v2257, 2
      %v2262 = vsel %vm436, %v2238, %v2246
      %v2263 = vsel %vm440, %v2238, %v2246
      %v2265 = vrot.slane %v2263, 2
      %v2268 = vsel %vm436, %v2239, %v2247
      %v2269 = vsel %vm440, %v2239, %v2247
      %v2271 = vrot.slane %v2269, 2
      %v2272 = vshrl.u32 %v2250, 16
      %v2274 = vrot.slane %v2272, 6
      %v2275 = vshll.u32 %v2250, 16
      %v2277 = vrot.slane %v2275, 7
      %v2278 = vor.u32 %v2274, %v2277
      %v2279 = vrot.slane %v2278, 2
      %v2281 = vshll.u32 %v2253, 16
      %v2283 = vrot.slane %v2281, 7
      %v2284 = vsel %vm468, %v2279, %v2283
      %v2285 = vshrl.u32 %v2256, 16
      %v2287 = vrot.slane %v2285, 6
      %v2288 = vshll.u32 %v2256, 16
      %v2290 = vrot.slane %v2288, 7
      %v2291 = vor.u32 %v2287, %v2290
      %v2292 = vrot.slane %v2291, 2
      %v2294 = vshll.u32 %v2259, 16
      %v2296 = vrot.slane %v2294, 7
      %v2297 = vsel %vm468, %v2292, %v2296
      %v2298 = vshrl.u32 %v2262, 16
      %v2300 = vrot.slane %v2298, 6
      %v2301 = vshll.u32 %v2262, 16
      %v2303 = vrot.slane %v2301, 7
      %v2304 = vor.u32 %v2300, %v2303
      %v2305 = vrot.slane %v2304, 2
      %v2307 = vshll.u32 %v2265, 16
      %v2309 = vrot.slane %v2307, 7
      %v2310 = vsel %vm468, %v2305, %v2309
      %v2311 = vshrl.u32 %v2268, 16
      %v2313 = vrot.slane %v2311, 6
      %v2314 = vshll.u32 %v2268, 16
      %v2316 = vrot.slane %v2314, 7
      %v2317 = vor.u32 %v2313, %v2316
      %v2318 = vrot.slane %v2317, 2
      %v2320 = vshll.u32 %v2271, 16
      %v2322 = vrot.slane %v2320, 7
      %v2323 = vsel %vm468, %v2318, %v2322
      %s2324 = scalar_lea.vmem %s3, 832
      %v2325 = vld [vmem:[%s2324] sm:$0xf]
      %v2326 = vld [vmem:[%s2324 + $0x4] sm:$0xf]
      %v2327 = vld [vmem:[%s2324 + $0x8] sm:$0xf]
      %v2328 = vld [vmem:[%s2324 + $0xc] sm:$0xf]
      %v2329 = vld [vmem:[%s2324 + $0x10] sm:$0xf]
      %v2330 = vld [vmem:[%s2324 + $0x14] sm:$0xf]
      %v2331 = vld [vmem:[%s2324 + $0x18] sm:$0xf]
      %v2332 = vld [vmem:[%s2324 + $0x1c] sm:$0xf]
      %v2333 = vld [vmem:[%s2324 + $0x20] sm:$0xf]
      %v2334 = vld [vmem:[%s2324 + $0x24] sm:$0xf]
      %v2335 = vld [vmem:[%s2324 + $0x28] sm:$0xf]
      %v2336 = vld [vmem:[%s2324 + $0x2c] sm:$0xf]
      %v2337 = vld [vmem:[%s2324 + $0x30] sm:$0xf]
      %v2338 = vld [vmem:[%s2324 + $0x34] sm:$0xf]
      %v2339 = vld [vmem:[%s2324 + $0x38] sm:$0xf]
      %v2340 = vld [vmem:[%s2324 + $0x3c] sm:$0xf]
      %2342 = vst [vmem:[#allocation1] ss:$4 sm:$0xff] %v2284
      %s2344 = scalar_lea.vmem [#allocation1], 1
      %2345 = vst [vmem:[%s2344] ss:$4 sm:$0xff] %v2297
      %s2347 = scalar_lea.vmem [#allocation1], 2
      %2348 = vst [vmem:[%s2347] ss:$4 sm:$0xff] %v2310
      %s2350 = scalar_lea.vmem [#allocation1], 3
      %2351 = vst [vmem:[%s2350] ss:$4 sm:$0xff] %v2323
      %v2352 = vld.sshfl [vmem:[#allocation1] sm:$0xff pattern:$0x73625140]
      %v2370 = vunpack.c.l.b16 %v2325
      %v2371 = vunpack.c.l.b16 %v2326
      %v2372 = vunpack.c.l.b16 %v2327
      %v2373 = vunpack.c.l.b16 %v2328
      %v2374 = vunpack.c.l.b16 %v2329
      %v2375 = vunpack.c.l.b16 %v2330
      %v2376 = vunpack.c.l.b16 %v2331
      %v2377 = vunpack.c.l.b16 %v2332
      %v2378 = vunpack.c.l.b16 %v2333
      %v2379 = vunpack.c.l.b16 %v2334
      %v2380 = vunpack.c.l.b16 %v2335
      %v2381 = vunpack.c.l.b16 %v2336
      %v2382 = vunpack.c.l.b16 %v2337
      %v2383 = vunpack.c.l.b16 %v2338
      %v2384 = vunpack.c.l.b16 %v2339
      %v2385 = vunpack.c.l.b16 %v2340
      %v2386 = vpack.c.b16 %v2371, %v2370
      %v2387 = vpack.c.b16 %v2373, %v2372
      %v2388 = vpack.c.b16 %v2375, %v2374
      %v2389 = vpack.c.b16 %v2377, %v2376
      %v2390 = vpack.c.b16 %v2379, %v2378
      %v2391 = vpack.c.b16 %v2381, %v2380
      %v2392 = vpack.c.b16 %v2383, %v2382
      %v2393 = vpack.c.b16 %v2385, %v2384
      %2402 = vmatpush.bf16.msra.mxu0 %v2393
      %2403 = vmatpush.bf16.msra.mxu0 %v2392
      %2404 = vmatpush.bf16.msra.mxu0 %v2391
      %2405 = vmatpush.bf16.msra.mxu0 %v2390
      %2406 = vmatpush.bf16.msra.mxu0 %v2389
      %2407 = vmatpush.bf16.msra.mxu0 %v2388
      %2408 = vmatpush.bf16.msra.mxu0 %v2387
      %2409 = vmatpush.bf16.msra.mxu0 %v2386
      %2410 = vmatmul.bf16.gmra.mxu0 %v2352
      %v2411 = vpop.f32.mrf.mxu0
      %v2412 = vadd.f32 0.0, %v2411
      %v2413 = vpop.f32.mrf.mxu0
      %v2414 = vadd.f32 0.0, %v2413
      %2415 = vdwg.mxu0
      %v2416 = vadd.f32 %v2234, %v2412
      %v2417 = vadd.f32 %v2235, %v2414
      %v2418 = vld [vmem:[%s2137] sm:$0x6]
      %v2419 = vld [vmem:[%s2137 + $0x4] sm:$0x6]
      %v2420 = vld [vmem:[%s2137 + $0x8] sm:$0x6]
      %v2421 = vld [vmem:[%s2137 + $0xc] sm:$0x6]
      %v2426 = vrot.slane %v2418, 2
      %v2427 = vrot.slane %v2419, 2
      %v2428 = vrot.slane %v2420, 2
      %v2429 = vrot.slane %v2421, 2
      %v2432 = vsel %vm436, %v2418, %v2426
      %v2434 = vsel %vm440, %v2418, %v2426
      %v2436 = vrot.slane %v2434, 2
      %v2439 = vsel %vm436, %v2419, %v2427
      %v2441 = vsel %vm440, %v2419, %v2427
      %v2443 = vrot.slane %v2441, 2
      %v2446 = vsel %vm436, %v2420, %v2428
      %v2448 = vsel %vm440, %v2420, %v2428
      %v2450 = vrot.slane %v2448, 2
      %v2453 = vsel %vm436, %v2421, %v2429
      %v2455 = vsel %vm440, %v2421, %v2429
      %v2457 = vrot.slane %v2455, 2
      %v2458 = vrot.slane %v2432, 7
      %v2459 = vrot.slane %v2458, 2
      %v2460 = vrot.slane %v2436, 7
      %v2461 = vsel %vm734, %v2459, %v2460
      %v2462 = vrot.slane %v2439, 7
      %v2463 = vrot.slane %v2462, 2
      %v2464 = vrot.slane %v2443, 7
      %v2465 = vsel %vm734, %v2463, %v2464
      %v2466 = vrot.slane %v2446, 7
      %v2467 = vrot.slane %v2466, 2
      %v2468 = vrot.slane %v2450, 7
      %v2469 = vsel %vm734, %v2467, %v2468
      %v2470 = vrot.slane %v2453, 7
      %v2471 = vrot.slane %v2470, 2
      %v2472 = vrot.slane %v2457, 7
      %v2473 = vsel %vm734, %v2471, %v2472
      %s2474 = scalar_lea.vmem %s3, 896
      %v2475 = vld [vmem:[%s2474] sm:$0xf]
      %v2476 = vld [vmem:[%s2474 + $0x4] sm:$0xf]
      %v2477 = vld [vmem:[%s2474 + $0x8] sm:$0xf]
      %v2478 = vld [vmem:[%s2474 + $0xc] sm:$0xf]
      %v2479 = vld [vmem:[%s2474 + $0x10] sm:$0xf]
      %v2480 = vld [vmem:[%s2474 + $0x14] sm:$0xf]
      %v2481 = vld [vmem:[%s2474 + $0x18] sm:$0xf]
      %v2482 = vld [vmem:[%s2474 + $0x1c] sm:$0xf]
      %v2483 = vld [vmem:[%s2474 + $0x20] sm:$0xf]
      %v2484 = vld [vmem:[%s2474 + $0x24] sm:$0xf]
      %v2485 = vld [vmem:[%s2474 + $0x28] sm:$0xf]
      %v2486 = vld [vmem:[%s2474 + $0x2c] sm:$0xf]
      %v2487 = vld [vmem:[%s2474 + $0x30] sm:$0xf]
      %v2488 = vld [vmem:[%s2474 + $0x34] sm:$0xf]
      %v2489 = vld [vmem:[%s2474 + $0x38] sm:$0xf]
      %v2490 = vld [vmem:[%s2474 + $0x3c] sm:$0xf]
      %2492 = vst [vmem:[#allocation1] ss:$4 sm:$0xff] %v2461
      %s2494 = scalar_lea.vmem [#allocation1], 1
      %2495 = vst [vmem:[%s2494] ss:$4 sm:$0xff] %v2465
      %s2497 = scalar_lea.vmem [#allocation1], 2
      %2498 = vst [vmem:[%s2497] ss:$4 sm:$0xff] %v2469
      %s2500 = scalar_lea.vmem [#allocation1], 3
      %2501 = vst [vmem:[%s2500] ss:$4 sm:$0xff] %v2473
      %v2502 = vld.sshfl [vmem:[#allocation1] sm:$0xff pattern:$0x73625140]
      %v2520 = vunpack.c.l.b16 %v2475
      %v2521 = vunpack.c.l.b16 %v2476
      %v2522 = vunpack.c.l.b16 %v2477
      %v2523 = vunpack.c.l.b16 %v2478
      %v2524 = vunpack.c.l.b16 %v2479
      %v2525 = vunpack.c.l.b16 %v2480
      %v2526 = vunpack.c.l.b16 %v2481
      %v2527 = vunpack.c.l.b16 %v2482
      %v2528 = vunpack.c.l.b16 %v2483
      %v2529 = vunpack.c.l.b16 %v2484
      %v2530 = vunpack.c.l.b16 %v2485
      %v2531 = vunpack.c.l.b16 %v2486
      %v2532 = vunpack.c.l.b16 %v2487
      %v2533 = vunpack.c.l.b16 %v2488
      %v2534 = vunpack.c.l.b16 %v2489
      %v2535 = vunpack.c.l.b16 %v2490
      %v2536 = vpack.c.b16 %v2521, %v2520
      %v2537 = vpack.c.b16 %v2523, %v2522
      %v2538 = vpack.c.b16 %v2525, %v2524
      %v2539 = vpack.c.b16 %v2527, %v2526
      %v2540 = vpack.c.b16 %v2529, %v2528
      %v2541 = vpack.c.b16 %v2531, %v2530
      %v2542 = vpack.c.b16 %v2533, %v2532
      %v2543 = vpack.c.b16 %v2535, %v2534
      %2552 = vmatpush.bf16.msra.mxu0 %v2543
      %2553 = vmatpush.bf16.msra.mxu0 %v2542
      %2554 = vmatpush.bf16.msra.mxu0 %v2541
      %2555 = vmatpush.bf16.msra.mxu0 %v2540
      %2556 = vmatpush.bf16.msra.mxu0 %v2539
      %2557 = vmatpush.bf16.msra.mxu0 %v2538
      %2558 = vmatpush.bf16.msra.mxu0 %v2537
      %2559 = vmatpush.bf16.msra.mxu0 %v2536
      %2560 = vmatmul.bf16.gmra.mxu0 %v2502
      %v2561 = vpop.f32.mrf.mxu0
      %v2562 = vadd.f32 0.0, %v2561
      %v2563 = vpop.f32.mrf.mxu0
      %v2564 = vadd.f32 0.0, %v2563
      %2565 = vdwg.mxu0
      %v2566 = vadd.f32 %v2416, %v2562
      %v2567 = vadd.f32 %v2417, %v2564
      %s2568 = scalar_lea.vmem %s373, 8
      %v2569 = vld [vmem:[%s2568] sm:$0x3]
      %v2570 = vld [vmem:[%s2568 + $0x4] sm:$0x3]
      %v2571 = vld [vmem:[%s2568 + $0x8] sm:$0x3]
      %v2572 = vld [vmem:[%s2568 + $0xc] sm:$0x3]
      %s2573 = scalar_lea.vmem %s3, 960
      %v2574 = vld [vmem:[%s2573] sm:$0xf]
      %v2575 = vld [vmem:[%s2573 + $0x4] sm:$0xf]
      %v2576 = vld [vmem:[%s2573 + $0x8] sm:$0xf]
      %v2577 = vld [vmem:[%s2573 + $0xc] sm:$0xf]
      %v2578 = vld [vmem:[%s2573 + $0x10] sm:$0xf]
      %v2579 = vld [vmem:[%s2573 + $0x14] sm:$0xf]
      %v2580 = vld [vmem:[%s2573 + $0x18] sm:$0xf]
      %v2581 = vld [vmem:[%s2573 + $0x1c] sm:$0xf]
      %v2582 = vld [vmem:[%s2573 + $0x20] sm:$0xf]
      %v2583 = vld [vmem:[%s2573 + $0x24] sm:$0xf]
      %v2584 = vld [vmem:[%s2573 + $0x28] sm:$0xf]
      %v2585 = vld [vmem:[%s2573 + $0x2c] sm:$0xf]
      %v2586 = vld [vmem:[%s2573 + $0x30] sm:$0xf]
      %v2587 = vld [vmem:[%s2573 + $0x34] sm:$0xf]
      %v2588 = vld [vmem:[%s2573 + $0x38] sm:$0xf]
      %v2589 = vld [vmem:[%s2573 + $0x3c] sm:$0xf]
      %2591 = vst [vmem:[#allocation1] ss:$4 sm:$0xff] %v2569
      %s2593 = scalar_lea.vmem [#allocation1], 1
      %2594 = vst [vmem:[%s2593] ss:$4 sm:$0xff] %v2570
      %s2596 = scalar_lea.vmem [#allocation1], 2
      %2597 = vst [vmem:[%s2596] ss:$4 sm:$0xff] %v2571
      %s2599 = scalar_lea.vmem [#allocation1], 3
      %2600 = vst [vmem:[%s2599] ss:$4 sm:$0xff] %v2572
      %v2601 = vld.sshfl [vmem:[#allocation1] sm:$0xff pattern:$0x73625140]
      %v2619 = vunpack.c.l.b16 %v2574
      %v2620 = vunpack.c.l.b16 %v2575
      %v2621 = vunpack.c.l.b16 %v2576
      %v2622 = vunpack.c.l.b16 %v2577
      %v2623 = vunpack.c.l.b16 %v2578
      %v2624 = vunpack.c.l.b16 %v2579
      %v2625 = vunpack.c.l.b16 %v2580
      %v2626 = vunpack.c.l.b16 %v2581
      %v2627 = vunpack.c.l.b16 %v2582
      %v2628 = vunpack.c.l.b16 %v2583
      %v2629 = vunpack.c.l.b16 %v2584
      %v2630 = vunpack.c.l.b16 %v2585
      %v2631 = vunpack.c.l.b16 %v2586
      %v2632 = vunpack.c.l.b16 %v2587
      %v2633 = vunpack.c.l.b16 %v2588
      %v2634 = vunpack.c.l.b16 %v2589
      %v2635 = vpack.c.b16 %v2620, %v2619
      %v2636 = vpack.c.b16 %v2622, %v2621
      %v2637 = vpack.c.b16 %v2624, %v2623
      %v2638 = vpack.c.b16 %v2626, %v2625
      %v2639 = vpack.c.b16 %v2628, %v2627
      %v2640 = vpack.c.b16 %v2630, %v2629
      %v2641 = vpack.c.b16 %v2632, %v2631
      %v2642 = vpack.c.b16 %v2634, %v2633
      %2651 = vmatpush.bf16.msra.mxu0 %v2642
      %2652 = vmatpush.bf16.msra.mxu0 %v2641
      %2653 = vmatpush.bf16.msra.mxu0 %v2640
      %2654 = vmatpush.bf16.msra.mxu0 %v2639
      %2655 = vmatpush.bf16.msra.mxu0 %v2638
      %2656 = vmatpush.bf16.msra.mxu0 %v2637
      %2657 = vmatpush.bf16.msra.mxu0 %v2636
      %2658 = vmatpush.bf16.msra.mxu0 %v2635
      %2659 = vmatmul.bf16.gmra.mxu0 %v2601
      %v2660 = vpop.f32.mrf.mxu0
      %v2661 = vadd.f32 0.0, %v2660
      %v2662 = vpop.f32.mrf.mxu0
      %v2663 = vadd.f32 0.0, %v2662
      %2664 = vdwg.mxu0
      %v2665 = vadd.f32 %v2566, %v2661
      %v2666 = vadd.f32 %v2567, %v2663
      %v2667 = vld [vmem:[%s2568] sm:$0x7]
      %v2668 = vld [vmem:[%s2568 + $0x4] sm:$0x7]
      %v2669 = vld [vmem:[%s2568 + $0x8] sm:$0x7]
      %v2670 = vld [vmem:[%s2568 + $0xc] sm:$0x7]
      %v2675 = vrot.slane %v2667, 2
      %v2676 = vrot.slane %v2668, 2
      %v2677 = vrot.slane %v2669, 2
      %v2678 = vrot.slane %v2670, 2
      %v2681 = vsel %vm436, %v2667, %v2675
      %v2682 = vsel %vm440, %v2667, %v2675
      %v2684 = vrot.slane %v2682, 2
      %v2687 = vsel %vm436, %v2668, %v2676
      %v2688 = vsel %vm440, %v2668, %v2676
      %v2690 = vrot.slane %v2688, 2
      %v2693 = vsel %vm436, %v2669, %v2677
      %v2694 = vsel %vm440, %v2669, %v2677
      %v2696 = vrot.slane %v2694, 2
      %v2699 = vsel %vm436, %v2670, %v2678
      %v2700 = vsel %vm440, %v2670, %v2678
      %v2702 = vrot.slane %v2700, 2
      %v2703 = vshrl.u32 %v2681, 16
      %v2705 = vrot.slane %v2703, 6
      %v2706 = vshll.u32 %v2681, 16
      %v2708 = vrot.slane %v2706, 7
      %v2709 = vor.u32 %v2705, %v2708
      %v2710 = vrot.slane %v2709, 2
      %v2712 = vshll.u32 %v2684, 16
      %v2714 = vrot.slane %v2712, 7
      %v2715 = vsel %vm468, %v2710, %v2714
      %v2716 = vshrl.u32 %v2687, 16
      %v2718 = vrot.slane %v2716, 6
      %v2719 = vshll.u32 %v2687, 16
      %v2721 = vrot.slane %v2719, 7
      %v2722 = vor.u32 %v2718, %v2721
      %v2723 = vrot.slane %v2722, 2
      %v2725 = vshll.u32 %v2690, 16
      %v2727 = vrot.slane %v2725, 7
      %v2728 = vsel %vm468, %v2723, %v2727
      %v2729 = vshrl.u32 %v2693, 16
      %v2731 = vrot.slane %v2729, 6
      %v2732 = vshll.u32 %v2693, 16
      %v2734 = vrot.slane %v2732, 7
      %v2735 = vor.u32 %v2731, %v2734
      %v2736 = vrot.slane %v2735, 2
      %v2738 = vshll.u32 %v2696, 16
      %v2740 = vrot.slane %v2738, 7
      %v2741 = vsel %vm468, %v2736, %v2740
      %v2742 = vshrl.u32 %v2699, 16
      %v2744 = vrot.slane %v2742, 6
      %v2745 = vshll.u32 %v2699, 16
      %v2747 = vrot.slane %v2745, 7
      %v2748 = vor.u32 %v2744, %v2747
      %v2749 = vrot.slane %v2748, 2
      %v2751 = vshll.u32 %v2702, 16
      %v2753 = vrot.slane %v2751, 7
      %v2754 = vsel %vm468, %v2749, %v2753
      %s2755 = scalar_lea.vmem %s3, 1024
      %v2756 = vld [vmem:[%s2755] sm:$0xf]
      %v2757 = vld [vmem:[%s2755 + $0x4] sm:$0xf]
      %v2758 = vld [vmem:[%s2755 + $0x8] sm:$0xf]
      %v2759 = vld [vmem:[%s2755 + $0xc] sm:$0xf]
      %v2760 = vld [vmem:[%s2755 + $0x10] sm:$0xf]
      %v2761 = vld [vmem:[%s2755 + $0x14] sm:$0xf]
      %v2762 = vld [vmem:[%s2755 + $0x18] sm:$0xf]
      %v2763 = vld [vmem:[%s2755 + $0x1c] sm:$0xf]
      %v2764 = vld [vmem:[%s2755 + $0x20] sm:$0xf]
      %v2765 = vld [vmem:[%s2755 + $0x24] sm:$0xf]
      %v2766 = vld [vmem:[%s2755 + $0x28] sm:$0xf]
      %v2767 = vld [vmem:[%s2755 + $0x2c] sm:$0xf]
      %v2768 = vld [vmem:[%s2755 + $0x30] sm:$0xf]
      %v2769 = vld [vmem:[%s2755 + $0x34] sm:$0xf]
      %v2770 = vld [vmem:[%s2755 + $0x38] sm:$0xf]
      %v2771 = vld [vmem:[%s2755 + $0x3c] sm:$0xf]
      %2773 = vst [vmem:[#allocation1] ss:$4 sm:$0xff] %v2715
      %s2775 = scalar_lea.vmem [#allocation1], 1
      %2776 = vst [vmem:[%s2775] ss:$4 sm:$0xff] %v2728
      %s2778 = scalar_lea.vmem [#allocation1], 2
      %2779 = vst [vmem:[%s2778] ss:$4 sm:$0xff] %v2741
      %s2781 = scalar_lea.vmem [#allocation1], 3
      %2782 = vst [vmem:[%s2781] ss:$4 sm:$0xff] %v2754
      %v2783 = vld.sshfl [vmem:[#allocation1] sm:$0xff pattern:$0x73625140]
      %v2801 = vunpack.c.l.b16 %v2756
      %v2802 = vunpack.c.l.b16 %v2757
      %v2803 = vunpack.c.l.b16 %v2758
      %v2804 = vunpack.c.l.b16 %v2759
      %v2805 = vunpack.c.l.b16 %v2760
      %v2806 = vunpack.c.l.b16 %v2761
      %v2807 = vunpack.c.l.b16 %v2762
      %v2808 = vunpack.c.l.b16 %v2763
      %v2809 = vunpack.c.l.b16 %v2764
      %v2810 = vunpack.c.l.b16 %v2765
      %v2811 = vunpack.c.l.b16 %v2766
      %v2812 = vunpack.c.l.b16 %v2767
      %v2813 = vunpack.c.l.b16 %v2768
      %v2814 = vunpack.c.l.b16 %v2769
      %v2815 = vunpack.c.l.b16 %v2770
      %v2816 = vunpack.c.l.b16 %v2771
      %v2817 = vpack.c.b16 %v2802, %v2801
      %v2818 = vpack.c.b16 %v2804, %v2803
      %v2819 = vpack.c.b16 %v2806, %v2805
      %v2820 = vpack.c.b16 %v2808, %v2807
      %v2821 = vpack.c.b16 %v2810, %v2809
      %v2822 = vpack.c.b16 %v2812, %v2811
      %v2823 = vpack.c.b16 %v2814, %v2813
      %v2824 = vpack.c.b16 %v2816, %v2815
      %2833 = vmatpush.bf16.msra.mxu0 %v2824
      %2834 = vmatpush.bf16.msra.mxu0 %v2823
      %2835 = vmatpush.bf16.msra.mxu0 %v2822
      %2836 = vmatpush.bf16.msra.mxu0 %v2821
      %2837 = vmatpush.bf16.msra.mxu0 %v2820
      %2838 = vmatpush.bf16.msra.mxu0 %v2819
      %2839 = vmatpush.bf16.msra.mxu0 %v2818
      %2840 = vmatpush.bf16.msra.mxu0 %v2817
      %2841 = vmatmul.bf16.gmra.mxu0 %v2783
      %v2842 = vpop.f32.mrf.mxu0
      %v2843 = vadd.f32 0.0, %v2842
      %v2844 = vpop.f32.mrf.mxu0
      %v2845 = vadd.f32 0.0, %v2844
      %2846 = vdwg.mxu0
      %v2847 = vadd.f32 %v2665, %v2843
      %v2848 = vadd.f32 %v2666, %v2845
      %v2849 = vld [vmem:[%s2568] sm:$0x6]
      %v2850 = vld [vmem:[%s2568 + $0x4] sm:$0x6]
      %v2851 = vld [vmem:[%s2568 + $0x8] sm:$0x6]
      %v2852 = vld [vmem:[%s2568 + $0xc] sm:$0x6]
      %v2857 = vrot.slane %v2849, 2
      %v2858 = vrot.slane %v2850, 2
      %v2859 = vrot.slane %v2851, 2
      %v2860 = vrot.slane %v2852, 2
      %v2863 = vsel %vm436, %v2849, %v2857
      %v2865 = vsel %vm440, %v2849, %v2857
      %v2867 = vrot.slane %v2865, 2
      %v2870 = vsel %vm436, %v2850, %v2858
      %v2872 = vsel %vm440, %v2850, %v2858
      %v2874 = vrot.slane %v2872, 2
      %v2877 = vsel %vm436, %v2851, %v2859
      %v2879 = vsel %vm440, %v2851, %v2859
      %v2881 = vrot.slane %v2879, 2
      %v2884 = vsel %vm436, %v2852, %v2860
      %v2886 = vsel %vm440, %v2852, %v2860
      %v2888 = vrot.slane %v2886, 2
      %v2889 = vrot.slane %v2863, 7
      %v2890 = vrot.slane %v2889, 2
      %v2891 = vrot.slane %v2867, 7
      %v2892 = vsel %vm734, %v2890, %v2891
      %v2893 = vrot.slane %v2870, 7
      %v2894 = vrot.slane %v2893, 2
      %v2895 = vrot.slane %v2874, 7
      %v2896 = vsel %vm734, %v2894, %v2895
      %v2897 = vrot.slane %v2877, 7
      %v2898 = vrot.slane %v2897, 2
      %v2899 = vrot.slane %v2881, 7
      %v2900 = vsel %vm734, %v2898, %v2899
      %v2901 = vrot.slane %v2884, 7
      %v2902 = vrot.slane %v2901, 2
      %v2903 = vrot.slane %v2888, 7
      %v2904 = vsel %vm734, %v2902, %v2903
      %s2905 = scalar_lea.vmem %s3, 1088
      %v2906 = vld [vmem:[%s2905] sm:$0xf]
      %v2907 = vld [vmem:[%s2905 + $0x4] sm:$0xf]
      %v2908 = vld [vmem:[%s2905 + $0x8] sm:$0xf]
      %v2909 = vld [vmem:[%s2905 + $0xc] sm:$0xf]
      %v2910 = vld [vmem:[%s2905 + $0x10] sm:$0xf]
      %v2911 = vld [vmem:[%s2905 + $0x14] sm:$0xf]
      %v2912 = vld [vmem:[%s2905 + $0x18] sm:$0xf]
      %v2913 = vld [vmem:[%s2905 + $0x1c] sm:$0xf]
      %v2914 = vld [vmem:[%s2905 + $0x20] sm:$0xf]
      %v2915 = vld [vmem:[%s2905 + $0x24] sm:$0xf]
      %v2916 = vld [vmem:[%s2905 + $0x28] sm:$0xf]
      %v2917 = vld [vmem:[%s2905 + $0x2c] sm:$0xf]
      %v2918 = vld [vmem:[%s2905 + $0x30] sm:$0xf]
      %v2919 = vld [vmem:[%s2905 + $0x34] sm:$0xf]
      %v2920 = vld [vmem:[%s2905 + $0x38] sm:$0xf]
      %v2921 = vld [vmem:[%s2905 + $0x3c] sm:$0xf]
      %2923 = vst [vmem:[#allocation1] ss:$4 sm:$0xff] %v2892
      %s2925 = scalar_lea.vmem [#allocation1], 1
      %2926 = vst [vmem:[%s2925] ss:$4 sm:$0xff] %v2896
      %s2928 = scalar_lea.vmem [#allocation1], 2
      %2929 = vst [vmem:[%s2928] ss:$4 sm:$0xff] %v2900
      %s2931 = scalar_lea.vmem [#allocation1], 3
      %2932 = vst [vmem:[%s2931] ss:$4 sm:$0xff] %v2904
      %v2933 = vld.sshfl [vmem:[#allocation1] sm:$0xff pattern:$0x73625140]
      %v2951 = vunpack.c.l.b16 %v2906
      %v2952 = vunpack.c.l.b16 %v2907
      %v2953 = vunpack.c.l.b16 %v2908
      %v2954 = vunpack.c.l.b16 %v2909
      %v2955 = vunpack.c.l.b16 %v2910
      %v2956 = vunpack.c.l.b16 %v2911
      %v2957 = vunpack.c.l.b16 %v2912
      %v2958 = vunpack.c.l.b16 %v2913
      %v2959 = vunpack.c.l.b16 %v2914
      %v2960 = vunpack.c.l.b16 %v2915
      %v2961 = vunpack.c.l.b16 %v2916
      %v2962 = vunpack.c.l.b16 %v2917
      %v2963 = vunpack.c.l.b16 %v2918
      %v2964 = vunpack.c.l.b16 %v2919
      %v2965 = vunpack.c.l.b16 %v2920
      %v2966 = vunpack.c.l.b16 %v2921
      %v2967 = vpack.c.b16 %v2952, %v2951
      %v2968 = vpack.c.b16 %v2954, %v2953
      %v2969 = vpack.c.b16 %v2956, %v2955
      %v2970 = vpack.c.b16 %v2958, %v2957
      %v2971 = vpack.c.b16 %v2960, %v2959
      %v2972 = vpack.c.b16 %v2962, %v2961
      %v2973 = vpack.c.b16 %v2964, %v2963
      %v2974 = vpack.c.b16 %v2966, %v2965
      %2983 = vmatpush.bf16.msra.mxu0 %v2974
      %2984 = vmatpush.bf16.msra.mxu0 %v2973
      %2985 = vmatpush.bf16.msra.mxu0 %v2972
      %2986 = vmatpush.bf16.msra.mxu0 %v2971
      %2987 = vmatpush.bf16.msra.mxu0 %v2970
      %2988 = vmatpush.bf16.msra.mxu0 %v2969
      %2989 = vmatpush.bf16.msra.mxu0 %v2968
      %2990 = vmatpush.bf16.msra.mxu0 %v2967
      %2991 = vmatmul.bf16.gmra.mxu0 %v2933
      %v2992 = vpop.f32.mrf.mxu0
      %v2993 = vadd.f32 0.0, %v2992
      %v2994 = vpop.f32.mrf.mxu0
      %v2995 = vadd.f32 0.0, %v2994
      %2996 = vdwg.mxu0
      %v2997 = vadd.f32 %v2847, %v2993
      %v2998 = vadd.f32 %v2848, %v2995
      %v2999 = vld [vmem:[%s384] sm:$0x3]
      %v3000 = vld [vmem:[%s384 + $0x4] sm:$0x3]
      %v3001 = vld [vmem:[%s384 + $0x8] sm:$0x3]
      %v3002 = vld [vmem:[%s384 + $0xc] sm:$0x3]
      %s3003 = scalar_lea.vmem %s3, 1152
      %v3004 = vld [vmem:[%s3003] sm:$0xf]
      %v3005 = vld [vmem:[%s3003 + $0x4] sm:$0xf]
      %v3006 = vld [vmem:[%s3003 + $0x8] sm:$0xf]
      %v3007 = vld [vmem:[%s3003 + $0xc] sm:$0xf]
      %v3008 = vld [vmem:[%s3003 + $0x10] sm:$0xf]
      %v3009 = vld [vmem:[%s3003 + $0x14] sm:$0xf]
      %v3010 = vld [vmem:[%s3003 + $0x18] sm:$0xf]
      %v3011 = vld [vmem:[%s3003 + $0x1c] sm:$0xf]
      %v3012 = vld [vmem:[%s3003 + $0x20] sm:$0xf]
      %v3013 = vld [vmem:[%s3003 + $0x24] sm:$0xf]
      %v3014 = vld [vmem:[%s3003 + $0x28] sm:$0xf]
      %v3015 = vld [vmem:[%s3003 + $0x2c] sm:$0xf]
      %v3016 = vld [vmem:[%s3003 + $0x30] sm:$0xf]
      %v3017 = vld [vmem:[%s3003 + $0x34] sm:$0xf]
      %v3018 = vld [vmem:[%s3003 + $0x38] sm:$0xf]
      %v3019 = vld [vmem:[%s3003 + $0x3c] sm:$0xf]
      %3021 = vst [vmem:[#allocation1] ss:$4 sm:$0xff] %v2999
      %s3023 = scalar_lea.vmem [#allocation1], 1
      %3024 = vst [vmem:[%s3023] ss:$4 sm:$0xff] %v3000
      %s3026 = scalar_lea.vmem [#allocation1], 2
      %3027 = vst [vmem:[%s3026] ss:$4 sm:$0xff] %v3001
      %s3029 = scalar_lea.vmem [#allocation1], 3
      %3030 = vst [vmem:[%s3029] ss:$4 sm:$0xff] %v3002
      %v3031 = vld.sshfl [vmem:[#allocation1] sm:$0xff pattern:$0x73625140]
      %v3049 = vunpack.c.l.b16 %v3004
      %v3050 = vunpack.c.l.b16 %v3005
      %v3051 = vunpack.c.l.b16 %v3006
      %v3052 = vunpack.c.l.b16 %v3007
      %v3053 = vunpack.c.l.b16 %v3008
      %v3054 = vunpack.c.l.b16 %v3009
      %v3055 = vunpack.c.l.b16 %v3010
      %v3056 = vunpack.c.l.b16 %v3011
      %v3057 = vunpack.c.l.b16 %v3012
      %v3058 = vunpack.c.l.b16 %v3013
      %v3059 = vunpack.c.l.b16 %v3014
      %v3060 = vunpack.c.l.b16 %v3015
      %v3061 = vunpack.c.l.b16 %v3016
      %v3062 = vunpack.c.l.b16 %v3017
      %v3063 = vunpack.c.l.b16 %v3018
      %v3064 = vunpack.c.l.b16 %v3019
      %v3065 = vpack.c.b16 %v3050, %v3049
      %v3066 = vpack.c.b16 %v3052, %v3051
      %v3067 = vpack.c.b16 %v3054, %v3053
      %v3068 = vpack.c.b16 %v3056, %v3055
      %v3069 = vpack.c.b16 %v3058, %v3057
      %v3070 = vpack.c.b16 %v3060, %v3059
      %v3071 = vpack.c.b16 %v3062, %v3061
      %v3072 = vpack.c.b16 %v3064, %v3063
      %3081 = vmatpush.bf16.msra.mxu0 %v3072
      %3082 = vmatpush.bf16.msra.mxu0 %v3071
      %3083 = vmatpush.bf16.msra.mxu0 %v3070
      %3084 = vmatpush.bf16.msra.mxu0 %v3069
      %3085 = vmatpush.bf16.msra.mxu0 %v3068
      %3086 = vmatpush.bf16.msra.mxu0 %v3067
      %3087 = vmatpush.bf16.msra.mxu0 %v3066
      %3088 = vmatpush.bf16.msra.mxu0 %v3065
      %3089 = vmatmul.bf16.gmra.mxu0 %v3031
      %v3090 = vpop.f32.mrf.mxu0
      %v3091 = vadd.f32 0.0, %v3090
      %v3092 = vpop.f32.mrf.mxu0
      %v3093 = vadd.f32 0.0, %v3092
      %3094 = vdwg.mxu0
      %v3095 = vadd.f32 %v2997, %v3091
      %v3096 = vadd.f32 %v2998, %v3093
      %v3097 = vld [vmem:[%s384] sm:$0x7]
      %v3098 = vld [vmem:[%s384 + $0x4] sm:$0x7]
      %v3099 = vld [vmem:[%s384 + $0x8] sm:$0x7]
      %v3100 = vld [vmem:[%s384 + $0xc] sm:$0x7]
      %v3105 = vrot.slane %v3097, 2
      %v3106 = vrot.slane %v3098, 2
      %v3107 = vrot.slane %v3099, 2
      %v3108 = vrot.slane %v3100, 2
      %v3111 = vsel %vm436, %v3097, %v3105
      %v3112 = vsel %vm440, %v3097, %v3105
      %v3114 = vrot.slane %v3112, 2
      %v3117 = vsel %vm436, %v3098, %v3106
      %v3118 = vsel %vm440, %v3098, %v3106
      %v3120 = vrot.slane %v3118, 2
      %v3123 = vsel %vm436, %v3099, %v3107
      %v3124 = vsel %vm440, %v3099, %v3107
      %v3126 = vrot.slane %v3124, 2
      %v3129 = vsel %vm436, %v3100, %v3108
      %v3130 = vsel %vm440, %v3100, %v3108
      %v3132 = vrot.slane %v3130, 2
      %v3133 = vshrl.u32 %v3111, 16
      %v3135 = vrot.slane %v3133, 6
      %v3136 = vshll.u32 %v3111, 16
      %v3138 = vrot.slane %v3136, 7
      %v3139 = vor.u32 %v3135, %v3138
      %v3140 = vrot.slane %v3139, 2
      %v3142 = vshll.u32 %v3114, 16
      %v3144 = vrot.slane %v3142, 7
      %v3145 = vsel %vm468, %v3140, %v3144
      %v3146 = vshrl.u32 %v3117, 16
      %v3148 = vrot.slane %v3146, 6
      %v3149 = vshll.u32 %v3117, 16
      %v3151 = vrot.slane %v3149, 7
      %v3152 = vor.u32 %v3148, %v3151
      %v3153 = vrot.slane %v3152, 2
      %v3155 = vshll.u32 %v3120, 16
      %v3157 = vrot.slane %v3155, 7
      %v3158 = vsel %vm468, %v3153, %v3157
      %v3159 = vshrl.u32 %v3123, 16
      %v3161 = vrot.slane %v3159, 6
      %v3162 = vshll.u32 %v3123, 16
      %v3164 = vrot.slane %v3162, 7
      %v3165 = vor.u32 %v3161, %v3164
      %v3166 = vrot.slane %v3165, 2
      %v3168 = vshll.u32 %v3126, 16
      %v3170 = vrot.slane %v3168, 7
      %v3171 = vsel %vm468, %v3166, %v3170
      %v3172 = vshrl.u32 %v3129, 16
      %v3174 = vrot.slane %v3172, 6
      %v3175 = vshll.u32 %v3129, 16
      %v3177 = vrot.slane %v3175, 7
      %v3178 = vor.u32 %v3174, %v3177
      %v3179 = vrot.slane %v3178, 2
      %v3181 = vshll.u32 %v3132, 16
      %v3183 = vrot.slane %v3181, 7
      %v3184 = vsel %vm468, %v3179, %v3183
      %s3185 = scalar_lea.vmem %s3, 1216
      %v3186 = vld [vmem:[%s3185] sm:$0xf]
      %v3187 = vld [vmem:[%s3185 + $0x4] sm:$0xf]
      %v3188 = vld [vmem:[%s3185 + $0x8] sm:$0xf]
      %v3189 = vld [vmem:[%s3185 + $0xc] sm:$0xf]
      %v3190 = vld [vmem:[%s3185 + $0x10] sm:$0xf]
      %v3191 = vld [vmem:[%s3185 + $0x14] sm:$0xf]
      %v3192 = vld [vmem:[%s3185 + $0x18] sm:$0xf]
      %v3193 = vld [vmem:[%s3185 + $0x1c] sm:$0xf]
      %v3194 = vld [vmem:[%s3185 + $0x20] sm:$0xf]
      %v3195 = vld [vmem:[%s3185 + $0x24] sm:$0xf]
      %v3196 = vld [vmem:[%s3185 + $0x28] sm:$0xf]
      %v3197 = vld [vmem:[%s3185 + $0x2c] sm:$0xf]
      %v3198 = vld [vmem:[%s3185 + $0x30] sm:$0xf]
      %v3199 = vld [vmem:[%s3185 + $0x34] sm:$0xf]
      %v3200 = vld [vmem:[%s3185 + $0x38] sm:$0xf]
      %v3201 = vld [vmem:[%s3185 + $0x3c] sm:$0xf]
      %3203 = vst [vmem:[#allocation1] ss:$4 sm:$0xff] %v3145
      %s3205 = scalar_lea.vmem [#allocation1], 1
      %3206 = vst [vmem:[%s3205] ss:$4 sm:$0xff] %v3158
      %s3208 = scalar_lea.vmem [#allocation1], 2
      %3209 = vst [vmem:[%s3208] ss:$4 sm:$0xff] %v3171
      %s3211 = scalar_lea.vmem [#allocation1], 3
      %3212 = vst [vmem:[%s3211] ss:$4 sm:$0xff] %v3184
      %v3213 = vld.sshfl [vmem:[#allocation1] sm:$0xff pattern:$0x73625140]
      %v3231 = vunpack.c.l.b16 %v3186
      %v3232 = vunpack.c.l.b16 %v3187
      %v3233 = vunpack.c.l.b16 %v3188
      %v3234 = vunpack.c.l.b16 %v3189
      %v3235 = vunpack.c.l.b16 %v3190
      %v3236 = vunpack.c.l.b16 %v3191
      %v3237 = vunpack.c.l.b16 %v3192
      %v3238 = vunpack.c.l.b16 %v3193
      %v3239 = vunpack.c.l.b16 %v3194
      %v3240 = vunpack.c.l.b16 %v3195
      %v3241 = vunpack.c.l.b16 %v3196
      %v3242 = vunpack.c.l.b16 %v3197
      %v3243 = vunpack.c.l.b16 %v3198
      %v3244 = vunpack.c.l.b16 %v3199
      %v3245 = vunpack.c.l.b16 %v3200
      %v3246 = vunpack.c.l.b16 %v3201
      %v3247 = vpack.c.b16 %v3232, %v3231
      %v3248 = vpack.c.b16 %v3234, %v3233
      %v3249 = vpack.c.b16 %v3236, %v3235
      %v3250 = vpack.c.b16 %v3238, %v3237
      %v3251 = vpack.c.b16 %v3240, %v3239
      %v3252 = vpack.c.b16 %v3242, %v3241
      %v3253 = vpack.c.b16 %v3244, %v3243
      %v3254 = vpack.c.b16 %v3246, %v3245
      %3263 = vmatpush.bf16.msra.mxu0 %v3254
      %3264 = vmatpush.bf16.msra.mxu0 %v3253
      %3265 = vmatpush.bf16.msra.mxu0 %v3252
      %3266 = vmatpush.bf16.msra.mxu0 %v3251
      %3267 = vmatpush.bf16.msra.mxu0 %v3250
      %3268 = vmatpush.bf16.msra.mxu0 %v3249
      %3269 = vmatpush.bf16.msra.mxu0 %v3248
      %3270 = vmatpush.bf16.msra.mxu0 %v3247
      %3271 = vmatmul.bf16.gmra.mxu0 %v3213
      %v3272 = vpop.f32.mrf.mxu0
      %v3273 = vadd.f32 0.0, %v3272
      %v3274 = vpop.f32.mrf.mxu0
      %v3275 = vadd.f32 0.0, %v3274
      %3276 = vdwg.mxu0
      %v3277 = vadd.f32 %v3095, %v3273
      %v3278 = vadd.f32 %v3096, %v3275
      %v3279 = vld [vmem:[%s384] sm:$0x6]
      %v3280 = vld [vmem:[%s384 + $0x4] sm:$0x6]
      %v3281 = vld [vmem:[%s384 + $0x8] sm:$0x6]
      %v3282 = vld [vmem:[%s384 + $0xc] sm:$0x6]
      %v3287 = vrot.slane %v3279, 2
      %v3288 = vrot.slane %v3280, 2
      %v3289 = vrot.slane %v3281, 2
      %v3290 = vrot.slane %v3282, 2
      %v3293 = vsel %vm436, %v3279, %v3287
      %v3295 = vsel %vm440, %v3279, %v3287
      %v3297 = vrot.slane %v3295, 2
      %v3300 = vsel %vm436, %v3280, %v3288
      %v3302 = vsel %vm440, %v3280, %v3288
      %v3304 = vrot.slane %v3302, 2
      %v3307 = vsel %vm436, %v3281, %v3289
      %v3309 = vsel %vm440, %v3281, %v3289
      %v3311 = vrot.slane %v3309, 2
      %v3314 = vsel %vm436, %v3282, %v3290
      %v3316 = vsel %vm440, %v3282, %v3290
      %v3318 = vrot.slane %v3316, 2
      %v3319 = vrot.slane %v3293, 7
      %v3320 = vrot.slane %v3319, 2
      %v3321 = vrot.slane %v3297, 7
      %v3322 = vsel %vm734, %v3320, %v3321
      %v3323 = vrot.slane %v3300, 7
      %v3324 = vrot.slane %v3323, 2
      %v3325 = vrot.slane %v3304, 7
      %v3326 = vsel %vm734, %v3324, %v3325
      %v3327 = vrot.slane %v3307, 7
      %v3328 = vrot.slane %v3327, 2
      %v3329 = vrot.slane %v3311, 7
      %v3330 = vsel %vm734, %v3328, %v3329
      %v3331 = vrot.slane %v3314, 7
      %v3332 = vrot.slane %v3331, 2
      %v3333 = vrot.slane %v3318, 7
      %v3334 = vsel %vm734, %v3332, %v3333
      %s3335 = scalar_lea.vmem %s3, 1280
      %v3336 = vld [vmem:[%s3335] sm:$0xf]
      %v3337 = vld [vmem:[%s3335 + $0x4] sm:$0xf]
      %v3338 = vld [vmem:[%s3335 + $0x8] sm:$0xf]
      %v3339 = vld [vmem:[%s3335 + $0xc] sm:$0xf]
      %v3340 = vld [vmem:[%s3335 + $0x10] sm:$0xf]
      %v3341 = vld [vmem:[%s3335 + $0x14] sm:$0xf]
      %v3342 = vld [vmem:[%s3335 + $0x18] sm:$0xf]
      %v3343 = vld [vmem:[%s3335 + $0x1c] sm:$0xf]
      %v3344 = vld [vmem:[%s3335 + $0x20] sm:$0xf]
      %v3345 = vld [vmem:[%s3335 + $0x24] sm:$0xf]
      %v3346 = vld [vmem:[%s3335 + $0x28] sm:$0xf]
      %v3347 = vld [vmem:[%s3335 + $0x2c] sm:$0xf]
      %v3348 = vld [vmem:[%s3335 + $0x30] sm:$0xf]
      %v3349 = vld [vmem:[%s3335 + $0x34] sm:$0xf]
      %v3350 = vld [vmem:[%s3335 + $0x38] sm:$0xf]
      %v3351 = vld [vmem:[%s3335 + $0x3c] sm:$0xf]
      %3353 = vst [vmem:[#allocation1] ss:$4 sm:$0xff] %v3322
      %s3355 = scalar_lea.vmem [#allocation1], 1
      %3356 = vst [vmem:[%s3355] ss:$4 sm:$0xff] %v3326
      %s3358 = scalar_lea.vmem [#allocation1], 2
      %3359 = vst [vmem:[%s3358] ss:$4 sm:$0xff] %v3330
      %s3361 = scalar_lea.vmem [#allocation1], 3
      %3362 = vst [vmem:[%s3361] ss:$4 sm:$0xff] %v3334
      %v3363 = vld.sshfl [vmem:[#allocation1] sm:$0xff pattern:$0x73625140]
      %v3381 = vunpack.c.l.b16 %v3336
      %v3382 = vunpack.c.l.b16 %v3337
      %v3383 = vunpack.c.l.b16 %v3338
      %v3384 = vunpack.c.l.b16 %v3339
      %v3385 = vunpack.c.l.b16 %v3340
      %v3386 = vunpack.c.l.b16 %v3341
      %v3387 = vunpack.c.l.b16 %v3342
      %v3388 = vunpack.c.l.b16 %v3343
      %v3389 = vunpack.c.l.b16 %v3344
      %v3390 = vunpack.c.l.b16 %v3345
      %v3391 = vunpack.c.l.b16 %v3346
      %v3392 = vunpack.c.l.b16 %v3347
      %v3393 = vunpack.c.l.b16 %v3348
      %v3394 = vunpack.c.l.b16 %v3349
      %v3395 = vunpack.c.l.b16 %v3350
      %v3396 = vunpack.c.l.b16 %v3351
      %v3397 = vpack.c.b16 %v3382, %v3381
      %v3398 = vpack.c.b16 %v3384, %v3383
      %v3399 = vpack.c.b16 %v3386, %v3385
      %v3400 = vpack.c.b16 %v3388, %v3387
      %v3401 = vpack.c.b16 %v3390, %v3389
      %v3402 = vpack.c.b16 %v3392, %v3391
      %v3403 = vpack.c.b16 %v3394, %v3393
      %v3404 = vpack.c.b16 %v3396, %v3395
      %3413 = vmatpush.bf16.msra.mxu0 %v3404
      %3414 = vmatpush.bf16.msra.mxu0 %v3403
      %3415 = vmatpush.bf16.msra.mxu0 %v3402
      %3416 = vmatpush.bf16.msra.mxu0 %v3401
      %3417 = vmatpush.bf16.msra.mxu0 %v3400
      %3418 = vmatpush.bf16.msra.mxu0 %v3399
      %3419 = vmatpush.bf16.msra.mxu0 %v3398
      %3420 = vmatpush.bf16.msra.mxu0 %v3397
      %3421 = vmatmul.bf16.gmra.mxu0 %v3363
      %v3422 = vpop.f32.mrf.mxu0
      %v3423 = vadd.f32 0.0, %v3422
      %v3424 = vpop.f32.mrf.mxu0
      %v3425 = vadd.f32 0.0, %v3424
      %3426 = vdwg.mxu0
      %v3427 = vadd.f32 %v3277, %v3423
      %v3428 = vadd.f32 %v3278, %v3425
      %s3429 = scalar_lea.vmem %s384, 4
      %v3430 = vld [vmem:[%s3429] sm:$0x3]
      %v3431 = vld [vmem:[%s3429 + $0x4] sm:$0x3]
      %v3432 = vld [vmem:[%s3429 + $0x8] sm:$0x3]
      %v3433 = vld [vmem:[%s3429 + $0xc] sm:$0x3]
      %s3434 = scalar_lea.vmem %s3, 1344
      %v3435 = vld [vmem:[%s3434] sm:$0xf]
      %v3436 = vld [vmem:[%s3434 + $0x4] sm:$0xf]
      %v3437 = vld [vmem:[%s3434 + $0x8] sm:$0xf]
      %v3438 = vld [vmem:[%s3434 + $0xc] sm:$0xf]
      %v3439 = vld [vmem:[%s3434 + $0x10] sm:$0xf]
      %v3440 = vld [vmem:[%s3434 + $0x14] sm:$0xf]
      %v3441 = vld [vmem:[%s3434 + $0x18] sm:$0xf]
      %v3442 = vld [vmem:[%s3434 + $0x1c] sm:$0xf]
      %v3443 = vld [vmem:[%s3434 + $0x20] sm:$0xf]
      %v3444 = vld [vmem:[%s3434 + $0x24] sm:$0xf]
      %v3445 = vld [vmem:[%s3434 + $0x28] sm:$0xf]
      %v3446 = vld [vmem:[%s3434 + $0x2c] sm:$0xf]
      %v3447 = vld [vmem:[%s3434 + $0x30] sm:$0xf]
      %v3448 = vld [vmem:[%s3434 + $0x34] sm:$0xf]
      %v3449 = vld [vmem:[%s3434 + $0x38] sm:$0xf]
      %v3450 = vld [vmem:[%s3434 + $0x3c] sm:$0xf]
      %3452 = vst [vmem:[#allocation1] ss:$4 sm:$0xff] %v3430
      %s3454 = scalar_lea.vmem [#allocation1], 1
      %3455 = vst [vmem:[%s3454] ss:$4 sm:$0xff] %v3431
      %s3457 = scalar_lea.vmem [#allocation1], 2
      %3458 = vst [vmem:[%s3457] ss:$4 sm:$0xff] %v3432
      %s3460 = scalar_lea.vmem [#allocation1], 3
      %3461 = vst [vmem:[%s3460] ss:$4 sm:$0xff] %v3433
      %v3462 = vld.sshfl [vmem:[#allocation1] sm:$0xff pattern:$0x73625140]
      %v3480 = vunpack.c.l.b16 %v3435
      %v3481 = vunpack.c.l.b16 %v3436
      %v3482 = vunpack.c.l.b16 %v3437
      %v3483 = vunpack.c.l.b16 %v3438
      %v3484 = vunpack.c.l.b16 %v3439
      %v3485 = vunpack.c.l.b16 %v3440
      %v3486 = vunpack.c.l.b16 %v3441
      %v3487 = vunpack.c.l.b16 %v3442
      %v3488 = vunpack.c.l.b16 %v3443
      %v3489 = vunpack.c.l.b16 %v3444
      %v3490 = vunpack.c.l.b16 %v3445
      %v3491 = vunpack.c.l.b16 %v3446
      %v3492 = vunpack.c.l.b16 %v3447
      %v3493 = vunpack.c.l.b16 %v3448
      %v3494 = vunpack.c.l.b16 %v3449
      %v3495 = vunpack.c.l.b16 %v3450
      %v3496 = vpack.c.b16 %v3481, %v3480
      %v3497 = vpack.c.b16 %v3483, %v3482
      %v3498 = vpack.c.b16 %v3485, %v3484
      %v3499 = vpack.c.b16 %v3487, %v3486
      %v3500 = vpack.c.b16 %v3489, %v3488
      %v3501 = vpack.c.b16 %v3491, %v3490
      %v3502 = vpack.c.b16 %v3493, %v3492
      %v3503 = vpack.c.b16 %v3495, %v3494
      %3512 = vmatpush.bf16.msra.mxu0 %v3503
      %3513 = vmatpush.bf16.msra.mxu0 %v3502
      %3514 = vmatpush.bf16.msra.mxu0 %v3501
      %3515 = vmatpush.bf16.msra.mxu0 %v3500
      %3516 = vmatpush.bf16.msra.mxu0 %v3499
      %3517 = vmatpush.bf16.msra.mxu0 %v3498
      %3518 = vmatpush.bf16.msra.mxu0 %v3497
      %3519 = vmatpush.bf16.msra.mxu0 %v3496
      %3520 = vmatmul.bf16.gmra.mxu0 %v3462
      %v3521 = vpop.f32.mrf.mxu0
      %v3522 = vadd.f32 0.0, %v3521
      %v3523 = vpop.f32.mrf.mxu0
      %v3524 = vadd.f32 0.0, %v3523
      %3525 = vdwg.mxu0
      %v3526 = vadd.f32 %v3427, %v3522
      %v3527 = vadd.f32 %v3428, %v3524
      %v3528 = vld [vmem:[%s3429] sm:$0x7]
      %v3529 = vld [vmem:[%s3429 + $0x4] sm:$0x7]
      %v3530 = vld [vmem:[%s3429 + $0x8] sm:$0x7]
      %v3531 = vld [vmem:[%s3429 + $0xc] sm:$0x7]
      %v3536 = vrot.slane %v3528, 2
      %v3537 = vrot.slane %v3529, 2
      %v3538 = vrot.slane %v3530, 2
      %v3539 = vrot.slane %v3531, 2
      %v3542 = vsel %vm436, %v3528, %v3536
      %v3543 = vsel %vm440, %v3528, %v3536
      %v3545 = vrot.slane %v3543, 2
      %v3548 = vsel %vm436, %v3529, %v3537
      %v3549 = vsel %vm440, %v3529, %v3537
      %v3551 = vrot.slane %v3549, 2
      %v3554 = vsel %vm436, %v3530, %v3538
      %v3555 = vsel %vm440, %v3530, %v3538
      %v3557 = vrot.slane %v3555, 2
      %v3560 = vsel %vm436, %v3531, %v3539
      %v3561 = vsel %vm440, %v3531, %v3539
      %v3563 = vrot.slane %v3561, 2
      %v3564 = vshrl.u32 %v3542, 16
      %v3566 = vrot.slane %v3564, 6
      %v3567 = vshll.u32 %v3542, 16
      %v3569 = vrot.slane %v3567, 7
      %v3570 = vor.u32 %v3566, %v3569
      %v3571 = vrot.slane %v3570, 2
      %v3573 = vshll.u32 %v3545, 16
      %v3575 = vrot.slane %v3573, 7
      %v3576 = vsel %vm468, %v3571, %v3575
      %v3577 = vshrl.u32 %v3548, 16
      %v3579 = vrot.slane %v3577, 6
      %v3580 = vshll.u32 %v3548, 16
      %v3582 = vrot.slane %v3580, 7
      %v3583 = vor.u32 %v3579, %v3582
      %v3584 = vrot.slane %v3583, 2
      %v3586 = vshll.u32 %v3551, 16
      %v3588 = vrot.slane %v3586, 7
      %v3589 = vsel %vm468, %v3584, %v3588
      %v3590 = vshrl.u32 %v3554, 16
      %v3592 = vrot.slane %v3590, 6
      %v3593 = vshll.u32 %v3554, 16
      %v3595 = vrot.slane %v3593, 7
      %v3596 = vor.u32 %v3592, %v3595
      %v3597 = vrot.slane %v3596, 2
      %v3599 = vshll.u32 %v3557, 16
      %v3601 = vrot.slane %v3599, 7
      %v3602 = vsel %vm468, %v3597, %v3601
      %v3603 = vshrl.u32 %v3560, 16
      %v3605 = vrot.slane %v3603, 6
      %v3606 = vshll.u32 %v3560, 16
      %v3608 = vrot.slane %v3606, 7
      %v3609 = vor.u32 %v3605, %v3608
      %v3610 = vrot.slane %v3609, 2
      %v3612 = vshll.u32 %v3563, 16
      %v3614 = vrot.slane %v3612, 7
      %v3615 = vsel %vm468, %v3610, %v3614
      %s3616 = scalar_lea.vmem %s3, 1408
      %v3617 = vld [vmem:[%s3616] sm:$0xf]
      %v3618 = vld [vmem:[%s3616 + $0x4] sm:$0xf]
      %v3619 = vld [vmem:[%s3616 + $0x8] sm:$0xf]
      %v3620 = vld [vmem:[%s3616 + $0xc] sm:$0xf]
      %v3621 = vld [vmem:[%s3616 + $0x10] sm:$0xf]
      %v3622 = vld [vmem:[%s3616 + $0x14] sm:$0xf]
      %v3623 = vld [vmem:[%s3616 + $0x18] sm:$0xf]
      %v3624 = vld [vmem:[%s3616 + $0x1c] sm:$0xf]
      %v3625 = vld [vmem:[%s3616 + $0x20] sm:$0xf]
      %v3626 = vld [vmem:[%s3616 + $0x24] sm:$0xf]
      %v3627 = vld [vmem:[%s3616 + $0x28] sm:$0xf]
      %v3628 = vld [vmem:[%s3616 + $0x2c] sm:$0xf]
      %v3629 = vld [vmem:[%s3616 + $0x30] sm:$0xf]
      %v3630 = vld [vmem:[%s3616 + $0x34] sm:$0xf]
      %v3631 = vld [vmem:[%s3616 + $0x38] sm:$0xf]
      %v3632 = vld [vmem:[%s3616 + $0x3c] sm:$0xf]
      %3634 = vst [vmem:[#allocation1] ss:$4 sm:$0xff] %v3576
      %s3636 = scalar_lea.vmem [#allocation1], 1
      %3637 = vst [vmem:[%s3636] ss:$4 sm:$0xff] %v3589
      %s3639 = scalar_lea.vmem [#allocation1], 2
      %3640 = vst [vmem:[%s3639] ss:$4 sm:$0xff] %v3602
      %s3642 = scalar_lea.vmem [#allocation1], 3
      %3643 = vst [vmem:[%s3642] ss:$4 sm:$0xff] %v3615
      %v3644 = vld.sshfl [vmem:[#allocation1] sm:$0xff pattern:$0x73625140]
      %v3662 = vunpack.c.l.b16 %v3617
      %v3663 = vunpack.c.l.b16 %v3618
      %v3664 = vunpack.c.l.b16 %v3619
      %v3665 = vunpack.c.l.b16 %v3620
      %v3666 = vunpack.c.l.b16 %v3621
      %v3667 = vunpack.c.l.b16 %v3622
      %v3668 = vunpack.c.l.b16 %v3623
      %v3669 = vunpack.c.l.b16 %v3624
      %v3670 = vunpack.c.l.b16 %v3625
      %v3671 = vunpack.c.l.b16 %v3626
      %v3672 = vunpack.c.l.b16 %v3627
      %v3673 = vunpack.c.l.b16 %v3628
      %v3674 = vunpack.c.l.b16 %v3629
      %v3675 = vunpack.c.l.b16 %v3630
      %v3676 = vunpack.c.l.b16 %v3631
      %v3677 = vunpack.c.l.b16 %v3632
      %v3678 = vpack.c.b16 %v3663, %v3662
      %v3679 = vpack.c.b16 %v3665, %v3664
      %v3680 = vpack.c.b16 %v3667, %v3666
      %v3681 = vpack.c.b16 %v3669, %v3668
      %v3682 = vpack.c.b16 %v3671, %v3670
      %v3683 = vpack.c.b16 %v3673, %v3672
      %v3684 = vpack.c.b16 %v3675, %v3674
      %v3685 = vpack.c.b16 %v3677, %v3676
      %3694 = vmatpush.bf16.msra.mxu0 %v3685
      %3695 = vmatpush.bf16.msra.mxu0 %v3684
      %3696 = vmatpush.bf16.msra.mxu0 %v3683
      %3697 = vmatpush.bf16.msra.mxu0 %v3682
      %3698 = vmatpush.bf16.msra.mxu0 %v3681
      %3699 = vmatpush.bf16.msra.mxu0 %v3680
      %3700 = vmatpush.bf16.msra.mxu0 %v3679
      %3701 = vmatpush.bf16.msra.mxu0 %v3678
      %3702 = vmatmul.bf16.gmra.mxu0 %v3644
      %v3703 = vpop.f32.mrf.mxu0
      %v3704 = vadd.f32 0.0, %v3703
      %v3705 = vpop.f32.mrf.mxu0
      %v3706 = vadd.f32 0.0, %v3705
      %3707 = vdwg.mxu0
      %v3708 = vadd.f32 %v3526, %v3704
      %v3709 = vadd.f32 %v3527, %v3706
      %v3710 = vld [vmem:[%s3429] sm:$0x6]
      %v3711 = vld [vmem:[%s3429 + $0x4] sm:$0x6]
      %v3712 = vld [vmem:[%s3429 + $0x8] sm:$0x6]
      %v3713 = vld [vmem:[%s3429 + $0xc] sm:$0x6]
      %v3718 = vrot.slane %v3710, 2
      %v3719 = vrot.slane %v3711, 2
      %v3720 = vrot.slane %v3712, 2
      %v3721 = vrot.slane %v3713, 2
      %v3724 = vsel %vm436, %v3710, %v3718
      %v3726 = vsel %vm440, %v3710, %v3718
      %v3728 = vrot.slane %v3726, 2
      %v3731 = vsel %vm436, %v3711, %v3719
      %v3733 = vsel %vm440, %v3711, %v3719
      %v3735 = vrot.slane %v3733, 2
      %v3738 = vsel %vm436, %v3712, %v3720
      %v3740 = vsel %vm440, %v3712, %v3720
      %v3742 = vrot.slane %v3740, 2
      %v3745 = vsel %vm436, %v3713, %v3721
      %v3747 = vsel %vm440, %v3713, %v3721
      %v3749 = vrot.slane %v3747, 2
      %v3750 = vrot.slane %v3724, 7
      %v3751 = vrot.slane %v3750, 2
      %v3752 = vrot.slane %v3728, 7
      %v3753 = vsel %vm734, %v3751, %v3752
      %v3754 = vrot.slane %v3731, 7
      %v3755 = vrot.slane %v3754, 2
      %v3756 = vrot.slane %v3735, 7
      %v3757 = vsel %vm734, %v3755, %v3756
      %v3758 = vrot.slane %v3738, 7
      %v3759 = vrot.slane %v3758, 2
      %v3760 = vrot.slane %v3742, 7
      %v3761 = vsel %vm734, %v3759, %v3760
      %v3762 = vrot.slane %v3745, 7
      %v3763 = vrot.slane %v3762, 2
      %v3764 = vrot.slane %v3749, 7
      %v3765 = vsel %vm734, %v3763, %v3764
      %s3766 = scalar_lea.vmem %s3, 1472
      %v3767 = vld [vmem:[%s3766] sm:$0xf]
      %v3768 = vld [vmem:[%s3766 + $0x4] sm:$0xf]
      %v3769 = vld [vmem:[%s3766 + $0x8] sm:$0xf]
      %v3770 = vld [vmem:[%s3766 + $0xc] sm:$0xf]
      %v3771 = vld [vmem:[%s3766 + $0x10] sm:$0xf]
      %v3772 = vld [vmem:[%s3766 + $0x14] sm:$0xf]
      %v3773 = vld [vmem:[%s3766 + $0x18] sm:$0xf]
      %v3774 = vld [vmem:[%s3766 + $0x1c] sm:$0xf]
      %v3775 = vld [vmem:[%s3766 + $0x20] sm:$0xf]
      %v3776 = vld [vmem:[%s3766 + $0x24] sm:$0xf]
      %v3777 = vld [vmem:[%s3766 + $0x28] sm:$0xf]
      %v3778 = vld [vmem:[%s3766 + $0x2c] sm:$0xf]
      %v3779 = vld [vmem:[%s3766 + $0x30] sm:$0xf]
      %v3780 = vld [vmem:[%s3766 + $0x34] sm:$0xf]
      %v3781 = vld [vmem:[%s3766 + $0x38] sm:$0xf]
      %v3782 = vld [vmem:[%s3766 + $0x3c] sm:$0xf]
      %3784 = vst [vmem:[#allocation1] ss:$4 sm:$0xff] %v3753
      %s3786 = scalar_lea.vmem [#allocation1], 1
      %3787 = vst [vmem:[%s3786] ss:$4 sm:$0xff] %v3757
      %s3789 = scalar_lea.vmem [#allocation1], 2
      %3790 = vst [vmem:[%s3789] ss:$4 sm:$0xff] %v3761
      %s3792 = scalar_lea.vmem [#allocation1], 3
      %3793 = vst [vmem:[%s3792] ss:$4 sm:$0xff] %v3765
      %v3794 = vld.sshfl [vmem:[#allocation1] sm:$0xff pattern:$0x73625140]
      %v3812 = vunpack.c.l.b16 %v3767
      %v3813 = vunpack.c.l.b16 %v3768
      %v3814 = vunpack.c.l.b16 %v3769
      %v3815 = vunpack.c.l.b16 %v3770
      %v3816 = vunpack.c.l.b16 %v3771
      %v3817 = vunpack.c.l.b16 %v3772
      %v3818 = vunpack.c.l.b16 %v3773
      %v3819 = vunpack.c.l.b16 %v3774
      %v3820 = vunpack.c.l.b16 %v3775
      %v3821 = vunpack.c.l.b16 %v3776
      %v3822 = vunpack.c.l.b16 %v3777
      %v3823 = vunpack.c.l.b16 %v3778
      %v3824 = vunpack.c.l.b16 %v3779
      %v3825 = vunpack.c.l.b16 %v3780
      %v3826 = vunpack.c.l.b16 %v3781
      %v3827 = vunpack.c.l.b16 %v3782
      %v3828 = vpack.c.b16 %v3813, %v3812
      %v3829 = vpack.c.b16 %v3815, %v3814
      %v3830 = vpack.c.b16 %v3817, %v3816
      %v3831 = vpack.c.b16 %v3819, %v3818
      %v3832 = vpack.c.b16 %v3821, %v3820
      %v3833 = vpack.c.b16 %v3823, %v3822
      %v3834 = vpack.c.b16 %v3825, %v3824
      %v3835 = vpack.c.b16 %v3827, %v3826
      %3844 = vmatpush.bf16.msra.mxu0 %v3835
      %3845 = vmatpush.bf16.msra.mxu0 %v3834
      %3846 = vmatpush.bf16.msra.mxu0 %v3833
      %3847 = vmatpush.bf16.msra.mxu0 %v3832
      %3848 = vmatpush.bf16.msra.mxu0 %v3831
      %3849 = vmatpush.bf16.msra.mxu0 %v3830
      %3850 = vmatpush.bf16.msra.mxu0 %v3829
      %3851 = vmatpush.bf16.msra.mxu0 %v3828
      %3852 = vmatmul.bf16.gmra.mxu0 %v3794
      %v3853 = vpop.f32.mrf.mxu0
      %v3854 = vadd.f32 0.0, %v3853
      %v3855 = vpop.f32.mrf.mxu0
      %v3856 = vadd.f32 0.0, %v3855
      %3857 = vdwg.mxu0
      %v3858 = vadd.f32 %v3708, %v3854
      %v3859 = vadd.f32 %v3709, %v3856
      %s3860 = scalar_lea.vmem %s384, 8
      %v3861 = vld [vmem:[%s3860] sm:$0x3]
      %v3862 = vld [vmem:[%s3860 + $0x4] sm:$0x3]
      %v3863 = vld [vmem:[%s3860 + $0x8] sm:$0x3]
      %v3864 = vld [vmem:[%s3860 + $0xc] sm:$0x3]
      %s3865 = scalar_lea.vmem %s3, 1536
      %v3866 = vld [vmem:[%s3865] sm:$0xf]
      %v3867 = vld [vmem:[%s3865 + $0x4] sm:$0xf]
      %v3868 = vld [vmem:[%s3865 + $0x8] sm:$0xf]
      %v3869 = vld [vmem:[%s3865 + $0xc] sm:$0xf]
      %v3870 = vld [vmem:[%s3865 + $0x10] sm:$0xf]
      %v3871 = vld [vmem:[%s3865 + $0x14] sm:$0xf]
      %v3872 = vld [vmem:[%s3865 + $0x18] sm:$0xf]
      %v3873 = vld [vmem:[%s3865 + $0x1c] sm:$0xf]
      %v3874 = vld [vmem:[%s3865 + $0x20] sm:$0xf]
      %v3875 = vld [vmem:[%s3865 + $0x24] sm:$0xf]
      %v3876 = vld [vmem:[%s3865 + $0x28] sm:$0xf]
      %v3877 = vld [vmem:[%s3865 + $0x2c] sm:$0xf]
      %v3878 = vld [vmem:[%s3865 + $0x30] sm:$0xf]
      %v3879 = vld [vmem:[%s3865 + $0x34] sm:$0xf]
      %v3880 = vld [vmem:[%s3865 + $0x38] sm:$0xf]
      %v3881 = vld [vmem:[%s3865 + $0x3c] sm:$0xf]
      %3883 = vst [vmem:[#allocation1] ss:$4 sm:$0xff] %v3861
      %s3885 = scalar_lea.vmem [#allocation1], 1
      %3886 = vst [vmem:[%s3885] ss:$4 sm:$0xff] %v3862
      %s3888 = scalar_lea.vmem [#allocation1], 2
      %3889 = vst [vmem:[%s3888] ss:$4 sm:$0xff] %v3863
      %s3891 = scalar_lea.vmem [#allocation1], 3
      %3892 = vst [vmem:[%s3891] ss:$4 sm:$0xff] %v3864
      %v3893 = vld.sshfl [vmem:[#allocation1] sm:$0xff pattern:$0x73625140]
      %v3911 = vunpack.c.l.b16 %v3866
      %v3912 = vunpack.c.l.b16 %v3867
      %v3913 = vunpack.c.l.b16 %v3868
      %v3914 = vunpack.c.l.b16 %v3869
      %v3915 = vunpack.c.l.b16 %v3870
      %v3916 = vunpack.c.l.b16 %v3871
      %v3917 = vunpack.c.l.b16 %v3872
      %v3918 = vunpack.c.l.b16 %v3873
      %v3919 = vunpack.c.l.b16 %v3874
      %v3920 = vunpack.c.l.b16 %v3875
      %v3921 = vunpack.c.l.b16 %v3876
      %v3922 = vunpack.c.l.b16 %v3877
      %v3923 = vunpack.c.l.b16 %v3878
      %v3924 = vunpack.c.l.b16 %v3879
      %v3925 = vunpack.c.l.b16 %v3880
      %v3926 = vunpack.c.l.b16 %v3881
      %v3927 = vpack.c.b16 %v3912, %v3911
      %v3928 = vpack.c.b16 %v3914, %v3913
      %v3929 = vpack.c.b16 %v3916, %v3915
      %v3930 = vpack.c.b16 %v3918, %v3917
      %v3931 = vpack.c.b16 %v3920, %v3919
      %v3932 = vpack.c.b16 %v3922, %v3921
      %v3933 = vpack.c.b16 %v3924, %v3923
      %v3934 = vpack.c.b16 %v3926, %v3925
      %3943 = vmatpush.bf16.msra.mxu0 %v3934
      %3944 = vmatpush.bf16.msra.mxu0 %v3933
      %3945 = vmatpush.bf16.msra.mxu0 %v3932
      %3946 = vmatpush.bf16.msra.mxu0 %v3931
      %3947 = vmatpush.bf16.msra.mxu0 %v3930
      %3948 = vmatpush.bf16.msra.mxu0 %v3929
      %3949 = vmatpush.bf16.msra.mxu0 %v3928
      %3950 = vmatpush.bf16.msra.mxu0 %v3927
      %3951 = vmatmul.bf16.gmra.mxu0 %v3893
      %v3952 = vpop.f32.mrf.mxu0
      %v3953 = vadd.f32 0.0, %v3952
      %v3954 = vpop.f32.mrf.mxu0
      %v3955 = vadd.f32 0.0, %v3954
      %3956 = vdwg.mxu0
      %v3957 = vadd.f32 %v3858, %v3953
      %v3958 = vadd.f32 %v3859, %v3955
      %v3959 = vld [vmem:[%s3860] sm:$0x7]
      %v3960 = vld [vmem:[%s3860 + $0x4] sm:$0x7]
      %v3961 = vld [vmem:[%s3860 + $0x8] sm:$0x7]
      %v3962 = vld [vmem:[%s3860 + $0xc] sm:$0x7]
      %v3967 = vrot.slane %v3959, 2
      %v3968 = vrot.slane %v3960, 2
      %v3969 = vrot.slane %v3961, 2
      %v3970 = vrot.slane %v3962, 2
      %v3973 = vsel %vm436, %v3959, %v3967
      %v3974 = vsel %vm440, %v3959, %v3967
      %v3976 = vrot.slane %v3974, 2
      %v3979 = vsel %vm436, %v3960, %v3968
      %v3980 = vsel %vm440, %v3960, %v3968
      %v3982 = vrot.slane %v3980, 2
      %v3985 = vsel %vm436, %v3961, %v3969
      %v3986 = vsel %vm440, %v3961, %v3969
      %v3988 = vrot.slane %v3986, 2
      %v3991 = vsel %vm436, %v3962, %v3970
      %v3992 = vsel %vm440, %v3962, %v3970
      %v3994 = vrot.slane %v3992, 2
      %v3995 = vshrl.u32 %v3973, 16
      %v3997 = vrot.slane %v3995, 6
      %v3998 = vshll.u32 %v3973, 16
      %v4000 = vrot.slane %v3998, 7
      %v4001 = vor.u32 %v3997, %v4000
      %v4002 = vrot.slane %v4001, 2
      %v4004 = vshll.u32 %v3976, 16
      %v4006 = vrot.slane %v4004, 7
      %v4007 = vsel %vm468, %v4002, %v4006
      %v4008 = vshrl.u32 %v3979, 16
      %v4010 = vrot.slane %v4008, 6
      %v4011 = vshll.u32 %v3979, 16
      %v4013 = vrot.slane %v4011, 7
      %v4014 = vor.u32 %v4010, %v4013
      %v4015 = vrot.slane %v4014, 2
      %v4017 = vshll.u32 %v3982, 16
      %v4019 = vrot.slane %v4017, 7
      %v4020 = vsel %vm468, %v4015, %v4019
      %v4021 = vshrl.u32 %v3985, 16
      %v4023 = vrot.slane %v4021, 6
      %v4024 = vshll.u32 %v3985, 16
      %v4026 = vrot.slane %v4024, 7
      %v4027 = vor.u32 %v4023, %v4026
      %v4028 = vrot.slane %v4027, 2
      %v4030 = vshll.u32 %v3988, 16
      %v4032 = vrot.slane %v4030, 7
      %v4033 = vsel %vm468, %v4028, %v4032
      %v4034 = vshrl.u32 %v3991, 16
      %v4036 = vrot.slane %v4034, 6
      %v4037 = vshll.u32 %v3991, 16
      %v4039 = vrot.slane %v4037, 7
      %v4040 = vor.u32 %v4036, %v4039
      %v4041 = vrot.slane %v4040, 2
      %v4043 = vshll.u32 %v3994, 16
      %v4045 = vrot.slane %v4043, 7
      %v4046 = vsel %vm468, %v4041, %v4045
      %s4047 = scalar_lea.vmem %s3, 1600
      %v4048 = vld [vmem:[%s4047] sm:$0xf]
      %v4049 = vld [vmem:[%s4047 + $0x4] sm:$0xf]
      %v4050 = vld [vmem:[%s4047 + $0x8] sm:$0xf]
      %v4051 = vld [vmem:[%s4047 + $0xc] sm:$0xf]
      %v4052 = vld [vmem:[%s4047 + $0x10] sm:$0xf]
      %v4053 = vld [vmem:[%s4047 + $0x14] sm:$0xf]
      %v4054 = vld [vmem:[%s4047 + $0x18] sm:$0xf]
      %v4055 = vld [vmem:[%s4047 + $0x1c] sm:$0xf]
      %v4056 = vld [vmem:[%s4047 + $0x20] sm:$0xf]
      %v4057 = vld [vmem:[%s4047 + $0x24] sm:$0xf]
      %v4058 = vld [vmem:[%s4047 + $0x28] sm:$0xf]
      %v4059 = vld [vmem:[%s4047 + $0x2c] sm:$0xf]
      %v4060 = vld [vmem:[%s4047 + $0x30] sm:$0xf]
      %v4061 = vld [vmem:[%s4047 + $0x34] sm:$0xf]
      %v4062 = vld [vmem:[%s4047 + $0x38] sm:$0xf]
      %v4063 = vld [vmem:[%s4047 + $0x3c] sm:$0xf]
      %4065 = vst [vmem:[#allocation1] ss:$4 sm:$0xff] %v4007
      %s4067 = scalar_lea.vmem [#allocation1], 1
      %4068 = vst [vmem:[%s4067] ss:$4 sm:$0xff] %v4020
      %s4070 = scalar_lea.vmem [#allocation1], 2
      %4071 = vst [vmem:[%s4070] ss:$4 sm:$0xff] %v4033
      %s4073 = scalar_lea.vmem [#allocation1], 3
      %4074 = vst [vmem:[%s4073] ss:$4 sm:$0xff] %v4046
      %v4075 = vld.sshfl [vmem:[#allocation1] sm:$0xff pattern:$0x73625140]
      %v4093 = vunpack.c.l.b16 %v4048
      %v4094 = vunpack.c.l.b16 %v4049
      %v4095 = vunpack.c.l.b16 %v4050
      %v4096 = vunpack.c.l.b16 %v4051
      %v4097 = vunpack.c.l.b16 %v4052
      %v4098 = vunpack.c.l.b16 %v4053
      %v4099 = vunpack.c.l.b16 %v4054
      %v4100 = vunpack.c.l.b16 %v4055
      %v4101 = vunpack.c.l.b16 %v4056
      %v4102 = vunpack.c.l.b16 %v4057
      %v4103 = vunpack.c.l.b16 %v4058
      %v4104 = vunpack.c.l.b16 %v4059
      %v4105 = vunpack.c.l.b16 %v4060
      %v4106 = vunpack.c.l.b16 %v4061
      %v4107 = vunpack.c.l.b16 %v4062
      %v4108 = vunpack.c.l.b16 %v4063
      %v4109 = vpack.c.b16 %v4094, %v4093
      %v4110 = vpack.c.b16 %v4096, %v4095
      %v4111 = vpack.c.b16 %v4098, %v4097
      %v4112 = vpack.c.b16 %v4100, %v4099
      %v4113 = vpack.c.b16 %v4102, %v4101
      %v4114 = vpack.c.b16 %v4104, %v4103
      %v4115 = vpack.c.b16 %v4106, %v4105
      %v4116 = vpack.c.b16 %v4108, %v4107
      %4125 = vmatpush.bf16.msra.mxu0 %v4116
      %4126 = vmatpush.bf16.msra.mxu0 %v4115
      %4127 = vmatpush.bf16.msra.mxu0 %v4114
      %4128 = vmatpush.bf16.msra.mxu0 %v4113
      %4129 = vmatpush.bf16.msra.mxu0 %v4112
      %4130 = vmatpush.bf16.msra.mxu0 %v4111
      %4131 = vmatpush.bf16.msra.mxu0 %v4110
      %4132 = vmatpush.bf16.msra.mxu0 %v4109
      %4133 = vmatmul.bf16.gmra.mxu0 %v4075
      %v4134 = vpop.f32.mrf.mxu0
      %v4135 = vadd.f32 0.0, %v4134
      %v4136 = vpop.f32.mrf.mxu0
      %v4137 = vadd.f32 0.0, %v4136
      %4138 = vdwg.mxu0
      %v4139 = vadd.f32 %v3957, %v4135
      %v4140 = vadd.f32 %v3958, %v4137
      %v4141 = vld [vmem:[%s3860] sm:$0x6]
      %v4142 = vld [vmem:[%s3860 + $0x4] sm:$0x6]
      %v4143 = vld [vmem:[%s3860 + $0x8] sm:$0x6]
      %v4144 = vld [vmem:[%s3860 + $0xc] sm:$0x6]
      %v4149 = vrot.slane %v4141, 2
      %v4150 = vrot.slane %v4142, 2
      %v4151 = vrot.slane %v4143, 2
      %v4152 = vrot.slane %v4144, 2
      %v4155 = vsel %vm436, %v4141, %v4149
      %v4157 = vsel %vm440, %v4141, %v4149
      %v4159 = vrot.slane %v4157, 2
      %v4162 = vsel %vm436, %v4142, %v4150
      %v4164 = vsel %vm440, %v4142, %v4150
      %v4166 = vrot.slane %v4164, 2
      %v4169 = vsel %vm436, %v4143, %v4151
      %v4171 = vsel %vm440, %v4143, %v4151
      %v4173 = vrot.slane %v4171, 2
      %v4176 = vsel %vm436, %v4144, %v4152
      %v4178 = vsel %vm440, %v4144, %v4152
      %v4180 = vrot.slane %v4178, 2
      %v4181 = vrot.slane %v4155, 7
      %v4182 = vrot.slane %v4181, 2
      %v4183 = vrot.slane %v4159, 7
      %v4184 = vsel %vm734, %v4182, %v4183
      %v4185 = vrot.slane %v4162, 7
      %v4186 = vrot.slane %v4185, 2
      %v4187 = vrot.slane %v4166, 7
      %v4188 = vsel %vm734, %v4186, %v4187
      %v4189 = vrot.slane %v4169, 7
      %v4190 = vrot.slane %v4189, 2
      %v4191 = vrot.slane %v4173, 7
      %v4192 = vsel %vm734, %v4190, %v4191
      %v4193 = vrot.slane %v4176, 7
      %v4194 = vrot.slane %v4193, 2
      %v4195 = vrot.slane %v4180, 7
      %v4196 = vsel %vm734, %v4194, %v4195
      %s4197 = scalar_lea.vmem %s3, 1664
      %v4198 = vld [vmem:[%s4197] sm:$0xf]
      %v4199 = vld [vmem:[%s4197 + $0x4] sm:$0xf]
      %v4200 = vld [vmem:[%s4197 + $0x8] sm:$0xf]
      %v4201 = vld [vmem:[%s4197 + $0xc] sm:$0xf]
      %v4202 = vld [vmem:[%s4197 + $0x10] sm:$0xf]
      %v4203 = vld [vmem:[%s4197 + $0x14] sm:$0xf]
      %v4204 = vld [vmem:[%s4197 + $0x18] sm:$0xf]
      %v4205 = vld [vmem:[%s4197 + $0x1c] sm:$0xf]
      %v4206 = vld [vmem:[%s4197 + $0x20] sm:$0xf]
      %v4207 = vld [vmem:[%s4197 + $0x24] sm:$0xf]
      %v4208 = vld [vmem:[%s4197 + $0x28] sm:$0xf]
      %v4209 = vld [vmem:[%s4197 + $0x2c] sm:$0xf]
      %v4210 = vld [vmem:[%s4197 + $0x30] sm:$0xf]
      %v4211 = vld [vmem:[%s4197 + $0x34] sm:$0xf]
      %v4212 = vld [vmem:[%s4197 + $0x38] sm:$0xf]
      %v4213 = vld [vmem:[%s4197 + $0x3c] sm:$0xf]
      %4215 = vst [vmem:[#allocation1] ss:$4 sm:$0xff] %v4184
      %s4217 = scalar_lea.vmem [#allocation1], 1
      %4218 = vst [vmem:[%s4217] ss:$4 sm:$0xff] %v4188
      %s4220 = scalar_lea.vmem [#allocation1], 2
      %4221 = vst [vmem:[%s4220] ss:$4 sm:$0xff] %v4192
      %s4223 = scalar_lea.vmem [#allocation1], 3
      %4224 = vst [vmem:[%s4223] ss:$4 sm:$0xff] %v4196
      %v4225 = vld.sshfl [vmem:[#allocation1] sm:$0xff pattern:$0x73625140]
      %v4243 = vunpack.c.l.b16 %v4198
      %v4244 = vunpack.c.l.b16 %v4199
      %v4245 = vunpack.c.l.b16 %v4200
      %v4246 = vunpack.c.l.b16 %v4201
      %v4247 = vunpack.c.l.b16 %v4202
      %v4248 = vunpack.c.l.b16 %v4203
      %v4249 = vunpack.c.l.b16 %v4204
      %v4250 = vunpack.c.l.b16 %v4205
      %v4251 = vunpack.c.l.b16 %v4206
      %v4252 = vunpack.c.l.b16 %v4207
      %v4253 = vunpack.c.l.b16 %v4208
      %v4254 = vunpack.c.l.b16 %v4209
      %v4255 = vunpack.c.l.b16 %v4210
      %v4256 = vunpack.c.l.b16 %v4211
      %v4257 = vunpack.c.l.b16 %v4212
      %v4258 = vunpack.c.l.b16 %v4213
      %v4259 = vpack.c.b16 %v4244, %v4243
      %v4260 = vpack.c.b16 %v4246, %v4245
      %v4261 = vpack.c.b16 %v4248, %v4247
      %v4262 = vpack.c.b16 %v4250, %v4249
      %v4263 = vpack.c.b16 %v4252, %v4251
      %v4264 = vpack.c.b16 %v4254, %v4253
      %v4265 = vpack.c.b16 %v4256, %v4255
      %v4266 = vpack.c.b16 %v4258, %v4257
      %4275 = vmatpush.bf16.msra.mxu0 %v4266
      %4276 = vmatpush.bf16.msra.mxu0 %v4265
      %4277 = vmatpush.bf16.msra.mxu0 %v4264
      %4278 = vmatpush.bf16.msra.mxu0 %v4263
      %4279 = vmatpush.bf16.msra.mxu0 %v4262
      %4280 = vmatpush.bf16.msra.mxu0 %v4261
      %4281 = vmatpush.bf16.msra.mxu0 %v4260
      %4282 = vmatpush.bf16.msra.mxu0 %v4259
      %4283 = vmatmul.bf16.gmra.mxu0 %v4225
      %v4284 = vpop.f32.mrf.mxu0
      %v4285 = vadd.f32 0.0, %v4284
      %v4286 = vpop.f32.mrf.mxu0
      %v4287 = vadd.f32 0.0, %v4286
      %4288 = vdwg.mxu0
      %v4289 = vadd.f32 %v4139, %v4285
      %v4290 = vadd.f32 %v4140, %v4287
      %v4291 = vld [vmem:[%s4] sm:$0x1]
      %v4293 = vperm.slane %v4291, 0
      %v4295 = vadd.f32 %v4289, %v4293
      %v4296 = vadd.f32 %v4290, %v4293
      %v4297 = vld [vmem:[%s394] sm:$0xf]
      %v4298 = vld [vmem:[%s394 + $0x4] sm:$0xf]
      %v4299 = vunpack.c.l.bf16 %v4297
      %v4300 = vunpack.c.l.bf16 %v4298
      %v4301 = vadd.f32 %v4295, %v4299
      %v4302 = vadd.f32 %v4296, %v4300
      %v4303 = vmax.f32 %v4301, 0.0
      %v4304 = vmax.f32 %v4302, 0.0
      %v4305 = vpack.c.bf16 %v4303, %v4303
      %v4306 = vpack.c.bf16 %v4304, %v4304
      %4307 = vst [vmem:[%s403] sm:$0xf] %v4305
      %4308 = vst [vmem:[%s403 + $0x4] sm:$0xf] %v4306
      %p4309 = scmp.lt.s32.totalorder %s21, 1
      %s4310 = scalar_select %p4309, %s21, 1
      %p4311 = scmp.lt.s32.totalorder %s22, 3
      %s4312 = scalar_select %p4311, %s22, 3
      %s4313 = smul.addr %s4312, 2
      %s4314 = smul.addr %s4310, 8
      %s4315 = sadd.s32 %s4313, %s4314
      %s4316 = smul.addr %s4315, 4
      %s4317 = scalar_lea.vmem %s6, %s4316
      // Predicated region
      $region45: #{down_block_forward.5} parent=43 // pred_check
        %p4318 = pneg %p207
      $region46: #{down_block_forward.5} parent=43 // pred_check_branch
        %4320 = sbr.rel (%p4318) target = $region48
      $region47: #{down_block_forward.5} parent=43 // pred_region
        _
      $region48: #{down_block_forward.5} parent=43 // pred_fallthru
        _
    $region44: #{down_block_forward.5} parent=5 // pred_fallthru
      _
    %p4321 = scmp.le.s32.totalorder 2, %s12
    // Predicated region
    $region49: #{down_block_forward.5} parent=5 // pred_check
      %p4322 = pneg %p4321
    $region50: #{down_block_forward.5} parent=5 // pred_check_branch
      %4324 = sbr.rel (%p4322) target = $region52
    $region51: #{down_block_forward.5} parent=5 // pred_region
      %s4325 = ssub.s32 %s12, 2
      // Predicated region
      $region53: #{down_block_forward.5} parent=51 // pred_check
        %p4326 = pneg %p213
      $region54: #{down_block_forward.5} parent=51 // pred_check_branch
        %4328 = sbr.rel (%p4326) target = $region56
      $region55: #{down_block_forward.5} parent=51 // pred_region
        %p4329 = scmp.lt.s32.totalorder %s23, 1
        %s4330 = scalar_select %p4329, %s23, 1
        %p4331 = scmp.lt.s32.totalorder %s24, 3
        %s4332 = scalar_select %p4331, %s24, 3
        %s4333 = smul.addr %s4332, 2
        %s4334 = smul.addr %s4330, 8
        %s4335 = sadd.s32 %s4333, %s4334
        %s4336 = smul.addr %s4335, 4
        %s4337 = scalar_lea.vmem %s6, %s4336
      $region56: #{down_block_forward.5} parent=51 // pred_fallthru
        _
    $region52: #{down_block_forward.5} parent=5 // pred_fallthru
      _
  $region6: #{down_block_forward.5} parent=0 // loop_footer
    %s16 = sadd.s32 1, %s12
  $region7: #{down_block_forward.5} parent=0 // loop_footer_branch
    %11 = sbr.rel target = $region3
  $region8: #{down_block_forward.5} parent=0 // loop_exit
    _

</llo_original>
